<compile_context>
chip_gen: v5e
topology: v5e:2x2
jax: 0.10.0
libtpu: 0.0.40
codegen_flags: <defaults>
</compile_context>

<pallas_src>
import jax
import jax.numpy as jnp
import numpy as np
from jax.experimental import pallas as pl
from jax.experimental.pallas import tpu as pltpu

_BN_EPS = 1e-5


# ---------------------------------------------------------------------------
# Fused residual-block Pallas kernel (direct conv, one image per grid step)
# ---------------------------------------------------------------------------
def _make_block_kernel(stride, has_projection):
    def kernel(*refs):
        if has_projection:
            x_ref, w1_ref, b1_ref, w2_ref, b2_ref, wsc_ref = refs[:6]
            rest = refs[6:]
        else:
            x_ref, w1_ref, b1_ref, w2_ref, b2_ref = refs[:5]
            wsc_ref = None
            rest = refs[5:]
        if stride == 1:
            o_ref, xpad_ref, y1pad_ref, acc_ref = rest
        else:
            o_ref, y1pad_ref, acc_ref = rest
            xpad_ref = None

        _, ho, wo, cout = o_ref.shape
        cin = x_ref.shape[-1]

        if stride == 1:
            # Stage x with a 1-pixel zero halo in VMEM (no host pad copy).
            _, h_in, w_in, _ = x_ref.shape
            xpad_ref[...] = jnp.zeros_like(xpad_ref)
            xpad_ref[1:h_in + 1, 1:w_in + 1, :] = x_ref[0]

            def tap_x(kh, kw):
                return xpad_ref[kh:kh + ho, kw:kw + wo, :]

            def load_xs():                      # x itself (stride 1)
                return xpad_ref[1:ho + 1, 1:wo + 1, :]
        else:
            # x arrives phase-split (space-to-depth by `stride`), so every tap
            # is a contiguous slice of one phase slab.
            def tap_x(kh, kw):
                p = (kh % stride) * stride + (kw % stride)
                r0, c0 = kh // stride, kw // stride
                return x_ref[p, r0:r0 + ho, c0:c0 + wo, :]

            def load_xs():                      # x[::stride, ::stride]
                p0 = (1 % stride) * stride + (1 % stride)
                o0 = 1 // stride
                return x_ref[p0, o0:o0 + ho, o0:o0 + wo, :]

        # ---- conv1(3x3, stride) + BN1 (folded) + ReLU : 9 shifted dots ----
        acc_ref[...] = jnp.zeros_like(acc_ref)
        for kh in range(3):
            for kw in range(3):
                acc_ref[...] += jnp.dot(
                    tap_x(kh, kw).reshape(ho * wo, cin),
                    w1_ref[kh, kw],
                    preferred_element_type=jnp.float32)
        y1 = jnp.maximum(acc_ref[...] + b1_ref[...], 0.0)

        # y1 stays on-chip: VMEM scratch with a zero halo for conv2.
        y1pad_ref[...] = jnp.zeros_like(y1pad_ref)
        y1pad_ref[1:ho + 1, 1:wo + 1, :] = (
            y1.reshape(ho, wo, cout).astype(y1pad_ref.dtype))

        # ---- conv2(3x3, stride 1) + BN2 (folded) ---------------------------
        acc_ref[...] = jnp.zeros_like(acc_ref)
        for kh in range(3):
            for kw in range(3):
                acc_ref[...] += jnp.dot(
                    y1pad_ref[kh:kh + ho, kw:kw + wo, :].reshape(ho * wo, cout),
                    w2_ref[kh, kw],
                    preferred_element_type=jnp.float32)
        out = acc_ref[...] + b2_ref[...]        # b2 (+ folded shortcut bias)

        # ---- shortcut: tiny 1x1 dot (projection) or f32 residual add -------
        xs = load_xs()
        if has_projection:
            out = out + jnp.dot(xs.reshape(ho * wo, cin), wsc_ref[...],
                                preferred_element_type=jnp.float32)
        else:
            out = out + xs.astype(jnp.float32).reshape(ho * wo, cin)

        o_ref[0] = jnp.maximum(out, 0.0).reshape(ho, wo, cout).astype(o_ref.dtype)

    return kernel


# ---------------------------------------------------------------------------
# Host-side helpers
# ---------------------------------------------------------------------------
def fold_bn(bn):
    scale = bn["gamma"] / jnp.sqrt(bn["var"] + _BN_EPS)
    bias = bn["beta"] - bn["mean"] * scale
    return scale, bias                                   # both (Cout,)


def _phase_split(x_nhwc, stride, ho, wo):
    """Pad by 1 and space-to-depth by `stride` so all 3x3 taps are contiguous
    slices in the kernel.  One cheap pass over x (no 9x im2col inflation)."""
    n, h, w, c = x_nhwc.shape
    hq = 2 // stride + ho
    wq = 2 // stride + wo
    xp = jnp.pad(x_nhwc, ((0, 0), (1, stride * hq - h - 1),
                          (1, stride * wq - w - 1), (0, 0)))
    xq = xp.reshape(n, hq, stride, wq, stride, c)
    xq = jnp.transpose(xq, (0, 2, 4, 1, 3, 5))           # (N, s, s, hq, wq, C)
    return xq.reshape(n * stride * stride, hq, wq, c)


def _vmem_limit_bytes(est_bytes):
    try:
        cap = pltpu.get_tpu_info().vmem_capacity_bytes
    except Exception:                                    # conservative (v7x/TC)
        cap = 64 * 1024 * 1024
    # 2x headroom over the static estimate, floor at the 32 MiB scoped default,
    # never request more than ~85% of physical VMEM (Mosaic scratch headroom).
    return int(min(max(2 * est_bytes, 32 * 1024 * 1024), int(0.85 * cap)))


def residual_block_forward(x_nchw, params, stride=1,
                           compute_dtype=jnp.bfloat16, out_dtype=jnp.float32):
    x = jnp.transpose(x_nchw, (0, 2, 3, 1))              # NCHW -> NHWC
    n, h, w, cin = x.shape
    cout = params["w1"].shape[0]
    ho = (h + 2 - 3) // stride + 1
    wo = (w + 2 - 3) // stride + 1
    has_projection = (stride != 1) or (cin != cout)
    itemsize = jnp.dtype(compute_dtype).itemsize

    # Fold BatchNorm (running stats) into weight columns / per-channel biases.
    s1, b1 = fold_bn(params["bn1"])
    s2, b2 = fold_bn(params["bn2"])
    w1 = (jnp.transpose(params["w1"], (2, 3, 1, 0)) * s1).astype(compute_dtype)
    w2 = (jnp.transpose(params["w2"], (2, 3, 1, 0)) * s2).astype(compute_dtype)

    args, in_specs = [], []
    if stride == 1:
        args.append(x.astype(compute_dtype))             # raw x, no host copies
        in_specs.append(pl.BlockSpec((1, h, w, cin), lambda i: (i, 0, 0, 0)))
        x_block_bytes = h * w * cin * itemsize
    else:
        xq = _phase_split(x.astype(compute_dtype), stride, ho, wo)
        hq, wq = xq.shape[1], xq.shape[2]
        args.append(xq)
        in_specs.append(pl.BlockSpec((stride * stride, hq, wq, cin),
                                     lambda i: (i, 0, 0, 0)))
        x_block_bytes = stride * stride * hq * wq * cin * itemsize

    args += [w1, b1.reshape(1, -1).astype(jnp.float32), w2]
    in_specs += [
        pl.BlockSpec((3, 3, cin, cout), lambda i: (0, 0, 0, 0)),
        pl.BlockSpec((1, cout), lambda i: (0, 0)),
        pl.BlockSpec((3, 3, cout, cout), lambda i: (0, 0, 0, 0)),
    ]
    if has_projection:
        ssc, bsc = fold_bn(params["bnsc"])
        wsc = (jnp.transpose(params["wsc"][:, :, 0, 0]) * ssc).astype(compute_dtype)
        args += [(b2 + bsc).reshape(1, -1).astype(jnp.float32), wsc]
        in_specs += [pl.BlockSpec((1, cout), lambda i: (0, 0)),
                     pl.BlockSpec((cin, cout), lambda i: (0, 0))]
    else:
        args += [b2.reshape(1, -1).astype(jnp.float32)]
        in_specs += [pl.BlockSpec((1, cout), lambda i: (0, 0))]

    scratch = []
    if stride == 1:
        scratch.append(pltpu.VMEM((h + 2, w + 2, cin), compute_dtype))   # x halo
    scratch.append(pltpu.VMEM((ho + 2, wo + 2, cout), compute_dtype))    # y1 halo
    scratch.append(pltpu.VMEM((ho * wo, cout), jnp.float32))             # f32 acc

    est = (2 * x_block_bytes
           + 2 * 9 * (cin + cout) * cout * itemsize                      # w1, w2
           + 2 * ho * wo * cout * jnp.dtype(out_dtype).itemsize          # out
           + (h + 2) * (w + 2) * cin * itemsize                          # xpad
           + (ho + 2) * (wo + 2) * cout * itemsize                       # y1pad
           + ho * wo * cout * 4)                                         # acc

    out = pl.pallas_call(
        _make_block_kernel(stride, has_projection),
        out_shape=jax.ShapeDtypeStruct((n, ho, wo, cout), out_dtype),
        grid=(n,),
        in_specs=in_specs,
        out_specs=pl.BlockSpec((1, ho, wo, cout), lambda i: (i, 0, 0, 0)),
        scratch_shapes=scratch,
        compiler_params=pltpu.CompilerParams(
            dimension_semantics=("parallel",),
            vmem_limit_bytes=_vmem_limit_bytes(est)),
    )(*args)

    # Dropout(0.5): identity in eval/inference mode.
    return jnp.transpose(out, (0, 3, 1, 2))              # NHWC -> NCHW


# ---------------------------------------------------------------------------
# Reference (plain JAX, NCHW) for verification
# ---------------------------------------------------------------------------
def reference_forward(x, params, stride=1):
    def conv(x, w, s, pad):
        return jax.lax.conv_general_dilated(
            x, w, (s, s), [(pad, pad), (pad, pad)],
            dimension_numbers=("NCHW", "OIHW", "NCHW"))

    def bn(x, p):
        sc = p["gamma"] / jnp.sqrt(p["var"] + _BN_EPS)
        bi = p["beta"] - p["mean"] * sc
        return x * sc[None, :, None, None] + bi[None, :, None, None]

    left = jax.nn.relu(bn(conv(x, params["w1"], stride, 1), params["bn1"]))
    left = bn(conv(left, params["w2"], 1, 1), params["bn2"])
    cin, cout = params["w1"].shape[1], params["w1"].shape[0]
    if stride != 1 or cin != cout:
        short = bn(conv(x, params["wsc"], stride, 0), params["bnsc"])
    else:
        short = x
    return jax.nn.relu(left + short)


def init_params(key, cin, cout, stride):
    ks = jax.random.split(key, 12)

    def bn_params(k):
        k1, k2, k3, k4 = jax.random.split(k, 4)
        return {
            "gamma": 1.0 + 0.1 * jax.random.normal(k1, (cout,), jnp.float32),
            "beta": 0.1 * jax.random.normal(k2, (cout,), jnp.float32),
            "mean": 0.1 * jax.random.normal(k3, (cout,), jnp.float32),
            "var": 0.5 + jnp.abs(jax.random.normal(k4, (cout,), jnp.float32)),
        }

    params = {
        "w1": 0.1 * jax.random.normal(ks[0], (cout, cin, 3, 3), jnp.float32),
        "bn1": bn_params(ks[1]),
        "w2": 0.1 * jax.random.normal(ks[2], (cout, cout, 3, 3), jnp.float32),
        "bn2": bn_params(ks[3]),
    }
    if stride != 1 or cin != cout:
        params["wsc"] = 0.1 * jax.random.normal(ks[4], (cout, cin, 1, 1), jnp.float32)
        params["bnsc"] = bn_params(ks[5])
    return params


if __name__ == "__main__":
    key = jax.random.PRNGKey(0)
    k_x, k_p1, k_p2, k_p3 = jax.random.split(key, 4)
    N, H, W = 2, 16, 16

    # Case 1: projection shortcut (cin != cout, stride 1) -> in-kernel 1x1 dot.
    CIN, COUT = 4, 8
    x = jax.random.normal(k_x, (N, CIN, H, W), jnp.float32)       # NCHW input
    params = init_params(k_p1, CIN, COUT, 1)
    ref = jax.block_until_ready(reference_forward(x, params, stride=1))
    out_f32 = jax.block_until_ready(
        residual_block_forward(x, params, stride=1, compute_dtype=jnp.float32))
    np.testing.assert_allclose(np.asarray(out_f32), np.asarray(ref),
                               rtol=1e-3, atol=1e-3)
    out_bf16 = jax.block_until_ready(residual_block_forward(x, params, stride=1))
    np.testing.assert_allclose(np.asarray(out_bf16), np.asarray(ref),
                               rtol=3e-2, atol=3e-2)
    assert out_bf16.shape == (N, COUT, H, W)

    # Case 2: identity shortcut (cin == cout, stride 1) -> in-kernel residual add.
    CIN2 = COUT2 = 8
    x2 = jax.random.normal(k_x, (N, CIN2, H, W), jnp.float32)
    params2 = init_params(k_p2, CIN2, COUT2, 1)
    ref2 = jax.block_until_ready(reference_forward(x2, params2, stride=1))
    out2_f32 = jax.block_until_ready(
        residual_block_forward(x2, params2, stride=1, compute_dtype=jnp.float32))
    np.testing.assert_allclose(np.asarray(out2_f32), np.asarray(ref2),
                               rtol=1e-3, atol=1e-3)
    out2 = jax.block_until_ready(residual_block_forward(x2, params2, stride=1))
    np.testing.assert_allclose(np.asarray(out2), np.asarray(ref2),
                               rtol=5e-2, atol=5e-2)
    assert out2.shape == (N, COUT2, H, W)

    # Case 3: downsampling block (stride 2, cin != cout) -> phase-split input.
    CIN3, COUT3, S3 = 8, 16, 2
    x3 = jax.random.normal(k_x, (N, CIN3, H, W), jnp.float32)
    params3 = init_params(k_p3, CIN3, COUT3, S3)
    ref3 = jax.block_until_ready(reference_forward(x3, params3, stride=S3))
    out3_f32 = jax.block_until_ready(
        residual_block_forward(x3, params3, stride=S3, compute_dtype=jnp.float32))
    np.testing.assert_allclose(np.asarray(out3_f32), np.asarray(ref3),
                               rtol=1e-3, atol=1e-3)
    out3 = jax.block_until_ready(residual_block_forward(x3, params3, stride=S3))
    np.testing.assert_allclose(np.asarray(out3), np.asarray(ref3),
                               rtol=5e-2, atol=5e-2)
    assert out3.shape == (N, COUT3, H // S3, W // S3)

    print("KERNEL_OK")
</pallas_src>

<mosaic_0001>
module attributes {stable_mosaic.version = 11 : i64} {
  func.func @kernel(%arg0: i32, %arg1: memref<1x16x16x4xf32, #tpu.memory_space<vmem>>, %arg2: memref<3x3x4x8xf32, #tpu.memory_space<vmem>>, %arg3: memref<1x8xf32, #tpu.memory_space<vmem>>, %arg4: memref<3x3x8x8xf32, #tpu.memory_space<vmem>>, %arg5: memref<1x8xf32, #tpu.memory_space<vmem>>, %arg6: memref<4x8xf32, #tpu.memory_space<vmem>>, %arg7: memref<1x16x16x8xf32, #tpu.memory_space<vmem>>, %arg8: memref<18x18x4xf32, #tpu.memory_space<vmem>>, %arg9: memref<18x18x8xf32, #tpu.memory_space<vmem>>, %arg10: memref<256x8xf32, #tpu.memory_space<vmem>>) attributes {dimension_semantics = [#tpu.dimension_semantics<parallel>], iteration_bounds = array<i64: 2>, scalar_prefetch = 0 : i64, scratch_operands = 3 : i64, tpu.core_type = #tpu.core_type<tc>, window_params = [{transform_indices = @transform_0, window_bounds = array<i64: 1, 16, 16, 4>}, {pipeline_mode = #tpu.pipeline_mode<synchronous>, transform_indices = @transform_1, window_bounds = array<i64: 3, 3, 4, 8>}, {pipeline_mode = #tpu.pipeline_mode<synchronous>, transform_indices = @transform_2, window_bounds = array<i64: 1, 8>}, {pipeline_mode = #tpu.pipeline_mode<synchronous>, transform_indices = @transform_3, window_bounds = array<i64: 3, 3, 8, 8>}, {pipeline_mode = #tpu.pipeline_mode<synchronous>, transform_indices = @transform_4, window_bounds = array<i64: 1, 8>}, {pipeline_mode = #tpu.pipeline_mode<synchronous>, transform_indices = @transform_5, window_bounds = array<i64: 4, 8>}, {transform_indices = @transform_6, window_bounds = array<i64: 1, 16, 16, 8>}]} {
    %cst = arith.constant 0.000000e+00 : f32
    %0 = vector.broadcast %cst : f32 to vector<18x18x4xf32>
    %c0 = arith.constant 0 : index
    %c0_0 = arith.constant 0 : index
    %c0_1 = arith.constant 0 : index
    %1 = vector.load %arg8[%c0, %c0_0, %c0_1] : memref<18x18x4xf32, #tpu.memory_space<vmem>>, vector<18x18x4xf32>
    tpu.vector_store %arg8[%c0, %c0_0, %c0_1], %0 {strides = array<i32>} : memref<18x18x4xf32, #tpu.memory_space<vmem>>, vector<18x18x4xf32>,
    %c0_2 = arith.constant 0 : index
    %c0_3 = arith.constant 0 : index
    %c0_4 = arith.constant 0 : index
    %c0_5 = arith.constant 0 : index
    %2 = vector.load %arg1[%c0_2, %c0_3, %c0_4, %c0_5] : memref<1x16x16x4xf32, #tpu.memory_space<vmem>>, vector<1x16x16x4xf32>
    %3 = vector.shape_cast %2 : vector<1x16x16x4xf32> to vector<16x16x4xf32>
    %c1 = arith.constant 1 : index
    %c1_6 = arith.constant 1 : index
    %c0_7 = arith.constant 0 : index
    %4 = vector.load %arg8[%c1, %c1_6, %c0_7] : memref<18x18x4xf32, #tpu.memory_space<vmem>>, vector<16x16x4xf32>
    tpu.vector_store %arg8[%c1, %c1_6, %c0_7], %3 {strides = array<i32>} : memref<18x18x4xf32, #tpu.memory_space<vmem>>, vector<16x16x4xf32>,
    %cst_8 = arith.constant 0.000000e+00 : f32
    %5 = vector.broadcast %cst_8 : f32 to vector<256x8xf32>
    %c0_9 = arith.constant 0 : index
    %c0_10 = arith.constant 0 : index
    %6 = vector.load %arg10[%c0_9, %c0_10] : memref<256x8xf32, #tpu.memory_space<vmem>>, vector<256x8xf32>
    tpu.vector_store %arg10[%c0_9, %c0_10], %5 {strides = array<i32>} : memref<256x8xf32, #tpu.memory_space<vmem>>, vector<256x8xf32>,
    %c0_11 = arith.constant 0 : index
    %c0_12 = arith.constant 0 : index
    %7 = vector.load %arg10[%c0_11, %c0_12] : memref<256x8xf32, #tpu.memory_space<vmem>>, vector<256x8xf32>
    %c0_13 = arith.constant 0 : index
    %c0_14 = arith.constant 0 : index
    %c0_15 = arith.constant 0 : index
    %8 = vector.load %arg8[%c0_13, %c0_14, %c0_15] : memref<18x18x4xf32, #tpu.memory_space<vmem>>, vector<16x16x4xf32>
    %9 = vector.shape_cast %8 : vector<16x16x4xf32> to vector<256x4xf32>
    %c0_16 = arith.constant 0 : index
    %c0_17 = arith.constant 0 : index
    %c0_18 = arith.constant 0 : index
    %c0_19 = arith.constant 0 : index
    %10 = vector.load %arg2[%c0_16, %c0_17, %c0_18, %c0_19] : memref<3x3x4x8xf32, #tpu.memory_space<vmem>>, vector<1x1x4x8xf32>
    %11 = vector.shape_cast %10 : vector<1x1x4x8xf32> to vector<4x8xf32>
    %cst_20 = arith.constant dense<0.000000e+00> : vector<256x8xf32>
    %12 = tpu.matmul %9, %11, %cst_20 {dimension_numbers = #tpu.dot_dimension_numbers<[1], [0], [0], [1], [0, 0, 1, 1], [], []>} : vector<256x4xf32>, vector<4x8xf32>, vector<256x8xf32> -> vector<256x8xf32>
    %13 = arith.addf %7, %12 : vector<256x8xf32>
    %c0_21 = arith.constant 0 : index
    %c0_22 = arith.constant 0 : index
    %14 = vector.load %arg10[%c0_21, %c0_22] : memref<256x8xf32, #tpu.memory_space<vmem>>, vector<256x8xf32>
    tpu.vector_store %arg10[%c0_21, %c0_22], %13 {strides = array<i32>} : memref<256x8xf32, #tpu.memory_space<vmem>>, vector<256x8xf32>,
    %c0_23 = arith.constant 0 : index
    %c0_24 = arith.constant 0 : index
    %15 = vector.load %arg10[%c0_23, %c0_24] : memref<256x8xf32, #tpu.memory_space<vmem>>, vector<256x8xf32>
    %c0_25 = arith.constant 0 : index
    %c1_26 = arith.constant 1 : index
    %c0_27 = arith.constant 0 : index
    %16 = vector.load %arg8[%c0_25, %c1_26, %c0_27] : memref<18x18x4xf32, #tpu.memory_space<vmem>>, vector<16x16x4xf32>
    %17 = vector.shape_cast %16 : vector<16x16x4xf32> to vector<256x4xf32>
    %c0_28 = arith.constant 0 : index
    %c1_29 = arith.constant 1 : index
    %c0_30 = arith.constant 0 : index
    %c0_31 = arith.constant 0 : index
    %18 = vector.load %arg2[%c0_28, %c1_29, %c0_30, %c0_31] : memref<3x3x4x8xf32, #tpu.memory_space<vmem>>, vector<1x1x4x8xf32>
    %19 = vector.shape_cast %18 : vector<1x1x4x8xf32> to vector<4x8xf32>
    %cst_32 = arith.constant dense<0.000000e+00> : vector<256x8xf32>
    %20 = tpu.matmul %17, %19, %cst_32 {dimension_numbers = #tpu.dot_dimension_numbers<[1], [0], [0], [1], [0, 0, 1, 1], [], []>} : vector<256x4xf32>, vector<4x8xf32>, vector<256x8xf32> -> vector<256x8xf32>
    %21 = arith.addf %15, %20 : vector<256x8xf32>
    %c0_33 = arith.constant 0 : index
    %c0_34 = arith.constant 0 : index
    %22 = vector.load %arg10[%c0_33, %c0_34] : memref<256x8xf32, #tpu.memory_space<vmem>>, vector<256x8xf32>
    tpu.vector_store %arg10[%c0_33, %c0_34], %21 {strides = array<i32>} : memref<256x8xf32, #tpu.memory_space<vmem>>, vector<256x8xf32>,
    %c0_35 = arith.constant 0 : index
    %c0_36 = arith.constant 0 : index
    %23 = vector.load %arg10[%c0_35, %c0_36] : memref<256x8xf32, #tpu.memory_space<vmem>>, vector<256x8xf32>
    %c0_37 = arith.constant 0 : index
    %c2 = arith.constant 2 : index
    %c0_38 = arith.constant 0 : index
    %24 = vector.load %arg8[%c0_37, %c2, %c0_38] : memref<18x18x4xf32, #tpu.memory_space<vmem>>, vector<16x16x4xf32>
    %25 = vector.shape_cast %24 : vector<16x16x4xf32> to vector<256x4xf32>
    %c0_39 = arith.constant 0 : index
    %c2_40 = arith.constant 2 : index
    %c0_41 = arith.constant 0 : index
    %c0_42 = arith.constant 0 : index
    %26 = vector.load %arg2[%c0_39, %c2_40, %c0_41, %c0_42] : memref<3x3x4x8xf32, #tpu.memory_space<vmem>>, vector<1x1x4x8xf32>
    %27 = vector.shape_cast %26 : vector<1x1x4x8xf32> to vector<4x8xf32>
    %cst_43 = arith.constant dense<0.000000e+00> : vector<256x8xf32>
    %28 = tpu.matmul %25, %27, %cst_43 {dimension_numbers = #tpu.dot_dimension_numbers<[1], [0], [0], [1], [0, 0, 1, 1], [], []>} : vector<256x4xf32>, vector<4x8xf32>, vector<256x8xf32> -> vector<256x8xf32>
    %29 = arith.addf %23, %28 : vector<256x8xf32>
    %c0_44 = arith.constant 0 : index
    %c0_45 = arith.constant 0 : index
    %30 = vector.load %arg10[%c0_44, %c0_45] : memref<256x8xf32, #tpu.memory_space<vmem>>, vector<256x8xf32>
    tpu.vector_store %arg10[%c0_44, %c0_45], %29 {strides = array<i32>} : memref<256x8xf32, #tpu.memory_space<vmem>>, vector<256x8xf32>,
    %c0_46 = arith.constant 0 : index
    %c0_47 = arith.constant 0 : index
    %31 = vector.load %arg10[%c0_46, %c0_47] : memref<256x8xf32, #tpu.memory_space<vmem>>, vector<256x8xf32>
    %c1_48 = arith.constant 1 : index
    %c0_49 = arith.constant 0 : index
    %c0_50 = arith.constant 0 : index
    %32 = vector.load %arg8[%c1_48, %c0_49, %c0_50] : memref<18x18x4xf32, #tpu.memory_space<vmem>>, vector<16x16x4xf32>
    %33 = vector.shape_cast %32 : vector<16x16x4xf32> to vector<256x4xf32>
    %c1_51 = arith.constant 1 : index
    %c0_52 = arith.constant 0 : index
    %c0_53 = arith.constant 0 : index
    %c0_54 = arith.constant 0 : index
    %34 = vector.load %arg2[%c1_51, %c0_52, %c0_53, %c0_54] : memref<3x3x4x8xf32, #tpu.memory_space<vmem>>, vector<1x1x4x8xf32>
    %35 = vector.shape_cast %34 : vector<1x1x4x8xf32> to vector<4x8xf32>
    %cst_55 = arith.constant dense<0.000000e+00> : vector<256x8xf32>
    %36 = tpu.matmul %33, %35, %cst_55 {dimension_numbers = #tpu.dot_dimension_numbers<[1], [0], [0], [1], [0, 0, 1, 1], [], []>} : vector<256x4xf32>, vector<4x8xf32>, vector<256x8xf32> -> vector<256x8xf32>
    %37 = arith.addf %31, %36 : vector<256x8xf32>
    %c0_56 = arith.constant 0 : index
    %c0_57 = arith.constant 0 : index
    %38 = vector.load %arg10[%c0_56, %c0_57] : memref<256x8xf32, #tpu.memory_space<vmem>>, vector<256x8xf32>
    tpu.vector_store %arg10[%c0_56, %c0_57], %37 {strides = array<i32>} : memref<256x8xf32, #tpu.memory_space<vmem>>, vector<256x8xf32>,
    %c0_58 = arith.constant 0 : index
    %c0_59 = arith.constant 0 : index
    %39 = vector.load %arg10[%c0_58, %c0_59] : memref<256x8xf32, #tpu.memory_space<vmem>>, vector<256x8xf32>
    %c1_60 = arith.constant 1 : index
    %c1_61 = arith.constant 1 : index
    %c0_62 = arith.constant 0 : index
    %40 = vector.load %arg8[%c1_60, %c1_61, %c0_62] : memref<18x18x4xf32, #tpu.memory_space<vmem>>, vector<16x16x4xf32>
    %41 = vector.shape_cast %40 : vector<16x16x4xf32> to vector<256x4xf32>
    %c1_63 = arith.constant 1 : index
    %c1_64 = arith.constant 1 : index
    %c0_65 = arith.constant 0 : index
    %c0_66 = arith.constant 0 : index
    %42 = vector.load %arg2[%c1_63, %c1_64, %c0_65, %c0_66] : memref<3x3x4x8xf32, #tpu.memory_space<vmem>>, vector<1x1x4x8xf32>
    %43 = vector.shape_cast %42 : vector<1x1x4x8xf32> to vector<4x8xf32>
    %cst_67 = arith.constant dense<0.000000e+00> : vector<256x8xf32>
    %44 = tpu.matmul %41, %43, %cst_67 {dimension_numbers = #tpu.dot_dimension_numbers<[1], [0], [0], [1], [0, 0, 1, 1], [], []>} : vector<256x4xf32>, vector<4x8xf32>, vector<256x8xf32> -> vector<256x8xf32>
    %45 = arith.addf %39, %44 : vector<256x8xf32>
    %c0_68 = arith.constant 0 : index
    %c0_69 = arith.constant 0 : index
    %46 = vector.load %arg10[%c0_68, %c0_69] : memref<256x8xf32, #tpu.memory_space<vmem>>, vector<256x8xf32>
    tpu.vector_store %arg10[%c0_68, %c0_69], %45 {strides = array<i32>} : memref<256x8xf32, #tpu.memory_space<vmem>>, vector<256x8xf32>,
    %c0_70 = arith.constant 0 : index
    %c0_71 = arith.constant 0 : index
    %47 = vector.load %arg10[%c0_70, %c0_71] : memref<256x8xf32, #tpu.memory_space<vmem>>, vector<256x8xf32>
    %c1_72 = arith.constant 1 : index
    %c2_73 = arith.constant 2 : index
    %c0_74 = arith.constant 0 : index
    %48 = vector.load %arg8[%c1_72, %c2_73, %c0_74] : memref<18x18x4xf32, #tpu.memory_space<vmem>>, vector<16x16x4xf32>
    %49 = vector.shape_cast %48 : vector<16x16x4xf32> to vector<256x4xf32>
    %c1_75 = arith.constant 1 : index
    %c2_76 = arith.constant 2 : index
    %c0_77 = arith.constant 0 : index
    %c0_78 = arith.constant 0 : index
    %50 = vector.load %arg2[%c1_75, %c2_76, %c0_77, %c0_78] : memref<3x3x4x8xf32, #tpu.memory_space<vmem>>, vector<1x1x4x8xf32>
    %51 = vector.shape_cast %50 : vector<1x1x4x8xf32> to vector<4x8xf32>
    %cst_79 = arith.constant dense<0.000000e+00> : vector<256x8xf32>
    %52 = tpu.matmul %49, %51, %cst_79 {dimension_numbers = #tpu.dot_dimension_numbers<[1], [0], [0], [1], [0, 0, 1, 1], [], []>} : vector<256x4xf32>, vector<4x8xf32>, vector<256x8xf32> -> vector<256x8xf32>
    %53 = arith.addf %47, %52 : vector<256x8xf32>
    %c0_80 = arith.constant 0 : index
    %c0_81 = arith.constant 0 : index
    %54 = vector.load %arg10[%c0_80, %c0_81] : memref<256x8xf32, #tpu.memory_space<vmem>>, vector<256x8xf32>
    tpu.vector_store %arg10[%c0_80, %c0_81], %53 {strides = array<i32>} : memref<256x8xf32, #tpu.memory_space<vmem>>, vector<256x8xf32>,
    %c0_82 = arith.constant 0 : index
    %c0_83 = arith.constant 0 : index
    %55 = vector.load %arg10[%c0_82, %c0_83] : memref<256x8xf32, #tpu.memory_space<vmem>>, vector<256x8xf32>
    %c2_84 = arith.constant 2 : index
    %c0_85 = arith.constant 0 : index
    %c0_86 = arith.constant 0 : index
    %56 = vector.load %arg8[%c2_84, %c0_85, %c0_86] : memref<18x18x4xf32, #tpu.memory_space<vmem>>, vector<16x16x4xf32>
    %57 = vector.shape_cast %56 : vector<16x16x4xf32> to vector<256x4xf32>
    %c2_87 = arith.constant 2 : index
    %c0_88 = arith.constant 0 : index
    %c0_89 = arith.constant 0 : index
    %c0_90 = arith.constant 0 : index
    %58 = vector.load %arg2[%c2_87, %c0_88, %c0_89, %c0_90] : memref<3x3x4x8xf32, #tpu.memory_space<vmem>>, vector<1x1x4x8xf32>
    %59 = vector.shape_cast %58 : vector<1x1x4x8xf32> to vector<4x8xf32>
    %cst_91 = arith.constant dense<0.000000e+00> : vector<256x8xf32>
    %60 = tpu.matmul %57, %59, %cst_91 {dimension_numbers = #tpu.dot_dimension_numbers<[1], [0], [0], [1], [0, 0, 1, 1], [], []>} : vector<256x4xf32>, vector<4x8xf32>, vector<256x8xf32> -> vector<256x8xf32>
    %61 = arith.addf %55, %60 : vector<256x8xf32>
    %c0_92 = arith.constant 0 : index
    %c0_93 = arith.constant 0 : index
    %62 = vector.load %arg10[%c0_92, %c0_93] : memref<256x8xf32, #tpu.memory_space<vmem>>, vector<256x8xf32>
    tpu.vector_store %arg10[%c0_92, %c0_93], %61 {strides = array<i32>} : memref<256x8xf32, #tpu.memory_space<vmem>>, vector<256x8xf32>,
    %c0_94 = arith.constant 0 : index
    %c0_95 = arith.constant 0 : index
    %63 = vector.load %arg10[%c0_94, %c0_95] : memref<256x8xf32, #tpu.memory_space<vmem>>, vector<256x8xf32>
    %c2_96 = arith.constant 2 : index
    %c1_97 = arith.constant 1 : index
    %c0_98 = arith.constant 0 : index
    %64 = vector.load %arg8[%c2_96, %c1_97, %c0_98] : memref<18x18x4xf32, #tpu.memory_space<vmem>>, vector<16x16x4xf32>
    %65 = vector.shape_cast %64 : vector<16x16x4xf32> to vector<256x4xf32>
    %c2_99 = arith.constant 2 : index
    %c1_100 = arith.constant 1 : index
    %c0_101 = arith.constant 0 : index
    %c0_102 = arith.constant 0 : index
    %66 = vector.load %arg2[%c2_99, %c1_100, %c0_101, %c0_102] : memref<3x3x4x8xf32, #tpu.memory_space<vmem>>, vector<1x1x4x8xf32>
    %67 = vector.shape_cast %66 : vector<1x1x4x8xf32> to vector<4x8xf32>
    %cst_103 = arith.constant dense<0.000000e+00> : vector<256x8xf32>
    %68 = tpu.matmul %65, %67, %cst_103 {dimension_numbers = #tpu.dot_dimension_numbers<[1], [0], [0], [1], [0, 0, 1, 1], [], []>} : vector<256x4xf32>, vector<4x8xf32>, vector<256x8xf32> -> vector<256x8xf32>
    %69 = arith.addf %63, %68 : vector<256x8xf32>
    %c0_104 = arith.constant 0 : index
    %c0_105 = arith.constant 0 : index
    %70 = vector.load %arg10[%c0_104, %c0_105] : memref<256x8xf32, #tpu.memory_space<vmem>>, vector<256x8xf32>
    tpu.vector_store %arg10[%c0_104, %c0_105], %69 {strides = array<i32>} : memref<256x8xf32, #tpu.memory_space<vmem>>, vector<256x8xf32>,
    %c0_106 = arith.constant 0 : index
    %c0_107 = arith.constant 0 : index
    %71 = vector.load %arg10[%c0_106, %c0_107] : memref<256x8xf32, #tpu.memory_space<vmem>>, vector<256x8xf32>
    %c2_108 = arith.constant 2 : index
    %c2_109 = arith.constant 2 : index
    %c0_110 = arith.constant 0 : index
    %72 = vector.load %arg8[%c2_108, %c2_109, %c0_110] : memref<18x18x4xf32, #tpu.memory_space<vmem>>, vector<16x16x4xf32>
    %73 = vector.shape_cast %72 : vector<16x16x4xf32> to vector<256x4xf32>
    %c2_111 = arith.constant 2 : index
    %c2_112 = arith.constant 2 : index
    %c0_113 = arith.constant 0 : index
    %c0_114 = arith.constant 0 : index
    %74 = vector.load %arg2[%c2_111, %c2_112, %c0_113, %c0_114] : memref<3x3x4x8xf32, #tpu.memory_space<vmem>>, vector<1x1x4x8xf32>
    %75 = vector.shape_cast %74 : vector<1x1x4x8xf32> to vector<4x8xf32>
    %cst_115 = arith.constant dense<0.000000e+00> : vector<256x8xf32>
    %76 = tpu.matmul %73, %75, %cst_115 {dimension_numbers = #tpu.dot_dimension_numbers<[1], [0], [0], [1], [0, 0, 1, 1], [], []>} : vector<256x4xf32>, vector<4x8xf32>, vector<256x8xf32> -> vector<256x8xf32>
    %77 = arith.addf %71, %76 : vector<256x8xf32>
    %c0_116 = arith.constant 0 : index
    %c0_117 = arith.constant 0 : index
    %78 = vector.load %arg10[%c0_116, %c0_117] : memref<256x8xf32, #tpu.memory_space<vmem>>, vector<256x8xf32>
    tpu.vector_store %arg10[%c0_116, %c0_117], %77 {strides = array<i32>} : memref<256x8xf32, #tpu.memory_space<vmem>>, vector<256x8xf32>,
    %c0_118 = arith.constant 0 : index
    %c0_119 = arith.constant 0 : index
    %79 = vector.load %arg10[%c0_118, %c0_119] : memref<256x8xf32, #tpu.memory_space<vmem>>, vector<256x8xf32>
    %c0_120 = arith.constant 0 : index
    %c0_121 = arith.constant 0 : index
    %80 = vector.load %arg3[%c0_120, %c0_121] : memref<1x8xf32, #tpu.memory_space<vmem>>, vector<1x8xf32>
    %81 = vector.broadcast %80 : vector<1x8xf32> to vector<256x8xf32>
    %82 = arith.addf %79, %81 : vector<256x8xf32>
    %cst_122 = arith.constant 0.000000e+00 : f32
    %83 = vector.broadcast %cst_122 : f32 to vector<256x8xf32>
    %84 = arith.maximumf %82, %83 : vector<256x8xf32>
    %cst_123 = arith.constant 0.000000e+00 : f32
    %85 = vector.broadcast %cst_123 : f32 to vector<18x18x8xf32>
    %c0_124 = arith.constant 0 : index
    %c0_125 = arith.constant 0 : index
    %c0_126 = arith.constant 0 : index
    %86 = vector.load %arg9[%c0_124, %c0_125, %c0_126] : memref<18x18x8xf32, #tpu.memory_space<vmem>>, vector<18x18x8xf32>
    tpu.vector_store %arg9[%c0_124, %c0_125, %c0_126], %85 {strides = array<i32>} : memref<18x18x8xf32, #tpu.memory_space<vmem>>, vector<18x18x8xf32>,
    %87 = vector.shape_cast %84 : vector<256x8xf32> to vector<16x16x8xf32>
    %c1_127 = arith.constant 1 : index
    %c1_128 = arith.constant 1 : index
    %c0_129 = arith.constant 0 : index
    %88 = vector.load %arg9[%c1_127, %c1_128, %c0_129] : memref<18x18x8xf32, #tpu.memory_space<vmem>>, vector<16x16x8xf32>
    tpu.vector_store %arg9[%c1_127, %c1_128, %c0_129], %87 {strides = array<i32>} : memref<18x18x8xf32, #tpu.memory_space<vmem>>, vector<16x16x8xf32>,
    %cst_130 = arith.constant 0.000000e+00 : f32
    %89 = vector.broadcast %cst_130 : f32 to vector<256x8xf32>
    %c0_131 = arith.constant 0 : index
    %c0_132 = arith.constant 0 : index
    %90 = vector.load %arg10[%c0_131, %c0_132] : memref<256x8xf32, #tpu.memory_space<vmem>>, vector<256x8xf32>
    tpu.vector_store %arg10[%c0_131, %c0_132], %89 {strides = array<i32>} : memref<256x8xf32, #tpu.memory_space<vmem>>, vector<256x8xf32>,
    %c0_133 = arith.constant 0 : index
    %c0_134 = arith.constant 0 : index
    %91 = vector.load %arg10[%c0_133, %c0_134] : memref<256x8xf32, #tpu.memory_space<vmem>>, vector<256x8xf32>
    %c0_135 = arith.constant 0 : index
    %c0_136 = arith.constant 0 : index
    %c0_137 = arith.constant 0 : index
    %92 = vector.load %arg9[%c0_135, %c0_136, %c0_137] : memref<18x18x8xf32, #tpu.memory_space<vmem>>, vector<16x16x8xf32>
    %93 = vector.shape_cast %92 : vector<16x16x8xf32> to vector<256x8xf32>
    %c0_138 = arith.constant 0 : index
    %c0_139 = arith.constant 0 : index
    %c0_140 = arith.constant 0 : index
    %c0_141 = arith.constant 0 : index
    %94 = vector.load %arg4[%c0_138, %c0_139, %c0_140, %c0_141] : memref<3x3x8x8xf32, #tpu.memory_space<vmem>>, vector<1x1x8x8xf32>
    %95 = vector.shape_cast %94 : vector<1x1x8x8xf32> to vector<8x8xf32>
    %cst_142 = arith.constant dense<0.000000e+00> : vector<256x8xf32>
    %96 = tpu.matmul %93, %95, %cst_142 {dimension_numbers = #tpu.dot_dimension_numbers<[1], [0], [0], [1], [0, 0, 1, 1], [], []>} : vector<256x8xf32>, vector<8x8xf32>, vector<256x8xf32> -> vector<256x8xf32>
    %97 = arith.addf %91, %96 : vector<256x8xf32>
    %c0_143 = arith.constant 0 : index
    %c0_144 = arith.constant 0 : index
    %98 = vector.load %arg10[%c0_143, %c0_144] : memref<256x8xf32, #tpu.memory_space<vmem>>, vector<256x8xf32>
    tpu.vector_store %arg10[%c0_143, %c0_144], %97 {strides = array<i32>} : memref<256x8xf32, #tpu.memory_space<vmem>>, vector<256x8xf32>,
    %c0_145 = arith.constant 0 : index
    %c0_146 = arith.constant 0 : index
    %99 = vector.load %arg10[%c0_145, %c0_146] : memref<256x8xf32, #tpu.memory_space<vmem>>, vector<256x8xf32>
    %c0_147 = arith.constant 0 : index
    %c1_148 = arith.constant 1 : index
    %c0_149 = arith.constant 0 : index
    %100 = vector.load %arg9[%c0_147, %c1_148, %c0_149] : memref<18x18x8xf32, #tpu.memory_space<vmem>>, vector<16x16x8xf32>
    %101 = vector.shape_cast %100 : vector<16x16x8xf32> to vector<256x8xf32>
    %c0_150 = arith.constant 0 : index
    %c1_151 = arith.constant 1 : index
    %c0_152 = arith.constant 0 : index
    %c0_153 = arith.constant 0 : index
    %102 = vector.load %arg4[%c0_150, %c1_151, %c0_152, %c0_153] : memref<3x3x8x8xf32, #tpu.memory_space<vmem>>, vector<1x1x8x8xf32>
    %103 = vector.shape_cast %102 : vector<1x1x8x8xf32> to vector<8x8xf32>
    %cst_154 = arith.constant dense<0.000000e+00> : vector<256x8xf32>
    %104 = tpu.matmul %101, %103, %cst_154 {dimension_numbers = #tpu.dot_dimension_numbers<[1], [0], [0], [1], [0, 0, 1, 1], [], []>} : vector<256x8xf32>, vector<8x8xf32>, vector<256x8xf32> -> vector<256x8xf32>
    %105 = arith.addf %99, %104 : vector<256x8xf32>
    %c0_155 = arith.constant 0 : index
    %c0_156 = arith.constant 0 : index
    %106 = vector.load %arg10[%c0_155, %c0_156] : memref<256x8xf32, #tpu.memory_space<vmem>>, vector<256x8xf32>
    tpu.vector_store %arg10[%c0_155, %c0_156], %105 {strides = array<i32>} : memref<256x8xf32, #tpu.memory_space<vmem>>, vector<256x8xf32>,
    %c0_157 = arith.constant 0 : index
    %c0_158 = arith.constant 0 : index
    %107 = vector.load %arg10[%c0_157, %c0_158] : memref<256x8xf32, #tpu.memory_space<vmem>>, vector<256x8xf32>
    %c0_159 = arith.constant 0 : index
    %c2_160 = arith.constant 2 : index
    %c0_161 = arith.constant 0 : index
    %108 = vector.load %arg9[%c0_159, %c2_160, %c0_161] : memref<18x18x8xf32, #tpu.memory_space<vmem>>, vector<16x16x8xf32>
    %109 = vector.shape_cast %108 : vector<16x16x8xf32> to vector<256x8xf32>
    %c0_162 = arith.constant 0 : index
    %c2_163 = arith.constant 2 : index
    %c0_164 = arith.constant 0 : index
    %c0_165 = arith.constant 0 : index
    %110 = vector.load %arg4[%c0_162, %c2_163, %c0_164, %c0_165] : memref<3x3x8x8xf32, #tpu.memory_space<vmem>>, vector<1x1x8x8xf32>
    %111 = vector.shape_cast %110 : vector<1x1x8x8xf32> to vector<8x8xf32>
    %cst_166 = arith.constant dense<0.000000e+00> : vector<256x8xf32>
    %112 = tpu.matmul %109, %111, %cst_166 {dimension_numbers = #tpu.dot_dimension_numbers<[1], [0], [0], [1], [0, 0, 1, 1], [], []>} : vector<256x8xf32>, vector<8x8xf32>, vector<256x8xf32> -> vector<256x8xf32>
    %113 = arith.addf %107, %112 : vector<256x8xf32>
    %c0_167 = arith.constant 0 : index
    %c0_168 = arith.constant 0 : index
    %114 = vector.load %arg10[%c0_167, %c0_168] : memref<256x8xf32, #tpu.memory_space<vmem>>, vector<256x8xf32>
    tpu.vector_store %arg10[%c0_167, %c0_168], %113 {strides = array<i32>} : memref<256x8xf32, #tpu.memory_space<vmem>>, vector<256x8xf32>,
    %c0_169 = arith.constant 0 : index
    %c0_170 = arith.constant 0 : index
    %115 = vector.load %arg10[%c0_169, %c0_170] : memref<256x8xf32, #tpu.memory_space<vmem>>, vector<256x8xf32>
    %c1_171 = arith.constant 1 : index
    %c0_172 = arith.constant 0 : index
    %c0_173 = arith.constant 0 : index
    %116 = vector.load %arg9[%c1_171, %c0_172, %c0_173] : memref<18x18x8xf32, #tpu.memory_space<vmem>>, vector<16x16x8xf32>
    %117 = vector.shape_cast %116 : vector<16x16x8xf32> to vector<256x8xf32>
    %c1_174 = arith.constant 1 : index
    %c0_175 = arith.constant 0 : index
    %c0_176 = arith.constant 0 : index
    %c0_177 = arith.constant 0 : index
    %118 = vector.load %arg4[%c1_174, %c0_175, %c0_176, %c0_177] : memref<3x3x8x8xf32, #tpu.memory_space<vmem>>, vector<1x1x8x8xf32>
    %119 = vector.shape_cast %118 : vector<1x1x8x8xf32> to vector<8x8xf32>
    %cst_178 = arith.constant dense<0.000000e+00> : vector<256x8xf32>
    %120 = tpu.matmul %117, %119, %cst_178 {dimension_numbers = #tpu.dot_dimension_numbers<[1], [0], [0], [1], [0, 0, 1, 1], [], []>} : vector<256x8xf32>, vector<8x8xf32>, vector<256x8xf32> -> vector<256x8xf32>
    %121 = arith.addf %115, %120 : vector<256x8xf32>
    %c0_179 = arith.constant 0 : index
    %c0_180 = arith.constant 0 : index
    %122 = vector.load %arg10[%c0_179, %c0_180] : memref<256x8xf32, #tpu.memory_space<vmem>>, vector<256x8xf32>
    tpu.vector_store %arg10[%c0_179, %c0_180], %121 {strides = array<i32>} : memref<256x8xf32, #tpu.memory_space<vmem>>, vector<256x8xf32>,
    %c0_181 = arith.constant 0 : index
    %c0_182 = arith.constant 0 : index
    %123 = vector.load %arg10[%c0_181, %c0_182] : memref<256x8xf32, #tpu.memory_space<vmem>>, vector<256x8xf32>
    %c1_183 = arith.constant 1 : index
    %c1_184 = arith.constant 1 : index
    %c0_185 = arith.constant 0 : index
    %124 = vector.load %arg9[%c1_183, %c1_184, %c0_185] : memref<18x18x8xf32, #tpu.memory_space<vmem>>, vector<16x16x8xf32>
    %125 = vector.shape_cast %124 : vector<16x16x8xf32> to vector<256x8xf32>
    %c1_186 = arith.constant 1 : index
    %c1_187 = arith.constant 1 : index
    %c0_188 = arith.constant 0 : index
    %c0_189 = arith.constant 0 : index
    %126 = vector.load %arg4[%c1_186, %c1_187, %c0_188, %c0_189] : memref<3x3x8x8xf32, #tpu.memory_space<vmem>>, vector<1x1x8x8xf32>
    %127 = vector.shape_cast %126 : vector<1x1x8x8xf32> to vector<8x8xf32>
    %cst_190 = arith.constant dense<0.000000e+00> : vector<256x8xf32>
    %128 = tpu.matmul %125, %127, %cst_190 {dimension_numbers = #tpu.dot_dimension_numbers<[1], [0], [0], [1], [0, 0, 1, 1], [], []>} : vector<256x8xf32>, vector<8x8xf32>, vector<256x8xf32> -> vector<256x8xf32>
    %129 = arith.addf %123, %128 : vector<256x8xf32>
    %c0_191 = arith.constant 0 : index
    %c0_192 = arith.constant 0 : index
    %130 = vector.load %arg10[%c0_191, %c0_192] : memref<256x8xf32, #tpu.memory_space<vmem>>, vector<256x8xf32>
    tpu.vector_store %arg10[%c0_191, %c0_192], %129 {strides = array<i32>} : memref<256x8xf32, #tpu.memory_space<vmem>>, vector<256x8xf32>,
    %c0_193 = arith.constant 0 : index
    %c0_194 = arith.constant 0 : index
    %131 = vector.load %arg10[%c0_193, %c0_194] : memref<256x8xf32, #tpu.memory_space<vmem>>, vector<256x8xf32>
    %c1_195 = arith.constant 1 : index
    %c2_196 = arith.constant 2 : index
    %c0_197 = arith.constant 0 : index
    %132 = vector.load %arg9[%c1_195, %c2_196, %c0_197] : memref<18x18x8xf32, #tpu.memory_space<vmem>>, vector<16x16x8xf32>
    %133 = vector.shape_cast %132 : vector<16x16x8xf32> to vector<256x8xf32>
    %c1_198 = arith.constant 1 : index
    %c2_199 = arith.constant 2 : index
    %c0_200 = arith.constant 0 : index
    %c0_201 = arith.constant 0 : index
    %134 = vector.load %arg4[%c1_198, %c2_199, %c0_200, %c0_201] : memref<3x3x8x8xf32, #tpu.memory_space<vmem>>, vector<1x1x8x8xf32>
    %135 = vector.shape_cast %134 : vector<1x1x8x8xf32> to vector<8x8xf32>
    %cst_202 = arith.constant dense<0.000000e+00> : vector<256x8xf32>
    %136 = tpu.matmul %133, %135, %cst_202 {dimension_numbers = #tpu.dot_dimension_numbers<[1], [0], [0], [1], [0, 0, 1, 1], [], []>} : vector<256x8xf32>, vector<8x8xf32>, vector<256x8xf32> -> vector<256x8xf32>
    %137 = arith.addf %131, %136 : vector<256x8xf32>
    %c0_203 = arith.constant 0 : index
    %c0_204 = arith.constant 0 : index
    %138 = vector.load %arg10[%c0_203, %c0_204] : memref<256x8xf32, #tpu.memory_space<vmem>>, vector<256x8xf32>
    tpu.vector_store %arg10[%c0_203, %c0_204], %137 {strides = array<i32>} : memref<256x8xf32, #tpu.memory_space<vmem>>, vector<256x8xf32>,
    %c0_205 = arith.constant 0 : index
    %c0_206 = arith.constant 0 : index
    %139 = vector.load %arg10[%c0_205, %c0_206] : memref<256x8xf32, #tpu.memory_space<vmem>>, vector<256x8xf32>
    %c2_207 = arith.constant 2 : index
    %c0_208 = arith.constant 0 : index
    %c0_209 = arith.constant 0 : index
    %140 = vector.load %arg9[%c2_207, %c0_208, %c0_209] : memref<18x18x8xf32, #tpu.memory_space<vmem>>, vector<16x16x8xf32>
    %141 = vector.shape_cast %140 : vector<16x16x8xf32> to vector<256x8xf32>
    %c2_210 = arith.constant 2 : index
    %c0_211 = arith.constant 0 : index
    %c0_212 = arith.constant 0 : index
    %c0_213 = arith.constant 0 : index
    %142 = vector.load %arg4[%c2_210, %c0_211, %c0_212, %c0_213] : memref<3x3x8x8xf32, #tpu.memory_space<vmem>>, vector<1x1x8x8xf32>
    %143 = vector.shape_cast %142 : vector<1x1x8x8xf32> to vector<8x8xf32>
    %cst_214 = arith.constant dense<0.000000e+00> : vector<256x8xf32>
    %144 = tpu.matmul %141, %143, %cst_214 {dimension_numbers = #tpu.dot_dimension_numbers<[1], [0], [0], [1], [0, 0, 1, 1], [], []>} : vector<256x8xf32>, vector<8x8xf32>, vector<256x8xf32> -> vector<256x8xf32>
    %145 = arith.addf %139, %144 : vector<256x8xf32>
    %c0_215 = arith.constant 0 : index
    %c0_216 = arith.constant 0 : index
    %146 = vector.load %arg10[%c0_215, %c0_216] : memref<256x8xf32, #tpu.memory_space<vmem>>, vector<256x8xf32>
    tpu.vector_store %arg10[%c0_215, %c0_216], %145 {strides = array<i32>} : memref<256x8xf32, #tpu.memory_space<vmem>>, vector<256x8xf32>,
    %c0_217 = arith.constant 0 : index
    %c0_218 = arith.constant 0 : index
    %147 = vector.load %arg10[%c0_217, %c0_218] : memref<256x8xf32, #tpu.memory_space<vmem>>, vector<256x8xf32>
    %c2_219 = arith.constant 2 : index
    %c1_220 = arith.constant 1 : index
    %c0_221 = arith.constant 0 : index
    %148 = vector.load %arg9[%c2_219, %c1_220, %c0_221] : memref<18x18x8xf32, #tpu.memory_space<vmem>>, vector<16x16x8xf32>
    %149 = vector.shape_cast %148 : vector<16x16x8xf32> to vector<256x8xf32>
    %c2_222 = arith.constant 2 : index
    %c1_223 = arith.constant 1 : index
    %c0_224 = arith.constant 0 : index
    %c0_225 = arith.constant 0 : index
    %150 = vector.load %arg4[%c2_222, %c1_223, %c0_224, %c0_225] : memref<3x3x8x8xf32, #tpu.memory_space<vmem>>, vector<1x1x8x8xf32>
    %151 = vector.shape_cast %150 : vector<1x1x8x8xf32> to vector<8x8xf32>
    %cst_226 = arith.constant dense<0.000000e+00> : vector<256x8xf32>
    %152 = tpu.matmul %149, %151, %cst_226 {dimension_numbers = #tpu.dot_dimension_numbers<[1], [0], [0], [1], [0, 0, 1, 1], [], []>} : vector<256x8xf32>, vector<8x8xf32>, vector<256x8xf32> -> vector<256x8xf32>
    %153 = arith.addf %147, %152 : vector<256x8xf32>
    %c0_227 = arith.constant 0 : index
    %c0_228 = arith.constant 0 : index
    %154 = vector.load %arg10[%c0_227, %c0_228] : memref<256x8xf32, #tpu.memory_space<vmem>>, vector<256x8xf32>
    tpu.vector_store %arg10[%c0_227, %c0_228], %153 {strides = array<i32>} : memref<256x8xf32, #tpu.memory_space<vmem>>, vector<256x8xf32>,
    %c0_229 = arith.constant 0 : index
    %c0_230 = arith.constant 0 : index
    %155 = vector.load %arg10[%c0_229, %c0_230] : memref<256x8xf32, #tpu.memory_space<vmem>>, vector<256x8xf32>
    %c2_231 = arith.constant 2 : index
    %c2_232 = arith.constant 2 : index
    %c0_233 = arith.constant 0 : index
    %156 = vector.load %arg9[%c2_231, %c2_232, %c0_233] : memref<18x18x8xf32, #tpu.memory_space<vmem>>, vector<16x16x8xf32>
    %157 = vector.shape_cast %156 : vector<16x16x8xf32> to vector<256x8xf32>
    %c2_234 = arith.constant 2 : index
    %c2_235 = arith.constant 2 : index
    %c0_236 = arith.constant 0 : index
    %c0_237 = arith.constant 0 : index
    %158 = vector.load %arg4[%c2_234, %c2_235, %c0_236, %c0_237] : memref<3x3x8x8xf32, #tpu.memory_space<vmem>>, vector<1x1x8x8xf32>
    %159 = vector.shape_cast %158 : vector<1x1x8x8xf32> to vector<8x8xf32>
    %cst_238 = arith.constant dense<0.000000e+00> : vector<256x8xf32>
    %160 = tpu.matmul %157, %159, %cst_238 {dimension_numbers = #tpu.dot_dimension_numbers<[1], [0], [0], [1], [0, 0, 1, 1], [], []>} : vector<256x8xf32>, vector<8x8xf32>, vector<256x8xf32> -> vector<256x8xf32>
    %161 = arith.addf %155, %160 : vector<256x8xf32>
    %c0_239 = arith.constant 0 : index
    %c0_240 = arith.constant 0 : index
    %162 = vector.load %arg10[%c0_239, %c0_240] : memref<256x8xf32, #tpu.memory_space<vmem>>, vector<256x8xf32>
    tpu.vector_store %arg10[%c0_239, %c0_240], %161 {strides = array<i32>} : memref<256x8xf32, #tpu.memory_space<vmem>>, vector<256x8xf32>,
    %c0_241 = arith.constant 0 : index
    %c0_242 = arith.constant 0 : index
    %163 = vector.load %arg10[%c0_241, %c0_242] : memref<256x8xf32, #tpu.memory_space<vmem>>, vector<256x8xf32>
    %c0_243 = arith.constant 0 : index
    %c0_244 = arith.constant 0 : index
    %164 = vector.load %arg5[%c0_243, %c0_244] : memref<1x8xf32, #tpu.memory_space<vmem>>, vector<1x8xf32>
    %165 = vector.broadcast %164 : vector<1x8xf32> to vector<256x8xf32>
    %166 = arith.addf %163, %165 : vector<256x8xf32>
    %c1_245 = arith.constant 1 : index
    %c1_246 = arith.constant 1 : index
    %c0_247 = arith.constant 0 : index
    %167 = vector.load %arg8[%c1_245, %c1_246, %c0_247] : memref<18x18x4xf32, #tpu.memory_space<vmem>>, vector<16x16x4xf32>
    %168 = vector.shape_cast %167 : vector<16x16x4xf32> to vector<256x4xf32>
    %c0_248 = arith.constant 0 : index
    %c0_249 = arith.constant 0 : index
    %169 = vector.load %arg6[%c0_248, %c0_249] : memref<4x8xf32, #tpu.memory_space<vmem>>, vector<4x8xf32>
    %cst_250 = arith.constant dense<0.000000e+00> : vector<256x8xf32>
    %170 = tpu.matmul %168, %169, %cst_250 {dimension_numbers = #tpu.dot_dimension_numbers<[1], [0], [0], [1], [0, 0, 1, 1], [], []>} : vector<256x4xf32>, vector<4x8xf32>, vector<256x8xf32> -> vector<256x8xf32>
    %171 = arith.addf %166, %170 : vector<256x8xf32>
    %cst_251 = arith.constant 0.000000e+00 : f32
    %172 = vector.broadcast %cst_251 : f32 to vector<256x8xf32>
    %173 = arith.maximumf %171, %172 : vector<256x8xf32>
    %174 = vector.shape_cast %173 : vector<256x8xf32> to vector<16x16x8xf32>
    %c0_252 = arith.constant 0 : index
    %c0_253 = arith.constant 0 : index
    %c0_254 = arith.constant 0 : index
    %c0_255 = arith.constant 0 : index
    %175 = vector.load %arg7[%c0_252, %c0_253, %c0_254, %c0_255] : memref<1x16x16x8xf32, #tpu.memory_space<vmem>>, vector<1x16x16x8xf32>
    %176 = vector.shape_cast %175 : vector<1x16x16x8xf32> to vector<16x16x8xf32>
    %177 = vector.shape_cast %174 : vector<16x16x8xf32> to vector<1x16x16x8xf32>
    tpu.vector_store %arg7[%c0_252, %c0_253, %c0_254, %c0_255], %177 {strides = array<i32>} : memref<1x16x16x8xf32, #tpu.memory_space<vmem>>, vector<1x16x16x8xf32>,
    return
  }
  func.func @transform_0(%arg0: i32) -> (i32, i32, i32, i32) {
    %c0_i32 = arith.constant 0 : i32
    %c0_i32_0 = arith.constant 0 : i32
    %c0_i32_1 = arith.constant 0 : i32
    %c0_i32_2 = arith.constant 0 : i32
    return %arg0, %c0_i32, %c0_i32_0, %c0_i32_1 : i32, i32, i32, i32
  }
  func.func @transform_1(%arg0: i32) -> (i32, i32, i32, i32) {
    %c0_i32 = arith.constant 0 : i32
    %c0_i32_0 = arith.constant 0 : i32
    %c0_i32_1 = arith.constant 0 : i32
    %c0_i32_2 = arith.constant 0 : i32
    %c0_i32_3 = arith.constant 0 : i32
    return %c0_i32, %c0_i32_0, %c0_i32_1, %c0_i32_2 : i32, i32, i32, i32
  }
  func.func @transform_2(%arg0: i32) -> (i32, i32) {
    %c0_i32 = arith.constant 0 : i32
    %c0_i32_0 = arith.constant 0 : i32
    %c0_i32_1 = arith.constant 0 : i32
    return %c0_i32, %c0_i32_0 : i32, i32
  }
  func.func @transform_3(%arg0: i32) -> (i32, i32, i32, i32) {
    %c0_i32 = arith.constant 0 : i32
    %c0_i32_0 = arith.constant 0 : i32
    %c0_i32_1 = arith.constant 0 : i32
    %c0_i32_2 = arith.constant 0 : i32
    %c0_i32_3 = arith.constant 0 : i32
    return %c0_i32, %c0_i32_0, %c0_i32_1, %c0_i32_2 : i32, i32, i32, i32
  }
  func.func @transform_4(%arg0: i32) -> (i32, i32) {
    %c0_i32 = arith.constant 0 : i32
    %c0_i32_0 = arith.constant 0 : i32
    %c0_i32_1 = arith.constant 0 : i32
    return %c0_i32, %c0_i32_0 : i32, i32
  }
  func.func @transform_5(%arg0: i32) -> (i32, i32) {
    %c0_i32 = arith.constant 0 : i32
    %c0_i32_0 = arith.constant 0 : i32
    %c0_i32_1 = arith.constant 0 : i32
    return %c0_i32, %c0_i32_0 : i32, i32
  }
  func.func @transform_6(%arg0: i32) -> (i32, i32, i32, i32) {
    %c0_i32 = arith.constant 0 : i32
    %c0_i32_0 = arith.constant 0 : i32
    %c0_i32_1 = arith.constant 0 : i32
    %c0_i32_2 = arith.constant 0 : i32
    return %arg0, %c0_i32, %c0_i32_0, %c0_i32_1 : i32, i32, i32, i32
  }
}

</mosaic_0001>

<llo_original>
// kernel: tpu_custom_call.1
$region0: #{tpu_custom_call.1}
  #allocation0 [shape = 'u32[]', space=smem, size = 0x4, offset = 0x4, fixed_abs, tag = 'smem constant byte address 0x4 - core index']
  #allocation1 [shape = 'u32[72,128]{1,0:T(1,128)}', space=vmem, size = 0x9000, scoped, tag = 'internal scratch']
  #allocation2 [shape = 'f32[18,18,4]{2,1,0:T(8,128)}', space=vmem, size = 0x36000, scoped, tag = 'scratch operand']
  #allocation3 [shape = 'f32[18,18,8]{2,1,0:T(8,128)}', space=vmem, size = 0x36000, scoped, tag = 'scratch operand']
  #allocation4 [shape = 'f32[256,8]{1,0:T(8,128)}', space=vmem, size = 0x20000, scoped, tag = 'scratch operand']
  %s0 = inlined_call_operand.vmem [shape: f32[2,16,16,4], index: 0, kind: input, shape index: {}]
  %s1 = inlined_call_operand.vmem [shape: f32[3,3,4,8], index: 1, kind: input, shape index: {}]
  %s2 = inlined_call_operand.vmem [shape: f32[1,8], index: 2, kind: input, shape index: {}]
  %s3 = inlined_call_operand.vmem [shape: f32[3,3,8,8], index: 3, kind: input, shape index: {}]
  %s4 = inlined_call_operand.vmem [shape: f32[1,8], index: 4, kind: input, shape index: {}]
  %s5 = inlined_call_operand.vmem [shape: f32[4,8], index: 5, kind: input, shape index: {}]
  %s6 = inlined_call_operand.vmem [shape: f32[2,16,16,8], index: 6, kind: output, shape index: {}]
  %s7 = sld [smem:[#allocation0]]
  $region57: #{tpu_custom_call.1} parent=0
    _
  %s9 = ssub.s32 1, %s7
  %s10 = scalar_select 0, %s9, %s7
  loop: start=0, step=1, limit=4
  $region2: #{tpu_custom_call.1} parent=0 // loop_pre_header
    _
  $region3: #{tpu_custom_call.1} parent=0 // loop_header
    %s12 = sphi 0, %s16
    %p13 = scmp.ge.s32.totalorder %s12, 4
    %s22 = sphi 0, %s24
    %s25 = sphi 0, %s22
    %s26 = sphi 0, %s25
    %s42 = sphi 0, %s26
    %s46 = sphi 0, %s46
    %s48 = sphi 0, %s46
    %s49 = sphi 0, %s48
    %s63 = sphi 0, %s49
    %s67 = sphi 0, %s67
    %s69 = sphi 0, %s67
    %s70 = sphi 0, %s69
    %s84 = sphi 0, %s70
    %s88 = sphi 0, %s88
    %s90 = sphi 0, %s88
    %s91 = sphi 0, %s90
    %s105 = sphi 0, %s91
    %s109 = sphi 0, %s109
    %s111 = sphi 0, %s109
    %s112 = sphi 0, %s111
    %s126 = sphi 0, %s112
    %s130 = sphi 0, %s130
    %s132 = sphi 0, %s130
    %s133 = sphi 0, %s132
    %s147 = sphi 0, %s133
    %s153 = sphi 0, %s155
    %s156 = sphi 0, %s153
    %s157 = sphi 0, %s156
    %s173 = sphi 0, %s157
  $region4: #{tpu_custom_call.1} parent=0 // loop_header_branch
    %15 = sbr.rel (%p13) target = $region8
  $region5: #{tpu_custom_call.1} parent=0 // loop_body
    %s17 = ssub.s32 %s12, 1
    %s18 = ssub.s32 %s12, 2
    %s19 = sadd.s32 %s12, 1
    %s20 = ssub.s32 %s12, %s19
    %p21 = scmp.eq.s32.totalorder %s20, 0
    %s23 = sadd.s32 %s22, 1
    %s24 = scalar_select %p21, %s22, %s23
    %p27 = pneg %p21
    %p28 = scmp.eq.s32.totalorder %s12, 1
    %p29 = por %p27, %p28
    %p30 = scmp.ne.s32.totalorder %s22, %s25
    %p31 = scmp.eq.s32.totalorder %s12, 0
    %p32 = por %p30, %p31
    %p33 = scmp.ne.s32.totalorder %s22, %s25
    %p34 = scmp.eq.s32.totalorder %s17, 1
    %p35 = por %p33, %p34
    %p36 = scmp.ne.s32.totalorder %s25, %s26
    %p37 = scmp.eq.s32.totalorder %s17, 0
    %p38 = por %p36, %p37
    %p39 = scmp.ne.s32.totalorder %s25, %s26
    %p40 = scmp.eq.s32.totalorder %s18, 1
    %p41 = por %p39, %p40
    %p43 = scmp.ne.s32.totalorder %s26, %s42
    %p44 = scmp.eq.s32.totalorder %s18, 0
    %p45 = por %p43, %p44
    %s47 = sadd.s32 %s46, 1
    %p50 = scmp.eq.s32.totalorder %s12, 1
    %p51 = scmp.ne.s32.totalorder %s46, %s48
    %p52 = scmp.eq.s32.totalorder %s12, 0
    %p53 = por %p51, %p52
    %p54 = scmp.ne.s32.totalorder %s46, %s48
    %p55 = scmp.eq.s32.totalorder %s17, 1
    %p56 = por %p54, %p55
    %p57 = scmp.ne.s32.totalorder %s48, %s49
    %p58 = scmp.eq.s32.totalorder %s17, 0
    %p59 = por %p57, %p58
    %p60 = scmp.ne.s32.totalorder %s48, %s49
    %p61 = scmp.eq.s32.totalorder %s18, 1
    %p62 = por %p60, %p61
    %p64 = scmp.ne.s32.totalorder %s49, %s63
    %p65 = scmp.eq.s32.totalorder %s18, 0
    %p66 = por %p64, %p65
    %s68 = sadd.s32 %s67, 1
    %p71 = scmp.eq.s32.totalorder %s12, 1
    %p72 = scmp.ne.s32.totalorder %s67, %s69
    %p73 = scmp.eq.s32.totalorder %s12, 0
    %p74 = por %p72, %p73
    %p75 = scmp.ne.s32.totalorder %s67, %s69
    %p76 = scmp.eq.s32.totalorder %s17, 1
    %p77 = por %p75, %p76
    %p78 = scmp.ne.s32.totalorder %s69, %s70
    %p79 = scmp.eq.s32.totalorder %s17, 0
    %p80 = por %p78, %p79
    %p81 = scmp.ne.s32.totalorder %s69, %s70
    %p82 = scmp.eq.s32.totalorder %s18, 1
    %p83 = por %p81, %p82
    %p85 = scmp.ne.s32.totalorder %s70, %s84
    %p86 = scmp.eq.s32.totalorder %s18, 0
    %p87 = por %p85, %p86
    %s89 = sadd.s32 %s88, 1
    %p92 = scmp.eq.s32.totalorder %s12, 1
    %p93 = scmp.ne.s32.totalorder %s88, %s90
    %p94 = scmp.eq.s32.totalorder %s12, 0
    %p95 = por %p93, %p94
    %p96 = scmp.ne.s32.totalorder %s88, %s90
    %p97 = scmp.eq.s32.totalorder %s17, 1
    %p98 = por %p96, %p97
    %p99 = scmp.ne.s32.totalorder %s90, %s91
    %p100 = scmp.eq.s32.totalorder %s17, 0
    %p101 = por %p99, %p100
    %p102 = scmp.ne.s32.totalorder %s90, %s91
    %p103 = scmp.eq.s32.totalorder %s18, 1
    %p104 = por %p102, %p103
    %p106 = scmp.ne.s32.totalorder %s91, %s105
    %p107 = scmp.eq.s32.totalorder %s18, 0
    %p108 = por %p106, %p107
    %s110 = sadd.s32 %s109, 1
    %p113 = scmp.eq.s32.totalorder %s12, 1
    %p114 = scmp.ne.s32.totalorder %s109, %s111
    %p115 = scmp.eq.s32.totalorder %s12, 0
    %p116 = por %p114, %p115
    %p117 = scmp.ne.s32.totalorder %s109, %s111
    %p118 = scmp.eq.s32.totalorder %s17, 1
    %p119 = por %p117, %p118
    %p120 = scmp.ne.s32.totalorder %s111, %s112
    %p121 = scmp.eq.s32.totalorder %s17, 0
    %p122 = por %p120, %p121
    %p123 = scmp.ne.s32.totalorder %s111, %s112
    %p124 = scmp.eq.s32.totalorder %s18, 1
    %p125 = por %p123, %p124
    %p127 = scmp.ne.s32.totalorder %s112, %s126
    %p128 = scmp.eq.s32.totalorder %s18, 0
    %p129 = por %p127, %p128
    %s131 = sadd.s32 %s130, 1
    %p134 = scmp.eq.s32.totalorder %s12, 1
    %p135 = scmp.ne.s32.totalorder %s130, %s132
    %p136 = scmp.eq.s32.totalorder %s12, 0
    %p137 = por %p135, %p136
    %p138 = scmp.ne.s32.totalorder %s130, %s132
    %p139 = scmp.eq.s32.totalorder %s17, 1
    %p140 = por %p138, %p139
    %p141 = scmp.ne.s32.totalorder %s132, %s133
    %p142 = scmp.eq.s32.totalorder %s17, 0
    %p143 = por %p141, %p142
    %p144 = scmp.ne.s32.totalorder %s132, %s133
    %p145 = scmp.eq.s32.totalorder %s18, 1
    %p146 = por %p144, %p145
    %p148 = scmp.ne.s32.totalorder %s133, %s147
    %p149 = scmp.eq.s32.totalorder %s18, 0
    %p150 = por %p148, %p149
    %s151 = ssub.s32 %s12, %s19
    %p152 = scmp.eq.s32.totalorder %s151, 0
    %s154 = sadd.s32 %s153, 1
    %s155 = scalar_select %p152, %s153, %s154
    %p158 = pneg %p152
    %p159 = scmp.eq.s32.totalorder %s12, 1
    %p160 = por %p158, %p159
    %p161 = scmp.ne.s32.totalorder %s153, %s156
    %p162 = scmp.eq.s32.totalorder %s12, 0
    %p163 = por %p161, %p162
    %p164 = scmp.ne.s32.totalorder %s153, %s156
    %p165 = scmp.eq.s32.totalorder %s17, 1
    %p166 = por %p164, %p165
    %p167 = scmp.ne.s32.totalorder %s156, %s157
    %p168 = scmp.eq.s32.totalorder %s17, 0
    %p169 = por %p167, %p168
    %p170 = scmp.ne.s32.totalorder %s156, %s157
    %p171 = scmp.eq.s32.totalorder %s18, 1
    %p172 = por %p170, %p171
    %p174 = scmp.ne.s32.totalorder %s157, %s173
    %p175 = scmp.eq.s32.totalorder %s18, 0
    %p176 = por %p174, %p175
    %p177 = scmp.le.s32.totalorder 1, %s12
    %p178 = scmp.lt.s32.totalorder %s12, 3
    %p179 = pnand %p177, %p178
    %p180 = pneg %p179
    // Predicated region
    $region9: #{tpu_custom_call.1} parent=5 // pred_check
      _
    $region10: #{tpu_custom_call.1} parent=5 // pred_check_branch
      %182 = sbr.rel (%p179) target = $region12
    $region11: #{tpu_custom_call.1} parent=5 // pred_region
      %s183 = ssub.s32 %s12, 1
      // Predicated region
      $region13: #{tpu_custom_call.1} parent=11 // pred_check
        %p184 = pneg %p59
      $region14: #{tpu_custom_call.1} parent=11 // pred_check_branch
        %186 = sbr.rel (%p184) target = $region16
      $region15: #{tpu_custom_call.1} parent=11 // pred_region
        _
      $region16: #{tpu_custom_call.1} parent=11 // pred_fallthru
        _
      // Predicated region
      $region17: #{tpu_custom_call.1} parent=11 // pred_check
        %p187 = pneg %p80
      $region18: #{tpu_custom_call.1} parent=11 // pred_check_branch
        %189 = sbr.rel (%p187) target = $region20
      $region19: #{tpu_custom_call.1} parent=11 // pred_region
        _
      $region20: #{tpu_custom_call.1} parent=11 // pred_fallthru
        _
      // Predicated region
      $region21: #{tpu_custom_call.1} parent=11 // pred_check
        %p190 = pneg %p101
      $region22: #{tpu_custom_call.1} parent=11 // pred_check_branch
        %192 = sbr.rel (%p190) target = $region24
      $region23: #{tpu_custom_call.1} parent=11 // pred_region
        _
      $region24: #{tpu_custom_call.1} parent=11 // pred_fallthru
        _
      // Predicated region
      $region25: #{tpu_custom_call.1} parent=11 // pred_check
        %p193 = pneg %p122
      $region26: #{tpu_custom_call.1} parent=11 // pred_check_branch
        %195 = sbr.rel (%p193) target = $region28
      $region27: #{tpu_custom_call.1} parent=11 // pred_region
        _
      $region28: #{tpu_custom_call.1} parent=11 // pred_fallthru
        _
      // Predicated region
      $region29: #{tpu_custom_call.1} parent=11 // pred_check
        %p196 = pneg %p143
      $region30: #{tpu_custom_call.1} parent=11 // pred_check_branch
        %198 = sbr.rel (%p196) target = $region32
      $region31: #{tpu_custom_call.1} parent=11 // pred_region
        _
      $region32: #{tpu_custom_call.1} parent=11 // pred_fallthru
        _
    $region12: #{tpu_custom_call.1} parent=5 // pred_fallthru
      _
    %p199 = scmp.lt.s32.totalorder %s12, 2
    // Predicated region
    $region33: #{tpu_custom_call.1} parent=5 // pred_check
      %p200 = pneg %p199
    $region34: #{tpu_custom_call.1} parent=5 // pred_check_branch
      %202 = sbr.rel (%p200) target = $region36
    $region35: #{tpu_custom_call.1} parent=5 // pred_region
      // Predicated region
      $region37: #{tpu_custom_call.1} parent=35 // pred_check
        %p203 = pneg %p32
      $region38: #{tpu_custom_call.1} parent=35 // pred_check_branch
        %205 = sbr.rel (%p203) target = $region40
      $region39: #{tpu_custom_call.1} parent=35 // pred_region
        %p206 = scmp.lt.s32.totalorder %s12, 1
        %s207 = scalar_select %p206, %s12, 1
        %s208 = smul.addr %s207, 32
        %s209 = smul.addr %s208, 8
        %s210 = scalar_lea.vmem %s0, %s209
      $region40: #{tpu_custom_call.1} parent=35 // pred_fallthru
        _
    $region36: #{tpu_custom_call.1} parent=5 // pred_fallthru
      _
    %p211 = scmp.le.s32.totalorder 1, %s12
    %p212 = scmp.lt.s32.totalorder %s12, 3
    %p213 = pnand %p211, %p212
    %p214 = pneg %p213
    // Predicated region
    $region41: #{tpu_custom_call.1} parent=5 // pred_check
      _
    $region42: #{tpu_custom_call.1} parent=5 // pred_check_branch
      %216 = sbr.rel (%p213) target = $region44
    $region43: #{tpu_custom_call.1} parent=5 // pred_region
      %s217 = ssub.s32 %s12, 1
      %p218 = scmp.lt.s32.totalorder %s17, 1
      %s219 = scalar_select %p218, %s17, 1
      %s220 = smul.addr %s219, 32
      %s221 = smul.addr %s220, 8
      %s222 = scalar_lea.vmem %s0, %s221
      %p223 = pneg %p38
      %p224 = pneg %p35
      %p225 = pneg %p59
      %p226 = pneg %p56
      %p227 = pneg %p80
      %p228 = pneg %p77
      %p229 = pneg %p101
      %p230 = pneg %p98
      %p231 = pneg %p122
      %p232 = pneg %p119
      %p233 = pneg %p143
      %p234 = pneg %p140
      %p235 = pneg %p169
      %p236 = pneg %p166
      %p237 = scmp.lt.s32.totalorder %s17, 1
      %s238 = scalar_select %p237, %s17, 1
      %s239 = smul.addr %s238, 32
      %s240 = smul.addr %s239, 8
      %s241 = scalar_lea.vmem %s6, %s240
      %p242 = scmp.lt.s32.totalorder %s17, 1
      %s243 = scalar_select %p242, %s17, 1
      %s244 = smul.addr %s243, 32
      %s245 = smul.addr %s244, 8
      %s246 = scalar_lea.vmem %s0, %s245
      %p247 = scmp.lt.s32.totalorder %s17, 1
      %s248 = scalar_select %p247, %s17, 1
      %s249 = smul.addr %s248, 32
      %s250 = smul.addr %s249, 8
      %s251 = scalar_lea.vmem %s6, %s250
      %vm252 = vcmask 31744
      %253 = vst.msk [vmem:[#allocation2] sm:$0xff] %vm252, 0.0
      %254 = vst.msk [vmem:[#allocation2 + $0x8] sm:$0xff] %vm252, 0.0
      %vm255 = vcmask 25600
      %256 = vst.msk [vmem:[#allocation2 + $0x10] sm:$0x3] %vm255, 0.0
      %257 = vst.msk [vmem:[#allocation2 + $0x18] sm:$0xff] %vm252, 0.0
      %258 = vst.msk [vmem:[#allocation2 + $0x20] sm:$0xff] %vm252, 0.0
      %259 = vst.msk [vmem:[#allocation2 + $0x28] sm:$0x3] %vm255, 0.0
      %260 = vst.msk [vmem:[#allocation2 + $0x30] sm:$0xff] %vm252, 0.0
      %261 = vst.msk [vmem:[#allocation2 + $0x38] sm:$0xff] %vm252, 0.0
      %262 = vst.msk [vmem:[#allocation2 + $0x40] sm:$0x3] %vm255, 0.0
      %263 = vst.msk [vmem:[#allocation2 + $0x48] sm:$0xff] %vm252, 0.0
      %264 = vst.msk [vmem:[#allocation2 + $0x50] sm:$0xff] %vm252, 0.0
      %265 = vst.msk [vmem:[#allocation2 + $0x58] sm:$0x3] %vm255, 0.0
      %266 = vst.msk [vmem:[#allocation2 + $0x60] sm:$0xff] %vm252, 0.0
      %267 = vst.msk [vmem:[#allocation2 + $0x68] sm:$0xff] %vm252, 0.0
      %268 = vst.msk [vmem:[#allocation2 + $0x70] sm:$0x3] %vm255, 0.0
      %269 = vst.msk [vmem:[#allocation2 + $0x78] sm:$0xff] %vm252, 0.0
      %270 = vst.msk [vmem:[#allocation2 + $0x80] sm:$0xff] %vm252, 0.0
      %271 = vst.msk [vmem:[#allocation2 + $0x88] sm:$0x3] %vm255, 0.0
      %272 = vst.msk [vmem:[#allocation2 + $0x90] sm:$0xff] %vm252, 0.0
      %273 = vst.msk [vmem:[#allocation2 + $0x98] sm:$0xff] %vm252, 0.0
      %274 = vst.msk [vmem:[#allocation2 + $0xa0] sm:$0x3] %vm255, 0.0
      %275 = vst.msk [vmem:[#allocation2 + $0xa8] sm:$0xff] %vm252, 0.0
      %276 = vst.msk [vmem:[#allocation2 + $0xb0] sm:$0xff] %vm252, 0.0
      %277 = vst.msk [vmem:[#allocation2 + $0xb8] sm:$0x3] %vm255, 0.0
      %278 = vst.msk [vmem:[#allocation2 + $0xc0] sm:$0xff] %vm252, 0.0
      %279 = vst.msk [vmem:[#allocation2 + $0xc8] sm:$0xff] %vm252, 0.0
      %280 = vst.msk [vmem:[#allocation2 + $0xd0] sm:$0x3] %vm255, 0.0
      %281 = vst.msk [vmem:[#allocation2 + $0xd8] sm:$0xff] %vm252, 0.0
      %282 = vst.msk [vmem:[#allocation2 + $0xe0] sm:$0xff] %vm252, 0.0
      %283 = vst.msk [vmem:[#allocation2 + $0xe8] sm:$0x3] %vm255, 0.0
      %284 = vst.msk [vmem:[#allocation2 + $0xf0] sm:$0xff] %vm252, 0.0
      %285 = vst.msk [vmem:[#allocation2 + $0xf8] sm:$0xff] %vm252, 0.0
      %286 = vst.msk [vmem:[#allocation2 + $0x100] sm:$0x3] %vm255, 0.0
      %287 = vst.msk [vmem:[#allocation2 + $0x108] sm:$0xff] %vm252, 0.0
      %288 = vst.msk [vmem:[#allocation2 + $0x110] sm:$0xff] %vm252, 0.0
      %289 = vst.msk [vmem:[#allocation2 + $0x118] sm:$0x3] %vm255, 0.0
      %290 = vst.msk [vmem:[#allocation2 + $0x120] sm:$0xff] %vm252, 0.0
      %291 = vst.msk [vmem:[#allocation2 + $0x128] sm:$0xff] %vm252, 0.0
      %292 = vst.msk [vmem:[#allocation2 + $0x130] sm:$0x3] %vm255, 0.0
      %293 = vst.msk [vmem:[#allocation2 + $0x138] sm:$0xff] %vm252, 0.0
      %294 = vst.msk [vmem:[#allocation2 + $0x140] sm:$0xff] %vm252, 0.0
      %295 = vst.msk [vmem:[#allocation2 + $0x148] sm:$0x3] %vm255, 0.0
      %296 = vst.msk [vmem:[#allocation2 + $0x150] sm:$0xff] %vm252, 0.0
      %297 = vst.msk [vmem:[#allocation2 + $0x158] sm:$0xff] %vm252, 0.0
      %298 = vst.msk [vmem:[#allocation2 + $0x160] sm:$0x3] %vm255, 0.0
      %299 = vst.msk [vmem:[#allocation2 + $0x168] sm:$0xff] %vm252, 0.0
      %300 = vst.msk [vmem:[#allocation2 + $0x170] sm:$0xff] %vm252, 0.0
      %301 = vst.msk [vmem:[#allocation2 + $0x178] sm:$0x3] %vm255, 0.0
      %302 = vst.msk [vmem:[#allocation2 + $0x180] sm:$0xff] %vm252, 0.0
      %303 = vst.msk [vmem:[#allocation2 + $0x188] sm:$0xff] %vm252, 0.0
      %304 = vst.msk [vmem:[#allocation2 + $0x190] sm:$0x3] %vm255, 0.0
      %305 = vst.msk [vmem:[#allocation2 + $0x198] sm:$0xff] %vm252, 0.0
      %306 = vst.msk [vmem:[#allocation2 + $0x1a0] sm:$0xff] %vm252, 0.0
      %307 = vst.msk [vmem:[#allocation2 + $0x1a8] sm:$0x3] %vm255, 0.0
      %v308 = vld [vmem:[%s246] sm:$0xff]
      %v309 = vld [vmem:[%s246 + $0x8] sm:$0xff]
      %v310 = vld [vmem:[%s246 + $0x10] sm:$0xff]
      %v311 = vld [vmem:[%s246 + $0x18] sm:$0xff]
      %v312 = vld [vmem:[%s246 + $0x20] sm:$0xff]
      %v313 = vld [vmem:[%s246 + $0x28] sm:$0xff]
      %v314 = vld [vmem:[%s246 + $0x30] sm:$0xff]
      %v315 = vld [vmem:[%s246 + $0x38] sm:$0xff]
      %v316 = vld [vmem:[%s246 + $0x40] sm:$0xff]
      %v317 = vld [vmem:[%s246 + $0x48] sm:$0xff]
      %v318 = vld [vmem:[%s246 + $0x50] sm:$0xff]
      %v319 = vld [vmem:[%s246 + $0x58] sm:$0xff]
      %v320 = vld [vmem:[%s246 + $0x60] sm:$0xff]
      %v321 = vld [vmem:[%s246 + $0x68] sm:$0xff]
      %v322 = vld [vmem:[%s246 + $0x70] sm:$0xff]
      %v323 = vld [vmem:[%s246 + $0x78] sm:$0xff]
      %v324 = vld [vmem:[%s246 + $0x80] sm:$0xff]
      %v325 = vld [vmem:[%s246 + $0x88] sm:$0xff]
      %v326 = vld [vmem:[%s246 + $0x90] sm:$0xff]
      %v327 = vld [vmem:[%s246 + $0x98] sm:$0xff]
      %v328 = vld [vmem:[%s246 + $0xa0] sm:$0xff]
      %v329 = vld [vmem:[%s246 + $0xa8] sm:$0xff]
      %v330 = vld [vmem:[%s246 + $0xb0] sm:$0xff]
      %v331 = vld [vmem:[%s246 + $0xb8] sm:$0xff]
      %v332 = vld [vmem:[%s246 + $0xc0] sm:$0xff]
      %v333 = vld [vmem:[%s246 + $0xc8] sm:$0xff]
      %v334 = vld [vmem:[%s246 + $0xd0] sm:$0xff]
      %v335 = vld [vmem:[%s246 + $0xd8] sm:$0xff]
      %v336 = vld [vmem:[%s246 + $0xe0] sm:$0xff]
      %v337 = vld [vmem:[%s246 + $0xe8] sm:$0xff]
      %v338 = vld [vmem:[%s246 + $0xf0] sm:$0xff]
      %v339 = vld [vmem:[%s246 + $0xf8] sm:$0xff]
      %s340 = scalar_lea.vmem [#allocation2], 24
      %341 = vst.msk [vmem:[%s340 + $0x1] sm:$0xff] %vm252, %v308
      %342 = vst.msk [vmem:[%s340 + $0x9] sm:$0xff] %vm252, %v309
      %343 = vst.msk [vmem:[%s340 + $0x19] sm:$0xff] %vm252, %v310
      %344 = vst.msk [vmem:[%s340 + $0x21] sm:$0xff] %vm252, %v311
      %345 = vst.msk [vmem:[%s340 + $0x31] sm:$0xff] %vm252, %v312
      %346 = vst.msk [vmem:[%s340 + $0x39] sm:$0xff] %vm252, %v313
      %347 = vst.msk [vmem:[%s340 + $0x49] sm:$0xff] %vm252, %v314
      %348 = vst.msk [vmem:[%s340 + $0x51] sm:$0xff] %vm252, %v315
      %349 = vst.msk [vmem:[%s340 + $0x61] sm:$0xff] %vm252, %v316
      %350 = vst.msk [vmem:[%s340 + $0x69] sm:$0xff] %vm252, %v317
      %351 = vst.msk [vmem:[%s340 + $0x79] sm:$0xff] %vm252, %v318
      %352 = vst.msk [vmem:[%s340 + $0x81] sm:$0xff] %vm252, %v319
      %353 = vst.msk [vmem:[%s340 + $0x91] sm:$0xff] %vm252, %v320
      %354 = vst.msk [vmem:[%s340 + $0x99] sm:$0xff] %vm252, %v321
      %355 = vst.msk [vmem:[%s340 + $0xa9] sm:$0xff] %vm252, %v322
      %356 = vst.msk [vmem:[%s340 + $0xb1] sm:$0xff] %vm252, %v323
      %357 = vst.msk [vmem:[%s340 + $0xc1] sm:$0xff] %vm252, %v324
      %358 = vst.msk [vmem:[%s340 + $0xc9] sm:$0xff] %vm252, %v325
      %359 = vst.msk [vmem:[%s340 + $0xd9] sm:$0xff] %vm252, %v326
      %360 = vst.msk [vmem:[%s340 + $0xe1] sm:$0xff] %vm252, %v327
      %361 = vst.msk [vmem:[%s340 + $0xf1] sm:$0xff] %vm252, %v328
      %362 = vst.msk [vmem:[%s340 + $0xf9] sm:$0xff] %vm252, %v329
      %363 = vst.msk [vmem:[%s340 + $0x109] sm:$0xff] %vm252, %v330
      %364 = vst.msk [vmem:[%s340 + $0x111] sm:$0xff] %vm252, %v331
      %365 = vst.msk [vmem:[%s340 + $0x121] sm:$0xff] %vm252, %v332
      %366 = vst.msk [vmem:[%s340 + $0x129] sm:$0xff] %vm252, %v333
      %367 = vst.msk [vmem:[%s340 + $0x139] sm:$0xff] %vm252, %v334
      %368 = vst.msk [vmem:[%s340 + $0x141] sm:$0xff] %vm252, %v335
      %369 = vst.msk [vmem:[%s340 + $0x151] sm:$0xff] %vm252, %v336
      %370 = vst.msk [vmem:[%s340 + $0x159] sm:$0xff] %vm252, %v337
      %371 = vst.msk [vmem:[%s340 + $0x169] sm:$0xff] %vm252, %v338
      %372 = vst.msk [vmem:[%s340 + $0x171] sm:$0xff] %vm252, %v339
      %vm373 = vcmask 64512
      %374 = vst.msk [vmem:[#allocation4] sm:$0xff] %vm373, 0.0
      %375 = vst.msk [vmem:[#allocation4 + $0x8] sm:$0xff] %vm373, 0.0
      %376 = vst.msk [vmem:[#allocation4 + $0x10] sm:$0xff] %vm373, 0.0
      %377 = vst.msk [vmem:[#allocation4 + $0x18] sm:$0xff] %vm373, 0.0
      %378 = vst.msk [vmem:[#allocation4 + $0x20] sm:$0xff] %vm373, 0.0
      %379 = vst.msk [vmem:[#allocation4 + $0x28] sm:$0xff] %vm373, 0.0
      %380 = vst.msk [vmem:[#allocation4 + $0x30] sm:$0xff] %vm373, 0.0
      %381 = vst.msk [vmem:[#allocation4 + $0x38] sm:$0xff] %vm373, 0.0
      %382 = vst.msk [vmem:[#allocation4 + $0x40] sm:$0xff] %vm373, 0.0
      %383 = vst.msk [vmem:[#allocation4 + $0x48] sm:$0xff] %vm373, 0.0
      %384 = vst.msk [vmem:[#allocation4 + $0x50] sm:$0xff] %vm373, 0.0
      %385 = vst.msk [vmem:[#allocation4 + $0x58] sm:$0xff] %vm373, 0.0
      %386 = vst.msk [vmem:[#allocation4 + $0x60] sm:$0xff] %vm373, 0.0
      %387 = vst.msk [vmem:[#allocation4 + $0x68] sm:$0xff] %vm373, 0.0
      %388 = vst.msk [vmem:[#allocation4 + $0x70] sm:$0xff] %vm373, 0.0
      %389 = vst.msk [vmem:[#allocation4 + $0x78] sm:$0xff] %vm373, 0.0
      %390 = vst.msk [vmem:[#allocation4 + $0x80] sm:$0xff] %vm373, 0.0
      %391 = vst.msk [vmem:[#allocation4 + $0x88] sm:$0xff] %vm373, 0.0
      %392 = vst.msk [vmem:[#allocation4 + $0x90] sm:$0xff] %vm373, 0.0
      %393 = vst.msk [vmem:[#allocation4 + $0x98] sm:$0xff] %vm373, 0.0
      %394 = vst.msk [vmem:[#allocation4 + $0xa0] sm:$0xff] %vm373, 0.0
      %395 = vst.msk [vmem:[#allocation4 + $0xa8] sm:$0xff] %vm373, 0.0
      %396 = vst.msk [vmem:[#allocation4 + $0xb0] sm:$0xff] %vm373, 0.0
      %397 = vst.msk [vmem:[#allocation4 + $0xb8] sm:$0xff] %vm373, 0.0
      %398 = vst.msk [vmem:[#allocation4 + $0xc0] sm:$0xff] %vm373, 0.0
      %399 = vst.msk [vmem:[#allocation4 + $0xc8] sm:$0xff] %vm373, 0.0
      %400 = vst.msk [vmem:[#allocation4 + $0xd0] sm:$0xff] %vm373, 0.0
      %401 = vst.msk [vmem:[#allocation4 + $0xd8] sm:$0xff] %vm373, 0.0
      %402 = vst.msk [vmem:[#allocation4 + $0xe0] sm:$0xff] %vm373, 0.0
      %403 = vst.msk [vmem:[#allocation4 + $0xe8] sm:$0xff] %vm373, 0.0
      %404 = vst.msk [vmem:[#allocation4 + $0xf0] sm:$0xff] %vm373, 0.0
      %405 = vst.msk [vmem:[#allocation4 + $0xf8] sm:$0xff] %vm373, 0.0
      %v406 = vld [vmem:[#allocation4] sm:$0xff]
      %v407 = vld [vmem:[#allocation4 + $0x8] sm:$0xff]
      %v408 = vld [vmem:[#allocation4 + $0x10] sm:$0xff]
      %v409 = vld [vmem:[#allocation4 + $0x18] sm:$0xff]
      %v410 = vld [vmem:[#allocation4 + $0x20] sm:$0xff]
      %v411 = vld [vmem:[#allocation4 + $0x28] sm:$0xff]
      %v412 = vld [vmem:[#allocation4 + $0x30] sm:$0xff]
      %v413 = vld [vmem:[#allocation4 + $0x38] sm:$0xff]
      %v414 = vld [vmem:[#allocation4 + $0x40] sm:$0xff]
      %v415 = vld [vmem:[#allocation4 + $0x48] sm:$0xff]
      %v416 = vld [vmem:[#allocation4 + $0x50] sm:$0xff]
      %v417 = vld [vmem:[#allocation4 + $0x58] sm:$0xff]
      %v418 = vld [vmem:[#allocation4 + $0x60] sm:$0xff]
      %v419 = vld [vmem:[#allocation4 + $0x68] sm:$0xff]
      %v420 = vld [vmem:[#allocation4 + $0x70] sm:$0xff]
      %v421 = vld [vmem:[#allocation4 + $0x78] sm:$0xff]
      %v422 = vld [vmem:[#allocation4 + $0x80] sm:$0xff]
      %v423 = vld [vmem:[#allocation4 + $0x88] sm:$0xff]
      %v424 = vld [vmem:[#allocation4 + $0x90] sm:$0xff]
      %v425 = vld [vmem:[#allocation4 + $0x98] sm:$0xff]
      %v426 = vld [vmem:[#allocation4 + $0xa0] sm:$0xff]
      %v427 = vld [vmem:[#allocation4 + $0xa8] sm:$0xff]
      %v428 = vld [vmem:[#allocation4 + $0xb0] sm:$0xff]
      %v429 = vld [vmem:[#allocation4 + $0xb8] sm:$0xff]
      %v430 = vld [vmem:[#allocation4 + $0xc0] sm:$0xff]
      %v431 = vld [vmem:[#allocation4 + $0xc8] sm:$0xff]
      %v432 = vld [vmem:[#allocation4 + $0xd0] sm:$0xff]
      %v433 = vld [vmem:[#allocation4 + $0xd8] sm:$0xff]
      %v434 = vld [vmem:[#allocation4 + $0xe0] sm:$0xff]
      %v435 = vld [vmem:[#allocation4 + $0xe8] sm:$0xff]
      %v436 = vld [vmem:[#allocation4 + $0xf0] sm:$0xff]
      %v437 = vld [vmem:[#allocation4 + $0xf8] sm:$0xff]
      %v438 = vld [vmem:[#allocation2] sm:$0xff]
      %v439 = vld [vmem:[#allocation2 + $0x8] sm:$0xff]
      %v440 = vld [vmem:[#allocation2 + $0x18] sm:$0xff]
      %v441 = vld [vmem:[#allocation2 + $0x20] sm:$0xff]
      %v442 = vld [vmem:[#allocation2 + $0x30] sm:$0xff]
      %v443 = vld [vmem:[#allocation2 + $0x38] sm:$0xff]
      %v444 = vld [vmem:[#allocation2 + $0x48] sm:$0xff]
      %v445 = vld [vmem:[#allocation2 + $0x50] sm:$0xff]
      %v446 = vld [vmem:[#allocation2 + $0x60] sm:$0xff]
      %v447 = vld [vmem:[#allocation2 + $0x68] sm:$0xff]
      %v448 = vld [vmem:[#allocation2 + $0x78] sm:$0xff]
      %v449 = vld [vmem:[#allocation2 + $0x80] sm:$0xff]
      %v450 = vld [vmem:[#allocation2 + $0x90] sm:$0xff]
      %v451 = vld [vmem:[#allocation2 + $0x98] sm:$0xff]
      %v452 = vld [vmem:[#allocation2 + $0xa8] sm:$0xff]
      %v453 = vld [vmem:[#allocation2 + $0xb0] sm:$0xff]
      %v454 = vld [vmem:[#allocation2 + $0xc0] sm:$0xff]
      %v455 = vld [vmem:[#allocation2 + $0xc8] sm:$0xff]
      %v456 = vld [vmem:[#allocation2 + $0xd8] sm:$0xff]
      %v457 = vld [vmem:[#allocation2 + $0xe0] sm:$0xff]
      %v458 = vld [vmem:[#allocation2 + $0xf0] sm:$0xff]
      %v459 = vld [vmem:[#allocation2 + $0xf8] sm:$0xff]
      %v460 = vld [vmem:[#allocation2 + $0x108] sm:$0xff]
      %v461 = vld [vmem:[#allocation2 + $0x110] sm:$0xff]
      %v462 = vld [vmem:[#allocation2 + $0x120] sm:$0xff]
      %v463 = vld [vmem:[#allocation2 + $0x128] sm:$0xff]
      %v464 = vld [vmem:[#allocation2 + $0x138] sm:$0xff]
      %v465 = vld [vmem:[#allocation2 + $0x140] sm:$0xff]
      %v466 = vld [vmem:[#allocation2 + $0x150] sm:$0xff]
      %v467 = vld [vmem:[#allocation2 + $0x158] sm:$0xff]
      %v468 = vld [vmem:[#allocation2 + $0x168] sm:$0xff]
      %v469 = vld [vmem:[#allocation2 + $0x170] sm:$0xff]
      %v470 = vld [vmem:[%s1] sm:$0xf]
      %v472 = vsel %vm252, %v438, 0
      %v475 = vsel %vm252, %v439, 0
      %v478 = vsel %vm252, %v440, 0
      %v481 = vsel %vm252, %v441, 0
      %v484 = vsel %vm252, %v442, 0
      %v487 = vsel %vm252, %v443, 0
      %v490 = vsel %vm252, %v444, 0
      %v493 = vsel %vm252, %v445, 0
      %v496 = vsel %vm252, %v446, 0
      %v499 = vsel %vm252, %v447, 0
      %v502 = vsel %vm252, %v448, 0
      %v505 = vsel %vm252, %v449, 0
      %v508 = vsel %vm252, %v450, 0
      %v511 = vsel %vm252, %v451, 0
      %v514 = vsel %vm252, %v452, 0
      %v517 = vsel %vm252, %v453, 0
      %v520 = vsel %vm252, %v454, 0
      %v523 = vsel %vm252, %v455, 0
      %v526 = vsel %vm252, %v456, 0
      %v529 = vsel %vm252, %v457, 0
      %v532 = vsel %vm252, %v458, 0
      %v535 = vsel %vm252, %v459, 0
      %v538 = vsel %vm252, %v460, 0
      %v541 = vsel %vm252, %v461, 0
      %v544 = vsel %vm252, %v462, 0
      %v547 = vsel %vm252, %v463, 0
      %v550 = vsel %vm252, %v464, 0
      %v553 = vsel %vm252, %v465, 0
      %v556 = vsel %vm252, %v466, 0
      %v559 = vsel %vm252, %v467, 0
      %v562 = vsel %vm252, %v468, 0
      %v565 = vsel %vm252, %v469, 0
      %vm567 = vcmask 1043456
      %v569 = vsel %vm567, %v470, 0
      %571 = vmatpush.msra.mxu0 0.0
      %572 = vmatpush.msra.mxu0 0.0
      %573 = vmatpush.msra.mxu0 0.0
      %574 = vmatpush.msra.mxu0 0.0
      %575 = vmatpush.msra.mxu0 0.0
      %576 = vmatpush.msra.mxu0 0.0
      %577 = vmatpush.msra.mxu0 0.0
      %578 = vmatpush.msra.mxu0 0.0
      %579 = vmatpush.msra.mxu0 0.0
      %580 = vmatpush.msra.mxu0 0.0
      %581 = vmatpush.msra.mxu0 0.0
      %582 = vmatpush.msra.mxu0 0.0
      %583 = vmatpush.msra.mxu0 0.0
      %584 = vmatpush.msra.mxu0 0.0
      %585 = vmatpush.msra.mxu0 0.0
      %586 = vmatpush.msra.mxu0 %v569
      %587 = vmatmul.f32.gmra.mxu0 %v472
      %v588 = vpop.f32.mrf.mxu0
      %v589 = vadd.f32 0.0, %v588
      %590 = vmatmul.f32.gmra.mxu0 %v475
      %v591 = vpop.f32.mrf.mxu0
      %v592 = vadd.f32 0.0, %v591
      %593 = vmatmul.f32.gmra.mxu0 %v478
      %v594 = vpop.f32.mrf.mxu0
      %v595 = vadd.f32 0.0, %v594
      %596 = vmatmul.f32.gmra.mxu0 %v481
      %v597 = vpop.f32.mrf.mxu0
      %v598 = vadd.f32 0.0, %v597
      %599 = vmatmul.f32.gmra.mxu0 %v484
      %v600 = vpop.f32.mrf.mxu0
      %v601 = vadd.f32 0.0, %v600
      %602 = vmatmul.f32.gmra.mxu0 %v487
      %v603 = vpop.f32.mrf.mxu0
      %v604 = vadd.f32 0.0, %v603
      %605 = vmatmul.f32.gmra.mxu0 %v490
      %v606 = vpop.f32.mrf.mxu0
      %v607 = vadd.f32 0.0, %v606
      %608 = vmatmul.f32.gmra.mxu0 %v493
      %v609 = vpop.f32.mrf.mxu0
      %v610 = vadd.f32 0.0, %v609
      %611 = vmatmul.f32.gmra.mxu0 %v496
      %v612 = vpop.f32.mrf.mxu0
      %v613 = vadd.f32 0.0, %v612
      %614 = vmatmul.f32.gmra.mxu0 %v499
      %v615 = vpop.f32.mrf.mxu0
      %v616 = vadd.f32 0.0, %v615
      %617 = vmatmul.f32.gmra.mxu0 %v502
      %v618 = vpop.f32.mrf.mxu0
      %v619 = vadd.f32 0.0, %v618
      %620 = vmatmul.f32.gmra.mxu0 %v505
      %v621 = vpop.f32.mrf.mxu0
      %v622 = vadd.f32 0.0, %v621
      %623 = vmatmul.f32.gmra.mxu0 %v508
      %v624 = vpop.f32.mrf.mxu0
      %v625 = vadd.f32 0.0, %v624
      %626 = vmatmul.f32.gmra.mxu0 %v511
      %v627 = vpop.f32.mrf.mxu0
      %v628 = vadd.f32 0.0, %v627
      %629 = vmatmul.f32.gmra.mxu0 %v514
      %v630 = vpop.f32.mrf.mxu0
      %v631 = vadd.f32 0.0, %v630
      %632 = vmatmul.f32.gmra.mxu0 %v517
      %v633 = vpop.f32.mrf.mxu0
      %v634 = vadd.f32 0.0, %v633
      %635 = vmatmul.f32.gmra.mxu0 %v520
      %v636 = vpop.f32.mrf.mxu0
      %v637 = vadd.f32 0.0, %v636
      %638 = vmatmul.f32.gmra.mxu0 %v523
      %v639 = vpop.f32.mrf.mxu0
      %v640 = vadd.f32 0.0, %v639
      %641 = vmatmul.f32.gmra.mxu0 %v526
      %v642 = vpop.f32.mrf.mxu0
      %v643 = vadd.f32 0.0, %v642
      %644 = vmatmul.f32.gmra.mxu0 %v529
      %v645 = vpop.f32.mrf.mxu0
      %v646 = vadd.f32 0.0, %v645
      %647 = vmatmul.f32.gmra.mxu0 %v532
      %v648 = vpop.f32.mrf.mxu0
      %v649 = vadd.f32 0.0, %v648
      %650 = vmatmul.f32.gmra.mxu0 %v535
      %v651 = vpop.f32.mrf.mxu0
      %v652 = vadd.f32 0.0, %v651
      %653 = vmatmul.f32.gmra.mxu0 %v538
      %v654 = vpop.f32.mrf.mxu0
      %v655 = vadd.f32 0.0, %v654
      %656 = vmatmul.f32.gmra.mxu0 %v541
      %v657 = vpop.f32.mrf.mxu0
      %v658 = vadd.f32 0.0, %v657
      %659 = vmatmul.f32.gmra.mxu0 %v544
      %v660 = vpop.f32.mrf.mxu0
      %v661 = vadd.f32 0.0, %v660
      %662 = vmatmul.f32.gmra.mxu0 %v547
      %v663 = vpop.f32.mrf.mxu0
      %v664 = vadd.f32 0.0, %v663
      %665 = vmatmul.f32.gmra.mxu0 %v550
      %v666 = vpop.f32.mrf.mxu0
      %v667 = vadd.f32 0.0, %v666
      %668 = vmatmul.f32.gmra.mxu0 %v553
      %v669 = vpop.f32.mrf.mxu0
      %v670 = vadd.f32 0.0, %v669
      %671 = vmatmul.f32.gmra.mxu0 %v556
      %v672 = vpop.f32.mrf.mxu0
      %v673 = vadd.f32 0.0, %v672
      %674 = vmatmul.f32.gmra.mxu0 %v559
      %v675 = vpop.f32.mrf.mxu0
      %v676 = vadd.f32 0.0, %v675
      %677 = vmatmul.f32.gmra.mxu0 %v562
      %v678 = vpop.f32.mrf.mxu0
      %v679 = vadd.f32 0.0, %v678
      %680 = vmatmul.f32.gmra.mxu0 %v565
      %v681 = vpop.f32.mrf.mxu0
      %v682 = vadd.f32 0.0, %v681
      %683 = vdwg.mxu0
      %v684 = vadd.f32 %v406, %v589
      %v685 = vadd.f32 %v407, %v592
      %v686 = vadd.f32 %v408, %v595
      %v687 = vadd.f32 %v409, %v598
      %v688 = vadd.f32 %v410, %v601
      %v689 = vadd.f32 %v411, %v604
      %v690 = vadd.f32 %v412, %v607
      %v691 = vadd.f32 %v413, %v610
      %v692 = vadd.f32 %v414, %v613
      %v693 = vadd.f32 %v415, %v616
      %v694 = vadd.f32 %v416, %v619
      %v695 = vadd.f32 %v417, %v622
      %v696 = vadd.f32 %v418, %v625
      %v697 = vadd.f32 %v419, %v628
      %v698 = vadd.f32 %v420, %v631
      %v699 = vadd.f32 %v421, %v634
      %v700 = vadd.f32 %v422, %v637
      %v701 = vadd.f32 %v423, %v640
      %v702 = vadd.f32 %v424, %v643
      %v703 = vadd.f32 %v425, %v646
      %v704 = vadd.f32 %v426, %v649
      %v705 = vadd.f32 %v427, %v652
      %v706 = vadd.f32 %v428, %v655
      %v707 = vadd.f32 %v429, %v658
      %v708 = vadd.f32 %v430, %v661
      %v709 = vadd.f32 %v431, %v664
      %v710 = vadd.f32 %v432, %v667
      %v711 = vadd.f32 %v433, %v670
      %v712 = vadd.f32 %v434, %v673
      %v713 = vadd.f32 %v435, %v676
      %v714 = vadd.f32 %v436, %v679
      %v715 = vadd.f32 %v437, %v682
      %716 = vst.msk [vmem:[#allocation4] sm:$0xff] %vm373, %v684
      %717 = vst.msk [vmem:[#allocation4 + $0x8] sm:$0xff] %vm373, %v685
      %718 = vst.msk [vmem:[#allocation4 + $0x10] sm:$0xff] %vm373, %v686
      %719 = vst.msk [vmem:[#allocation4 + $0x18] sm:$0xff] %vm373, %v687
      %720 = vst.msk [vmem:[#allocation4 + $0x20] sm:$0xff] %vm373, %v688
      %721 = vst.msk [vmem:[#allocation4 + $0x28] sm:$0xff] %vm373, %v689
      %722 = vst.msk [vmem:[#allocation4 + $0x30] sm:$0xff] %vm373, %v690
      %723 = vst.msk [vmem:[#allocation4 + $0x38] sm:$0xff] %vm373, %v691
      %724 = vst.msk [vmem:[#allocation4 + $0x40] sm:$0xff] %vm373, %v692
      %725 = vst.msk [vmem:[#allocation4 + $0x48] sm:$0xff] %vm373, %v693
      %726 = vst.msk [vmem:[#allocation4 + $0x50] sm:$0xff] %vm373, %v694
      %727 = vst.msk [vmem:[#allocation4 + $0x58] sm:$0xff] %vm373, %v695
      %728 = vst.msk [vmem:[#allocation4 + $0x60] sm:$0xff] %vm373, %v696
      %729 = vst.msk [vmem:[#allocation4 + $0x68] sm:$0xff] %vm373, %v697
      %730 = vst.msk [vmem:[#allocation4 + $0x70] sm:$0xff] %vm373, %v698
      %731 = vst.msk [vmem:[#allocation4 + $0x78] sm:$0xff] %vm373, %v699
      %732 = vst.msk [vmem:[#allocation4 + $0x80] sm:$0xff] %vm373, %v700
      %733 = vst.msk [vmem:[#allocation4 + $0x88] sm:$0xff] %vm373, %v701
      %734 = vst.msk [vmem:[#allocation4 + $0x90] sm:$0xff] %vm373, %v702
      %735 = vst.msk [vmem:[#allocation4 + $0x98] sm:$0xff] %vm373, %v703
      %736 = vst.msk [vmem:[#allocation4 + $0xa0] sm:$0xff] %vm373, %v704
      %737 = vst.msk [vmem:[#allocation4 + $0xa8] sm:$0xff] %vm373, %v705
      %738 = vst.msk [vmem:[#allocation4 + $0xb0] sm:$0xff] %vm373, %v706
      %739 = vst.msk [vmem:[#allocation4 + $0xb8] sm:$0xff] %vm373, %v707
      %740 = vst.msk [vmem:[#allocation4 + $0xc0] sm:$0xff] %vm373, %v708
      %741 = vst.msk [vmem:[#allocation4 + $0xc8] sm:$0xff] %vm373, %v709
      %742 = vst.msk [vmem:[#allocation4 + $0xd0] sm:$0xff] %vm373, %v710
      %743 = vst.msk [vmem:[#allocation4 + $0xd8] sm:$0xff] %vm373, %v711
      %744 = vst.msk [vmem:[#allocation4 + $0xe0] sm:$0xff] %vm373, %v712
      %745 = vst.msk [vmem:[#allocation4 + $0xe8] sm:$0xff] %vm373, %v713
      %746 = vst.msk [vmem:[#allocation4 + $0xf0] sm:$0xff] %vm373, %v714
      %747 = vst.msk [vmem:[#allocation4 + $0xf8] sm:$0xff] %vm373, %v715
      %v748 = vld [vmem:[#allocation4] sm:$0xff]
      %v749 = vld [vmem:[#allocation4 + $0x8] sm:$0xff]
      %v750 = vld [vmem:[#allocation4 + $0x10] sm:$0xff]
      %v751 = vld [vmem:[#allocation4 + $0x18] sm:$0xff]
      %v752 = vld [vmem:[#allocation4 + $0x20] sm:$0xff]
      %v753 = vld [vmem:[#allocation4 + $0x28] sm:$0xff]
      %v754 = vld [vmem:[#allocation4 + $0x30] sm:$0xff]
      %v755 = vld [vmem:[#allocation4 + $0x38] sm:$0xff]
      %v756 = vld [vmem:[#allocation4 + $0x40] sm:$0xff]
      %v757 = vld [vmem:[#allocation4 + $0x48] sm:$0xff]
      %v758 = vld [vmem:[#allocation4 + $0x50] sm:$0xff]
      %v759 = vld [vmem:[#allocation4 + $0x58] sm:$0xff]
      %v760 = vld [vmem:[#allocation4 + $0x60] sm:$0xff]
      %v761 = vld [vmem:[#allocation4 + $0x68] sm:$0xff]
      %v762 = vld [vmem:[#allocation4 + $0x70] sm:$0xff]
      %v763 = vld [vmem:[#allocation4 + $0x78] sm:$0xff]
      %v764 = vld [vmem:[#allocation4 + $0x80] sm:$0xff]
      %v765 = vld [vmem:[#allocation4 + $0x88] sm:$0xff]
      %v766 = vld [vmem:[#allocation4 + $0x90] sm:$0xff]
      %v767 = vld [vmem:[#allocation4 + $0x98] sm:$0xff]
      %v768 = vld [vmem:[#allocation4 + $0xa0] sm:$0xff]
      %v769 = vld [vmem:[#allocation4 + $0xa8] sm:$0xff]
      %v770 = vld [vmem:[#allocation4 + $0xb0] sm:$0xff]
      %v771 = vld [vmem:[#allocation4 + $0xb8] sm:$0xff]
      %v772 = vld [vmem:[#allocation4 + $0xc0] sm:$0xff]
      %v773 = vld [vmem:[#allocation4 + $0xc8] sm:$0xff]
      %v774 = vld [vmem:[#allocation4 + $0xd0] sm:$0xff]
      %v775 = vld [vmem:[#allocation4 + $0xd8] sm:$0xff]
      %v776 = vld [vmem:[#allocation4 + $0xe0] sm:$0xff]
      %v777 = vld [vmem:[#allocation4 + $0xe8] sm:$0xff]
      %v778 = vld [vmem:[#allocation4 + $0xf0] sm:$0xff]
      %v779 = vld [vmem:[#allocation4 + $0xf8] sm:$0xff]
      %v780 = vld [vmem:[#allocation2 + $0x1] sm:$0xff]
      %v781 = vld [vmem:[#allocation2 + $0x9] sm:$0xff]
      %v782 = vld [vmem:[#allocation2 + $0x19] sm:$0xff]
      %v783 = vld [vmem:[#allocation2 + $0x21] sm:$0xff]
      %v784 = vld [vmem:[#allocation2 + $0x31] sm:$0xff]
      %v785 = vld [vmem:[#allocation2 + $0x39] sm:$0xff]
      %v786 = vld [vmem:[#allocation2 + $0x49] sm:$0xff]
      %v787 = vld [vmem:[#allocation2 + $0x51] sm:$0xff]
      %v788 = vld [vmem:[#allocation2 + $0x61] sm:$0xff]
      %v789 = vld [vmem:[#allocation2 + $0x69] sm:$0xff]
      %v790 = vld [vmem:[#allocation2 + $0x79] sm:$0xff]
      %v791 = vld [vmem:[#allocation2 + $0x81] sm:$0xff]
      %v792 = vld [vmem:[#allocation2 + $0x91] sm:$0xff]
      %v793 = vld [vmem:[#allocation2 + $0x99] sm:$0xff]
      %v794 = vld [vmem:[#allocation2 + $0xa9] sm:$0xff]
      %v795 = vld [vmem:[#allocation2 + $0xb1] sm:$0xff]
      %v796 = vld [vmem:[#allocation2 + $0xc1] sm:$0xff]
      %v797 = vld [vmem:[#allocation2 + $0xc9] sm:$0xff]
      %v798 = vld [vmem:[#allocation2 + $0xd9] sm:$0xff]
      %v799 = vld [vmem:[#allocation2 + $0xe1] sm:$0xff]
      %v800 = vld [vmem:[#allocation2 + $0xf1] sm:$0xff]
      %v801 = vld [vmem:[#allocation2 + $0xf9] sm:$0xff]
      %v802 = vld [vmem:[#allocation2 + $0x109] sm:$0xff]
      %v803 = vld [vmem:[#allocation2 + $0x111] sm:$0xff]
      %v804 = vld [vmem:[#allocation2 + $0x121] sm:$0xff]
      %v805 = vld [vmem:[#allocation2 + $0x129] sm:$0xff]
      %v806 = vld [vmem:[#allocation2 + $0x139] sm:$0xff]
      %v807 = vld [vmem:[#allocation2 + $0x141] sm:$0xff]
      %v808 = vld [vmem:[#allocation2 + $0x151] sm:$0xff]
      %v809 = vld [vmem:[#allocation2 + $0x159] sm:$0xff]
      %v810 = vld [vmem:[#allocation2 + $0x169] sm:$0xff]
      %v811 = vld [vmem:[#allocation2 + $0x171] sm:$0xff]
      %s812 = scalar_lea.vmem %s1, 4
      %v813 = vld [vmem:[%s812] sm:$0xf]
      %v815 = vsel %vm252, %v780, 0
      %v818 = vsel %vm252, %v781, 0
      %v821 = vsel %vm252, %v782, 0
      %v824 = vsel %vm252, %v783, 0
      %v827 = vsel %vm252, %v784, 0
      %v830 = vsel %vm252, %v785, 0
      %v833 = vsel %vm252, %v786, 0
      %v836 = vsel %vm252, %v787, 0
      %v839 = vsel %vm252, %v788, 0
      %v842 = vsel %vm252, %v789, 0
      %v845 = vsel %vm252, %v790, 0
      %v848 = vsel %vm252, %v791, 0
      %v851 = vsel %vm252, %v792, 0
      %v854 = vsel %vm252, %v793, 0
      %v857 = vsel %vm252, %v794, 0
      %v860 = vsel %vm252, %v795, 0
      %v863 = vsel %vm252, %v796, 0
      %v866 = vsel %vm252, %v797, 0
      %v869 = vsel %vm252, %v798, 0
      %v872 = vsel %vm252, %v799, 0
      %v875 = vsel %vm252, %v800, 0
      %v878 = vsel %vm252, %v801, 0
      %v881 = vsel %vm252, %v802, 0
      %v884 = vsel %vm252, %v803, 0
      %v887 = vsel %vm252, %v804, 0
      %v890 = vsel %vm252, %v805, 0
      %v893 = vsel %vm252, %v806, 0
      %v896 = vsel %vm252, %v807, 0
      %v899 = vsel %vm252, %v808, 0
      %v902 = vsel %vm252, %v809, 0
      %v905 = vsel %vm252, %v810, 0
      %v908 = vsel %vm252, %v811, 0
      %v911 = vsel %vm567, %v813, 0
      %913 = vmatpush.msra.mxu0 0.0
      %914 = vmatpush.msra.mxu0 0.0
      %915 = vmatpush.msra.mxu0 0.0
      %916 = vmatpush.msra.mxu0 0.0
      %917 = vmatpush.msra.mxu0 0.0
      %918 = vmatpush.msra.mxu0 0.0
      %919 = vmatpush.msra.mxu0 0.0
      %920 = vmatpush.msra.mxu0 0.0
      %921 = vmatpush.msra.mxu0 0.0
      %922 = vmatpush.msra.mxu0 0.0
      %923 = vmatpush.msra.mxu0 0.0
      %924 = vmatpush.msra.mxu0 0.0
      %925 = vmatpush.msra.mxu0 0.0
      %926 = vmatpush.msra.mxu0 0.0
      %927 = vmatpush.msra.mxu0 0.0
      %928 = vmatpush.msra.mxu0 %v911
      %929 = vmatmul.f32.gmra.mxu0 %v815
      %v930 = vpop.f32.mrf.mxu0
      %v931 = vadd.f32 0.0, %v930
      %932 = vmatmul.f32.gmra.mxu0 %v818
      %v933 = vpop.f32.mrf.mxu0
      %v934 = vadd.f32 0.0, %v933
      %935 = vmatmul.f32.gmra.mxu0 %v821
      %v936 = vpop.f32.mrf.mxu0
      %v937 = vadd.f32 0.0, %v936
      %938 = vmatmul.f32.gmra.mxu0 %v824
      %v939 = vpop.f32.mrf.mxu0
      %v940 = vadd.f32 0.0, %v939
      %941 = vmatmul.f32.gmra.mxu0 %v827
      %v942 = vpop.f32.mrf.mxu0
      %v943 = vadd.f32 0.0, %v942
      %944 = vmatmul.f32.gmra.mxu0 %v830
      %v945 = vpop.f32.mrf.mxu0
      %v946 = vadd.f32 0.0, %v945
      %947 = vmatmul.f32.gmra.mxu0 %v833
      %v948 = vpop.f32.mrf.mxu0
      %v949 = vadd.f32 0.0, %v948
      %950 = vmatmul.f32.gmra.mxu0 %v836
      %v951 = vpop.f32.mrf.mxu0
      %v952 = vadd.f32 0.0, %v951
      %953 = vmatmul.f32.gmra.mxu0 %v839
      %v954 = vpop.f32.mrf.mxu0
      %v955 = vadd.f32 0.0, %v954
      %956 = vmatmul.f32.gmra.mxu0 %v842
      %v957 = vpop.f32.mrf.mxu0
      %v958 = vadd.f32 0.0, %v957
      %959 = vmatmul.f32.gmra.mxu0 %v845
      %v960 = vpop.f32.mrf.mxu0
      %v961 = vadd.f32 0.0, %v960
      %962 = vmatmul.f32.gmra.mxu0 %v848
      %v963 = vpop.f32.mrf.mxu0
      %v964 = vadd.f32 0.0, %v963
      %965 = vmatmul.f32.gmra.mxu0 %v851
      %v966 = vpop.f32.mrf.mxu0
      %v967 = vadd.f32 0.0, %v966
      %968 = vmatmul.f32.gmra.mxu0 %v854
      %v969 = vpop.f32.mrf.mxu0
      %v970 = vadd.f32 0.0, %v969
      %971 = vmatmul.f32.gmra.mxu0 %v857
      %v972 = vpop.f32.mrf.mxu0
      %v973 = vadd.f32 0.0, %v972
      %974 = vmatmul.f32.gmra.mxu0 %v860
      %v975 = vpop.f32.mrf.mxu0
      %v976 = vadd.f32 0.0, %v975
      %977 = vmatmul.f32.gmra.mxu0 %v863
      %v978 = vpop.f32.mrf.mxu0
      %v979 = vadd.f32 0.0, %v978
      %980 = vmatmul.f32.gmra.mxu0 %v866
      %v981 = vpop.f32.mrf.mxu0
      %v982 = vadd.f32 0.0, %v981
      %983 = vmatmul.f32.gmra.mxu0 %v869
      %v984 = vpop.f32.mrf.mxu0
      %v985 = vadd.f32 0.0, %v984
      %986 = vmatmul.f32.gmra.mxu0 %v872
      %v987 = vpop.f32.mrf.mxu0
      %v988 = vadd.f32 0.0, %v987
      %989 = vmatmul.f32.gmra.mxu0 %v875
      %v990 = vpop.f32.mrf.mxu0
      %v991 = vadd.f32 0.0, %v990
      %992 = vmatmul.f32.gmra.mxu0 %v878
      %v993 = vpop.f32.mrf.mxu0
      %v994 = vadd.f32 0.0, %v993
      %995 = vmatmul.f32.gmra.mxu0 %v881
      %v996 = vpop.f32.mrf.mxu0
      %v997 = vadd.f32 0.0, %v996
      %998 = vmatmul.f32.gmra.mxu0 %v884
      %v999 = vpop.f32.mrf.mxu0
      %v1000 = vadd.f32 0.0, %v999
      %1001 = vmatmul.f32.gmra.mxu0 %v887
      %v1002 = vpop.f32.mrf.mxu0
      %v1003 = vadd.f32 0.0, %v1002
      %1004 = vmatmul.f32.gmra.mxu0 %v890
      %v1005 = vpop.f32.mrf.mxu0
      %v1006 = vadd.f32 0.0, %v1005
      %1007 = vmatmul.f32.gmra.mxu0 %v893
      %v1008 = vpop.f32.mrf.mxu0
      %v1009 = vadd.f32 0.0, %v1008
      %1010 = vmatmul.f32.gmra.mxu0 %v896
      %v1011 = vpop.f32.mrf.mxu0
      %v1012 = vadd.f32 0.0, %v1011
      %1013 = vmatmul.f32.gmra.mxu0 %v899
      %v1014 = vpop.f32.mrf.mxu0
      %v1015 = vadd.f32 0.0, %v1014
      %1016 = vmatmul.f32.gmra.mxu0 %v902
      %v1017 = vpop.f32.mrf.mxu0
      %v1018 = vadd.f32 0.0, %v1017
      %1019 = vmatmul.f32.gmra.mxu0 %v905
      %v1020 = vpop.f32.mrf.mxu0
      %v1021 = vadd.f32 0.0, %v1020
      %1022 = vmatmul.f32.gmra.mxu0 %v908
      %v1023 = vpop.f32.mrf.mxu0
      %v1024 = vadd.f32 0.0, %v1023
      %1025 = vdwg.mxu0
      %v1026 = vadd.f32 %v748, %v931
      %v1027 = vadd.f32 %v749, %v934
      %v1028 = vadd.f32 %v750, %v937
      %v1029 = vadd.f32 %v751, %v940
      %v1030 = vadd.f32 %v752, %v943
      %v1031 = vadd.f32 %v753, %v946
      %v1032 = vadd.f32 %v754, %v949
      %v1033 = vadd.f32 %v755, %v952
      %v1034 = vadd.f32 %v756, %v955
      %v1035 = vadd.f32 %v757, %v958
      %v1036 = vadd.f32 %v758, %v961
      %v1037 = vadd.f32 %v759, %v964
      %v1038 = vadd.f32 %v760, %v967
      %v1039 = vadd.f32 %v761, %v970
      %v1040 = vadd.f32 %v762, %v973
      %v1041 = vadd.f32 %v763, %v976
      %v1042 = vadd.f32 %v764, %v979
      %v1043 = vadd.f32 %v765, %v982
      %v1044 = vadd.f32 %v766, %v985
      %v1045 = vadd.f32 %v767, %v988
      %v1046 = vadd.f32 %v768, %v991
      %v1047 = vadd.f32 %v769, %v994
      %v1048 = vadd.f32 %v770, %v997
      %v1049 = vadd.f32 %v771, %v1000
      %v1050 = vadd.f32 %v772, %v1003
      %v1051 = vadd.f32 %v773, %v1006
      %v1052 = vadd.f32 %v774, %v1009
      %v1053 = vadd.f32 %v775, %v1012
      %v1054 = vadd.f32 %v776, %v1015
      %v1055 = vadd.f32 %v777, %v1018
      %v1056 = vadd.f32 %v778, %v1021
      %v1057 = vadd.f32 %v779, %v1024
      %1058 = vst.msk [vmem:[#allocation4] sm:$0xff] %vm373, %v1026
      %1059 = vst.msk [vmem:[#allocation4 + $0x8] sm:$0xff] %vm373, %v1027
      %1060 = vst.msk [vmem:[#allocation4 + $0x10] sm:$0xff] %vm373, %v1028
      %1061 = vst.msk [vmem:[#allocation4 + $0x18] sm:$0xff] %vm373, %v1029
      %1062 = vst.msk [vmem:[#allocation4 + $0x20] sm:$0xff] %vm373, %v1030
      %1063 = vst.msk [vmem:[#allocation4 + $0x28] sm:$0xff] %vm373, %v1031
      %1064 = vst.msk [vmem:[#allocation4 + $0x30] sm:$0xff] %vm373, %v1032
      %1065 = vst.msk [vmem:[#allocation4 + $0x38] sm:$0xff] %vm373, %v1033
      %1066 = vst.msk [vmem:[#allocation4 + $0x40] sm:$0xff] %vm373, %v1034
      %1067 = vst.msk [vmem:[#allocation4 + $0x48] sm:$0xff] %vm373, %v1035
      %1068 = vst.msk [vmem:[#allocation4 + $0x50] sm:$0xff] %vm373, %v1036
      %1069 = vst.msk [vmem:[#allocation4 + $0x58] sm:$0xff] %vm373, %v1037
      %1070 = vst.msk [vmem:[#allocation4 + $0x60] sm:$0xff] %vm373, %v1038
      %1071 = vst.msk [vmem:[#allocation4 + $0x68] sm:$0xff] %vm373, %v1039
      %1072 = vst.msk [vmem:[#allocation4 + $0x70] sm:$0xff] %vm373, %v1040
      %1073 = vst.msk [vmem:[#allocation4 + $0x78] sm:$0xff] %vm373, %v1041
      %1074 = vst.msk [vmem:[#allocation4 + $0x80] sm:$0xff] %vm373, %v1042
      %1075 = vst.msk [vmem:[#allocation4 + $0x88] sm:$0xff] %vm373, %v1043
      %1076 = vst.msk [vmem:[#allocation4 + $0x90] sm:$0xff] %vm373, %v1044
      %1077 = vst.msk [vmem:[#allocation4 + $0x98] sm:$0xff] %vm373, %v1045
      %1078 = vst.msk [vmem:[#allocation4 + $0xa0] sm:$0xff] %vm373, %v1046
      %1079 = vst.msk [vmem:[#allocation4 + $0xa8] sm:$0xff] %vm373, %v1047
      %1080 = vst.msk [vmem:[#allocation4 + $0xb0] sm:$0xff] %vm373, %v1048
      %1081 = vst.msk [vmem:[#allocation4 + $0xb8] sm:$0xff] %vm373, %v1049
      %1082 = vst.msk [vmem:[#allocation4 + $0xc0] sm:$0xff] %vm373, %v1050
      %1083 = vst.msk [vmem:[#allocation4 + $0xc8] sm:$0xff] %vm373, %v1051
      %1084 = vst.msk [vmem:[#allocation4 + $0xd0] sm:$0xff] %vm373, %v1052
      %1085 = vst.msk [vmem:[#allocation4 + $0xd8] sm:$0xff] %vm373, %v1053
      %1086 = vst.msk [vmem:[#allocation4 + $0xe0] sm:$0xff] %vm373, %v1054
      %1087 = vst.msk [vmem:[#allocation4 + $0xe8] sm:$0xff] %vm373, %v1055
      %1088 = vst.msk [vmem:[#allocation4 + $0xf0] sm:$0xff] %vm373, %v1056
      %1089 = vst.msk [vmem:[#allocation4 + $0xf8] sm:$0xff] %vm373, %v1057
      %v1090 = vld [vmem:[#allocation4] sm:$0xff]
      %v1091 = vld [vmem:[#allocation4 + $0x8] sm:$0xff]
      %v1092 = vld [vmem:[#allocation4 + $0x10] sm:$0xff]
      %v1093 = vld [vmem:[#allocation4 + $0x18] sm:$0xff]
      %v1094 = vld [vmem:[#allocation4 + $0x20] sm:$0xff]
      %v1095 = vld [vmem:[#allocation4 + $0x28] sm:$0xff]
      %v1096 = vld [vmem:[#allocation4 + $0x30] sm:$0xff]
      %v1097 = vld [vmem:[#allocation4 + $0x38] sm:$0xff]
      %v1098 = vld [vmem:[#allocation4 + $0x40] sm:$0xff]
      %v1099 = vld [vmem:[#allocation4 + $0x48] sm:$0xff]
      %v1100 = vld [vmem:[#allocation4 + $0x50] sm:$0xff]
      %v1101 = vld [vmem:[#allocation4 + $0x58] sm:$0xff]
      %v1102 = vld [vmem:[#allocation4 + $0x60] sm:$0xff]
      %v1103 = vld [vmem:[#allocation4 + $0x68] sm:$0xff]
      %v1104 = vld [vmem:[#allocation4 + $0x70] sm:$0xff]
      %v1105 = vld [vmem:[#allocation4 + $0x78] sm:$0xff]
      %v1106 = vld [vmem:[#allocation4 + $0x80] sm:$0xff]
      %v1107 = vld [vmem:[#allocation4 + $0x88] sm:$0xff]
      %v1108 = vld [vmem:[#allocation4 + $0x90] sm:$0xff]
      %v1109 = vld [vmem:[#allocation4 + $0x98] sm:$0xff]
      %v1110 = vld [vmem:[#allocation4 + $0xa0] sm:$0xff]
      %v1111 = vld [vmem:[#allocation4 + $0xa8] sm:$0xff]
      %v1112 = vld [vmem:[#allocation4 + $0xb0] sm:$0xff]
      %v1113 = vld [vmem:[#allocation4 + $0xb8] sm:$0xff]
      %v1114 = vld [vmem:[#allocation4 + $0xc0] sm:$0xff]
      %v1115 = vld [vmem:[#allocation4 + $0xc8] sm:$0xff]
      %v1116 = vld [vmem:[#allocation4 + $0xd0] sm:$0xff]
      %v1117 = vld [vmem:[#allocation4 + $0xd8] sm:$0xff]
      %v1118 = vld [vmem:[#allocation4 + $0xe0] sm:$0xff]
      %v1119 = vld [vmem:[#allocation4 + $0xe8] sm:$0xff]
      %v1120 = vld [vmem:[#allocation4 + $0xf0] sm:$0xff]
      %v1121 = vld [vmem:[#allocation4 + $0xf8] sm:$0xff]
      %v1122 = vld [vmem:[#allocation2 + $0x2] sm:$0xff]
      %v1123 = vld [vmem:[#allocation2 + $0xa] sm:$0xff]
      %v1124 = vld [vmem:[#allocation2 + $0x1a] sm:$0xff]
      %v1125 = vld [vmem:[#allocation2 + $0x22] sm:$0xff]
      %v1126 = vld [vmem:[#allocation2 + $0x32] sm:$0xff]
      %v1127 = vld [vmem:[#allocation2 + $0x3a] sm:$0xff]
      %v1128 = vld [vmem:[#allocation2 + $0x4a] sm:$0xff]
      %v1129 = vld [vmem:[#allocation2 + $0x52] sm:$0xff]
      %v1130 = vld [vmem:[#allocation2 + $0x62] sm:$0xff]
      %v1131 = vld [vmem:[#allocation2 + $0x6a] sm:$0xff]
      %v1132 = vld [vmem:[#allocation2 + $0x7a] sm:$0xff]
      %v1133 = vld [vmem:[#allocation2 + $0x82] sm:$0xff]
      %v1134 = vld [vmem:[#allocation2 + $0x92] sm:$0xff]
      %v1135 = vld [vmem:[#allocation2 + $0x9a] sm:$0xff]
      %v1136 = vld [vmem:[#allocation2 + $0xaa] sm:$0xff]
      %v1137 = vld [vmem:[#allocation2 + $0xb2] sm:$0xff]
      %v1138 = vld [vmem:[#allocation2 + $0xc2] sm:$0xff]
      %v1139 = vld [vmem:[#allocation2 + $0xca] sm:$0xff]
      %v1140 = vld [vmem:[#allocation2 + $0xda] sm:$0xff]
      %v1141 = vld [vmem:[#allocation2 + $0xe2] sm:$0xff]
      %v1142 = vld [vmem:[#allocation2 + $0xf2] sm:$0xff]
      %v1143 = vld [vmem:[#allocation2 + $0xfa] sm:$0xff]
      %v1144 = vld [vmem:[#allocation2 + $0x10a] sm:$0xff]
      %v1145 = vld [vmem:[#allocation2 + $0x112] sm:$0xff]
      %v1146 = vld [vmem:[#allocation2 + $0x122] sm:$0xff]
      %v1147 = vld [vmem:[#allocation2 + $0x12a] sm:$0xff]
      %v1148 = vld [vmem:[#allocation2 + $0x13a] sm:$0xff]
      %v1149 = vld [vmem:[#allocation2 + $0x142] sm:$0xff]
      %v1150 = vld [vmem:[#allocation2 + $0x152] sm:$0xff]
      %v1151 = vld [vmem:[#allocation2 + $0x15a] sm:$0xff]
      %v1152 = vld [vmem:[#allocation2 + $0x16a] sm:$0xff]
      %v1153 = vld [vmem:[#allocation2 + $0x172] sm:$0xff]
      %s1154 = scalar_lea.vmem %s1, 8
      %v1155 = vld [vmem:[%s1154] sm:$0xf]
      %v1157 = vsel %vm252, %v1122, 0
      %v1160 = vsel %vm252, %v1123, 0
      %v1163 = vsel %vm252, %v1124, 0
      %v1166 = vsel %vm252, %v1125, 0
      %v1169 = vsel %vm252, %v1126, 0
      %v1172 = vsel %vm252, %v1127, 0
      %v1175 = vsel %vm252, %v1128, 0
      %v1178 = vsel %vm252, %v1129, 0
      %v1181 = vsel %vm252, %v1130, 0
      %v1184 = vsel %vm252, %v1131, 0
      %v1187 = vsel %vm252, %v1132, 0
      %v1190 = vsel %vm252, %v1133, 0
      %v1193 = vsel %vm252, %v1134, 0
      %v1196 = vsel %vm252, %v1135, 0
      %v1199 = vsel %vm252, %v1136, 0
      %v1202 = vsel %vm252, %v1137, 0
      %v1205 = vsel %vm252, %v1138, 0
      %v1208 = vsel %vm252, %v1139, 0
      %v1211 = vsel %vm252, %v1140, 0
      %v1214 = vsel %vm252, %v1141, 0
      %v1217 = vsel %vm252, %v1142, 0
      %v1220 = vsel %vm252, %v1143, 0
      %v1223 = vsel %vm252, %v1144, 0
      %v1226 = vsel %vm252, %v1145, 0
      %v1229 = vsel %vm252, %v1146, 0
      %v1232 = vsel %vm252, %v1147, 0
      %v1235 = vsel %vm252, %v1148, 0
      %v1238 = vsel %vm252, %v1149, 0
      %v1241 = vsel %vm252, %v1150, 0
      %v1244 = vsel %vm252, %v1151, 0
      %v1247 = vsel %vm252, %v1152, 0
      %v1250 = vsel %vm252, %v1153, 0
      %v1253 = vsel %vm567, %v1155, 0
      %1255 = vmatpush.msra.mxu0 0.0
      %1256 = vmatpush.msra.mxu0 0.0
      %1257 = vmatpush.msra.mxu0 0.0
      %1258 = vmatpush.msra.mxu0 0.0
      %1259 = vmatpush.msra.mxu0 0.0
      %1260 = vmatpush.msra.mxu0 0.0
      %1261 = vmatpush.msra.mxu0 0.0
      %1262 = vmatpush.msra.mxu0 0.0
      %1263 = vmatpush.msra.mxu0 0.0
      %1264 = vmatpush.msra.mxu0 0.0
      %1265 = vmatpush.msra.mxu0 0.0
      %1266 = vmatpush.msra.mxu0 0.0
      %1267 = vmatpush.msra.mxu0 0.0
      %1268 = vmatpush.msra.mxu0 0.0
      %1269 = vmatpush.msra.mxu0 0.0
      %1270 = vmatpush.msra.mxu0 %v1253
      %1271 = vmatmul.f32.gmra.mxu0 %v1157
      %v1272 = vpop.f32.mrf.mxu0
      %v1273 = vadd.f32 0.0, %v1272
      %1274 = vmatmul.f32.gmra.mxu0 %v1160
      %v1275 = vpop.f32.mrf.mxu0
      %v1276 = vadd.f32 0.0, %v1275
      %1277 = vmatmul.f32.gmra.mxu0 %v1163
      %v1278 = vpop.f32.mrf.mxu0
      %v1279 = vadd.f32 0.0, %v1278
      %1280 = vmatmul.f32.gmra.mxu0 %v1166
      %v1281 = vpop.f32.mrf.mxu0
      %v1282 = vadd.f32 0.0, %v1281
      %1283 = vmatmul.f32.gmra.mxu0 %v1169
      %v1284 = vpop.f32.mrf.mxu0
      %v1285 = vadd.f32 0.0, %v1284
      %1286 = vmatmul.f32.gmra.mxu0 %v1172
      %v1287 = vpop.f32.mrf.mxu0
      %v1288 = vadd.f32 0.0, %v1287
      %1289 = vmatmul.f32.gmra.mxu0 %v1175
      %v1290 = vpop.f32.mrf.mxu0
      %v1291 = vadd.f32 0.0, %v1290
      %1292 = vmatmul.f32.gmra.mxu0 %v1178
      %v1293 = vpop.f32.mrf.mxu0
      %v1294 = vadd.f32 0.0, %v1293
      %1295 = vmatmul.f32.gmra.mxu0 %v1181
      %v1296 = vpop.f32.mrf.mxu0
      %v1297 = vadd.f32 0.0, %v1296
      %1298 = vmatmul.f32.gmra.mxu0 %v1184
      %v1299 = vpop.f32.mrf.mxu0
      %v1300 = vadd.f32 0.0, %v1299
      %1301 = vmatmul.f32.gmra.mxu0 %v1187
      %v1302 = vpop.f32.mrf.mxu0
      %v1303 = vadd.f32 0.0, %v1302
      %1304 = vmatmul.f32.gmra.mxu0 %v1190
      %v1305 = vpop.f32.mrf.mxu0
      %v1306 = vadd.f32 0.0, %v1305
      %1307 = vmatmul.f32.gmra.mxu0 %v1193
      %v1308 = vpop.f32.mrf.mxu0
      %v1309 = vadd.f32 0.0, %v1308
      %1310 = vmatmul.f32.gmra.mxu0 %v1196
      %v1311 = vpop.f32.mrf.mxu0
      %v1312 = vadd.f32 0.0, %v1311
      %1313 = vmatmul.f32.gmra.mxu0 %v1199
      %v1314 = vpop.f32.mrf.mxu0
      %v1315 = vadd.f32 0.0, %v1314
      %1316 = vmatmul.f32.gmra.mxu0 %v1202
      %v1317 = vpop.f32.mrf.mxu0
      %v1318 = vadd.f32 0.0, %v1317
      %1319 = vmatmul.f32.gmra.mxu0 %v1205
      %v1320 = vpop.f32.mrf.mxu0
      %v1321 = vadd.f32 0.0, %v1320
      %1322 = vmatmul.f32.gmra.mxu0 %v1208
      %v1323 = vpop.f32.mrf.mxu0
      %v1324 = vadd.f32 0.0, %v1323
      %1325 = vmatmul.f32.gmra.mxu0 %v1211
      %v1326 = vpop.f32.mrf.mxu0
      %v1327 = vadd.f32 0.0, %v1326
      %1328 = vmatmul.f32.gmra.mxu0 %v1214
      %v1329 = vpop.f32.mrf.mxu0
      %v1330 = vadd.f32 0.0, %v1329
      %1331 = vmatmul.f32.gmra.mxu0 %v1217
      %v1332 = vpop.f32.mrf.mxu0
      %v1333 = vadd.f32 0.0, %v1332
      %1334 = vmatmul.f32.gmra.mxu0 %v1220
      %v1335 = vpop.f32.mrf.mxu0
      %v1336 = vadd.f32 0.0, %v1335
      %1337 = vmatmul.f32.gmra.mxu0 %v1223
      %v1338 = vpop.f32.mrf.mxu0
      %v1339 = vadd.f32 0.0, %v1338
      %1340 = vmatmul.f32.gmra.mxu0 %v1226
      %v1341 = vpop.f32.mrf.mxu0
      %v1342 = vadd.f32 0.0, %v1341
      %1343 = vmatmul.f32.gmra.mxu0 %v1229
      %v1344 = vpop.f32.mrf.mxu0
      %v1345 = vadd.f32 0.0, %v1344
      %1346 = vmatmul.f32.gmra.mxu0 %v1232
      %v1347 = vpop.f32.mrf.mxu0
      %v1348 = vadd.f32 0.0, %v1347
      %1349 = vmatmul.f32.gmra.mxu0 %v1235
      %v1350 = vpop.f32.mrf.mxu0
      %v1351 = vadd.f32 0.0, %v1350
      %1352 = vmatmul.f32.gmra.mxu0 %v1238
      %v1353 = vpop.f32.mrf.mxu0
      %v1354 = vadd.f32 0.0, %v1353
      %1355 = vmatmul.f32.gmra.mxu0 %v1241
      %v1356 = vpop.f32.mrf.mxu0
      %v1357 = vadd.f32 0.0, %v1356
      %1358 = vmatmul.f32.gmra.mxu0 %v1244
      %v1359 = vpop.f32.mrf.mxu0
      %v1360 = vadd.f32 0.0, %v1359
      %1361 = vmatmul.f32.gmra.mxu0 %v1247
      %v1362 = vpop.f32.mrf.mxu0
      %v1363 = vadd.f32 0.0, %v1362
      %1364 = vmatmul.f32.gmra.mxu0 %v1250
      %v1365 = vpop.f32.mrf.mxu0
      %v1366 = vadd.f32 0.0, %v1365
      %1367 = vdwg.mxu0
      %v1368 = vadd.f32 %v1090, %v1273
      %v1369 = vadd.f32 %v1091, %v1276
      %v1370 = vadd.f32 %v1092, %v1279
      %v1371 = vadd.f32 %v1093, %v1282
      %v1372 = vadd.f32 %v1094, %v1285
      %v1373 = vadd.f32 %v1095, %v1288
      %v1374 = vadd.f32 %v1096, %v1291
      %v1375 = vadd.f32 %v1097, %v1294
      %v1376 = vadd.f32 %v1098, %v1297
      %v1377 = vadd.f32 %v1099, %v1300
      %v1378 = vadd.f32 %v1100, %v1303
      %v1379 = vadd.f32 %v1101, %v1306
      %v1380 = vadd.f32 %v1102, %v1309
      %v1381 = vadd.f32 %v1103, %v1312
      %v1382 = vadd.f32 %v1104, %v1315
      %v1383 = vadd.f32 %v1105, %v1318
      %v1384 = vadd.f32 %v1106, %v1321
      %v1385 = vadd.f32 %v1107, %v1324
      %v1386 = vadd.f32 %v1108, %v1327
      %v1387 = vadd.f32 %v1109, %v1330
      %v1388 = vadd.f32 %v1110, %v1333
      %v1389 = vadd.f32 %v1111, %v1336
      %v1390 = vadd.f32 %v1112, %v1339
      %v1391 = vadd.f32 %v1113, %v1342
      %v1392 = vadd.f32 %v1114, %v1345
      %v1393 = vadd.f32 %v1115, %v1348
      %v1394 = vadd.f32 %v1116, %v1351
      %v1395 = vadd.f32 %v1117, %v1354
      %v1396 = vadd.f32 %v1118, %v1357
      %v1397 = vadd.f32 %v1119, %v1360
      %v1398 = vadd.f32 %v1120, %v1363
      %v1399 = vadd.f32 %v1121, %v1366
      %1400 = vst.msk [vmem:[#allocation4] sm:$0xff] %vm373, %v1368
      %1401 = vst.msk [vmem:[#allocation4 + $0x8] sm:$0xff] %vm373, %v1369
      %1402 = vst.msk [vmem:[#allocation4 + $0x10] sm:$0xff] %vm373, %v1370
      %1403 = vst.msk [vmem:[#allocation4 + $0x18] sm:$0xff] %vm373, %v1371
      %1404 = vst.msk [vmem:[#allocation4 + $0x20] sm:$0xff] %vm373, %v1372
      %1405 = vst.msk [vmem:[#allocation4 + $0x28] sm:$0xff] %vm373, %v1373
      %1406 = vst.msk [vmem:[#allocation4 + $0x30] sm:$0xff] %vm373, %v1374
      %1407 = vst.msk [vmem:[#allocation4 + $0x38] sm:$0xff] %vm373, %v1375
      %1408 = vst.msk [vmem:[#allocation4 + $0x40] sm:$0xff] %vm373, %v1376
      %1409 = vst.msk [vmem:[#allocation4 + $0x48] sm:$0xff] %vm373, %v1377
      %1410 = vst.msk [vmem:[#allocation4 + $0x50] sm:$0xff] %vm373, %v1378
      %1411 = vst.msk [vmem:[#allocation4 + $0x58] sm:$0xff] %vm373, %v1379
      %1412 = vst.msk [vmem:[#allocation4 + $0x60] sm:$0xff] %vm373, %v1380
      %1413 = vst.msk [vmem:[#allocation4 + $0x68] sm:$0xff] %vm373, %v1381
      %1414 = vst.msk [vmem:[#allocation4 + $0x70] sm:$0xff] %vm373, %v1382
      %1415 = vst.msk [vmem:[#allocation4 + $0x78] sm:$0xff] %vm373, %v1383
      %1416 = vst.msk [vmem:[#allocation4 + $0x80] sm:$0xff] %vm373, %v1384
      %1417 = vst.msk [vmem:[#allocation4 + $0x88] sm:$0xff] %vm373, %v1385
      %1418 = vst.msk [vmem:[#allocation4 + $0x90] sm:$0xff] %vm373, %v1386
      %1419 = vst.msk [vmem:[#allocation4 + $0x98] sm:$0xff] %vm373, %v1387
      %1420 = vst.msk [vmem:[#allocation4 + $0xa0] sm:$0xff] %vm373, %v1388
      %1421 = vst.msk [vmem:[#allocation4 + $0xa8] sm:$0xff] %vm373, %v1389
      %1422 = vst.msk [vmem:[#allocation4 + $0xb0] sm:$0xff] %vm373, %v1390
      %1423 = vst.msk [vmem:[#allocation4 + $0xb8] sm:$0xff] %vm373, %v1391
      %1424 = vst.msk [vmem:[#allocation4 + $0xc0] sm:$0xff] %vm373, %v1392
      %1425 = vst.msk [vmem:[#allocation4 + $0xc8] sm:$0xff] %vm373, %v1393
      %1426 = vst.msk [vmem:[#allocation4 + $0xd0] sm:$0xff] %vm373, %v1394
      %1427 = vst.msk [vmem:[#allocation4 + $0xd8] sm:$0xff] %vm373, %v1395
      %1428 = vst.msk [vmem:[#allocation4 + $0xe0] sm:$0xff] %vm373, %v1396
      %1429 = vst.msk [vmem:[#allocation4 + $0xe8] sm:$0xff] %vm373, %v1397
      %1430 = vst.msk [vmem:[#allocation4 + $0xf0] sm:$0xff] %vm373, %v1398
      %1431 = vst.msk [vmem:[#allocation4 + $0xf8] sm:$0xff] %vm373, %v1399
      %v1432 = vld [vmem:[#allocation4] sm:$0xff]
      %v1433 = vld [vmem:[#allocation4 + $0x8] sm:$0xff]
      %v1434 = vld [vmem:[#allocation4 + $0x10] sm:$0xff]
      %v1435 = vld [vmem:[#allocation4 + $0x18] sm:$0xff]
      %v1436 = vld [vmem:[#allocation4 + $0x20] sm:$0xff]
      %v1437 = vld [vmem:[#allocation4 + $0x28] sm:$0xff]
      %v1438 = vld [vmem:[#allocation4 + $0x30] sm:$0xff]
      %v1439 = vld [vmem:[#allocation4 + $0x38] sm:$0xff]
      %v1440 = vld [vmem:[#allocation4 + $0x40] sm:$0xff]
      %v1441 = vld [vmem:[#allocation4 + $0x48] sm:$0xff]
      %v1442 = vld [vmem:[#allocation4 + $0x50] sm:$0xff]
      %v1443 = vld [vmem:[#allocation4 + $0x58] sm:$0xff]
      %v1444 = vld [vmem:[#allocation4 + $0x60] sm:$0xff]
      %v1445 = vld [vmem:[#allocation4 + $0x68] sm:$0xff]
      %v1446 = vld [vmem:[#allocation4 + $0x70] sm:$0xff]
      %v1447 = vld [vmem:[#allocation4 + $0x78] sm:$0xff]
      %v1448 = vld [vmem:[#allocation4 + $0x80] sm:$0xff]
      %v1449 = vld [vmem:[#allocation4 + $0x88] sm:$0xff]
      %v1450 = vld [vmem:[#allocation4 + $0x90] sm:$0xff]
      %v1451 = vld [vmem:[#allocation4 + $0x98] sm:$0xff]
      %v1452 = vld [vmem:[#allocation4 + $0xa0] sm:$0xff]
      %v1453 = vld [vmem:[#allocation4 + $0xa8] sm:$0xff]
      %v1454 = vld [vmem:[#allocation4 + $0xb0] sm:$0xff]
      %v1455 = vld [vmem:[#allocation4 + $0xb8] sm:$0xff]
      %v1456 = vld [vmem:[#allocation4 + $0xc0] sm:$0xff]
      %v1457 = vld [vmem:[#allocation4 + $0xc8] sm:$0xff]
      %v1458 = vld [vmem:[#allocation4 + $0xd0] sm:$0xff]
      %v1459 = vld [vmem:[#allocation4 + $0xd8] sm:$0xff]
      %v1460 = vld [vmem:[#allocation4 + $0xe0] sm:$0xff]
      %v1461 = vld [vmem:[#allocation4 + $0xe8] sm:$0xff]
      %v1462 = vld [vmem:[#allocation4 + $0xf0] sm:$0xff]
      %v1463 = vld [vmem:[#allocation4 + $0xf8] sm:$0xff]
      %v1464 = vld [vmem:[%s340] sm:$0xff]
      %v1465 = vld [vmem:[%s340 + $0x8] sm:$0xff]
      %v1466 = vld [vmem:[%s340 + $0x18] sm:$0xff]
      %v1467 = vld [vmem:[%s340 + $0x20] sm:$0xff]
      %v1468 = vld [vmem:[%s340 + $0x30] sm:$0xff]
      %v1469 = vld [vmem:[%s340 + $0x38] sm:$0xff]
      %v1470 = vld [vmem:[%s340 + $0x48] sm:$0xff]
      %v1471 = vld [vmem:[%s340 + $0x50] sm:$0xff]
      %v1472 = vld [vmem:[%s340 + $0x60] sm:$0xff]
      %v1473 = vld [vmem:[%s340 + $0x68] sm:$0xff]
      %v1474 = vld [vmem:[%s340 + $0x78] sm:$0xff]
      %v1475 = vld [vmem:[%s340 + $0x80] sm:$0xff]
      %v1476 = vld [vmem:[%s340 + $0x90] sm:$0xff]
      %v1477 = vld [vmem:[%s340 + $0x98] sm:$0xff]
      %v1478 = vld [vmem:[%s340 + $0xa8] sm:$0xff]
      %v1479 = vld [vmem:[%s340 + $0xb0] sm:$0xff]
      %v1480 = vld [vmem:[%s340 + $0xc0] sm:$0xff]
      %v1481 = vld [vmem:[%s340 + $0xc8] sm:$0xff]
      %v1482 = vld [vmem:[%s340 + $0xd8] sm:$0xff]
      %v1483 = vld [vmem:[%s340 + $0xe0] sm:$0xff]
      %v1484 = vld [vmem:[%s340 + $0xf0] sm:$0xff]
      %v1485 = vld [vmem:[%s340 + $0xf8] sm:$0xff]
      %v1486 = vld [vmem:[%s340 + $0x108] sm:$0xff]
      %v1487 = vld [vmem:[%s340 + $0x110] sm:$0xff]
      %v1488 = vld [vmem:[%s340 + $0x120] sm:$0xff]
      %v1489 = vld [vmem:[%s340 + $0x128] sm:$0xff]
      %v1490 = vld [vmem:[%s340 + $0x138] sm:$0xff]
      %v1491 = vld [vmem:[%s340 + $0x140] sm:$0xff]
      %v1492 = vld [vmem:[%s340 + $0x150] sm:$0xff]
      %v1493 = vld [vmem:[%s340 + $0x158] sm:$0xff]
      %v1494 = vld [vmem:[%s340 + $0x168] sm:$0xff]
      %v1495 = vld [vmem:[%s340 + $0x170] sm:$0xff]
      %s1496 = scalar_lea.vmem %s1, 12
      %v1497 = vld [vmem:[%s1496] sm:$0xf]
      %v1499 = vsel %vm252, %v1464, 0
      %v1502 = vsel %vm252, %v1465, 0
      %v1505 = vsel %vm252, %v1466, 0
      %v1508 = vsel %vm252, %v1467, 0
      %v1511 = vsel %vm252, %v1468, 0
      %v1514 = vsel %vm252, %v1469, 0
      %v1517 = vsel %vm252, %v1470, 0
      %v1520 = vsel %vm252, %v1471, 0
      %v1523 = vsel %vm252, %v1472, 0
      %v1526 = vsel %vm252, %v1473, 0
      %v1529 = vsel %vm252, %v1474, 0
      %v1532 = vsel %vm252, %v1475, 0
      %v1535 = vsel %vm252, %v1476, 0
      %v1538 = vsel %vm252, %v1477, 0
      %v1541 = vsel %vm252, %v1478, 0
      %v1544 = vsel %vm252, %v1479, 0
      %v1547 = vsel %vm252, %v1480, 0
      %v1550 = vsel %vm252, %v1481, 0
      %v1553 = vsel %vm252, %v1482, 0
      %v1556 = vsel %vm252, %v1483, 0
      %v1559 = vsel %vm252, %v1484, 0
      %v1562 = vsel %vm252, %v1485, 0
      %v1565 = vsel %vm252, %v1486, 0
      %v1568 = vsel %vm252, %v1487, 0
      %v1571 = vsel %vm252, %v1488, 0
      %v1574 = vsel %vm252, %v1489, 0
      %v1577 = vsel %vm252, %v1490, 0
      %v1580 = vsel %vm252, %v1491, 0
      %v1583 = vsel %vm252, %v1492, 0
      %v1586 = vsel %vm252, %v1493, 0
      %v1589 = vsel %vm252, %v1494, 0
      %v1592 = vsel %vm252, %v1495, 0
      %v1595 = vsel %vm567, %v1497, 0
      %1597 = vmatpush.msra.mxu0 0.0
      %1598 = vmatpush.msra.mxu0 0.0
      %1599 = vmatpush.msra.mxu0 0.0
      %1600 = vmatpush.msra.mxu0 0.0
      %1601 = vmatpush.msra.mxu0 0.0
      %1602 = vmatpush.msra.mxu0 0.0
      %1603 = vmatpush.msra.mxu0 0.0
      %1604 = vmatpush.msra.mxu0 0.0
      %1605 = vmatpush.msra.mxu0 0.0
      %1606 = vmatpush.msra.mxu0 0.0
      %1607 = vmatpush.msra.mxu0 0.0
      %1608 = vmatpush.msra.mxu0 0.0
      %1609 = vmatpush.msra.mxu0 0.0
      %1610 = vmatpush.msra.mxu0 0.0
      %1611 = vmatpush.msra.mxu0 0.0
      %1612 = vmatpush.msra.mxu0 %v1595
      %1613 = vmatmul.f32.gmra.mxu0 %v1499
      %v1614 = vpop.f32.mrf.mxu0
      %v1615 = vadd.f32 0.0, %v1614
      %1616 = vmatmul.f32.gmra.mxu0 %v1502
      %v1617 = vpop.f32.mrf.mxu0
      %v1618 = vadd.f32 0.0, %v1617
      %1619 = vmatmul.f32.gmra.mxu0 %v1505
      %v1620 = vpop.f32.mrf.mxu0
      %v1621 = vadd.f32 0.0, %v1620
      %1622 = vmatmul.f32.gmra.mxu0 %v1508
      %v1623 = vpop.f32.mrf.mxu0
      %v1624 = vadd.f32 0.0, %v1623
      %1625 = vmatmul.f32.gmra.mxu0 %v1511
      %v1626 = vpop.f32.mrf.mxu0
      %v1627 = vadd.f32 0.0, %v1626
      %1628 = vmatmul.f32.gmra.mxu0 %v1514
      %v1629 = vpop.f32.mrf.mxu0
      %v1630 = vadd.f32 0.0, %v1629
      %1631 = vmatmul.f32.gmra.mxu0 %v1517
      %v1632 = vpop.f32.mrf.mxu0
      %v1633 = vadd.f32 0.0, %v1632
      %1634 = vmatmul.f32.gmra.mxu0 %v1520
      %v1635 = vpop.f32.mrf.mxu0
      %v1636 = vadd.f32 0.0, %v1635
      %1637 = vmatmul.f32.gmra.mxu0 %v1523
      %v1638 = vpop.f32.mrf.mxu0
      %v1639 = vadd.f32 0.0, %v1638
      %1640 = vmatmul.f32.gmra.mxu0 %v1526
      %v1641 = vpop.f32.mrf.mxu0
      %v1642 = vadd.f32 0.0, %v1641
      %1643 = vmatmul.f32.gmra.mxu0 %v1529
      %v1644 = vpop.f32.mrf.mxu0
      %v1645 = vadd.f32 0.0, %v1644
      %1646 = vmatmul.f32.gmra.mxu0 %v1532
      %v1647 = vpop.f32.mrf.mxu0
      %v1648 = vadd.f32 0.0, %v1647
      %1649 = vmatmul.f32.gmra.mxu0 %v1535
      %v1650 = vpop.f32.mrf.mxu0
      %v1651 = vadd.f32 0.0, %v1650
      %1652 = vmatmul.f32.gmra.mxu0 %v1538
      %v1653 = vpop.f32.mrf.mxu0
      %v1654 = vadd.f32 0.0, %v1653
      %1655 = vmatmul.f32.gmra.mxu0 %v1541
      %v1656 = vpop.f32.mrf.mxu0
      %v1657 = vadd.f32 0.0, %v1656
      %1658 = vmatmul.f32.gmra.mxu0 %v1544
      %v1659 = vpop.f32.mrf.mxu0
      %v1660 = vadd.f32 0.0, %v1659
      %1661 = vmatmul.f32.gmra.mxu0 %v1547
      %v1662 = vpop.f32.mrf.mxu0
      %v1663 = vadd.f32 0.0, %v1662
      %1664 = vmatmul.f32.gmra.mxu0 %v1550
      %v1665 = vpop.f32.mrf.mxu0
      %v1666 = vadd.f32 0.0, %v1665
      %1667 = vmatmul.f32.gmra.mxu0 %v1553
      %v1668 = vpop.f32.mrf.mxu0
      %v1669 = vadd.f32 0.0, %v1668
      %1670 = vmatmul.f32.gmra.mxu0 %v1556
      %v1671 = vpop.f32.mrf.mxu0
      %v1672 = vadd.f32 0.0, %v1671
      %1673 = vmatmul.f32.gmra.mxu0 %v1559
      %v1674 = vpop.f32.mrf.mxu0
      %v1675 = vadd.f32 0.0, %v1674
      %1676 = vmatmul.f32.gmra.mxu0 %v1562
      %v1677 = vpop.f32.mrf.mxu0
      %v1678 = vadd.f32 0.0, %v1677
      %1679 = vmatmul.f32.gmra.mxu0 %v1565
      %v1680 = vpop.f32.mrf.mxu0
      %v1681 = vadd.f32 0.0, %v1680
      %1682 = vmatmul.f32.gmra.mxu0 %v1568
      %v1683 = vpop.f32.mrf.mxu0
      %v1684 = vadd.f32 0.0, %v1683
      %1685 = vmatmul.f32.gmra.mxu0 %v1571
      %v1686 = vpop.f32.mrf.mxu0
      %v1687 = vadd.f32 0.0, %v1686
      %1688 = vmatmul.f32.gmra.mxu0 %v1574
      %v1689 = vpop.f32.mrf.mxu0
      %v1690 = vadd.f32 0.0, %v1689
      %1691 = vmatmul.f32.gmra.mxu0 %v1577
      %v1692 = vpop.f32.mrf.mxu0
      %v1693 = vadd.f32 0.0, %v1692
      %1694 = vmatmul.f32.gmra.mxu0 %v1580
      %v1695 = vpop.f32.mrf.mxu0
      %v1696 = vadd.f32 0.0, %v1695
      %1697 = vmatmul.f32.gmra.mxu0 %v1583
      %v1698 = vpop.f32.mrf.mxu0
      %v1699 = vadd.f32 0.0, %v1698
      %1700 = vmatmul.f32.gmra.mxu0 %v1586
      %v1701 = vpop.f32.mrf.mxu0
      %v1702 = vadd.f32 0.0, %v1701
      %1703 = vmatmul.f32.gmra.mxu0 %v1589
      %v1704 = vpop.f32.mrf.mxu0
      %v1705 = vadd.f32 0.0, %v1704
      %1706 = vmatmul.f32.gmra.mxu0 %v1592
      %v1707 = vpop.f32.mrf.mxu0
      %v1708 = vadd.f32 0.0, %v1707
      %1709 = vdwg.mxu0
      %v1710 = vadd.f32 %v1432, %v1615
      %v1711 = vadd.f32 %v1433, %v1618
      %v1712 = vadd.f32 %v1434, %v1621
      %v1713 = vadd.f32 %v1435, %v1624
      %v1714 = vadd.f32 %v1436, %v1627
      %v1715 = vadd.f32 %v1437, %v1630
      %v1716 = vadd.f32 %v1438, %v1633
      %v1717 = vadd.f32 %v1439, %v1636
      %v1718 = vadd.f32 %v1440, %v1639
      %v1719 = vadd.f32 %v1441, %v1642
      %v1720 = vadd.f32 %v1442, %v1645
      %v1721 = vadd.f32 %v1443, %v1648
      %v1722 = vadd.f32 %v1444, %v1651
      %v1723 = vadd.f32 %v1445, %v1654
      %v1724 = vadd.f32 %v1446, %v1657
      %v1725 = vadd.f32 %v1447, %v1660
      %v1726 = vadd.f32 %v1448, %v1663
      %v1727 = vadd.f32 %v1449, %v1666
      %v1728 = vadd.f32 %v1450, %v1669
      %v1729 = vadd.f32 %v1451, %v1672
      %v1730 = vadd.f32 %v1452, %v1675
      %v1731 = vadd.f32 %v1453, %v1678
      %v1732 = vadd.f32 %v1454, %v1681
      %v1733 = vadd.f32 %v1455, %v1684
      %v1734 = vadd.f32 %v1456, %v1687
      %v1735 = vadd.f32 %v1457, %v1690
      %v1736 = vadd.f32 %v1458, %v1693
      %v1737 = vadd.f32 %v1459, %v1696
      %v1738 = vadd.f32 %v1460, %v1699
      %v1739 = vadd.f32 %v1461, %v1702
      %v1740 = vadd.f32 %v1462, %v1705
      %v1741 = vadd.f32 %v1463, %v1708
      %1742 = vst.msk [vmem:[#allocation4] sm:$0xff] %vm373, %v1710
      %1743 = vst.msk [vmem:[#allocation4 + $0x8] sm:$0xff] %vm373, %v1711
      %1744 = vst.msk [vmem:[#allocation4 + $0x10] sm:$0xff] %vm373, %v1712
      %1745 = vst.msk [vmem:[#allocation4 + $0x18] sm:$0xff] %vm373, %v1713
      %1746 = vst.msk [vmem:[#allocation4 + $0x20] sm:$0xff] %vm373, %v1714
      %1747 = vst.msk [vmem:[#allocation4 + $0x28] sm:$0xff] %vm373, %v1715
      %1748 = vst.msk [vmem:[#allocation4 + $0x30] sm:$0xff] %vm373, %v1716
      %1749 = vst.msk [vmem:[#allocation4 + $0x38] sm:$0xff] %vm373, %v1717
      %1750 = vst.msk [vmem:[#allocation4 + $0x40] sm:$0xff] %vm373, %v1718
      %1751 = vst.msk [vmem:[#allocation4 + $0x48] sm:$0xff] %vm373, %v1719
      %1752 = vst.msk [vmem:[#allocation4 + $0x50] sm:$0xff] %vm373, %v1720
      %1753 = vst.msk [vmem:[#allocation4 + $0x58] sm:$0xff] %vm373, %v1721
      %1754 = vst.msk [vmem:[#allocation4 + $0x60] sm:$0xff] %vm373, %v1722
      %1755 = vst.msk [vmem:[#allocation4 + $0x68] sm:$0xff] %vm373, %v1723
      %1756 = vst.msk [vmem:[#allocation4 + $0x70] sm:$0xff] %vm373, %v1724
      %1757 = vst.msk [vmem:[#allocation4 + $0x78] sm:$0xff] %vm373, %v1725
      %1758 = vst.msk [vmem:[#allocation4 + $0x80] sm:$0xff] %vm373, %v1726
      %1759 = vst.msk [vmem:[#allocation4 + $0x88] sm:$0xff] %vm373, %v1727
      %1760 = vst.msk [vmem:[#allocation4 + $0x90] sm:$0xff] %vm373, %v1728
      %1761 = vst.msk [vmem:[#allocation4 + $0x98] sm:$0xff] %vm373, %v1729
      %1762 = vst.msk [vmem:[#allocation4 + $0xa0] sm:$0xff] %vm373, %v1730
      %1763 = vst.msk [vmem:[#allocation4 + $0xa8] sm:$0xff] %vm373, %v1731
      %1764 = vst.msk [vmem:[#allocation4 + $0xb0] sm:$0xff] %vm373, %v1732
      %1765 = vst.msk [vmem:[#allocation4 + $0xb8] sm:$0xff] %vm373, %v1733
      %1766 = vst.msk [vmem:[#allocation4 + $0xc0] sm:$0xff] %vm373, %v1734
      %1767 = vst.msk [vmem:[#allocation4 + $0xc8] sm:$0xff] %vm373, %v1735
      %1768 = vst.msk [vmem:[#allocation4 + $0xd0] sm:$0xff] %vm373, %v1736
      %1769 = vst.msk [vmem:[#allocation4 + $0xd8] sm:$0xff] %vm373, %v1737
      %1770 = vst.msk [vmem:[#allocation4 + $0xe0] sm:$0xff] %vm373, %v1738
      %1771 = vst.msk [vmem:[#allocation4 + $0xe8] sm:$0xff] %vm373, %v1739
      %1772 = vst.msk [vmem:[#allocation4 + $0xf0] sm:$0xff] %vm373, %v1740
      %1773 = vst.msk [vmem:[#allocation4 + $0xf8] sm:$0xff] %vm373, %v1741
      %v1774 = vld [vmem:[#allocation4] sm:$0xff]
      %v1775 = vld [vmem:[#allocation4 + $0x8] sm:$0xff]
      %v1776 = vld [vmem:[#allocation4 + $0x10] sm:$0xff]
      %v1777 = vld [vmem:[#allocation4 + $0x18] sm:$0xff]
      %v1778 = vld [vmem:[#allocation4 + $0x20] sm:$0xff]
      %v1779 = vld [vmem:[#allocation4 + $0x28] sm:$0xff]
      %v1780 = vld [vmem:[#allocation4 + $0x30] sm:$0xff]
      %v1781 = vld [vmem:[#allocation4 + $0x38] sm:$0xff]
      %v1782 = vld [vmem:[#allocation4 + $0x40] sm:$0xff]
      %v1783 = vld [vmem:[#allocation4 + $0x48] sm:$0xff]
      %v1784 = vld [vmem:[#allocation4 + $0x50] sm:$0xff]
      %v1785 = vld [vmem:[#allocation4 + $0x58] sm:$0xff]
      %v1786 = vld [vmem:[#allocation4 + $0x60] sm:$0xff]
      %v1787 = vld [vmem:[#allocation4 + $0x68] sm:$0xff]
      %v1788 = vld [vmem:[#allocation4 + $0x70] sm:$0xff]
      %v1789 = vld [vmem:[#allocation4 + $0x78] sm:$0xff]
      %v1790 = vld [vmem:[#allocation4 + $0x80] sm:$0xff]
      %v1791 = vld [vmem:[#allocation4 + $0x88] sm:$0xff]
      %v1792 = vld [vmem:[#allocation4 + $0x90] sm:$0xff]
      %v1793 = vld [vmem:[#allocation4 + $0x98] sm:$0xff]
      %v1794 = vld [vmem:[#allocation4 + $0xa0] sm:$0xff]
      %v1795 = vld [vmem:[#allocation4 + $0xa8] sm:$0xff]
      %v1796 = vld [vmem:[#allocation4 + $0xb0] sm:$0xff]
      %v1797 = vld [vmem:[#allocation4 + $0xb8] sm:$0xff]
      %v1798 = vld [vmem:[#allocation4 + $0xc0] sm:$0xff]
      %v1799 = vld [vmem:[#allocation4 + $0xc8] sm:$0xff]
      %v1800 = vld [vmem:[#allocation4 + $0xd0] sm:$0xff]
      %v1801 = vld [vmem:[#allocation4 + $0xd8] sm:$0xff]
      %v1802 = vld [vmem:[#allocation4 + $0xe0] sm:$0xff]
      %v1803 = vld [vmem:[#allocation4 + $0xe8] sm:$0xff]
      %v1804 = vld [vmem:[#allocation4 + $0xf0] sm:$0xff]
      %v1805 = vld [vmem:[#allocation4 + $0xf8] sm:$0xff]
      %v1806 = vld [vmem:[%s340 + $0x1] sm:$0xff]
      %v1807 = vld [vmem:[%s340 + $0x9] sm:$0xff]
      %v1808 = vld [vmem:[%s340 + $0x19] sm:$0xff]
      %v1809 = vld [vmem:[%s340 + $0x21] sm:$0xff]
      %v1810 = vld [vmem:[%s340 + $0x31] sm:$0xff]
      %v1811 = vld [vmem:[%s340 + $0x39] sm:$0xff]
      %v1812 = vld [vmem:[%s340 + $0x49] sm:$0xff]
      %v1813 = vld [vmem:[%s340 + $0x51] sm:$0xff]
      %v1814 = vld [vmem:[%s340 + $0x61] sm:$0xff]
      %v1815 = vld [vmem:[%s340 + $0x69] sm:$0xff]
      %v1816 = vld [vmem:[%s340 + $0x79] sm:$0xff]
      %v1817 = vld [vmem:[%s340 + $0x81] sm:$0xff]
      %v1818 = vld [vmem:[%s340 + $0x91] sm:$0xff]
      %v1819 = vld [vmem:[%s340 + $0x99] sm:$0xff]
      %v1820 = vld [vmem:[%s340 + $0xa9] sm:$0xff]
      %v1821 = vld [vmem:[%s340 + $0xb1] sm:$0xff]
      %v1822 = vld [vmem:[%s340 + $0xc1] sm:$0xff]
      %v1823 = vld [vmem:[%s340 + $0xc9] sm:$0xff]
      %v1824 = vld [vmem:[%s340 + $0xd9] sm:$0xff]
      %v1825 = vld [vmem:[%s340 + $0xe1] sm:$0xff]
      %v1826 = vld [vmem:[%s340 + $0xf1] sm:$0xff]
      %v1827 = vld [vmem:[%s340 + $0xf9] sm:$0xff]
      %v1828 = vld [vmem:[%s340 + $0x109] sm:$0xff]
      %v1829 = vld [vmem:[%s340 + $0x111] sm:$0xff]
      %v1830 = vld [vmem:[%s340 + $0x121] sm:$0xff]
      %v1831 = vld [vmem:[%s340 + $0x129] sm:$0xff]
      %v1832 = vld [vmem:[%s340 + $0x139] sm:$0xff]
      %v1833 = vld [vmem:[%s340 + $0x141] sm:$0xff]
      %v1834 = vld [vmem:[%s340 + $0x151] sm:$0xff]
      %v1835 = vld [vmem:[%s340 + $0x159] sm:$0xff]
      %v1836 = vld [vmem:[%s340 + $0x169] sm:$0xff]
      %v1837 = vld [vmem:[%s340 + $0x171] sm:$0xff]
      %s1838 = scalar_lea.vmem %s1, 16
      %v1839 = vld [vmem:[%s1838] sm:$0xf]
      %v1841 = vsel %vm252, %v1806, 0
      %v1844 = vsel %vm252, %v1807, 0
      %v1847 = vsel %vm252, %v1808, 0
      %v1850 = vsel %vm252, %v1809, 0
      %v1853 = vsel %vm252, %v1810, 0
      %v1856 = vsel %vm252, %v1811, 0
      %v1859 = vsel %vm252, %v1812, 0
      %v1862 = vsel %vm252, %v1813, 0
      %v1865 = vsel %vm252, %v1814, 0
      %v1868 = vsel %vm252, %v1815, 0
      %v1871 = vsel %vm252, %v1816, 0
      %v1874 = vsel %vm252, %v1817, 0
      %v1877 = vsel %vm252, %v1818, 0
      %v1880 = vsel %vm252, %v1819, 0
      %v1883 = vsel %vm252, %v1820, 0
      %v1886 = vsel %vm252, %v1821, 0
      %v1889 = vsel %vm252, %v1822, 0
      %v1892 = vsel %vm252, %v1823, 0
      %v1895 = vsel %vm252, %v1824, 0
      %v1898 = vsel %vm252, %v1825, 0
      %v1901 = vsel %vm252, %v1826, 0
      %v1904 = vsel %vm252, %v1827, 0
      %v1907 = vsel %vm252, %v1828, 0
      %v1910 = vsel %vm252, %v1829, 0
      %v1913 = vsel %vm252, %v1830, 0
      %v1916 = vsel %vm252, %v1831, 0
      %v1919 = vsel %vm252, %v1832, 0
      %v1922 = vsel %vm252, %v1833, 0
      %v1925 = vsel %vm252, %v1834, 0
      %v1928 = vsel %vm252, %v1835, 0
      %v1931 = vsel %vm252, %v1836, 0
      %v1934 = vsel %vm252, %v1837, 0
      %v1937 = vsel %vm567, %v1839, 0
      %1939 = vmatpush.msra.mxu0 0.0
      %1940 = vmatpush.msra.mxu0 0.0
      %1941 = vmatpush.msra.mxu0 0.0
      %1942 = vmatpush.msra.mxu0 0.0
      %1943 = vmatpush.msra.mxu0 0.0
      %1944 = vmatpush.msra.mxu0 0.0
      %1945 = vmatpush.msra.mxu0 0.0
      %1946 = vmatpush.msra.mxu0 0.0
      %1947 = vmatpush.msra.mxu0 0.0
      %1948 = vmatpush.msra.mxu0 0.0
      %1949 = vmatpush.msra.mxu0 0.0
      %1950 = vmatpush.msra.mxu0 0.0
      %1951 = vmatpush.msra.mxu0 0.0
      %1952 = vmatpush.msra.mxu0 0.0
      %1953 = vmatpush.msra.mxu0 0.0
      %1954 = vmatpush.msra.mxu0 %v1937
      %1955 = vmatmul.f32.gmra.mxu0 %v1841
      %v1956 = vpop.f32.mrf.mxu0
      %v1957 = vadd.f32 0.0, %v1956
      %1958 = vmatmul.f32.gmra.mxu0 %v1844
      %v1959 = vpop.f32.mrf.mxu0
      %v1960 = vadd.f32 0.0, %v1959
      %1961 = vmatmul.f32.gmra.mxu0 %v1847
      %v1962 = vpop.f32.mrf.mxu0
      %v1963 = vadd.f32 0.0, %v1962
      %1964 = vmatmul.f32.gmra.mxu0 %v1850
      %v1965 = vpop.f32.mrf.mxu0
      %v1966 = vadd.f32 0.0, %v1965
      %1967 = vmatmul.f32.gmra.mxu0 %v1853
      %v1968 = vpop.f32.mrf.mxu0
      %v1969 = vadd.f32 0.0, %v1968
      %1970 = vmatmul.f32.gmra.mxu0 %v1856
      %v1971 = vpop.f32.mrf.mxu0
      %v1972 = vadd.f32 0.0, %v1971
      %1973 = vmatmul.f32.gmra.mxu0 %v1859
      %v1974 = vpop.f32.mrf.mxu0
      %v1975 = vadd.f32 0.0, %v1974
      %1976 = vmatmul.f32.gmra.mxu0 %v1862
      %v1977 = vpop.f32.mrf.mxu0
      %v1978 = vadd.f32 0.0, %v1977
      %1979 = vmatmul.f32.gmra.mxu0 %v1865
      %v1980 = vpop.f32.mrf.mxu0
      %v1981 = vadd.f32 0.0, %v1980
      %1982 = vmatmul.f32.gmra.mxu0 %v1868
      %v1983 = vpop.f32.mrf.mxu0
      %v1984 = vadd.f32 0.0, %v1983
      %1985 = vmatmul.f32.gmra.mxu0 %v1871
      %v1986 = vpop.f32.mrf.mxu0
      %v1987 = vadd.f32 0.0, %v1986
      %1988 = vmatmul.f32.gmra.mxu0 %v1874
      %v1989 = vpop.f32.mrf.mxu0
      %v1990 = vadd.f32 0.0, %v1989
      %1991 = vmatmul.f32.gmra.mxu0 %v1877
      %v1992 = vpop.f32.mrf.mxu0
      %v1993 = vadd.f32 0.0, %v1992
      %1994 = vmatmul.f32.gmra.mxu0 %v1880
      %v1995 = vpop.f32.mrf.mxu0
      %v1996 = vadd.f32 0.0, %v1995
      %1997 = vmatmul.f32.gmra.mxu0 %v1883
      %v1998 = vpop.f32.mrf.mxu0
      %v1999 = vadd.f32 0.0, %v1998
      %2000 = vmatmul.f32.gmra.mxu0 %v1886
      %v2001 = vpop.f32.mrf.mxu0
      %v2002 = vadd.f32 0.0, %v2001
      %2003 = vmatmul.f32.gmra.mxu0 %v1889
      %v2004 = vpop.f32.mrf.mxu0
      %v2005 = vadd.f32 0.0, %v2004
      %2006 = vmatmul.f32.gmra.mxu0 %v1892
      %v2007 = vpop.f32.mrf.mxu0
      %v2008 = vadd.f32 0.0, %v2007
      %2009 = vmatmul.f32.gmra.mxu0 %v1895
      %v2010 = vpop.f32.mrf.mxu0
      %v2011 = vadd.f32 0.0, %v2010
      %2012 = vmatmul.f32.gmra.mxu0 %v1898
      %v2013 = vpop.f32.mrf.mxu0
      %v2014 = vadd.f32 0.0, %v2013
      %2015 = vmatmul.f32.gmra.mxu0 %v1901
      %v2016 = vpop.f32.mrf.mxu0
      %v2017 = vadd.f32 0.0, %v2016
      %2018 = vmatmul.f32.gmra.mxu0 %v1904
      %v2019 = vpop.f32.mrf.mxu0
      %v2020 = vadd.f32 0.0, %v2019
      %2021 = vmatmul.f32.gmra.mxu0 %v1907
      %v2022 = vpop.f32.mrf.mxu0
      %v2023 = vadd.f32 0.0, %v2022
      %2024 = vmatmul.f32.gmra.mxu0 %v1910
      %v2025 = vpop.f32.mrf.mxu0
      %v2026 = vadd.f32 0.0, %v2025
      %2027 = vmatmul.f32.gmra.mxu0 %v1913
      %v2028 = vpop.f32.mrf.mxu0
      %v2029 = vadd.f32 0.0, %v2028
      %2030 = vmatmul.f32.gmra.mxu0 %v1916
      %v2031 = vpop.f32.mrf.mxu0
      %v2032 = vadd.f32 0.0, %v2031
      %2033 = vmatmul.f32.gmra.mxu0 %v1919
      %v2034 = vpop.f32.mrf.mxu0
      %v2035 = vadd.f32 0.0, %v2034
      %2036 = vmatmul.f32.gmra.mxu0 %v1922
      %v2037 = vpop.f32.mrf.mxu0
      %v2038 = vadd.f32 0.0, %v2037
      %2039 = vmatmul.f32.gmra.mxu0 %v1925
      %v2040 = vpop.f32.mrf.mxu0
      %v2041 = vadd.f32 0.0, %v2040
      %2042 = vmatmul.f32.gmra.mxu0 %v1928
      %v2043 = vpop.f32.mrf.mxu0
      %v2044 = vadd.f32 0.0, %v2043
      %2045 = vmatmul.f32.gmra.mxu0 %v1931
      %v2046 = vpop.f32.mrf.mxu0
      %v2047 = vadd.f32 0.0, %v2046
      %2048 = vmatmul.f32.gmra.mxu0 %v1934
      %v2049 = vpop.f32.mrf.mxu0
      %v2050 = vadd.f32 0.0, %v2049
      %2051 = vdwg.mxu0
      %v2052 = vadd.f32 %v1774, %v1957
      %v2053 = vadd.f32 %v1775, %v1960
      %v2054 = vadd.f32 %v1776, %v1963
      %v2055 = vadd.f32 %v1777, %v1966
      %v2056 = vadd.f32 %v1778, %v1969
      %v2057 = vadd.f32 %v1779, %v1972
      %v2058 = vadd.f32 %v1780, %v1975
      %v2059 = vadd.f32 %v1781, %v1978
      %v2060 = vadd.f32 %v1782, %v1981
      %v2061 = vadd.f32 %v1783, %v1984
      %v2062 = vadd.f32 %v1784, %v1987
      %v2063 = vadd.f32 %v1785, %v1990
      %v2064 = vadd.f32 %v1786, %v1993
      %v2065 = vadd.f32 %v1787, %v1996
      %v2066 = vadd.f32 %v1788, %v1999
      %v2067 = vadd.f32 %v1789, %v2002
      %v2068 = vadd.f32 %v1790, %v2005
      %v2069 = vadd.f32 %v1791, %v2008
      %v2070 = vadd.f32 %v1792, %v2011
      %v2071 = vadd.f32 %v1793, %v2014
      %v2072 = vadd.f32 %v1794, %v2017
      %v2073 = vadd.f32 %v1795, %v2020
      %v2074 = vadd.f32 %v1796, %v2023
      %v2075 = vadd.f32 %v1797, %v2026
      %v2076 = vadd.f32 %v1798, %v2029
      %v2077 = vadd.f32 %v1799, %v2032
      %v2078 = vadd.f32 %v1800, %v2035
      %v2079 = vadd.f32 %v1801, %v2038
      %v2080 = vadd.f32 %v1802, %v2041
      %v2081 = vadd.f32 %v1803, %v2044
      %v2082 = vadd.f32 %v1804, %v2047
      %v2083 = vadd.f32 %v1805, %v2050
      %2084 = vst.msk [vmem:[#allocation4] sm:$0xff] %vm373, %v2052
      %2085 = vst.msk [vmem:[#allocation4 + $0x8] sm:$0xff] %vm373, %v2053
      %2086 = vst.msk [vmem:[#allocation4 + $0x10] sm:$0xff] %vm373, %v2054
      %2087 = vst.msk [vmem:[#allocation4 + $0x18] sm:$0xff] %vm373, %v2055
      %2088 = vst.msk [vmem:[#allocation4 + $0x20] sm:$0xff] %vm373, %v2056
      %2089 = vst.msk [vmem:[#allocation4 + $0x28] sm:$0xff] %vm373, %v2057
      %2090 = vst.msk [vmem:[#allocation4 + $0x30] sm:$0xff] %vm373, %v2058
      %2091 = vst.msk [vmem:[#allocation4 + $0x38] sm:$0xff] %vm373, %v2059
      %2092 = vst.msk [vmem:[#allocation4 + $0x40] sm:$0xff] %vm373, %v2060
      %2093 = vst.msk [vmem:[#allocation4 + $0x48] sm:$0xff] %vm373, %v2061
      %2094 = vst.msk [vmem:[#allocation4 + $0x50] sm:$0xff] %vm373, %v2062
      %2095 = vst.msk [vmem:[#allocation4 + $0x58] sm:$0xff] %vm373, %v2063
      %2096 = vst.msk [vmem:[#allocation4 + $0x60] sm:$0xff] %vm373, %v2064
      %2097 = vst.msk [vmem:[#allocation4 + $0x68] sm:$0xff] %vm373, %v2065
      %2098 = vst.msk [vmem:[#allocation4 + $0x70] sm:$0xff] %vm373, %v2066
      %2099 = vst.msk [vmem:[#allocation4 + $0x78] sm:$0xff] %vm373, %v2067
      %2100 = vst.msk [vmem:[#allocation4 + $0x80] sm:$0xff] %vm373, %v2068
      %2101 = vst.msk [vmem:[#allocation4 + $0x88] sm:$0xff] %vm373, %v2069
      %2102 = vst.msk [vmem:[#allocation4 + $0x90] sm:$0xff] %vm373, %v2070
      %2103 = vst.msk [vmem:[#allocation4 + $0x98] sm:$0xff] %vm373, %v2071
      %2104 = vst.msk [vmem:[#allocation4 + $0xa0] sm:$0xff] %vm373, %v2072
      %2105 = vst.msk [vmem:[#allocation4 + $0xa8] sm:$0xff] %vm373, %v2073
      %2106 = vst.msk [vmem:[#allocation4 + $0xb0] sm:$0xff] %vm373, %v2074
      %2107 = vst.msk [vmem:[#allocation4 + $0xb8] sm:$0xff] %vm373, %v2075
      %2108 = vst.msk [vmem:[#allocation4 + $0xc0] sm:$0xff] %vm373, %v2076
      %2109 = vst.msk [vmem:[#allocation4 + $0xc8] sm:$0xff] %vm373, %v2077
      %2110 = vst.msk [vmem:[#allocation4 + $0xd0] sm:$0xff] %vm373, %v2078
      %2111 = vst.msk [vmem:[#allocation4 + $0xd8] sm:$0xff] %vm373, %v2079
      %2112 = vst.msk [vmem:[#allocation4 + $0xe0] sm:$0xff] %vm373, %v2080
      %2113 = vst.msk [vmem:[#allocation4 + $0xe8] sm:$0xff] %vm373, %v2081
      %2114 = vst.msk [vmem:[#allocation4 + $0xf0] sm:$0xff] %vm373, %v2082
      %2115 = vst.msk [vmem:[#allocation4 + $0xf8] sm:$0xff] %vm373, %v2083
      %v2116 = vld [vmem:[#allocation4] sm:$0xff]
      %v2117 = vld [vmem:[#allocation4 + $0x8] sm:$0xff]
      %v2118 = vld [vmem:[#allocation4 + $0x10] sm:$0xff]
      %v2119 = vld [vmem:[#allocation4 + $0x18] sm:$0xff]
      %v2120 = vld [vmem:[#allocation4 + $0x20] sm:$0xff]
      %v2121 = vld [vmem:[#allocation4 + $0x28] sm:$0xff]
      %v2122 = vld [vmem:[#allocation4 + $0x30] sm:$0xff]
      %v2123 = vld [vmem:[#allocation4 + $0x38] sm:$0xff]
      %v2124 = vld [vmem:[#allocation4 + $0x40] sm:$0xff]
      %v2125 = vld [vmem:[#allocation4 + $0x48] sm:$0xff]
      %v2126 = vld [vmem:[#allocation4 + $0x50] sm:$0xff]
      %v2127 = vld [vmem:[#allocation4 + $0x58] sm:$0xff]
      %v2128 = vld [vmem:[#allocation4 + $0x60] sm:$0xff]
      %v2129 = vld [vmem:[#allocation4 + $0x68] sm:$0xff]
      %v2130 = vld [vmem:[#allocation4 + $0x70] sm:$0xff]
      %v2131 = vld [vmem:[#allocation4 + $0x78] sm:$0xff]
      %v2132 = vld [vmem:[#allocation4 + $0x80] sm:$0xff]
      %v2133 = vld [vmem:[#allocation4 + $0x88] sm:$0xff]
      %v2134 = vld [vmem:[#allocation4 + $0x90] sm:$0xff]
      %v2135 = vld [vmem:[#allocation4 + $0x98] sm:$0xff]
      %v2136 = vld [vmem:[#allocation4 + $0xa0] sm:$0xff]
      %v2137 = vld [vmem:[#allocation4 + $0xa8] sm:$0xff]
      %v2138 = vld [vmem:[#allocation4 + $0xb0] sm:$0xff]
      %v2139 = vld [vmem:[#allocation4 + $0xb8] sm:$0xff]
      %v2140 = vld [vmem:[#allocation4 + $0xc0] sm:$0xff]
      %v2141 = vld [vmem:[#allocation4 + $0xc8] sm:$0xff]
      %v2142 = vld [vmem:[#allocation4 + $0xd0] sm:$0xff]
      %v2143 = vld [vmem:[#allocation4 + $0xd8] sm:$0xff]
      %v2144 = vld [vmem:[#allocation4 + $0xe0] sm:$0xff]
      %v2145 = vld [vmem:[#allocation4 + $0xe8] sm:$0xff]
      %v2146 = vld [vmem:[#allocation4 + $0xf0] sm:$0xff]
      %v2147 = vld [vmem:[#allocation4 + $0xf8] sm:$0xff]
      %v2148 = vld [vmem:[%s340 + $0x2] sm:$0xff]
      %v2149 = vld [vmem:[%s340 + $0xa] sm:$0xff]
      %v2150 = vld [vmem:[%s340 + $0x1a] sm:$0xff]
      %v2151 = vld [vmem:[%s340 + $0x22] sm:$0xff]
      %v2152 = vld [vmem:[%s340 + $0x32] sm:$0xff]
      %v2153 = vld [vmem:[%s340 + $0x3a] sm:$0xff]
      %v2154 = vld [vmem:[%s340 + $0x4a] sm:$0xff]
      %v2155 = vld [vmem:[%s340 + $0x52] sm:$0xff]
      %v2156 = vld [vmem:[%s340 + $0x62] sm:$0xff]
      %v2157 = vld [vmem:[%s340 + $0x6a] sm:$0xff]
      %v2158 = vld [vmem:[%s340 + $0x7a] sm:$0xff]
      %v2159 = vld [vmem:[%s340 + $0x82] sm:$0xff]
      %v2160 = vld [vmem:[%s340 + $0x92] sm:$0xff]
      %v2161 = vld [vmem:[%s340 + $0x9a] sm:$0xff]
      %v2162 = vld [vmem:[%s340 + $0xaa] sm:$0xff]
      %v2163 = vld [vmem:[%s340 + $0xb2] sm:$0xff]
      %v2164 = vld [vmem:[%s340 + $0xc2] sm:$0xff]
      %v2165 = vld [vmem:[%s340 + $0xca] sm:$0xff]
      %v2166 = vld [vmem:[%s340 + $0xda] sm:$0xff]
      %v2167 = vld [vmem:[%s340 + $0xe2] sm:$0xff]
      %v2168 = vld [vmem:[%s340 + $0xf2] sm:$0xff]
      %v2169 = vld [vmem:[%s340 + $0xfa] sm:$0xff]
      %v2170 = vld [vmem:[%s340 + $0x10a] sm:$0xff]
      %v2171 = vld [vmem:[%s340 + $0x112] sm:$0xff]
      %v2172 = vld [vmem:[%s340 + $0x122] sm:$0xff]
      %v2173 = vld [vmem:[%s340 + $0x12a] sm:$0xff]
      %v2174 = vld [vmem:[%s340 + $0x13a] sm:$0xff]
      %v2175 = vld [vmem:[%s340 + $0x142] sm:$0xff]
      %v2176 = vld [vmem:[%s340 + $0x152] sm:$0xff]
      %v2177 = vld [vmem:[%s340 + $0x15a] sm:$0xff]
      %v2178 = vld [vmem:[%s340 + $0x16a] sm:$0xff]
      %v2179 = vld [vmem:[%s340 + $0x172] sm:$0xff]
      %s2180 = scalar_lea.vmem %s1, 20
      %v2181 = vld [vmem:[%s2180] sm:$0xf]
      %v2183 = vsel %vm252, %v2148, 0
      %v2186 = vsel %vm252, %v2149, 0
      %v2189 = vsel %vm252, %v2150, 0
      %v2192 = vsel %vm252, %v2151, 0
      %v2195 = vsel %vm252, %v2152, 0
      %v2198 = vsel %vm252, %v2153, 0
      %v2201 = vsel %vm252, %v2154, 0
      %v2204 = vsel %vm252, %v2155, 0
      %v2207 = vsel %vm252, %v2156, 0
      %v2210 = vsel %vm252, %v2157, 0
      %v2213 = vsel %vm252, %v2158, 0
      %v2216 = vsel %vm252, %v2159, 0
      %v2219 = vsel %vm252, %v2160, 0
      %v2222 = vsel %vm252, %v2161, 0
      %v2225 = vsel %vm252, %v2162, 0
      %v2228 = vsel %vm252, %v2163, 0
      %v2231 = vsel %vm252, %v2164, 0
      %v2234 = vsel %vm252, %v2165, 0
      %v2237 = vsel %vm252, %v2166, 0
      %v2240 = vsel %vm252, %v2167, 0
      %v2243 = vsel %vm252, %v2168, 0
      %v2246 = vsel %vm252, %v2169, 0
      %v2249 = vsel %vm252, %v2170, 0
      %v2252 = vsel %vm252, %v2171, 0
      %v2255 = vsel %vm252, %v2172, 0
      %v2258 = vsel %vm252, %v2173, 0
      %v2261 = vsel %vm252, %v2174, 0
      %v2264 = vsel %vm252, %v2175, 0
      %v2267 = vsel %vm252, %v2176, 0
      %v2270 = vsel %vm252, %v2177, 0
      %v2273 = vsel %vm252, %v2178, 0
      %v2276 = vsel %vm252, %v2179, 0
      %v2279 = vsel %vm567, %v2181, 0
      %2281 = vmatpush.msra.mxu0 0.0
      %2282 = vmatpush.msra.mxu0 0.0
      %2283 = vmatpush.msra.mxu0 0.0
      %2284 = vmatpush.msra.mxu0 0.0
      %2285 = vmatpush.msra.mxu0 0.0
      %2286 = vmatpush.msra.mxu0 0.0
      %2287 = vmatpush.msra.mxu0 0.0
      %2288 = vmatpush.msra.mxu0 0.0
      %2289 = vmatpush.msra.mxu0 0.0
      %2290 = vmatpush.msra.mxu0 0.0
      %2291 = vmatpush.msra.mxu0 0.0
      %2292 = vmatpush.msra.mxu0 0.0
      %2293 = vmatpush.msra.mxu0 0.0
      %2294 = vmatpush.msra.mxu0 0.0
      %2295 = vmatpush.msra.mxu0 0.0
      %2296 = vmatpush.msra.mxu0 %v2279
      %2297 = vmatmul.f32.gmra.mxu0 %v2183
      %v2298 = vpop.f32.mrf.mxu0
      %v2299 = vadd.f32 0.0, %v2298
      %2300 = vmatmul.f32.gmra.mxu0 %v2186
      %v2301 = vpop.f32.mrf.mxu0
      %v2302 = vadd.f32 0.0, %v2301
      %2303 = vmatmul.f32.gmra.mxu0 %v2189
      %v2304 = vpop.f32.mrf.mxu0
      %v2305 = vadd.f32 0.0, %v2304
      %2306 = vmatmul.f32.gmra.mxu0 %v2192
      %v2307 = vpop.f32.mrf.mxu0
      %v2308 = vadd.f32 0.0, %v2307
      %2309 = vmatmul.f32.gmra.mxu0 %v2195
      %v2310 = vpop.f32.mrf.mxu0
      %v2311 = vadd.f32 0.0, %v2310
      %2312 = vmatmul.f32.gmra.mxu0 %v2198
      %v2313 = vpop.f32.mrf.mxu0
      %v2314 = vadd.f32 0.0, %v2313
      %2315 = vmatmul.f32.gmra.mxu0 %v2201
      %v2316 = vpop.f32.mrf.mxu0
      %v2317 = vadd.f32 0.0, %v2316
      %2318 = vmatmul.f32.gmra.mxu0 %v2204
      %v2319 = vpop.f32.mrf.mxu0
      %v2320 = vadd.f32 0.0, %v2319
      %2321 = vmatmul.f32.gmra.mxu0 %v2207
      %v2322 = vpop.f32.mrf.mxu0
      %v2323 = vadd.f32 0.0, %v2322
      %2324 = vmatmul.f32.gmra.mxu0 %v2210
      %v2325 = vpop.f32.mrf.mxu0
      %v2326 = vadd.f32 0.0, %v2325
      %2327 = vmatmul.f32.gmra.mxu0 %v2213
      %v2328 = vpop.f32.mrf.mxu0
      %v2329 = vadd.f32 0.0, %v2328
      %2330 = vmatmul.f32.gmra.mxu0 %v2216
      %v2331 = vpop.f32.mrf.mxu0
      %v2332 = vadd.f32 0.0, %v2331
      %2333 = vmatmul.f32.gmra.mxu0 %v2219
      %v2334 = vpop.f32.mrf.mxu0
      %v2335 = vadd.f32 0.0, %v2334
      %2336 = vmatmul.f32.gmra.mxu0 %v2222
      %v2337 = vpop.f32.mrf.mxu0
      %v2338 = vadd.f32 0.0, %v2337
      %2339 = vmatmul.f32.gmra.mxu0 %v2225
      %v2340 = vpop.f32.mrf.mxu0
      %v2341 = vadd.f32 0.0, %v2340
      %2342 = vmatmul.f32.gmra.mxu0 %v2228
      %v2343 = vpop.f32.mrf.mxu0
      %v2344 = vadd.f32 0.0, %v2343
      %2345 = vmatmul.f32.gmra.mxu0 %v2231
      %v2346 = vpop.f32.mrf.mxu0
      %v2347 = vadd.f32 0.0, %v2346
      %2348 = vmatmul.f32.gmra.mxu0 %v2234
      %v2349 = vpop.f32.mrf.mxu0
      %v2350 = vadd.f32 0.0, %v2349
      %2351 = vmatmul.f32.gmra.mxu0 %v2237
      %v2352 = vpop.f32.mrf.mxu0
      %v2353 = vadd.f32 0.0, %v2352
      %2354 = vmatmul.f32.gmra.mxu0 %v2240
      %v2355 = vpop.f32.mrf.mxu0
      %v2356 = vadd.f32 0.0, %v2355
      %2357 = vmatmul.f32.gmra.mxu0 %v2243
      %v2358 = vpop.f32.mrf.mxu0
      %v2359 = vadd.f32 0.0, %v2358
      %2360 = vmatmul.f32.gmra.mxu0 %v2246
      %v2361 = vpop.f32.mrf.mxu0
      %v2362 = vadd.f32 0.0, %v2361
      %2363 = vmatmul.f32.gmra.mxu0 %v2249
      %v2364 = vpop.f32.mrf.mxu0
      %v2365 = vadd.f32 0.0, %v2364
      %2366 = vmatmul.f32.gmra.mxu0 %v2252
      %v2367 = vpop.f32.mrf.mxu0
      %v2368 = vadd.f32 0.0, %v2367
      %2369 = vmatmul.f32.gmra.mxu0 %v2255
      %v2370 = vpop.f32.mrf.mxu0
      %v2371 = vadd.f32 0.0, %v2370
      %2372 = vmatmul.f32.gmra.mxu0 %v2258
      %v2373 = vpop.f32.mrf.mxu0
      %v2374 = vadd.f32 0.0, %v2373
      %2375 = vmatmul.f32.gmra.mxu0 %v2261
      %v2376 = vpop.f32.mrf.mxu0
      %v2377 = vadd.f32 0.0, %v2376
      %2378 = vmatmul.f32.gmra.mxu0 %v2264
      %v2379 = vpop.f32.mrf.mxu0
      %v2380 = vadd.f32 0.0, %v2379
      %2381 = vmatmul.f32.gmra.mxu0 %v2267
      %v2382 = vpop.f32.mrf.mxu0
      %v2383 = vadd.f32 0.0, %v2382
      %2384 = vmatmul.f32.gmra.mxu0 %v2270
      %v2385 = vpop.f32.mrf.mxu0
      %v2386 = vadd.f32 0.0, %v2385
      %2387 = vmatmul.f32.gmra.mxu0 %v2273
      %v2388 = vpop.f32.mrf.mxu0
      %v2389 = vadd.f32 0.0, %v2388
      %2390 = vmatmul.f32.gmra.mxu0 %v2276
      %v2391 = vpop.f32.mrf.mxu0
      %v2392 = vadd.f32 0.0, %v2391
      %2393 = vdwg.mxu0
      %v2394 = vadd.f32 %v2116, %v2299
      %v2395 = vadd.f32 %v2117, %v2302
      %v2396 = vadd.f32 %v2118, %v2305
      %v2397 = vadd.f32 %v2119, %v2308
      %v2398 = vadd.f32 %v2120, %v2311
      %v2399 = vadd.f32 %v2121, %v2314
      %v2400 = vadd.f32 %v2122, %v2317
      %v2401 = vadd.f32 %v2123, %v2320
      %v2402 = vadd.f32 %v2124, %v2323
      %v2403 = vadd.f32 %v2125, %v2326
      %v2404 = vadd.f32 %v2126, %v2329
      %v2405 = vadd.f32 %v2127, %v2332
      %v2406 = vadd.f32 %v2128, %v2335
      %v2407 = vadd.f32 %v2129, %v2338
      %v2408 = vadd.f32 %v2130, %v2341
      %v2409 = vadd.f32 %v2131, %v2344
      %v2410 = vadd.f32 %v2132, %v2347
      %v2411 = vadd.f32 %v2133, %v2350
      %v2412 = vadd.f32 %v2134, %v2353
      %v2413 = vadd.f32 %v2135, %v2356
      %v2414 = vadd.f32 %v2136, %v2359
      %v2415 = vadd.f32 %v2137, %v2362
      %v2416 = vadd.f32 %v2138, %v2365
      %v2417 = vadd.f32 %v2139, %v2368
      %v2418 = vadd.f32 %v2140, %v2371
      %v2419 = vadd.f32 %v2141, %v2374
      %v2420 = vadd.f32 %v2142, %v2377
      %v2421 = vadd.f32 %v2143, %v2380
      %v2422 = vadd.f32 %v2144, %v2383
      %v2423 = vadd.f32 %v2145, %v2386
      %v2424 = vadd.f32 %v2146, %v2389
      %v2425 = vadd.f32 %v2147, %v2392
      %2426 = vst.msk [vmem:[#allocation4] sm:$0xff] %vm373, %v2394
      %2427 = vst.msk [vmem:[#allocation4 + $0x8] sm:$0xff] %vm373, %v2395
      %2428 = vst.msk [vmem:[#allocation4 + $0x10] sm:$0xff] %vm373, %v2396
      %2429 = vst.msk [vmem:[#allocation4 + $0x18] sm:$0xff] %vm373, %v2397
      %2430 = vst.msk [vmem:[#allocation4 + $0x20] sm:$0xff] %vm373, %v2398
      %2431 = vst.msk [vmem:[#allocation4 + $0x28] sm:$0xff] %vm373, %v2399
      %2432 = vst.msk [vmem:[#allocation4 + $0x30] sm:$0xff] %vm373, %v2400
      %2433 = vst.msk [vmem:[#allocation4 + $0x38] sm:$0xff] %vm373, %v2401
      %2434 = vst.msk [vmem:[#allocation4 + $0x40] sm:$0xff] %vm373, %v2402
      %2435 = vst.msk [vmem:[#allocation4 + $0x48] sm:$0xff] %vm373, %v2403
      %2436 = vst.msk [vmem:[#allocation4 + $0x50] sm:$0xff] %vm373, %v2404
      %2437 = vst.msk [vmem:[#allocation4 + $0x58] sm:$0xff] %vm373, %v2405
      %2438 = vst.msk [vmem:[#allocation4 + $0x60] sm:$0xff] %vm373, %v2406
      %2439 = vst.msk [vmem:[#allocation4 + $0x68] sm:$0xff] %vm373, %v2407
      %2440 = vst.msk [vmem:[#allocation4 + $0x70] sm:$0xff] %vm373, %v2408
      %2441 = vst.msk [vmem:[#allocation4 + $0x78] sm:$0xff] %vm373, %v2409
      %2442 = vst.msk [vmem:[#allocation4 + $0x80] sm:$0xff] %vm373, %v2410
      %2443 = vst.msk [vmem:[#allocation4 + $0x88] sm:$0xff] %vm373, %v2411
      %2444 = vst.msk [vmem:[#allocation4 + $0x90] sm:$0xff] %vm373, %v2412
      %2445 = vst.msk [vmem:[#allocation4 + $0x98] sm:$0xff] %vm373, %v2413
      %2446 = vst.msk [vmem:[#allocation4 + $0xa0] sm:$0xff] %vm373, %v2414
      %2447 = vst.msk [vmem:[#allocation4 + $0xa8] sm:$0xff] %vm373, %v2415
      %2448 = vst.msk [vmem:[#allocation4 + $0xb0] sm:$0xff] %vm373, %v2416
      %2449 = vst.msk [vmem:[#allocation4 + $0xb8] sm:$0xff] %vm373, %v2417
      %2450 = vst.msk [vmem:[#allocation4 + $0xc0] sm:$0xff] %vm373, %v2418
      %2451 = vst.msk [vmem:[#allocation4 + $0xc8] sm:$0xff] %vm373, %v2419
      %2452 = vst.msk [vmem:[#allocation4 + $0xd0] sm:$0xff] %vm373, %v2420
      %2453 = vst.msk [vmem:[#allocation4 + $0xd8] sm:$0xff] %vm373, %v2421
      %2454 = vst.msk [vmem:[#allocation4 + $0xe0] sm:$0xff] %vm373, %v2422
      %2455 = vst.msk [vmem:[#allocation4 + $0xe8] sm:$0xff] %vm373, %v2423
      %2456 = vst.msk [vmem:[#allocation4 + $0xf0] sm:$0xff] %vm373, %v2424
      %2457 = vst.msk [vmem:[#allocation4 + $0xf8] sm:$0xff] %vm373, %v2425
      %v2458 = vld [vmem:[#allocation4] sm:$0xff]
      %v2459 = vld [vmem:[#allocation4 + $0x8] sm:$0xff]
      %v2460 = vld [vmem:[#allocation4 + $0x10] sm:$0xff]
      %v2461 = vld [vmem:[#allocation4 + $0x18] sm:$0xff]
      %v2462 = vld [vmem:[#allocation4 + $0x20] sm:$0xff]
      %v2463 = vld [vmem:[#allocation4 + $0x28] sm:$0xff]
      %v2464 = vld [vmem:[#allocation4 + $0x30] sm:$0xff]
      %v2465 = vld [vmem:[#allocation4 + $0x38] sm:$0xff]
      %v2466 = vld [vmem:[#allocation4 + $0x40] sm:$0xff]
      %v2467 = vld [vmem:[#allocation4 + $0x48] sm:$0xff]
      %v2468 = vld [vmem:[#allocation4 + $0x50] sm:$0xff]
      %v2469 = vld [vmem:[#allocation4 + $0x58] sm:$0xff]
      %v2470 = vld [vmem:[#allocation4 + $0x60] sm:$0xff]
      %v2471 = vld [vmem:[#allocation4 + $0x68] sm:$0xff]
      %v2472 = vld [vmem:[#allocation4 + $0x70] sm:$0xff]
      %v2473 = vld [vmem:[#allocation4 + $0x78] sm:$0xff]
      %v2474 = vld [vmem:[#allocation4 + $0x80] sm:$0xff]
      %v2475 = vld [vmem:[#allocation4 + $0x88] sm:$0xff]
      %v2476 = vld [vmem:[#allocation4 + $0x90] sm:$0xff]
      %v2477 = vld [vmem:[#allocation4 + $0x98] sm:$0xff]
      %v2478 = vld [vmem:[#allocation4 + $0xa0] sm:$0xff]
      %v2479 = vld [vmem:[#allocation4 + $0xa8] sm:$0xff]
      %v2480 = vld [vmem:[#allocation4 + $0xb0] sm:$0xff]
      %v2481 = vld [vmem:[#allocation4 + $0xb8] sm:$0xff]
      %v2482 = vld [vmem:[#allocation4 + $0xc0] sm:$0xff]
      %v2483 = vld [vmem:[#allocation4 + $0xc8] sm:$0xff]
      %v2484 = vld [vmem:[#allocation4 + $0xd0] sm:$0xff]
      %v2485 = vld [vmem:[#allocation4 + $0xd8] sm:$0xff]
      %v2486 = vld [vmem:[#allocation4 + $0xe0] sm:$0xff]
      %v2487 = vld [vmem:[#allocation4 + $0xe8] sm:$0xff]
      %v2488 = vld [vmem:[#allocation4 + $0xf0] sm:$0xff]
      %v2489 = vld [vmem:[#allocation4 + $0xf8] sm:$0xff]
      %s2490 = scalar_lea.vmem [#allocation2], 48
      %v2491 = vld [vmem:[%s2490] sm:$0xff]
      %v2492 = vld [vmem:[%s2490 + $0x8] sm:$0xff]
      %v2493 = vld [vmem:[%s2490 + $0x18] sm:$0xff]
      %v2494 = vld [vmem:[%s2490 + $0x20] sm:$0xff]
      %v2495 = vld [vmem:[%s2490 + $0x30] sm:$0xff]
      %v2496 = vld [vmem:[%s2490 + $0x38] sm:$0xff]
      %v2497 = vld [vmem:[%s2490 + $0x48] sm:$0xff]
      %v2498 = vld [vmem:[%s2490 + $0x50] sm:$0xff]
      %v2499 = vld [vmem:[%s2490 + $0x60] sm:$0xff]
      %v2500 = vld [vmem:[%s2490 + $0x68] sm:$0xff]
      %v2501 = vld [vmem:[%s2490 + $0x78] sm:$0xff]
      %v2502 = vld [vmem:[%s2490 + $0x80] sm:$0xff]
      %v2503 = vld [vmem:[%s2490 + $0x90] sm:$0xff]
      %v2504 = vld [vmem:[%s2490 + $0x98] sm:$0xff]
      %v2505 = vld [vmem:[%s2490 + $0xa8] sm:$0xff]
      %v2506 = vld [vmem:[%s2490 + $0xb0] sm:$0xff]
      %v2507 = vld [vmem:[%s2490 + $0xc0] sm:$0xff]
      %v2508 = vld [vmem:[%s2490 + $0xc8] sm:$0xff]
      %v2509 = vld [vmem:[%s2490 + $0xd8] sm:$0xff]
      %v2510 = vld [vmem:[%s2490 + $0xe0] sm:$0xff]
      %v2511 = vld [vmem:[%s2490 + $0xf0] sm:$0xff]
      %v2512 = vld [vmem:[%s2490 + $0xf8] sm:$0xff]
      %v2513 = vld [vmem:[%s2490 + $0x108] sm:$0xff]
      %v2514 = vld [vmem:[%s2490 + $0x110] sm:$0xff]
      %v2515 = vld [vmem:[%s2490 + $0x120] sm:$0xff]
      %v2516 = vld [vmem:[%s2490 + $0x128] sm:$0xff]
      %v2517 = vld [vmem:[%s2490 + $0x138] sm:$0xff]
      %v2518 = vld [vmem:[%s2490 + $0x140] sm:$0xff]
      %v2519 = vld [vmem:[%s2490 + $0x150] sm:$0xff]
      %v2520 = vld [vmem:[%s2490 + $0x158] sm:$0xff]
      %v2521 = vld [vmem:[%s2490 + $0x168] sm:$0xff]
      %v2522 = vld [vmem:[%s2490 + $0x170] sm:$0xff]
      %s2523 = scalar_lea.vmem %s1, 24
      %v2524 = vld [vmem:[%s2523] sm:$0xf]
      %v2526 = vsel %vm252, %v2491, 0
      %v2529 = vsel %vm252, %v2492, 0
      %v2532 = vsel %vm252, %v2493, 0
      %v2535 = vsel %vm252, %v2494, 0
      %v2538 = vsel %vm252, %v2495, 0
      %v2541 = vsel %vm252, %v2496, 0
      %v2544 = vsel %vm252, %v2497, 0
      %v2547 = vsel %vm252, %v2498, 0
      %v2550 = vsel %vm252, %v2499, 0
      %v2553 = vsel %vm252, %v2500, 0
      %v2556 = vsel %vm252, %v2501, 0
      %v2559 = vsel %vm252, %v2502, 0
      %v2562 = vsel %vm252, %v2503, 0
      %v2565 = vsel %vm252, %v2504, 0
      %v2568 = vsel %vm252, %v2505, 0
      %v2571 = vsel %vm252, %v2506, 0
      %v2574 = vsel %vm252, %v2507, 0
      %v2577 = vsel %vm252, %v2508, 0
      %v2580 = vsel %vm252, %v2509, 0
      %v2583 = vsel %vm252, %v2510, 0
      %v2586 = vsel %vm252, %v2511, 0
      %v2589 = vsel %vm252, %v2512, 0
      %v2592 = vsel %vm252, %v2513, 0
      %v2595 = vsel %vm252, %v2514, 0
      %v2598 = vsel %vm252, %v2515, 0
      %v2601 = vsel %vm252, %v2516, 0
      %v2604 = vsel %vm252, %v2517, 0
      %v2607 = vsel %vm252, %v2518, 0
      %v2610 = vsel %vm252, %v2519, 0
      %v2613 = vsel %vm252, %v2520, 0
      %v2616 = vsel %vm252, %v2521, 0
      %v2619 = vsel %vm252, %v2522, 0
      %v2622 = vsel %vm567, %v2524, 0
      %2624 = vmatpush.msra.mxu0 0.0
      %2625 = vmatpush.msra.mxu0 0.0
      %2626 = vmatpush.msra.mxu0 0.0
      %2627 = vmatpush.msra.mxu0 0.0
      %2628 = vmatpush.msra.mxu0 0.0
      %2629 = vmatpush.msra.mxu0 0.0
      %2630 = vmatpush.msra.mxu0 0.0
      %2631 = vmatpush.msra.mxu0 0.0
      %2632 = vmatpush.msra.mxu0 0.0
      %2633 = vmatpush.msra.mxu0 0.0
      %2634 = vmatpush.msra.mxu0 0.0
      %2635 = vmatpush.msra.mxu0 0.0
      %2636 = vmatpush.msra.mxu0 0.0
      %2637 = vmatpush.msra.mxu0 0.0
      %2638 = vmatpush.msra.mxu0 0.0
      %2639 = vmatpush.msra.mxu0 %v2622
      %2640 = vmatmul.f32.gmra.mxu0 %v2526
      %v2641 = vpop.f32.mrf.mxu0
      %v2642 = vadd.f32 0.0, %v2641
      %2643 = vmatmul.f32.gmra.mxu0 %v2529
      %v2644 = vpop.f32.mrf.mxu0
      %v2645 = vadd.f32 0.0, %v2644
      %2646 = vmatmul.f32.gmra.mxu0 %v2532
      %v2647 = vpop.f32.mrf.mxu0
      %v2648 = vadd.f32 0.0, %v2647
      %2649 = vmatmul.f32.gmra.mxu0 %v2535
      %v2650 = vpop.f32.mrf.mxu0
      %v2651 = vadd.f32 0.0, %v2650
      %2652 = vmatmul.f32.gmra.mxu0 %v2538
      %v2653 = vpop.f32.mrf.mxu0
      %v2654 = vadd.f32 0.0, %v2653
      %2655 = vmatmul.f32.gmra.mxu0 %v2541
      %v2656 = vpop.f32.mrf.mxu0
      %v2657 = vadd.f32 0.0, %v2656
      %2658 = vmatmul.f32.gmra.mxu0 %v2544
      %v2659 = vpop.f32.mrf.mxu0
      %v2660 = vadd.f32 0.0, %v2659
      %2661 = vmatmul.f32.gmra.mxu0 %v2547
      %v2662 = vpop.f32.mrf.mxu0
      %v2663 = vadd.f32 0.0, %v2662
      %2664 = vmatmul.f32.gmra.mxu0 %v2550
      %v2665 = vpop.f32.mrf.mxu0
      %v2666 = vadd.f32 0.0, %v2665
      %2667 = vmatmul.f32.gmra.mxu0 %v2553
      %v2668 = vpop.f32.mrf.mxu0
      %v2669 = vadd.f32 0.0, %v2668
      %2670 = vmatmul.f32.gmra.mxu0 %v2556
      %v2671 = vpop.f32.mrf.mxu0
      %v2672 = vadd.f32 0.0, %v2671
      %2673 = vmatmul.f32.gmra.mxu0 %v2559
      %v2674 = vpop.f32.mrf.mxu0
      %v2675 = vadd.f32 0.0, %v2674
      %2676 = vmatmul.f32.gmra.mxu0 %v2562
      %v2677 = vpop.f32.mrf.mxu0
      %v2678 = vadd.f32 0.0, %v2677
      %2679 = vmatmul.f32.gmra.mxu0 %v2565
      %v2680 = vpop.f32.mrf.mxu0
      %v2681 = vadd.f32 0.0, %v2680
      %2682 = vmatmul.f32.gmra.mxu0 %v2568
      %v2683 = vpop.f32.mrf.mxu0
      %v2684 = vadd.f32 0.0, %v2683
      %2685 = vmatmul.f32.gmra.mxu0 %v2571
      %v2686 = vpop.f32.mrf.mxu0
      %v2687 = vadd.f32 0.0, %v2686
      %2688 = vmatmul.f32.gmra.mxu0 %v2574
      %v2689 = vpop.f32.mrf.mxu0
      %v2690 = vadd.f32 0.0, %v2689
      %2691 = vmatmul.f32.gmra.mxu0 %v2577
      %v2692 = vpop.f32.mrf.mxu0
      %v2693 = vadd.f32 0.0, %v2692
      %2694 = vmatmul.f32.gmra.mxu0 %v2580
      %v2695 = vpop.f32.mrf.mxu0
      %v2696 = vadd.f32 0.0, %v2695
      %2697 = vmatmul.f32.gmra.mxu0 %v2583
      %v2698 = vpop.f32.mrf.mxu0
      %v2699 = vadd.f32 0.0, %v2698
      %2700 = vmatmul.f32.gmra.mxu0 %v2586
      %v2701 = vpop.f32.mrf.mxu0
      %v2702 = vadd.f32 0.0, %v2701
      %2703 = vmatmul.f32.gmra.mxu0 %v2589
      %v2704 = vpop.f32.mrf.mxu0
      %v2705 = vadd.f32 0.0, %v2704
      %2706 = vmatmul.f32.gmra.mxu0 %v2592
      %v2707 = vpop.f32.mrf.mxu0
      %v2708 = vadd.f32 0.0, %v2707
      %2709 = vmatmul.f32.gmra.mxu0 %v2595
      %v2710 = vpop.f32.mrf.mxu0
      %v2711 = vadd.f32 0.0, %v2710
      %2712 = vmatmul.f32.gmra.mxu0 %v2598
      %v2713 = vpop.f32.mrf.mxu0
      %v2714 = vadd.f32 0.0, %v2713
      %2715 = vmatmul.f32.gmra.mxu0 %v2601
      %v2716 = vpop.f32.mrf.mxu0
      %v2717 = vadd.f32 0.0, %v2716
      %2718 = vmatmul.f32.gmra.mxu0 %v2604
      %v2719 = vpop.f32.mrf.mxu0
      %v2720 = vadd.f32 0.0, %v2719
      %2721 = vmatmul.f32.gmra.mxu0 %v2607
      %v2722 = vpop.f32.mrf.mxu0
      %v2723 = vadd.f32 0.0, %v2722
      %2724 = vmatmul.f32.gmra.mxu0 %v2610
      %v2725 = vpop.f32.mrf.mxu0
      %v2726 = vadd.f32 0.0, %v2725
      %2727 = vmatmul.f32.gmra.mxu0 %v2613
      %v2728 = vpop.f32.mrf.mxu0
      %v2729 = vadd.f32 0.0, %v2728
      %2730 = vmatmul.f32.gmra.mxu0 %v2616
      %v2731 = vpop.f32.mrf.mxu0
      %v2732 = vadd.f32 0.0, %v2731
      %2733 = vmatmul.f32.gmra.mxu0 %v2619
      %v2734 = vpop.f32.mrf.mxu0
      %v2735 = vadd.f32 0.0, %v2734
      %2736 = vdwg.mxu0
      %v2737 = vadd.f32 %v2458, %v2642
      %v2738 = vadd.f32 %v2459, %v2645
      %v2739 = vadd.f32 %v2460, %v2648
      %v2740 = vadd.f32 %v2461, %v2651
      %v2741 = vadd.f32 %v2462, %v2654
      %v2742 = vadd.f32 %v2463, %v2657
      %v2743 = vadd.f32 %v2464, %v2660
      %v2744 = vadd.f32 %v2465, %v2663
      %v2745 = vadd.f32 %v2466, %v2666
      %v2746 = vadd.f32 %v2467, %v2669
      %v2747 = vadd.f32 %v2468, %v2672
      %v2748 = vadd.f32 %v2469, %v2675
      %v2749 = vadd.f32 %v2470, %v2678
      %v2750 = vadd.f32 %v2471, %v2681
      %v2751 = vadd.f32 %v2472, %v2684
      %v2752 = vadd.f32 %v2473, %v2687
      %v2753 = vadd.f32 %v2474, %v2690
      %v2754 = vadd.f32 %v2475, %v2693
      %v2755 = vadd.f32 %v2476, %v2696
      %v2756 = vadd.f32 %v2477, %v2699
      %v2757 = vadd.f32 %v2478, %v2702
      %v2758 = vadd.f32 %v2479, %v2705
      %v2759 = vadd.f32 %v2480, %v2708
      %v2760 = vadd.f32 %v2481, %v2711
      %v2761 = vadd.f32 %v2482, %v2714
      %v2762 = vadd.f32 %v2483, %v2717
      %v2763 = vadd.f32 %v2484, %v2720
      %v2764 = vadd.f32 %v2485, %v2723
      %v2765 = vadd.f32 %v2486, %v2726
      %v2766 = vadd.f32 %v2487, %v2729
      %v2767 = vadd.f32 %v2488, %v2732
      %v2768 = vadd.f32 %v2489, %v2735
      %2769 = vst.msk [vmem:[#allocation4] sm:$0xff] %vm373, %v2737
      %2770 = vst.msk [vmem:[#allocation4 + $0x8] sm:$0xff] %vm373, %v2738
      %2771 = vst.msk [vmem:[#allocation4 + $0x10] sm:$0xff] %vm373, %v2739
      %2772 = vst.msk [vmem:[#allocation4 + $0x18] sm:$0xff] %vm373, %v2740
      %2773 = vst.msk [vmem:[#allocation4 + $0x20] sm:$0xff] %vm373, %v2741
      %2774 = vst.msk [vmem:[#allocation4 + $0x28] sm:$0xff] %vm373, %v2742
      %2775 = vst.msk [vmem:[#allocation4 + $0x30] sm:$0xff] %vm373, %v2743
      %2776 = vst.msk [vmem:[#allocation4 + $0x38] sm:$0xff] %vm373, %v2744
      %2777 = vst.msk [vmem:[#allocation4 + $0x40] sm:$0xff] %vm373, %v2745
      %2778 = vst.msk [vmem:[#allocation4 + $0x48] sm:$0xff] %vm373, %v2746
      %2779 = vst.msk [vmem:[#allocation4 + $0x50] sm:$0xff] %vm373, %v2747
      %2780 = vst.msk [vmem:[#allocation4 + $0x58] sm:$0xff] %vm373, %v2748
      %2781 = vst.msk [vmem:[#allocation4 + $0x60] sm:$0xff] %vm373, %v2749
      %2782 = vst.msk [vmem:[#allocation4 + $0x68] sm:$0xff] %vm373, %v2750
      %2783 = vst.msk [vmem:[#allocation4 + $0x70] sm:$0xff] %vm373, %v2751
      %2784 = vst.msk [vmem:[#allocation4 + $0x78] sm:$0xff] %vm373, %v2752
      %2785 = vst.msk [vmem:[#allocation4 + $0x80] sm:$0xff] %vm373, %v2753
      %2786 = vst.msk [vmem:[#allocation4 + $0x88] sm:$0xff] %vm373, %v2754
      %2787 = vst.msk [vmem:[#allocation4 + $0x90] sm:$0xff] %vm373, %v2755
      %2788 = vst.msk [vmem:[#allocation4 + $0x98] sm:$0xff] %vm373, %v2756
      %2789 = vst.msk [vmem:[#allocation4 + $0xa0] sm:$0xff] %vm373, %v2757
      %2790 = vst.msk [vmem:[#allocation4 + $0xa8] sm:$0xff] %vm373, %v2758
      %2791 = vst.msk [vmem:[#allocation4 + $0xb0] sm:$0xff] %vm373, %v2759
      %2792 = vst.msk [vmem:[#allocation4 + $0xb8] sm:$0xff] %vm373, %v2760
      %2793 = vst.msk [vmem:[#allocation4 + $0xc0] sm:$0xff] %vm373, %v2761
      %2794 = vst.msk [vmem:[#allocation4 + $0xc8] sm:$0xff] %vm373, %v2762
      %2795 = vst.msk [vmem:[#allocation4 + $0xd0] sm:$0xff] %vm373, %v2763
      %2796 = vst.msk [vmem:[#allocation4 + $0xd8] sm:$0xff] %vm373, %v2764
      %2797 = vst.msk [vmem:[#allocation4 + $0xe0] sm:$0xff] %vm373, %v2765
      %2798 = vst.msk [vmem:[#allocation4 + $0xe8] sm:$0xff] %vm373, %v2766
      %2799 = vst.msk [vmem:[#allocation4 + $0xf0] sm:$0xff] %vm373, %v2767
      %2800 = vst.msk [vmem:[#allocation4 + $0xf8] sm:$0xff] %vm373, %v2768
      %v2801 = vld [vmem:[#allocation4] sm:$0xff]
      %v2802 = vld [vmem:[#allocation4 + $0x8] sm:$0xff]
      %v2803 = vld [vmem:[#allocation4 + $0x10] sm:$0xff]
      %v2804 = vld [vmem:[#allocation4 + $0x18] sm:$0xff]
      %v2805 = vld [vmem:[#allocation4 + $0x20] sm:$0xff]
      %v2806 = vld [vmem:[#allocation4 + $0x28] sm:$0xff]
      %v2807 = vld [vmem:[#allocation4 + $0x30] sm:$0xff]
      %v2808 = vld [vmem:[#allocation4 + $0x38] sm:$0xff]
      %v2809 = vld [vmem:[#allocation4 + $0x40] sm:$0xff]
      %v2810 = vld [vmem:[#allocation4 + $0x48] sm:$0xff]
      %v2811 = vld [vmem:[#allocation4 + $0x50] sm:$0xff]
      %v2812 = vld [vmem:[#allocation4 + $0x58] sm:$0xff]
      %v2813 = vld [vmem:[#allocation4 + $0x60] sm:$0xff]
      %v2814 = vld [vmem:[#allocation4 + $0x68] sm:$0xff]
      %v2815 = vld [vmem:[#allocation4 + $0x70] sm:$0xff]
      %v2816 = vld [vmem:[#allocation4 + $0x78] sm:$0xff]
      %v2817 = vld [vmem:[#allocation4 + $0x80] sm:$0xff]
      %v2818 = vld [vmem:[#allocation4 + $0x88] sm:$0xff]
      %v2819 = vld [vmem:[#allocation4 + $0x90] sm:$0xff]
      %v2820 = vld [vmem:[#allocation4 + $0x98] sm:$0xff]
      %v2821 = vld [vmem:[#allocation4 + $0xa0] sm:$0xff]
      %v2822 = vld [vmem:[#allocation4 + $0xa8] sm:$0xff]
      %v2823 = vld [vmem:[#allocation4 + $0xb0] sm:$0xff]
      %v2824 = vld [vmem:[#allocation4 + $0xb8] sm:$0xff]
      %v2825 = vld [vmem:[#allocation4 + $0xc0] sm:$0xff]
      %v2826 = vld [vmem:[#allocation4 + $0xc8] sm:$0xff]
      %v2827 = vld [vmem:[#allocation4 + $0xd0] sm:$0xff]
      %v2828 = vld [vmem:[#allocation4 + $0xd8] sm:$0xff]
      %v2829 = vld [vmem:[#allocation4 + $0xe0] sm:$0xff]
      %v2830 = vld [vmem:[#allocation4 + $0xe8] sm:$0xff]
      %v2831 = vld [vmem:[#allocation4 + $0xf0] sm:$0xff]
      %v2832 = vld [vmem:[#allocation4 + $0xf8] sm:$0xff]
      %v2833 = vld [vmem:[%s2490 + $0x1] sm:$0xff]
      %v2834 = vld [vmem:[%s2490 + $0x9] sm:$0xff]
      %v2835 = vld [vmem:[%s2490 + $0x19] sm:$0xff]
      %v2836 = vld [vmem:[%s2490 + $0x21] sm:$0xff]
      %v2837 = vld [vmem:[%s2490 + $0x31] sm:$0xff]
      %v2838 = vld [vmem:[%s2490 + $0x39] sm:$0xff]
      %v2839 = vld [vmem:[%s2490 + $0x49] sm:$0xff]
      %v2840 = vld [vmem:[%s2490 + $0x51] sm:$0xff]
      %v2841 = vld [vmem:[%s2490 + $0x61] sm:$0xff]
      %v2842 = vld [vmem:[%s2490 + $0x69] sm:$0xff]
      %v2843 = vld [vmem:[%s2490 + $0x79] sm:$0xff]
      %v2844 = vld [vmem:[%s2490 + $0x81] sm:$0xff]
      %v2845 = vld [vmem:[%s2490 + $0x91] sm:$0xff]
      %v2846 = vld [vmem:[%s2490 + $0x99] sm:$0xff]
      %v2847 = vld [vmem:[%s2490 + $0xa9] sm:$0xff]
      %v2848 = vld [vmem:[%s2490 + $0xb1] sm:$0xff]
      %v2849 = vld [vmem:[%s2490 + $0xc1] sm:$0xff]
      %v2850 = vld [vmem:[%s2490 + $0xc9] sm:$0xff]
      %v2851 = vld [vmem:[%s2490 + $0xd9] sm:$0xff]
      %v2852 = vld [vmem:[%s2490 + $0xe1] sm:$0xff]
      %v2853 = vld [vmem:[%s2490 + $0xf1] sm:$0xff]
      %v2854 = vld [vmem:[%s2490 + $0xf9] sm:$0xff]
      %v2855 = vld [vmem:[%s2490 + $0x109] sm:$0xff]
      %v2856 = vld [vmem:[%s2490 + $0x111] sm:$0xff]
      %v2857 = vld [vmem:[%s2490 + $0x121] sm:$0xff]
      %v2858 = vld [vmem:[%s2490 + $0x129] sm:$0xff]
      %v2859 = vld [vmem:[%s2490 + $0x139] sm:$0xff]
      %v2860 = vld [vmem:[%s2490 + $0x141] sm:$0xff]
      %v2861 = vld [vmem:[%s2490 + $0x151] sm:$0xff]
      %v2862 = vld [vmem:[%s2490 + $0x159] sm:$0xff]
      %v2863 = vld [vmem:[%s2490 + $0x169] sm:$0xff]
      %v2864 = vld [vmem:[%s2490 + $0x171] sm:$0xff]
      %s2865 = scalar_lea.vmem %s1, 28
      %v2866 = vld [vmem:[%s2865] sm:$0xf]
      %v2868 = vsel %vm252, %v2833, 0
      %v2871 = vsel %vm252, %v2834, 0
      %v2874 = vsel %vm252, %v2835, 0
      %v2877 = vsel %vm252, %v2836, 0
      %v2880 = vsel %vm252, %v2837, 0
      %v2883 = vsel %vm252, %v2838, 0
      %v2886 = vsel %vm252, %v2839, 0
      %v2889 = vsel %vm252, %v2840, 0
      %v2892 = vsel %vm252, %v2841, 0
      %v2895 = vsel %vm252, %v2842, 0
      %v2898 = vsel %vm252, %v2843, 0
      %v2901 = vsel %vm252, %v2844, 0
      %v2904 = vsel %vm252, %v2845, 0
      %v2907 = vsel %vm252, %v2846, 0
      %v2910 = vsel %vm252, %v2847, 0
      %v2913 = vsel %vm252, %v2848, 0
      %v2916 = vsel %vm252, %v2849, 0
      %v2919 = vsel %vm252, %v2850, 0
      %v2922 = vsel %vm252, %v2851, 0
      %v2925 = vsel %vm252, %v2852, 0
      %v2928 = vsel %vm252, %v2853, 0
      %v2931 = vsel %vm252, %v2854, 0
      %v2934 = vsel %vm252, %v2855, 0
      %v2937 = vsel %vm252, %v2856, 0
      %v2940 = vsel %vm252, %v2857, 0
      %v2943 = vsel %vm252, %v2858, 0
      %v2946 = vsel %vm252, %v2859, 0
      %v2949 = vsel %vm252, %v2860, 0
      %v2952 = vsel %vm252, %v2861, 0
      %v2955 = vsel %vm252, %v2862, 0
      %v2958 = vsel %vm252, %v2863, 0
      %v2961 = vsel %vm252, %v2864, 0
      %v2964 = vsel %vm567, %v2866, 0
      %2966 = vmatpush.msra.mxu0 0.0
      %2967 = vmatpush.msra.mxu0 0.0
      %2968 = vmatpush.msra.mxu0 0.0
      %2969 = vmatpush.msra.mxu0 0.0
      %2970 = vmatpush.msra.mxu0 0.0
      %2971 = vmatpush.msra.mxu0 0.0
      %2972 = vmatpush.msra.mxu0 0.0
      %2973 = vmatpush.msra.mxu0 0.0
      %2974 = vmatpush.msra.mxu0 0.0
      %2975 = vmatpush.msra.mxu0 0.0
      %2976 = vmatpush.msra.mxu0 0.0
      %2977 = vmatpush.msra.mxu0 0.0
      %2978 = vmatpush.msra.mxu0 0.0
      %2979 = vmatpush.msra.mxu0 0.0
      %2980 = vmatpush.msra.mxu0 0.0
      %2981 = vmatpush.msra.mxu0 %v2964
      %2982 = vmatmul.f32.gmra.mxu0 %v2868
      %v2983 = vpop.f32.mrf.mxu0
      %v2984 = vadd.f32 0.0, %v2983
      %2985 = vmatmul.f32.gmra.mxu0 %v2871
      %v2986 = vpop.f32.mrf.mxu0
      %v2987 = vadd.f32 0.0, %v2986
      %2988 = vmatmul.f32.gmra.mxu0 %v2874
      %v2989 = vpop.f32.mrf.mxu0
      %v2990 = vadd.f32 0.0, %v2989
      %2991 = vmatmul.f32.gmra.mxu0 %v2877
      %v2992 = vpop.f32.mrf.mxu0
      %v2993 = vadd.f32 0.0, %v2992
      %2994 = vmatmul.f32.gmra.mxu0 %v2880
      %v2995 = vpop.f32.mrf.mxu0
      %v2996 = vadd.f32 0.0, %v2995
      %2997 = vmatmul.f32.gmra.mxu0 %v2883
      %v2998 = vpop.f32.mrf.mxu0
      %v2999 = vadd.f32 0.0, %v2998
      %3000 = vmatmul.f32.gmra.mxu0 %v2886
      %v3001 = vpop.f32.mrf.mxu0
      %v3002 = vadd.f32 0.0, %v3001
      %3003 = vmatmul.f32.gmra.mxu0 %v2889
      %v3004 = vpop.f32.mrf.mxu0
      %v3005 = vadd.f32 0.0, %v3004
      %3006 = vmatmul.f32.gmra.mxu0 %v2892
      %v3007 = vpop.f32.mrf.mxu0
      %v3008 = vadd.f32 0.0, %v3007
      %3009 = vmatmul.f32.gmra.mxu0 %v2895
      %v3010 = vpop.f32.mrf.mxu0
      %v3011 = vadd.f32 0.0, %v3010
      %3012 = vmatmul.f32.gmra.mxu0 %v2898
      %v3013 = vpop.f32.mrf.mxu0
      %v3014 = vadd.f32 0.0, %v3013
      %3015 = vmatmul.f32.gmra.mxu0 %v2901
      %v3016 = vpop.f32.mrf.mxu0
      %v3017 = vadd.f32 0.0, %v3016
      %3018 = vmatmul.f32.gmra.mxu0 %v2904
      %v3019 = vpop.f32.mrf.mxu0
      %v3020 = vadd.f32 0.0, %v3019
      %3021 = vmatmul.f32.gmra.mxu0 %v2907
      %v3022 = vpop.f32.mrf.mxu0
      %v3023 = vadd.f32 0.0, %v3022
      %3024 = vmatmul.f32.gmra.mxu0 %v2910
      %v3025 = vpop.f32.mrf.mxu0
      %v3026 = vadd.f32 0.0, %v3025
      %3027 = vmatmul.f32.gmra.mxu0 %v2913
      %v3028 = vpop.f32.mrf.mxu0
      %v3029 = vadd.f32 0.0, %v3028
      %3030 = vmatmul.f32.gmra.mxu0 %v2916
      %v3031 = vpop.f32.mrf.mxu0
      %v3032 = vadd.f32 0.0, %v3031
      %3033 = vmatmul.f32.gmra.mxu0 %v2919
      %v3034 = vpop.f32.mrf.mxu0
      %v3035 = vadd.f32 0.0, %v3034
      %3036 = vmatmul.f32.gmra.mxu0 %v2922
      %v3037 = vpop.f32.mrf.mxu0
      %v3038 = vadd.f32 0.0, %v3037
      %3039 = vmatmul.f32.gmra.mxu0 %v2925
      %v3040 = vpop.f32.mrf.mxu0
      %v3041 = vadd.f32 0.0, %v3040
      %3042 = vmatmul.f32.gmra.mxu0 %v2928
      %v3043 = vpop.f32.mrf.mxu0
      %v3044 = vadd.f32 0.0, %v3043
      %3045 = vmatmul.f32.gmra.mxu0 %v2931
      %v3046 = vpop.f32.mrf.mxu0
      %v3047 = vadd.f32 0.0, %v3046
      %3048 = vmatmul.f32.gmra.mxu0 %v2934
      %v3049 = vpop.f32.mrf.mxu0
      %v3050 = vadd.f32 0.0, %v3049
      %3051 = vmatmul.f32.gmra.mxu0 %v2937
      %v3052 = vpop.f32.mrf.mxu0
      %v3053 = vadd.f32 0.0, %v3052
      %3054 = vmatmul.f32.gmra.mxu0 %v2940
      %v3055 = vpop.f32.mrf.mxu0
      %v3056 = vadd.f32 0.0, %v3055
      %3057 = vmatmul.f32.gmra.mxu0 %v2943
      %v3058 = vpop.f32.mrf.mxu0
      %v3059 = vadd.f32 0.0, %v3058
      %3060 = vmatmul.f32.gmra.mxu0 %v2946
      %v3061 = vpop.f32.mrf.mxu0
      %v3062 = vadd.f32 0.0, %v3061
      %3063 = vmatmul.f32.gmra.mxu0 %v2949
      %v3064 = vpop.f32.mrf.mxu0
      %v3065 = vadd.f32 0.0, %v3064
      %3066 = vmatmul.f32.gmra.mxu0 %v2952
      %v3067 = vpop.f32.mrf.mxu0
      %v3068 = vadd.f32 0.0, %v3067
      %3069 = vmatmul.f32.gmra.mxu0 %v2955
      %v3070 = vpop.f32.mrf.mxu0
      %v3071 = vadd.f32 0.0, %v3070
      %3072 = vmatmul.f32.gmra.mxu0 %v2958
      %v3073 = vpop.f32.mrf.mxu0
      %v3074 = vadd.f32 0.0, %v3073
      %3075 = vmatmul.f32.gmra.mxu0 %v2961
      %v3076 = vpop.f32.mrf.mxu0
      %v3077 = vadd.f32 0.0, %v3076
      %3078 = vdwg.mxu0
      %v3079 = vadd.f32 %v2801, %v2984
      %v3080 = vadd.f32 %v2802, %v2987
      %v3081 = vadd.f32 %v2803, %v2990
      %v3082 = vadd.f32 %v2804, %v2993
      %v3083 = vadd.f32 %v2805, %v2996
      %v3084 = vadd.f32 %v2806, %v2999
      %v3085 = vadd.f32 %v2807, %v3002
      %v3086 = vadd.f32 %v2808, %v3005
      %v3087 = vadd.f32 %v2809, %v3008
      %v3088 = vadd.f32 %v2810, %v3011
      %v3089 = vadd.f32 %v2811, %v3014
      %v3090 = vadd.f32 %v2812, %v3017
      %v3091 = vadd.f32 %v2813, %v3020
      %v3092 = vadd.f32 %v2814, %v3023
      %v3093 = vadd.f32 %v2815, %v3026
      %v3094 = vadd.f32 %v2816, %v3029
      %v3095 = vadd.f32 %v2817, %v3032
      %v3096 = vadd.f32 %v2818, %v3035
      %v3097 = vadd.f32 %v2819, %v3038
      %v3098 = vadd.f32 %v2820, %v3041
      %v3099 = vadd.f32 %v2821, %v3044
      %v3100 = vadd.f32 %v2822, %v3047
      %v3101 = vadd.f32 %v2823, %v3050
      %v3102 = vadd.f32 %v2824, %v3053
      %v3103 = vadd.f32 %v2825, %v3056
      %v3104 = vadd.f32 %v2826, %v3059
      %v3105 = vadd.f32 %v2827, %v3062
      %v3106 = vadd.f32 %v2828, %v3065
      %v3107 = vadd.f32 %v2829, %v3068
      %v3108 = vadd.f32 %v2830, %v3071
      %v3109 = vadd.f32 %v2831, %v3074
      %v3110 = vadd.f32 %v2832, %v3077
      %3111 = vst.msk [vmem:[#allocation4] sm:$0xff] %vm373, %v3079
      %3112 = vst.msk [vmem:[#allocation4 + $0x8] sm:$0xff] %vm373, %v3080
      %3113 = vst.msk [vmem:[#allocation4 + $0x10] sm:$0xff] %vm373, %v3081
      %3114 = vst.msk [vmem:[#allocation4 + $0x18] sm:$0xff] %vm373, %v3082
      %3115 = vst.msk [vmem:[#allocation4 + $0x20] sm:$0xff] %vm373, %v3083
      %3116 = vst.msk [vmem:[#allocation4 + $0x28] sm:$0xff] %vm373, %v3084
      %3117 = vst.msk [vmem:[#allocation4 + $0x30] sm:$0xff] %vm373, %v3085
      %3118 = vst.msk [vmem:[#allocation4 + $0x38] sm:$0xff] %vm373, %v3086
      %3119 = vst.msk [vmem:[#allocation4 + $0x40] sm:$0xff] %vm373, %v3087
      %3120 = vst.msk [vmem:[#allocation4 + $0x48] sm:$0xff] %vm373, %v3088
      %3121 = vst.msk [vmem:[#allocation4 + $0x50] sm:$0xff] %vm373, %v3089
      %3122 = vst.msk [vmem:[#allocation4 + $0x58] sm:$0xff] %vm373, %v3090
      %3123 = vst.msk [vmem:[#allocation4 + $0x60] sm:$0xff] %vm373, %v3091
      %3124 = vst.msk [vmem:[#allocation4 + $0x68] sm:$0xff] %vm373, %v3092
      %3125 = vst.msk [vmem:[#allocation4 + $0x70] sm:$0xff] %vm373, %v3093
      %3126 = vst.msk [vmem:[#allocation4 + $0x78] sm:$0xff] %vm373, %v3094
      %3127 = vst.msk [vmem:[#allocation4 + $0x80] sm:$0xff] %vm373, %v3095
      %3128 = vst.msk [vmem:[#allocation4 + $0x88] sm:$0xff] %vm373, %v3096
      %3129 = vst.msk [vmem:[#allocation4 + $0x90] sm:$0xff] %vm373, %v3097
      %3130 = vst.msk [vmem:[#allocation4 + $0x98] sm:$0xff] %vm373, %v3098
      %3131 = vst.msk [vmem:[#allocation4 + $0xa0] sm:$0xff] %vm373, %v3099
      %3132 = vst.msk [vmem:[#allocation4 + $0xa8] sm:$0xff] %vm373, %v3100
      %3133 = vst.msk [vmem:[#allocation4 + $0xb0] sm:$0xff] %vm373, %v3101
      %3134 = vst.msk [vmem:[#allocation4 + $0xb8] sm:$0xff] %vm373, %v3102
      %3135 = vst.msk [vmem:[#allocation4 + $0xc0] sm:$0xff] %vm373, %v3103
      %3136 = vst.msk [vmem:[#allocation4 + $0xc8] sm:$0xff] %vm373, %v3104
      %3137 = vst.msk [vmem:[#allocation4 + $0xd0] sm:$0xff] %vm373, %v3105
      %3138 = vst.msk [vmem:[#allocation4 + $0xd8] sm:$0xff] %vm373, %v3106
      %3139 = vst.msk [vmem:[#allocation4 + $0xe0] sm:$0xff] %vm373, %v3107
      %3140 = vst.msk [vmem:[#allocation4 + $0xe8] sm:$0xff] %vm373, %v3108
      %3141 = vst.msk [vmem:[#allocation4 + $0xf0] sm:$0xff] %vm373, %v3109
      %3142 = vst.msk [vmem:[#allocation4 + $0xf8] sm:$0xff] %vm373, %v3110
      %v3143 = vld [vmem:[#allocation4] sm:$0xff]
      %v3144 = vld [vmem:[#allocation4 + $0x8] sm:$0xff]
      %v3145 = vld [vmem:[#allocation4 + $0x10] sm:$0xff]
      %v3146 = vld [vmem:[#allocation4 + $0x18] sm:$0xff]
      %v3147 = vld [vmem:[#allocation4 + $0x20] sm:$0xff]
      %v3148 = vld [vmem:[#allocation4 + $0x28] sm:$0xff]
      %v3149 = vld [vmem:[#allocation4 + $0x30] sm:$0xff]
      %v3150 = vld [vmem:[#allocation4 + $0x38] sm:$0xff]
      %v3151 = vld [vmem:[#allocation4 + $0x40] sm:$0xff]
      %v3152 = vld [vmem:[#allocation4 + $0x48] sm:$0xff]
      %v3153 = vld [vmem:[#allocation4 + $0x50] sm:$0xff]
      %v3154 = vld [vmem:[#allocation4 + $0x58] sm:$0xff]
      %v3155 = vld [vmem:[#allocation4 + $0x60] sm:$0xff]
      %v3156 = vld [vmem:[#allocation4 + $0x68] sm:$0xff]
      %v3157 = vld [vmem:[#allocation4 + $0x70] sm:$0xff]
      %v3158 = vld [vmem:[#allocation4 + $0x78] sm:$0xff]
      %v3159 = vld [vmem:[#allocation4 + $0x80] sm:$0xff]
      %v3160 = vld [vmem:[#allocation4 + $0x88] sm:$0xff]
      %v3161 = vld [vmem:[#allocation4 + $0x90] sm:$0xff]
      %v3162 = vld [vmem:[#allocation4 + $0x98] sm:$0xff]
      %v3163 = vld [vmem:[#allocation4 + $0xa0] sm:$0xff]
      %v3164 = vld [vmem:[#allocation4 + $0xa8] sm:$0xff]
      %v3165 = vld [vmem:[#allocation4 + $0xb0] sm:$0xff]
      %v3166 = vld [vmem:[#allocation4 + $0xb8] sm:$0xff]
      %v3167 = vld [vmem:[#allocation4 + $0xc0] sm:$0xff]
      %v3168 = vld [vmem:[#allocation4 + $0xc8] sm:$0xff]
      %v3169 = vld [vmem:[#allocation4 + $0xd0] sm:$0xff]
      %v3170 = vld [vmem:[#allocation4 + $0xd8] sm:$0xff]
      %v3171 = vld [vmem:[#allocation4 + $0xe0] sm:$0xff]
      %v3172 = vld [vmem:[#allocation4 + $0xe8] sm:$0xff]
      %v3173 = vld [vmem:[#allocation4 + $0xf0] sm:$0xff]
      %v3174 = vld [vmem:[#allocation4 + $0xf8] sm:$0xff]
      %v3175 = vld [vmem:[%s2490 + $0x2] sm:$0xff]
      %v3176 = vld [vmem:[%s2490 + $0xa] sm:$0xff]
      %v3177 = vld [vmem:[%s2490 + $0x1a] sm:$0xff]
      %v3178 = vld [vmem:[%s2490 + $0x22] sm:$0xff]
      %v3179 = vld [vmem:[%s2490 + $0x32] sm:$0xff]
      %v3180 = vld [vmem:[%s2490 + $0x3a] sm:$0xff]
      %v3181 = vld [vmem:[%s2490 + $0x4a] sm:$0xff]
      %v3182 = vld [vmem:[%s2490 + $0x52] sm:$0xff]
      %v3183 = vld [vmem:[%s2490 + $0x62] sm:$0xff]
      %v3184 = vld [vmem:[%s2490 + $0x6a] sm:$0xff]
      %v3185 = vld [vmem:[%s2490 + $0x7a] sm:$0xff]
      %v3186 = vld [vmem:[%s2490 + $0x82] sm:$0xff]
      %v3187 = vld [vmem:[%s2490 + $0x92] sm:$0xff]
      %v3188 = vld [vmem:[%s2490 + $0x9a] sm:$0xff]
      %v3189 = vld [vmem:[%s2490 + $0xaa] sm:$0xff]
      %v3190 = vld [vmem:[%s2490 + $0xb2] sm:$0xff]
      %v3191 = vld [vmem:[%s2490 + $0xc2] sm:$0xff]
      %v3192 = vld [vmem:[%s2490 + $0xca] sm:$0xff]
      %v3193 = vld [vmem:[%s2490 + $0xda] sm:$0xff]
      %v3194 = vld [vmem:[%s2490 + $0xe2] sm:$0xff]
      %v3195 = vld [vmem:[%s2490 + $0xf2] sm:$0xff]
      %v3196 = vld [vmem:[%s2490 + $0xfa] sm:$0xff]
      %v3197 = vld [vmem:[%s2490 + $0x10a] sm:$0xff]
      %v3198 = vld [vmem:[%s2490 + $0x112] sm:$0xff]
      %v3199 = vld [vmem:[%s2490 + $0x122] sm:$0xff]
      %v3200 = vld [vmem:[%s2490 + $0x12a] sm:$0xff]
      %v3201 = vld [vmem:[%s2490 + $0x13a] sm:$0xff]
      %v3202 = vld [vmem:[%s2490 + $0x142] sm:$0xff]
      %v3203 = vld [vmem:[%s2490 + $0x152] sm:$0xff]
      %v3204 = vld [vmem:[%s2490 + $0x15a] sm:$0xff]
      %v3205 = vld [vmem:[%s2490 + $0x16a] sm:$0xff]
      %v3206 = vld [vmem:[%s2490 + $0x172] sm:$0xff]
      %s3207 = scalar_lea.vmem %s1, 32
      %v3208 = vld [vmem:[%s3207] sm:$0xf]
      %v3210 = vsel %vm252, %v3175, 0
      %v3213 = vsel %vm252, %v3176, 0
      %v3216 = vsel %vm252, %v3177, 0
      %v3219 = vsel %vm252, %v3178, 0
      %v3222 = vsel %vm252, %v3179, 0
      %v3225 = vsel %vm252, %v3180, 0
      %v3228 = vsel %vm252, %v3181, 0
      %v3231 = vsel %vm252, %v3182, 0
      %v3234 = vsel %vm252, %v3183, 0
      %v3237 = vsel %vm252, %v3184, 0
      %v3240 = vsel %vm252, %v3185, 0
      %v3243 = vsel %vm252, %v3186, 0
      %v3246 = vsel %vm252, %v3187, 0
      %v3249 = vsel %vm252, %v3188, 0
      %v3252 = vsel %vm252, %v3189, 0
      %v3255 = vsel %vm252, %v3190, 0
      %v3258 = vsel %vm252, %v3191, 0
      %v3261 = vsel %vm252, %v3192, 0
      %v3264 = vsel %vm252, %v3193, 0
      %v3267 = vsel %vm252, %v3194, 0
      %v3270 = vsel %vm252, %v3195, 0
      %v3273 = vsel %vm252, %v3196, 0
      %v3276 = vsel %vm252, %v3197, 0
      %v3279 = vsel %vm252, %v3198, 0
      %v3282 = vsel %vm252, %v3199, 0
      %v3285 = vsel %vm252, %v3200, 0
      %v3288 = vsel %vm252, %v3201, 0
      %v3291 = vsel %vm252, %v3202, 0
      %v3294 = vsel %vm252, %v3203, 0
      %v3297 = vsel %vm252, %v3204, 0
      %v3300 = vsel %vm252, %v3205, 0
      %v3303 = vsel %vm252, %v3206, 0
      %v3306 = vsel %vm567, %v3208, 0
      %3308 = vmatpush.msra.mxu0 0.0
      %3309 = vmatpush.msra.mxu0 0.0
      %3310 = vmatpush.msra.mxu0 0.0
      %3311 = vmatpush.msra.mxu0 0.0
      %3312 = vmatpush.msra.mxu0 0.0
      %3313 = vmatpush.msra.mxu0 0.0
      %3314 = vmatpush.msra.mxu0 0.0
      %3315 = vmatpush.msra.mxu0 0.0
      %3316 = vmatpush.msra.mxu0 0.0
      %3317 = vmatpush.msra.mxu0 0.0
      %3318 = vmatpush.msra.mxu0 0.0
      %3319 = vmatpush.msra.mxu0 0.0
      %3320 = vmatpush.msra.mxu0 0.0
      %3321 = vmatpush.msra.mxu0 0.0
      %3322 = vmatpush.msra.mxu0 0.0
      %3323 = vmatpush.msra.mxu0 %v3306
      %3324 = vmatmul.f32.gmra.mxu0 %v3210
      %v3325 = vpop.f32.mrf.mxu0
      %v3326 = vadd.f32 0.0, %v3325
      %3327 = vmatmul.f32.gmra.mxu0 %v3213
      %v3328 = vpop.f32.mrf.mxu0
      %v3329 = vadd.f32 0.0, %v3328
      %3330 = vmatmul.f32.gmra.mxu0 %v3216
      %v3331 = vpop.f32.mrf.mxu0
      %v3332 = vadd.f32 0.0, %v3331
      %3333 = vmatmul.f32.gmra.mxu0 %v3219
      %v3334 = vpop.f32.mrf.mxu0
      %v3335 = vadd.f32 0.0, %v3334
      %3336 = vmatmul.f32.gmra.mxu0 %v3222
      %v3337 = vpop.f32.mrf.mxu0
      %v3338 = vadd.f32 0.0, %v3337
      %3339 = vmatmul.f32.gmra.mxu0 %v3225
      %v3340 = vpop.f32.mrf.mxu0
      %v3341 = vadd.f32 0.0, %v3340
      %3342 = vmatmul.f32.gmra.mxu0 %v3228
      %v3343 = vpop.f32.mrf.mxu0
      %v3344 = vadd.f32 0.0, %v3343
      %3345 = vmatmul.f32.gmra.mxu0 %v3231
      %v3346 = vpop.f32.mrf.mxu0
      %v3347 = vadd.f32 0.0, %v3346
      %3348 = vmatmul.f32.gmra.mxu0 %v3234
      %v3349 = vpop.f32.mrf.mxu0
      %v3350 = vadd.f32 0.0, %v3349
      %3351 = vmatmul.f32.gmra.mxu0 %v3237
      %v3352 = vpop.f32.mrf.mxu0
      %v3353 = vadd.f32 0.0, %v3352
      %3354 = vmatmul.f32.gmra.mxu0 %v3240
      %v3355 = vpop.f32.mrf.mxu0
      %v3356 = vadd.f32 0.0, %v3355
      %3357 = vmatmul.f32.gmra.mxu0 %v3243
      %v3358 = vpop.f32.mrf.mxu0
      %v3359 = vadd.f32 0.0, %v3358
      %3360 = vmatmul.f32.gmra.mxu0 %v3246
      %v3361 = vpop.f32.mrf.mxu0
      %v3362 = vadd.f32 0.0, %v3361
      %3363 = vmatmul.f32.gmra.mxu0 %v3249
      %v3364 = vpop.f32.mrf.mxu0
      %v3365 = vadd.f32 0.0, %v3364
      %3366 = vmatmul.f32.gmra.mxu0 %v3252
      %v3367 = vpop.f32.mrf.mxu0
      %v3368 = vadd.f32 0.0, %v3367
      %3369 = vmatmul.f32.gmra.mxu0 %v3255
      %v3370 = vpop.f32.mrf.mxu0
      %v3371 = vadd.f32 0.0, %v3370
      %3372 = vmatmul.f32.gmra.mxu0 %v3258
      %v3373 = vpop.f32.mrf.mxu0
      %v3374 = vadd.f32 0.0, %v3373
      %3375 = vmatmul.f32.gmra.mxu0 %v3261
      %v3376 = vpop.f32.mrf.mxu0
      %v3377 = vadd.f32 0.0, %v3376
      %3378 = vmatmul.f32.gmra.mxu0 %v3264
      %v3379 = vpop.f32.mrf.mxu0
      %v3380 = vadd.f32 0.0, %v3379
      %3381 = vmatmul.f32.gmra.mxu0 %v3267
      %v3382 = vpop.f32.mrf.mxu0
      %v3383 = vadd.f32 0.0, %v3382
      %3384 = vmatmul.f32.gmra.mxu0 %v3270
      %v3385 = vpop.f32.mrf.mxu0
      %v3386 = vadd.f32 0.0, %v3385
      %3387 = vmatmul.f32.gmra.mxu0 %v3273
      %v3388 = vpop.f32.mrf.mxu0
      %v3389 = vadd.f32 0.0, %v3388
      %3390 = vmatmul.f32.gmra.mxu0 %v3276
      %v3391 = vpop.f32.mrf.mxu0
      %v3392 = vadd.f32 0.0, %v3391
      %3393 = vmatmul.f32.gmra.mxu0 %v3279
      %v3394 = vpop.f32.mrf.mxu0
      %v3395 = vadd.f32 0.0, %v3394
      %3396 = vmatmul.f32.gmra.mxu0 %v3282
      %v3397 = vpop.f32.mrf.mxu0
      %v3398 = vadd.f32 0.0, %v3397
      %3399 = vmatmul.f32.gmra.mxu0 %v3285
      %v3400 = vpop.f32.mrf.mxu0
      %v3401 = vadd.f32 0.0, %v3400
      %3402 = vmatmul.f32.gmra.mxu0 %v3288
      %v3403 = vpop.f32.mrf.mxu0
      %v3404 = vadd.f32 0.0, %v3403
      %3405 = vmatmul.f32.gmra.mxu0 %v3291
      %v3406 = vpop.f32.mrf.mxu0
      %v3407 = vadd.f32 0.0, %v3406
      %3408 = vmatmul.f32.gmra.mxu0 %v3294
      %v3409 = vpop.f32.mrf.mxu0
      %v3410 = vadd.f32 0.0, %v3409
      %3411 = vmatmul.f32.gmra.mxu0 %v3297
      %v3412 = vpop.f32.mrf.mxu0
      %v3413 = vadd.f32 0.0, %v3412
      %3414 = vmatmul.f32.gmra.mxu0 %v3300
      %v3415 = vpop.f32.mrf.mxu0
      %v3416 = vadd.f32 0.0, %v3415
      %3417 = vmatmul.f32.gmra.mxu0 %v3303
      %v3418 = vpop.f32.mrf.mxu0
      %v3419 = vadd.f32 0.0, %v3418
      %3420 = vdwg.mxu0
      %v3421 = vadd.f32 %v3143, %v3326
      %v3422 = vadd.f32 %v3144, %v3329
      %v3423 = vadd.f32 %v3145, %v3332
      %v3424 = vadd.f32 %v3146, %v3335
      %v3425 = vadd.f32 %v3147, %v3338
      %v3426 = vadd.f32 %v3148, %v3341
      %v3427 = vadd.f32 %v3149, %v3344
      %v3428 = vadd.f32 %v3150, %v3347
      %v3429 = vadd.f32 %v3151, %v3350
      %v3430 = vadd.f32 %v3152, %v3353
      %v3431 = vadd.f32 %v3153, %v3356
      %v3432 = vadd.f32 %v3154, %v3359
      %v3433 = vadd.f32 %v3155, %v3362
      %v3434 = vadd.f32 %v3156, %v3365
      %v3435 = vadd.f32 %v3157, %v3368
      %v3436 = vadd.f32 %v3158, %v3371
      %v3437 = vadd.f32 %v3159, %v3374
      %v3438 = vadd.f32 %v3160, %v3377
      %v3439 = vadd.f32 %v3161, %v3380
      %v3440 = vadd.f32 %v3162, %v3383
      %v3441 = vadd.f32 %v3163, %v3386
      %v3442 = vadd.f32 %v3164, %v3389
      %v3443 = vadd.f32 %v3165, %v3392
      %v3444 = vadd.f32 %v3166, %v3395
      %v3445 = vadd.f32 %v3167, %v3398
      %v3446 = vadd.f32 %v3168, %v3401
      %v3447 = vadd.f32 %v3169, %v3404
      %v3448 = vadd.f32 %v3170, %v3407
      %v3449 = vadd.f32 %v3171, %v3410
      %v3450 = vadd.f32 %v3172, %v3413
      %v3451 = vadd.f32 %v3173, %v3416
      %v3452 = vadd.f32 %v3174, %v3419
      %3453 = vst.msk [vmem:[#allocation4] sm:$0xff] %vm373, %v3421
      %3454 = vst.msk [vmem:[#allocation4 + $0x8] sm:$0xff] %vm373, %v3422
      %3455 = vst.msk [vmem:[#allocation4 + $0x10] sm:$0xff] %vm373, %v3423
      %3456 = vst.msk [vmem:[#allocation4 + $0x18] sm:$0xff] %vm373, %v3424
      %3457 = vst.msk [vmem:[#allocation4 + $0x20] sm:$0xff] %vm373, %v3425
      %3458 = vst.msk [vmem:[#allocation4 + $0x28] sm:$0xff] %vm373, %v3426
      %3459 = vst.msk [vmem:[#allocation4 + $0x30] sm:$0xff] %vm373, %v3427
      %3460 = vst.msk [vmem:[#allocation4 + $0x38] sm:$0xff] %vm373, %v3428
      %3461 = vst.msk [vmem:[#allocation4 + $0x40] sm:$0xff] %vm373, %v3429
      %3462 = vst.msk [vmem:[#allocation4 + $0x48] sm:$0xff] %vm373, %v3430
      %3463 = vst.msk [vmem:[#allocation4 + $0x50] sm:$0xff] %vm373, %v3431
      %3464 = vst.msk [vmem:[#allocation4 + $0x58] sm:$0xff] %vm373, %v3432
      %3465 = vst.msk [vmem:[#allocation4 + $0x60] sm:$0xff] %vm373, %v3433
      %3466 = vst.msk [vmem:[#allocation4 + $0x68] sm:$0xff] %vm373, %v3434
      %3467 = vst.msk [vmem:[#allocation4 + $0x70] sm:$0xff] %vm373, %v3435
      %3468 = vst.msk [vmem:[#allocation4 + $0x78] sm:$0xff] %vm373, %v3436
      %3469 = vst.msk [vmem:[#allocation4 + $0x80] sm:$0xff] %vm373, %v3437
      %3470 = vst.msk [vmem:[#allocation4 + $0x88] sm:$0xff] %vm373, %v3438
      %3471 = vst.msk [vmem:[#allocation4 + $0x90] sm:$0xff] %vm373, %v3439
      %3472 = vst.msk [vmem:[#allocation4 + $0x98] sm:$0xff] %vm373, %v3440
      %3473 = vst.msk [vmem:[#allocation4 + $0xa0] sm:$0xff] %vm373, %v3441
      %3474 = vst.msk [vmem:[#allocation4 + $0xa8] sm:$0xff] %vm373, %v3442
      %3475 = vst.msk [vmem:[#allocation4 + $0xb0] sm:$0xff] %vm373, %v3443
      %3476 = vst.msk [vmem:[#allocation4 + $0xb8] sm:$0xff] %vm373, %v3444
      %3477 = vst.msk [vmem:[#allocation4 + $0xc0] sm:$0xff] %vm373, %v3445
      %3478 = vst.msk [vmem:[#allocation4 + $0xc8] sm:$0xff] %vm373, %v3446
      %3479 = vst.msk [vmem:[#allocation4 + $0xd0] sm:$0xff] %vm373, %v3447
      %3480 = vst.msk [vmem:[#allocation4 + $0xd8] sm:$0xff] %vm373, %v3448
      %3481 = vst.msk [vmem:[#allocation4 + $0xe0] sm:$0xff] %vm373, %v3449
      %3482 = vst.msk [vmem:[#allocation4 + $0xe8] sm:$0xff] %vm373, %v3450
      %3483 = vst.msk [vmem:[#allocation4 + $0xf0] sm:$0xff] %vm373, %v3451
      %3484 = vst.msk [vmem:[#allocation4 + $0xf8] sm:$0xff] %vm373, %v3452
      %v3485 = vld [vmem:[#allocation4] sm:$0xff]
      %v3486 = vld [vmem:[#allocation4 + $0x8] sm:$0xff]
      %v3487 = vld [vmem:[#allocation4 + $0x10] sm:$0xff]
      %v3488 = vld [vmem:[#allocation4 + $0x18] sm:$0xff]
      %v3489 = vld [vmem:[#allocation4 + $0x20] sm:$0xff]
      %v3490 = vld [vmem:[#allocation4 + $0x28] sm:$0xff]
      %v3491 = vld [vmem:[#allocation4 + $0x30] sm:$0xff]
      %v3492 = vld [vmem:[#allocation4 + $0x38] sm:$0xff]
      %v3493 = vld [vmem:[#allocation4 + $0x40] sm:$0xff]
      %v3494 = vld [vmem:[#allocation4 + $0x48] sm:$0xff]
      %v3495 = vld [vmem:[#allocation4 + $0x50] sm:$0xff]
      %v3496 = vld [vmem:[#allocation4 + $0x58] sm:$0xff]
      %v3497 = vld [vmem:[#allocation4 + $0x60] sm:$0xff]
      %v3498 = vld [vmem:[#allocation4 + $0x68] sm:$0xff]
      %v3499 = vld [vmem:[#allocation4 + $0x70] sm:$0xff]
      %v3500 = vld [vmem:[#allocation4 + $0x78] sm:$0xff]
      %v3501 = vld [vmem:[#allocation4 + $0x80] sm:$0xff]
      %v3502 = vld [vmem:[#allocation4 + $0x88] sm:$0xff]
      %v3503 = vld [vmem:[#allocation4 + $0x90] sm:$0xff]
      %v3504 = vld [vmem:[#allocation4 + $0x98] sm:$0xff]
      %v3505 = vld [vmem:[#allocation4 + $0xa0] sm:$0xff]
      %v3506 = vld [vmem:[#allocation4 + $0xa8] sm:$0xff]
      %v3507 = vld [vmem:[#allocation4 + $0xb0] sm:$0xff]
      %v3508 = vld [vmem:[#allocation4 + $0xb8] sm:$0xff]
      %v3509 = vld [vmem:[#allocation4 + $0xc0] sm:$0xff]
      %v3510 = vld [vmem:[#allocation4 + $0xc8] sm:$0xff]
      %v3511 = vld [vmem:[#allocation4 + $0xd0] sm:$0xff]
      %v3512 = vld [vmem:[#allocation4 + $0xd8] sm:$0xff]
      %v3513 = vld [vmem:[#allocation4 + $0xe0] sm:$0xff]
      %v3514 = vld [vmem:[#allocation4 + $0xe8] sm:$0xff]
      %v3515 = vld [vmem:[#allocation4 + $0xf0] sm:$0xff]
      %v3516 = vld [vmem:[#allocation4 + $0xf8] sm:$0xff]
      %v3517 = vld [vmem:[%s2] sm:$0x1]
      %v3519 = vperm.slane %v3517, 0
      %v3521 = vadd.f32 %v3485, %v3519
      %v3522 = vadd.f32 %v3486, %v3519
      %v3523 = vadd.f32 %v3487, %v3519
      %v3524 = vadd.f32 %v3488, %v3519
      %v3525 = vadd.f32 %v3489, %v3519
      %v3526 = vadd.f32 %v3490, %v3519
      %v3527 = vadd.f32 %v3491, %v3519
      %v3528 = vadd.f32 %v3492, %v3519
      %v3529 = vadd.f32 %v3493, %v3519
      %v3530 = vadd.f32 %v3494, %v3519
      %v3531 = vadd.f32 %v3495, %v3519
      %v3532 = vadd.f32 %v3496, %v3519
      %v3533 = vadd.f32 %v3497, %v3519
      %v3534 = vadd.f32 %v3498, %v3519
      %v3535 = vadd.f32 %v3499, %v3519
      %v3536 = vadd.f32 %v3500, %v3519
      %v3537 = vadd.f32 %v3501, %v3519
      %v3538 = vadd.f32 %v3502, %v3519
      %v3539 = vadd.f32 %v3503, %v3519
      %v3540 = vadd.f32 %v3504, %v3519
      %v3541 = vadd.f32 %v3505, %v3519
      %v3542 = vadd.f32 %v3506, %v3519
      %v3543 = vadd.f32 %v3507, %v3519
      %v3544 = vadd.f32 %v3508, %v3519
      %v3545 = vadd.f32 %v3509, %v3519
      %v3546 = vadd.f32 %v3510, %v3519
      %v3547 = vadd.f32 %v3511, %v3519
      %v3548 = vadd.f32 %v3512, %v3519
      %v3549 = vadd.f32 %v3513, %v3519
      %v3550 = vadd.f32 %v3514, %v3519
      %v3551 = vadd.f32 %v3515, %v3519
      %v3552 = vadd.f32 %v3516, %v3519
      %v3553 = vmax.f32 %v3521, 0.0
      %v3554 = vmax.f32 %v3522, 0.0
      %v3555 = vmax.f32 %v3523, 0.0
      %v3556 = vmax.f32 %v3524, 0.0
      %v3557 = vmax.f32 %v3525, 0.0
      %v3558 = vmax.f32 %v3526, 0.0
      %v3559 = vmax.f32 %v3527, 0.0
      %v3560 = vmax.f32 %v3528, 0.0
      %v3561 = vmax.f32 %v3529, 0.0
      %v3562 = vmax.f32 %v3530, 0.0
      %v3563 = vmax.f32 %v3531, 0.0
      %v3564 = vmax.f32 %v3532, 0.0
      %v3565 = vmax.f32 %v3533, 0.0
      %v3566 = vmax.f32 %v3534, 0.0
      %v3567 = vmax.f32 %v3535, 0.0
      %v3568 = vmax.f32 %v3536, 0.0
      %v3569 = vmax.f32 %v3537, 0.0
      %v3570 = vmax.f32 %v3538, 0.0
      %v3571 = vmax.f32 %v3539, 0.0
      %v3572 = vmax.f32 %v3540, 0.0
      %v3573 = vmax.f32 %v3541, 0.0
      %v3574 = vmax.f32 %v3542, 0.0
      %v3575 = vmax.f32 %v3543, 0.0
      %v3576 = vmax.f32 %v3544, 0.0
      %v3577 = vmax.f32 %v3545, 0.0
      %v3578 = vmax.f32 %v3546, 0.0
      %v3579 = vmax.f32 %v3547, 0.0
      %v3580 = vmax.f32 %v3548, 0.0
      %v3581 = vmax.f32 %v3549, 0.0
      %v3582 = vmax.f32 %v3550, 0.0
      %v3583 = vmax.f32 %v3551, 0.0
      %v3584 = vmax.f32 %v3552, 0.0
      %3585 = vst.msk [vmem:[#allocation3] sm:$0xff] %vm373, 0.0
      %3586 = vst.msk [vmem:[#allocation3 + $0x8] sm:$0xff] %vm373, 0.0
      %vm3587 = vcmask 58368
      %3588 = vst.msk [vmem:[#allocation3 + $0x10] sm:$0x3] %vm3587, 0.0
      %3589 = vst.msk [vmem:[#allocation3 + $0x18] sm:$0xff] %vm373, 0.0
      %3590 = vst.msk [vmem:[#allocation3 + $0x20] sm:$0xff] %vm373, 0.0
      %3591 = vst.msk [vmem:[#allocation3 + $0x28] sm:$0x3] %vm3587, 0.0
      %3592 = vst.msk [vmem:[#allocation3 + $0x30] sm:$0xff] %vm373, 0.0
      %3593 = vst.msk [vmem:[#allocation3 + $0x38] sm:$0xff] %vm373, 0.0
      %3594 = vst.msk [vmem:[#allocation3 + $0x40] sm:$0x3] %vm3587, 0.0
      %3595 = vst.msk [vmem:[#allocation3 + $0x48] sm:$0xff] %vm373, 0.0
      %3596 = vst.msk [vmem:[#allocation3 + $0x50] sm:$0xff] %vm373, 0.0
      %3597 = vst.msk [vmem:[#allocation3 + $0x58] sm:$0x3] %vm3587, 0.0
      %3598 = vst.msk [vmem:[#allocation3 + $0x60] sm:$0xff] %vm373, 0.0
      %3599 = vst.msk [vmem:[#allocation3 + $0x68] sm:$0xff] %vm373, 0.0
      %3600 = vst.msk [vmem:[#allocation3 + $0x70] sm:$0x3] %vm3587, 0.0
      %3601 = vst.msk [vmem:[#allocation3 + $0x78] sm:$0xff] %vm373, 0.0
      %3602 = vst.msk [vmem:[#allocation3 + $0x80] sm:$0xff] %vm373, 0.0
      %3603 = vst.msk [vmem:[#allocation3 + $0x88] sm:$0x3] %vm3587, 0.0
      %3604 = vst.msk [vmem:[#allocation3 + $0x90] sm:$0xff] %vm373, 0.0
      %3605 = vst.msk [vmem:[#allocation3 + $0x98] sm:$0xff] %vm373, 0.0
      %3606 = vst.msk [vmem:[#allocation3 + $0xa0] sm:$0x3] %vm3587, 0.0
      %3607 = vst.msk [vmem:[#allocation3 + $0xa8] sm:$0xff] %vm373, 0.0
      %3608 = vst.msk [vmem:[#allocation3 + $0xb0] sm:$0xff] %vm373, 0.0
      %3609 = vst.msk [vmem:[#allocation3 + $0xb8] sm:$0x3] %vm3587, 0.0
      %3610 = vst.msk [vmem:[#allocation3 + $0xc0] sm:$0xff] %vm373, 0.0
      %3611 = vst.msk [vmem:[#allocation3 + $0xc8] sm:$0xff] %vm373, 0.0
      %3612 = vst.msk [vmem:[#allocation3 + $0xd0] sm:$0x3] %vm3587, 0.0
      %3613 = vst.msk [vmem:[#allocation3 + $0xd8] sm:$0xff] %vm373, 0.0
      %3614 = vst.msk [vmem:[#allocation3 + $0xe0] sm:$0xff] %vm373, 0.0
      %3615 = vst.msk [vmem:[#allocation3 + $0xe8] sm:$0x3] %vm3587, 0.0
      %3616 = vst.msk [vmem:[#allocation3 + $0xf0] sm:$0xff] %vm373, 0.0
      %3617 = vst.msk [vmem:[#allocation3 + $0xf8] sm:$0xff] %vm373, 0.0
      %3618 = vst.msk [vmem:[#allocation3 + $0x100] sm:$0x3] %vm3587, 0.0
      %3619 = vst.msk [vmem:[#allocation3 + $0x108] sm:$0xff] %vm373, 0.0
      %3620 = vst.msk [vmem:[#allocation3 + $0x110] sm:$0xff] %vm373, 0.0
      %3621 = vst.msk [vmem:[#allocation3 + $0x118] sm:$0x3] %vm3587, 0.0
      %3622 = vst.msk [vmem:[#allocation3 + $0x120] sm:$0xff] %vm373, 0.0
      %3623 = vst.msk [vmem:[#allocation3 + $0x128] sm:$0xff] %vm373, 0.0
      %3624 = vst.msk [vmem:[#allocation3 + $0x130] sm:$0x3] %vm3587, 0.0
      %3625 = vst.msk [vmem:[#allocation3 + $0x138] sm:$0xff] %vm373, 0.0
      %3626 = vst.msk [vmem:[#allocation3 + $0x140] sm:$0xff] %vm373, 0.0
      %3627 = vst.msk [vmem:[#allocation3 + $0x148] sm:$0x3] %vm3587, 0.0
      %3628 = vst.msk [vmem:[#allocation3 + $0x150] sm:$0xff] %vm373, 0.0
      %3629 = vst.msk [vmem:[#allocation3 + $0x158] sm:$0xff] %vm373, 0.0
      %3630 = vst.msk [vmem:[#allocation3 + $0x160] sm:$0x3] %vm3587, 0.0
      %3631 = vst.msk [vmem:[#allocation3 + $0x168] sm:$0xff] %vm373, 0.0
      %3632 = vst.msk [vmem:[#allocation3 + $0x170] sm:$0xff] %vm373, 0.0
      %3633 = vst.msk [vmem:[#allocation3 + $0x178] sm:$0x3] %vm3587, 0.0
      %3634 = vst.msk [vmem:[#allocation3 + $0x180] sm:$0xff] %vm373, 0.0
      %3635 = vst.msk [vmem:[#allocation3 + $0x188] sm:$0xff] %vm373, 0.0
      %3636 = vst.msk [vmem:[#allocation3 + $0x190] sm:$0x3] %vm3587, 0.0
      %3637 = vst.msk [vmem:[#allocation3 + $0x198] sm:$0xff] %vm373, 0.0
      %3638 = vst.msk [vmem:[#allocation3 + $0x1a0] sm:$0xff] %vm373, 0.0
      %3639 = vst.msk [vmem:[#allocation3 + $0x1a8] sm:$0x3] %vm3587, 0.0
      %s3640 = scalar_lea.vmem [#allocation3], 24
      %3641 = vst.msk [vmem:[%s3640 + $0x1] sm:$0xff] %vm373, %v3553
      %3642 = vst.msk [vmem:[%s3640 + $0x9] sm:$0xff] %vm373, %v3554
      %3643 = vst.msk [vmem:[%s3640 + $0x19] sm:$0xff] %vm373, %v3555
      %3644 = vst.msk [vmem:[%s3640 + $0x21] sm:$0xff] %vm373, %v3556
      %3645 = vst.msk [vmem:[%s3640 + $0x31] sm:$0xff] %vm373, %v3557
      %3646 = vst.msk [vmem:[%s3640 + $0x39] sm:$0xff] %vm373, %v3558
      %3647 = vst.msk [vmem:[%s3640 + $0x49] sm:$0xff] %vm373, %v3559
      %3648 = vst.msk [vmem:[%s3640 + $0x51] sm:$0xff] %vm373, %v3560
      %3649 = vst.msk [vmem:[%s3640 + $0x61] sm:$0xff] %vm373, %v3561
      %3650 = vst.msk [vmem:[%s3640 + $0x69] sm:$0xff] %vm373, %v3562
      %3651 = vst.msk [vmem:[%s3640 + $0x79] sm:$0xff] %vm373, %v3563
      %3652 = vst.msk [vmem:[%s3640 + $0x81] sm:$0xff] %vm373, %v3564
      %3653 = vst.msk [vmem:[%s3640 + $0x91] sm:$0xff] %vm373, %v3565
      %3654 = vst.msk [vmem:[%s3640 + $0x99] sm:$0xff] %vm373, %v3566
      %3655 = vst.msk [vmem:[%s3640 + $0xa9] sm:$0xff] %vm373, %v3567
      %3656 = vst.msk [vmem:[%s3640 + $0xb1] sm:$0xff] %vm373, %v3568
      %3657 = vst.msk [vmem:[%s3640 + $0xc1] sm:$0xff] %vm373, %v3569
      %3658 = vst.msk [vmem:[%s3640 + $0xc9] sm:$0xff] %vm373, %v3570
      %3659 = vst.msk [vmem:[%s3640 + $0xd9] sm:$0xff] %vm373, %v3571
      %3660 = vst.msk [vmem:[%s3640 + $0xe1] sm:$0xff] %vm373, %v3572
      %3661 = vst.msk [vmem:[%s3640 + $0xf1] sm:$0xff] %vm373, %v3573
      %3662 = vst.msk [vmem:[%s3640 + $0xf9] sm:$0xff] %vm373, %v3574
      %3663 = vst.msk [vmem:[%s3640 + $0x109] sm:$0xff] %vm373, %v3575
      %3664 = vst.msk [vmem:[%s3640 + $0x111] sm:$0xff] %vm373, %v3576
      %3665 = vst.msk [vmem:[%s3640 + $0x121] sm:$0xff] %vm373, %v3577
      %3666 = vst.msk [vmem:[%s3640 + $0x129] sm:$0xff] %vm373, %v3578
      %3667 = vst.msk [vmem:[%s3640 + $0x139] sm:$0xff] %vm373, %v3579
      %3668 = vst.msk [vmem:[%s3640 + $0x141] sm:$0xff] %vm373, %v3580
      %3669 = vst.msk [vmem:[%s3640 + $0x151] sm:$0xff] %vm373, %v3581
      %3670 = vst.msk [vmem:[%s3640 + $0x159] sm:$0xff] %vm373, %v3582
      %3671 = vst.msk [vmem:[%s3640 + $0x169] sm:$0xff] %vm373, %v3583
      %3672 = vst.msk [vmem:[%s3640 + $0x171] sm:$0xff] %vm373, %v3584
      %3673 = vst.msk [vmem:[#allocation4] sm:$0xff] %vm373, 0.0
      %3674 = vst.msk [vmem:[#allocation4 + $0x8] sm:$0xff] %vm373, 0.0
      %3675 = vst.msk [vmem:[#allocation4 + $0x10] sm:$0xff] %vm373, 0.0
      %3676 = vst.msk [vmem:[#allocation4 + $0x18] sm:$0xff] %vm373, 0.0
      %3677 = vst.msk [vmem:[#allocation4 + $0x20] sm:$0xff] %vm373, 0.0
      %3678 = vst.msk [vmem:[#allocation4 + $0x28] sm:$0xff] %vm373, 0.0
      %3679 = vst.msk [vmem:[#allocation4 + $0x30] sm:$0xff] %vm373, 0.0
      %3680 = vst.msk [vmem:[#allocation4 + $0x38] sm:$0xff] %vm373, 0.0
      %3681 = vst.msk [vmem:[#allocation4 + $0x40] sm:$0xff] %vm373, 0.0
      %3682 = vst.msk [vmem:[#allocation4 + $0x48] sm:$0xff] %vm373, 0.0
      %3683 = vst.msk [vmem:[#allocation4 + $0x50] sm:$0xff] %vm373, 0.0
      %3684 = vst.msk [vmem:[#allocation4 + $0x58] sm:$0xff] %vm373, 0.0
      %3685 = vst.msk [vmem:[#allocation4 + $0x60] sm:$0xff] %vm373, 0.0
      %3686 = vst.msk [vmem:[#allocation4 + $0x68] sm:$0xff] %vm373, 0.0
      %3687 = vst.msk [vmem:[#allocation4 + $0x70] sm:$0xff] %vm373, 0.0
      %3688 = vst.msk [vmem:[#allocation4 + $0x78] sm:$0xff] %vm373, 0.0
      %3689 = vst.msk [vmem:[#allocation4 + $0x80] sm:$0xff] %vm373, 0.0
      %3690 = vst.msk [vmem:[#allocation4 + $0x88] sm:$0xff] %vm373, 0.0
      %3691 = vst.msk [vmem:[#allocation4 + $0x90] sm:$0xff] %vm373, 0.0
      %3692 = vst.msk [vmem:[#allocation4 + $0x98] sm:$0xff] %vm373, 0.0
      %3693 = vst.msk [vmem:[#allocation4 + $0xa0] sm:$0xff] %vm373, 0.0
      %3694 = vst.msk [vmem:[#allocation4 + $0xa8] sm:$0xff] %vm373, 0.0
      %3695 = vst.msk [vmem:[#allocation4 + $0xb0] sm:$0xff] %vm373, 0.0
      %3696 = vst.msk [vmem:[#allocation4 + $0xb8] sm:$0xff] %vm373, 0.0
      %3697 = vst.msk [vmem:[#allocation4 + $0xc0] sm:$0xff] %vm373, 0.0
      %3698 = vst.msk [vmem:[#allocation4 + $0xc8] sm:$0xff] %vm373, 0.0
      %3699 = vst.msk [vmem:[#allocation4 + $0xd0] sm:$0xff] %vm373, 0.0
      %3700 = vst.msk [vmem:[#allocation4 + $0xd8] sm:$0xff] %vm373, 0.0
      %3701 = vst.msk [vmem:[#allocation4 + $0xe0] sm:$0xff] %vm373, 0.0
      %3702 = vst.msk [vmem:[#allocation4 + $0xe8] sm:$0xff] %vm373, 0.0
      %3703 = vst.msk [vmem:[#allocation4 + $0xf0] sm:$0xff] %vm373, 0.0
      %3704 = vst.msk [vmem:[#allocation4 + $0xf8] sm:$0xff] %vm373, 0.0
      %v3705 = vld [vmem:[#allocation4] sm:$0xff]
      %v3706 = vld [vmem:[#allocation4 + $0x8] sm:$0xff]
      %v3707 = vld [vmem:[#allocation4 + $0x10] sm:$0xff]
      %v3708 = vld [vmem:[#allocation4 + $0x18] sm:$0xff]
      %v3709 = vld [vmem:[#allocation4 + $0x20] sm:$0xff]
      %v3710 = vld [vmem:[#allocation4 + $0x28] sm:$0xff]
      %v3711 = vld [vmem:[#allocation4 + $0x30] sm:$0xff]
      %v3712 = vld [vmem:[#allocation4 + $0x38] sm:$0xff]
      %v3713 = vld [vmem:[#allocation4 + $0x40] sm:$0xff]
      %v3714 = vld [vmem:[#allocation4 + $0x48] sm:$0xff]
      %v3715 = vld [vmem:[#allocation4 + $0x50] sm:$0xff]
      %v3716 = vld [vmem:[#allocation4 + $0x58] sm:$0xff]
      %v3717 = vld [vmem:[#allocation4 + $0x60] sm:$0xff]
      %v3718 = vld [vmem:[#allocation4 + $0x68] sm:$0xff]
      %v3719 = vld [vmem:[#allocation4 + $0x70] sm:$0xff]
      %v3720 = vld [vmem:[#allocation4 + $0x78] sm:$0xff]
      %v3721 = vld [vmem:[#allocation4 + $0x80] sm:$0xff]
      %v3722 = vld [vmem:[#allocation4 + $0x88] sm:$0xff]
      %v3723 = vld [vmem:[#allocation4 + $0x90] sm:$0xff]
      %v3724 = vld [vmem:[#allocation4 + $0x98] sm:$0xff]
      %v3725 = vld [vmem:[#allocation4 + $0xa0] sm:$0xff]
      %v3726 = vld [vmem:[#allocation4 + $0xa8] sm:$0xff]
      %v3727 = vld [vmem:[#allocation4 + $0xb0] sm:$0xff]
      %v3728 = vld [vmem:[#allocation4 + $0xb8] sm:$0xff]
      %v3729 = vld [vmem:[#allocation4 + $0xc0] sm:$0xff]
      %v3730 = vld [vmem:[#allocation4 + $0xc8] sm:$0xff]
      %v3731 = vld [vmem:[#allocation4 + $0xd0] sm:$0xff]
      %v3732 = vld [vmem:[#allocation4 + $0xd8] sm:$0xff]
      %v3733 = vld [vmem:[#allocation4 + $0xe0] sm:$0xff]
      %v3734 = vld [vmem:[#allocation4 + $0xe8] sm:$0xff]
      %v3735 = vld [vmem:[#allocation4 + $0xf0] sm:$0xff]
      %v3736 = vld [vmem:[#allocation4 + $0xf8] sm:$0xff]
      %v3737 = vld [vmem:[#allocation3] sm:$0xff]
      %v3738 = vld [vmem:[#allocation3 + $0x8] sm:$0xff]
      %v3739 = vld [vmem:[#allocation3 + $0x18] sm:$0xff]
      %v3740 = vld [vmem:[#allocation3 + $0x20] sm:$0xff]
      %v3741 = vld [vmem:[#allocation3 + $0x30] sm:$0xff]
      %v3742 = vld [vmem:[#allocation3 + $0x38] sm:$0xff]
      %v3743 = vld [vmem:[#allocation3 + $0x48] sm:$0xff]
      %v3744 = vld [vmem:[#allocation3 + $0x50] sm:$0xff]
      %v3745 = vld [vmem:[#allocation3 + $0x60] sm:$0xff]
      %v3746 = vld [vmem:[#allocation3 + $0x68] sm:$0xff]
      %v3747 = vld [vmem:[#allocation3 + $0x78] sm:$0xff]
      %v3748 = vld [vmem:[#allocation3 + $0x80] sm:$0xff]
      %v3749 = vld [vmem:[#allocation3 + $0x90] sm:$0xff]
      %v3750 = vld [vmem:[#allocation3 + $0x98] sm:$0xff]
      %v3751 = vld [vmem:[#allocation3 + $0xa8] sm:$0xff]
      %v3752 = vld [vmem:[#allocation3 + $0xb0] sm:$0xff]
      %v3753 = vld [vmem:[#allocation3 + $0xc0] sm:$0xff]
      %v3754 = vld [vmem:[#allocation3 + $0xc8] sm:$0xff]
      %v3755 = vld [vmem:[#allocation3 + $0xd8] sm:$0xff]
      %v3756 = vld [vmem:[#allocation3 + $0xe0] sm:$0xff]
      %v3757 = vld [vmem:[#allocation3 + $0xf0] sm:$0xff]
      %v3758 = vld [vmem:[#allocation3 + $0xf8] sm:$0xff]
      %v3759 = vld [vmem:[#allocation3 + $0x108] sm:$0xff]
      %v3760 = vld [vmem:[#allocation3 + $0x110] sm:$0xff]
      %v3761 = vld [vmem:[#allocation3 + $0x120] sm:$0xff]
      %v3762 = vld [vmem:[#allocation3 + $0x128] sm:$0xff]
      %v3763 = vld [vmem:[#allocation3 + $0x138] sm:$0xff]
      %v3764 = vld [vmem:[#allocation3 + $0x140] sm:$0xff]
      %v3765 = vld [vmem:[#allocation3 + $0x150] sm:$0xff]
      %v3766 = vld [vmem:[#allocation3 + $0x158] sm:$0xff]
      %v3767 = vld [vmem:[#allocation3 + $0x168] sm:$0xff]
      %v3768 = vld [vmem:[#allocation3 + $0x170] sm:$0xff]
      %v3769 = vld [vmem:[%s3] sm:$0xff]
      %v3771 = vsel %vm373, %v3737, 0
      %v3774 = vsel %vm373, %v3738, 0
      %v3777 = vsel %vm373, %v3739, 0
      %v3780 = vsel %vm373, %v3740, 0
      %v3783 = vsel %vm373, %v3741, 0
      %v3786 = vsel %vm373, %v3742, 0
      %v3789 = vsel %vm373, %v3743, 0
      %v3792 = vsel %vm373, %v3744, 0
      %v3795 = vsel %vm373, %v3745, 0
      %v3798 = vsel %vm373, %v3746, 0
      %v3801 = vsel %vm373, %v3747, 0
      %v3804 = vsel %vm373, %v3748, 0
      %v3807 = vsel %vm373, %v3749, 0
      %v3810 = vsel %vm373, %v3750, 0
      %v3813 = vsel %vm373, %v3751, 0
      %v3816 = vsel %vm373, %v3752, 0
      %v3819 = vsel %vm373, %v3753, 0
      %v3822 = vsel %vm373, %v3754, 0
      %v3825 = vsel %vm373, %v3755, 0
      %v3828 = vsel %vm373, %v3756, 0
      %v3831 = vsel %vm373, %v3757, 0
      %v3834 = vsel %vm373, %v3758, 0
      %v3837 = vsel %vm373, %v3759, 0
      %v3840 = vsel %vm373, %v3760, 0
      %v3843 = vsel %vm373, %v3761, 0
      %v3846 = vsel %vm373, %v3762, 0
      %v3849 = vsel %vm373, %v3763, 0
      %v3852 = vsel %vm373, %v3764, 0
      %v3855 = vsel %vm373, %v3765, 0
      %v3858 = vsel %vm373, %v3766, 0
      %v3861 = vsel %vm373, %v3767, 0
      %v3864 = vsel %vm373, %v3768, 0
      %3866 = vmatpush.msra.mxu0 0.0
      %3867 = vmatpush.msra.mxu0 0.0
      %3868 = vmatpush.msra.mxu0 0.0
      %3869 = vmatpush.msra.mxu0 0.0
      %3870 = vmatpush.msra.mxu0 0.0
      %3871 = vmatpush.msra.mxu0 0.0
      %3872 = vmatpush.msra.mxu0 0.0
      %3873 = vmatpush.msra.mxu0 0.0
      %3874 = vmatpush.msra.mxu0 0.0
      %3875 = vmatpush.msra.mxu0 0.0
      %3876 = vmatpush.msra.mxu0 0.0
      %3877 = vmatpush.msra.mxu0 0.0
      %3878 = vmatpush.msra.mxu0 0.0
      %3879 = vmatpush.msra.mxu0 0.0
      %3880 = vmatpush.msra.mxu0 0.0
      %3881 = vmatpush.msra.mxu0 %v3769
      %3882 = vmatmul.f32.gmra.mxu0 %v3771
      %v3883 = vpop.f32.mrf.mxu0
      %v3884 = vadd.f32 0.0, %v3883
      %3885 = vmatmul.f32.gmra.mxu0 %v3774
      %v3886 = vpop.f32.mrf.mxu0
      %v3887 = vadd.f32 0.0, %v3886
      %3888 = vmatmul.f32.gmra.mxu0 %v3777
      %v3889 = vpop.f32.mrf.mxu0
      %v3890 = vadd.f32 0.0, %v3889
      %3891 = vmatmul.f32.gmra.mxu0 %v3780
      %v3892 = vpop.f32.mrf.mxu0
      %v3893 = vadd.f32 0.0, %v3892
      %3894 = vmatmul.f32.gmra.mxu0 %v3783
      %v3895 = vpop.f32.mrf.mxu0
      %v3896 = vadd.f32 0.0, %v3895
      %3897 = vmatmul.f32.gmra.mxu0 %v3786
      %v3898 = vpop.f32.mrf.mxu0
      %v3899 = vadd.f32 0.0, %v3898
      %3900 = vmatmul.f32.gmra.mxu0 %v3789
      %v3901 = vpop.f32.mrf.mxu0
      %v3902 = vadd.f32 0.0, %v3901
      %3903 = vmatmul.f32.gmra.mxu0 %v3792
      %v3904 = vpop.f32.mrf.mxu0
      %v3905 = vadd.f32 0.0, %v3904
      %3906 = vmatmul.f32.gmra.mxu0 %v3795
      %v3907 = vpop.f32.mrf.mxu0
      %v3908 = vadd.f32 0.0, %v3907
      %3909 = vmatmul.f32.gmra.mxu0 %v3798
      %v3910 = vpop.f32.mrf.mxu0
      %v3911 = vadd.f32 0.0, %v3910
      %3912 = vmatmul.f32.gmra.mxu0 %v3801
      %v3913 = vpop.f32.mrf.mxu0
      %v3914 = vadd.f32 0.0, %v3913
      %3915 = vmatmul.f32.gmra.mxu0 %v3804
      %v3916 = vpop.f32.mrf.mxu0
      %v3917 = vadd.f32 0.0, %v3916
      %3918 = vmatmul.f32.gmra.mxu0 %v3807
      %v3919 = vpop.f32.mrf.mxu0
      %v3920 = vadd.f32 0.0, %v3919
      %3921 = vmatmul.f32.gmra.mxu0 %v3810
      %v3922 = vpop.f32.mrf.mxu0
      %v3923 = vadd.f32 0.0, %v3922
      %3924 = vmatmul.f32.gmra.mxu0 %v3813
      %v3925 = vpop.f32.mrf.mxu0
      %v3926 = vadd.f32 0.0, %v3925
      %3927 = vmatmul.f32.gmra.mxu0 %v3816
      %v3928 = vpop.f32.mrf.mxu0
      %v3929 = vadd.f32 0.0, %v3928
      %3930 = vmatmul.f32.gmra.mxu0 %v3819
      %v3931 = vpop.f32.mrf.mxu0
      %v3932 = vadd.f32 0.0, %v3931
      %3933 = vmatmul.f32.gmra.mxu0 %v3822
      %v3934 = vpop.f32.mrf.mxu0
      %v3935 = vadd.f32 0.0, %v3934
      %3936 = vmatmul.f32.gmra.mxu0 %v3825
      %v3937 = vpop.f32.mrf.mxu0
      %v3938 = vadd.f32 0.0, %v3937
      %3939 = vmatmul.f32.gmra.mxu0 %v3828
      %v3940 = vpop.f32.mrf.mxu0
      %v3941 = vadd.f32 0.0, %v3940
      %3942 = vmatmul.f32.gmra.mxu0 %v3831
      %v3943 = vpop.f32.mrf.mxu0
      %v3944 = vadd.f32 0.0, %v3943
      %3945 = vmatmul.f32.gmra.mxu0 %v3834
      %v3946 = vpop.f32.mrf.mxu0
      %v3947 = vadd.f32 0.0, %v3946
      %3948 = vmatmul.f32.gmra.mxu0 %v3837
      %v3949 = vpop.f32.mrf.mxu0
      %v3950 = vadd.f32 0.0, %v3949
      %3951 = vmatmul.f32.gmra.mxu0 %v3840
      %v3952 = vpop.f32.mrf.mxu0
      %v3953 = vadd.f32 0.0, %v3952
      %3954 = vmatmul.f32.gmra.mxu0 %v3843
      %v3955 = vpop.f32.mrf.mxu0
      %v3956 = vadd.f32 0.0, %v3955
      %3957 = vmatmul.f32.gmra.mxu0 %v3846
      %v3958 = vpop.f32.mrf.mxu0
      %v3959 = vadd.f32 0.0, %v3958
      %3960 = vmatmul.f32.gmra.mxu0 %v3849
      %v3961 = vpop.f32.mrf.mxu0
      %v3962 = vadd.f32 0.0, %v3961
      %3963 = vmatmul.f32.gmra.mxu0 %v3852
      %v3964 = vpop.f32.mrf.mxu0
      %v3965 = vadd.f32 0.0, %v3964
      %3966 = vmatmul.f32.gmra.mxu0 %v3855
      %v3967 = vpop.f32.mrf.mxu0
      %v3968 = vadd.f32 0.0, %v3967
      %3969 = vmatmul.f32.gmra.mxu0 %v3858
      %v3970 = vpop.f32.mrf.mxu0
      %v3971 = vadd.f32 0.0, %v3970
      %3972 = vmatmul.f32.gmra.mxu0 %v3861
      %v3973 = vpop.f32.mrf.mxu0
      %v3974 = vadd.f32 0.0, %v3973
      %3975 = vmatmul.f32.gmra.mxu0 %v3864
      %v3976 = vpop.f32.mrf.mxu0
      %v3977 = vadd.f32 0.0, %v3976
      %3978 = vdwg.mxu0
      %v3979 = vadd.f32 %v3705, %v3884
      %v3980 = vadd.f32 %v3706, %v3887
      %v3981 = vadd.f32 %v3707, %v3890
      %v3982 = vadd.f32 %v3708, %v3893
      %v3983 = vadd.f32 %v3709, %v3896
      %v3984 = vadd.f32 %v3710, %v3899
      %v3985 = vadd.f32 %v3711, %v3902
      %v3986 = vadd.f32 %v3712, %v3905
      %v3987 = vadd.f32 %v3713, %v3908
      %v3988 = vadd.f32 %v3714, %v3911
      %v3989 = vadd.f32 %v3715, %v3914
      %v3990 = vadd.f32 %v3716, %v3917
      %v3991 = vadd.f32 %v3717, %v3920
      %v3992 = vadd.f32 %v3718, %v3923
      %v3993 = vadd.f32 %v3719, %v3926
      %v3994 = vadd.f32 %v3720, %v3929
      %v3995 = vadd.f32 %v3721, %v3932
      %v3996 = vadd.f32 %v3722, %v3935
      %v3997 = vadd.f32 %v3723, %v3938
      %v3998 = vadd.f32 %v3724, %v3941
      %v3999 = vadd.f32 %v3725, %v3944
      %v4000 = vadd.f32 %v3726, %v3947
      %v4001 = vadd.f32 %v3727, %v3950
      %v4002 = vadd.f32 %v3728, %v3953
      %v4003 = vadd.f32 %v3729, %v3956
      %v4004 = vadd.f32 %v3730, %v3959
      %v4005 = vadd.f32 %v3731, %v3962
      %v4006 = vadd.f32 %v3732, %v3965
      %v4007 = vadd.f32 %v3733, %v3968
      %v4008 = vadd.f32 %v3734, %v3971
      %v4009 = vadd.f32 %v3735, %v3974
      %v4010 = vadd.f32 %v3736, %v3977
      %4011 = vst.msk [vmem:[#allocation4] sm:$0xff] %vm373, %v3979
      %4012 = vst.msk [vmem:[#allocation4 + $0x8] sm:$0xff] %vm373, %v3980
      %4013 = vst.msk [vmem:[#allocation4 + $0x10] sm:$0xff] %vm373, %v3981
      %4014 = vst.msk [vmem:[#allocation4 + $0x18] sm:$0xff] %vm373, %v3982
      %4015 = vst.msk [vmem:[#allocation4 + $0x20] sm:$0xff] %vm373, %v3983
      %4016 = vst.msk [vmem:[#allocation4 + $0x28] sm:$0xff] %vm373, %v3984
      %4017 = vst.msk [vmem:[#allocation4 + $0x30] sm:$0xff] %vm373, %v3985
      %4018 = vst.msk [vmem:[#allocation4 + $0x38] sm:$0xff] %vm373, %v3986
      %4019 = vst.msk [vmem:[#allocation4 + $0x40] sm:$0xff] %vm373, %v3987
      %4020 = vst.msk [vmem:[#allocation4 + $0x48] sm:$0xff] %vm373, %v3988
      %4021 = vst.msk [vmem:[#allocation4 + $0x50] sm:$0xff] %vm373, %v3989
      %4022 = vst.msk [vmem:[#allocation4 + $0x58] sm:$0xff] %vm373, %v3990
      %4023 = vst.msk [vmem:[#allocation4 + $0x60] sm:$0xff] %vm373, %v3991
      %4024 = vst.msk [vmem:[#allocation4 + $0x68] sm:$0xff] %vm373, %v3992
      %4025 = vst.msk [vmem:[#allocation4 + $0x70] sm:$0xff] %vm373, %v3993
      %4026 = vst.msk [vmem:[#allocation4 + $0x78] sm:$0xff] %vm373, %v3994
      %4027 = vst.msk [vmem:[#allocation4 + $0x80] sm:$0xff] %vm373, %v3995
      %4028 = vst.msk [vmem:[#allocation4 + $0x88] sm:$0xff] %vm373, %v3996
      %4029 = vst.msk [vmem:[#allocation4 + $0x90] sm:$0xff] %vm373, %v3997
      %4030 = vst.msk [vmem:[#allocation4 + $0x98] sm:$0xff] %vm373, %v3998
      %4031 = vst.msk [vmem:[#allocation4 + $0xa0] sm:$0xff] %vm373, %v3999
      %4032 = vst.msk [vmem:[#allocation4 + $0xa8] sm:$0xff] %vm373, %v4000
      %4033 = vst.msk [vmem:[#allocation4 + $0xb0] sm:$0xff] %vm373, %v4001
      %4034 = vst.msk [vmem:[#allocation4 + $0xb8] sm:$0xff] %vm373, %v4002
      %4035 = vst.msk [vmem:[#allocation4 + $0xc0] sm:$0xff] %vm373, %v4003
      %4036 = vst.msk [vmem:[#allocation4 + $0xc8] sm:$0xff] %vm373, %v4004
      %4037 = vst.msk [vmem:[#allocation4 + $0xd0] sm:$0xff] %vm373, %v4005
      %4038 = vst.msk [vmem:[#allocation4 + $0xd8] sm:$0xff] %vm373, %v4006
      %4039 = vst.msk [vmem:[#allocation4 + $0xe0] sm:$0xff] %vm373, %v4007
      %4040 = vst.msk [vmem:[#allocation4 + $0xe8] sm:$0xff] %vm373, %v4008
      %4041 = vst.msk [vmem:[#allocation4 + $0xf0] sm:$0xff] %vm373, %v4009
      %4042 = vst.msk [vmem:[#allocation4 + $0xf8] sm:$0xff] %vm373, %v4010
      %v4043 = vld [vmem:[#allocation4] sm:$0xff]
      %v4044 = vld [vmem:[#allocation4 + $0x8] sm:$0xff]
      %v4045 = vld [vmem:[#allocation4 + $0x10] sm:$0xff]
      %v4046 = vld [vmem:[#allocation4 + $0x18] sm:$0xff]
      %v4047 = vld [vmem:[#allocation4 + $0x20] sm:$0xff]
      %v4048 = vld [vmem:[#allocation4 + $0x28] sm:$0xff]
      %v4049 = vld [vmem:[#allocation4 + $0x30] sm:$0xff]
      %v4050 = vld [vmem:[#allocation4 + $0x38] sm:$0xff]
      %v4051 = vld [vmem:[#allocation4 + $0x40] sm:$0xff]
      %v4052 = vld [vmem:[#allocation4 + $0x48] sm:$0xff]
      %v4053 = vld [vmem:[#allocation4 + $0x50] sm:$0xff]
      %v4054 = vld [vmem:[#allocation4 + $0x58] sm:$0xff]
      %v4055 = vld [vmem:[#allocation4 + $0x60] sm:$0xff]
      %v4056 = vld [vmem:[#allocation4 + $0x68] sm:$0xff]
      %v4057 = vld [vmem:[#allocation4 + $0x70] sm:$0xff]
      %v4058 = vld [vmem:[#allocation4 + $0x78] sm:$0xff]
      %v4059 = vld [vmem:[#allocation4 + $0x80] sm:$0xff]
      %v4060 = vld [vmem:[#allocation4 + $0x88] sm:$0xff]
      %v4061 = vld [vmem:[#allocation4 + $0x90] sm:$0xff]
      %v4062 = vld [vmem:[#allocation4 + $0x98] sm:$0xff]
      %v4063 = vld [vmem:[#allocation4 + $0xa0] sm:$0xff]
      %v4064 = vld [vmem:[#allocation4 + $0xa8] sm:$0xff]
      %v4065 = vld [vmem:[#allocation4 + $0xb0] sm:$0xff]
      %v4066 = vld [vmem:[#allocation4 + $0xb8] sm:$0xff]
      %v4067 = vld [vmem:[#allocation4 + $0xc0] sm:$0xff]
      %v4068 = vld [vmem:[#allocation4 + $0xc8] sm:$0xff]
      %v4069 = vld [vmem:[#allocation4 + $0xd0] sm:$0xff]
      %v4070 = vld [vmem:[#allocation4 + $0xd8] sm:$0xff]
      %v4071 = vld [vmem:[#allocation4 + $0xe0] sm:$0xff]
      %v4072 = vld [vmem:[#allocation4 + $0xe8] sm:$0xff]
      %v4073 = vld [vmem:[#allocation4 + $0xf0] sm:$0xff]
      %v4074 = vld [vmem:[#allocation4 + $0xf8] sm:$0xff]
      %v4075 = vld [vmem:[#allocation3 + $0x1] sm:$0xff]
      %v4076 = vld [vmem:[#allocation3 + $0x9] sm:$0xff]
      %v4077 = vld [vmem:[#allocation3 + $0x19] sm:$0xff]
      %v4078 = vld [vmem:[#allocation3 + $0x21] sm:$0xff]
      %v4079 = vld [vmem:[#allocation3 + $0x31] sm:$0xff]
      %v4080 = vld [vmem:[#allocation3 + $0x39] sm:$0xff]
      %v4081 = vld [vmem:[#allocation3 + $0x49] sm:$0xff]
      %v4082 = vld [vmem:[#allocation3 + $0x51] sm:$0xff]
      %v4083 = vld [vmem:[#allocation3 + $0x61] sm:$0xff]
      %v4084 = vld [vmem:[#allocation3 + $0x69] sm:$0xff]
      %v4085 = vld [vmem:[#allocation3 + $0x79] sm:$0xff]
      %v4086 = vld [vmem:[#allocation3 + $0x81] sm:$0xff]
      %v4087 = vld [vmem:[#allocation3 + $0x91] sm:$0xff]
      %v4088 = vld [vmem:[#allocation3 + $0x99] sm:$0xff]
      %v4089 = vld [vmem:[#allocation3 + $0xa9] sm:$0xff]
      %v4090 = vld [vmem:[#allocation3 + $0xb1] sm:$0xff]
      %v4091 = vld [vmem:[#allocation3 + $0xc1] sm:$0xff]
      %v4092 = vld [vmem:[#allocation3 + $0xc9] sm:$0xff]
      %v4093 = vld [vmem:[#allocation3 + $0xd9] sm:$0xff]
      %v4094 = vld [vmem:[#allocation3 + $0xe1] sm:$0xff]
      %v4095 = vld [vmem:[#allocation3 + $0xf1] sm:$0xff]
      %v4096 = vld [vmem:[#allocation3 + $0xf9] sm:$0xff]
      %v4097 = vld [vmem:[#allocation3 + $0x109] sm:$0xff]
      %v4098 = vld [vmem:[#allocation3 + $0x111] sm:$0xff]
      %v4099 = vld [vmem:[#allocation3 + $0x121] sm:$0xff]
      %v4100 = vld [vmem:[#allocation3 + $0x129] sm:$0xff]
      %v4101 = vld [vmem:[#allocation3 + $0x139] sm:$0xff]
      %v4102 = vld [vmem:[#allocation3 + $0x141] sm:$0xff]
      %v4103 = vld [vmem:[#allocation3 + $0x151] sm:$0xff]
      %v4104 = vld [vmem:[#allocation3 + $0x159] sm:$0xff]
      %v4105 = vld [vmem:[#allocation3 + $0x169] sm:$0xff]
      %v4106 = vld [vmem:[#allocation3 + $0x171] sm:$0xff]
      %s4107 = scalar_lea.vmem %s3, 8
      %v4108 = vld [vmem:[%s4107] sm:$0xff]
      %v4110 = vsel %vm373, %v4075, 0
      %v4113 = vsel %vm373, %v4076, 0
      %v4116 = vsel %vm373, %v4077, 0
      %v4119 = vsel %vm373, %v4078, 0
      %v4122 = vsel %vm373, %v4079, 0
      %v4125 = vsel %vm373, %v4080, 0
      %v4128 = vsel %vm373, %v4081, 0
      %v4131 = vsel %vm373, %v4082, 0
      %v4134 = vsel %vm373, %v4083, 0
      %v4137 = vsel %vm373, %v4084, 0
      %v4140 = vsel %vm373, %v4085, 0
      %v4143 = vsel %vm373, %v4086, 0
      %v4146 = vsel %vm373, %v4087, 0
      %v4149 = vsel %vm373, %v4088, 0
      %v4152 = vsel %vm373, %v4089, 0
      %v4155 = vsel %vm373, %v4090, 0
      %v4158 = vsel %vm373, %v4091, 0
      %v4161 = vsel %vm373, %v4092, 0
      %v4164 = vsel %vm373, %v4093, 0
      %v4167 = vsel %vm373, %v4094, 0
      %v4170 = vsel %vm373, %v4095, 0
      %v4173 = vsel %vm373, %v4096, 0
      %v4176 = vsel %vm373, %v4097, 0
      %v4179 = vsel %vm373, %v4098, 0
      %v4182 = vsel %vm373, %v4099, 0
      %v4185 = vsel %vm373, %v4100, 0
      %v4188 = vsel %vm373, %v4101, 0
      %v4191 = vsel %vm373, %v4102, 0
      %v4194 = vsel %vm373, %v4103, 0
      %v4197 = vsel %vm373, %v4104, 0
      %v4200 = vsel %vm373, %v4105, 0
      %v4203 = vsel %vm373, %v4106, 0
      %4205 = vmatpush.msra.mxu0 0.0
      %4206 = vmatpush.msra.mxu0 0.0
      %4207 = vmatpush.msra.mxu0 0.0
      %4208 = vmatpush.msra.mxu0 0.0
      %4209 = vmatpush.msra.mxu0 0.0
      %4210 = vmatpush.msra.mxu0 0.0
      %4211 = vmatpush.msra.mxu0 0.0
      %4212 = vmatpush.msra.mxu0 0.0
      %4213 = vmatpush.msra.mxu0 0.0
      %4214 = vmatpush.msra.mxu0 0.0
      %4215 = vmatpush.msra.mxu0 0.0
      %4216 = vmatpush.msra.mxu0 0.0
      %4217 = vmatpush.msra.mxu0 0.0
      %4218 = vmatpush.msra.mxu0 0.0
      %4219 = vmatpush.msra.mxu0 0.0
      %4220 = vmatpush.msra.mxu0 %v4108
      %4221 = vmatmul.f32.gmra.mxu0 %v4110
      %v4222 = vpop.f32.mrf.mxu0
      %v4223 = vadd.f32 0.0, %v4222
      %4224 = vmatmul.f32.gmra.mxu0 %v4113
      %v4225 = vpop.f32.mrf.mxu0
      %v4226 = vadd.f32 0.0, %v4225
      %4227 = vmatmul.f32.gmra.mxu0 %v4116
      %v4228 = vpop.f32.mrf.mxu0
      %v4229 = vadd.f32 0.0, %v4228
      %4230 = vmatmul.f32.gmra.mxu0 %v4119
      %v4231 = vpop.f32.mrf.mxu0
      %v4232 = vadd.f32 0.0, %v4231
      %4233 = vmatmul.f32.gmra.mxu0 %v4122
      %v4234 = vpop.f32.mrf.mxu0
      %v4235 = vadd.f32 0.0, %v4234
      %4236 = vmatmul.f32.gmra.mxu0 %v4125
      %v4237 = vpop.f32.mrf.mxu0
      %v4238 = vadd.f32 0.0, %v4237
      %4239 = vmatmul.f32.gmra.mxu0 %v4128
      %v4240 = vpop.f32.mrf.mxu0
      %v4241 = vadd.f32 0.0, %v4240
      %4242 = vmatmul.f32.gmra.mxu0 %v4131
      %v4243 = vpop.f32.mrf.mxu0
      %v4244 = vadd.f32 0.0, %v4243
      %4245 = vmatmul.f32.gmra.mxu0 %v4134
      %v4246 = vpop.f32.mrf.mxu0
      %v4247 = vadd.f32 0.0, %v4246
      %4248 = vmatmul.f32.gmra.mxu0 %v4137
      %v4249 = vpop.f32.mrf.mxu0
      %v4250 = vadd.f32 0.0, %v4249
      %4251 = vmatmul.f32.gmra.mxu0 %v4140
      %v4252 = vpop.f32.mrf.mxu0
      %v4253 = vadd.f32 0.0, %v4252
      %4254 = vmatmul.f32.gmra.mxu0 %v4143
      %v4255 = vpop.f32.mrf.mxu0
      %v4256 = vadd.f32 0.0, %v4255
      %4257 = vmatmul.f32.gmra.mxu0 %v4146
      %v4258 = vpop.f32.mrf.mxu0
      %v4259 = vadd.f32 0.0, %v4258
      %4260 = vmatmul.f32.gmra.mxu0 %v4149
      %v4261 = vpop.f32.mrf.mxu0
      %v4262 = vadd.f32 0.0, %v4261
      %4263 = vmatmul.f32.gmra.mxu0 %v4152
      %v4264 = vpop.f32.mrf.mxu0
      %v4265 = vadd.f32 0.0, %v4264
      %4266 = vmatmul.f32.gmra.mxu0 %v4155
      %v4267 = vpop.f32.mrf.mxu0
      %v4268 = vadd.f32 0.0, %v4267
      %4269 = vmatmul.f32.gmra.mxu0 %v4158
      %v4270 = vpop.f32.mrf.mxu0
      %v4271 = vadd.f32 0.0, %v4270
      %4272 = vmatmul.f32.gmra.mxu0 %v4161
      %v4273 = vpop.f32.mrf.mxu0
      %v4274 = vadd.f32 0.0, %v4273
      %4275 = vmatmul.f32.gmra.mxu0 %v4164
      %v4276 = vpop.f32.mrf.mxu0
      %v4277 = vadd.f32 0.0, %v4276
      %4278 = vmatmul.f32.gmra.mxu0 %v4167
      %v4279 = vpop.f32.mrf.mxu0
      %v4280 = vadd.f32 0.0, %v4279
      %4281 = vmatmul.f32.gmra.mxu0 %v4170
      %v4282 = vpop.f32.mrf.mxu0
      %v4283 = vadd.f32 0.0, %v4282
      %4284 = vmatmul.f32.gmra.mxu0 %v4173
      %v4285 = vpop.f32.mrf.mxu0
      %v4286 = vadd.f32 0.0, %v4285
      %4287 = vmatmul.f32.gmra.mxu0 %v4176
      %v4288 = vpop.f32.mrf.mxu0
      %v4289 = vadd.f32 0.0, %v4288
      %4290 = vmatmul.f32.gmra.mxu0 %v4179
      %v4291 = vpop.f32.mrf.mxu0
      %v4292 = vadd.f32 0.0, %v4291
      %4293 = vmatmul.f32.gmra.mxu0 %v4182
      %v4294 = vpop.f32.mrf.mxu0
      %v4295 = vadd.f32 0.0, %v4294
      %4296 = vmatmul.f32.gmra.mxu0 %v4185
      %v4297 = vpop.f32.mrf.mxu0
      %v4298 = vadd.f32 0.0, %v4297
      %4299 = vmatmul.f32.gmra.mxu0 %v4188
      %v4300 = vpop.f32.mrf.mxu0
      %v4301 = vadd.f32 0.0, %v4300
      %4302 = vmatmul.f32.gmra.mxu0 %v4191
      %v4303 = vpop.f32.mrf.mxu0
      %v4304 = vadd.f32 0.0, %v4303
      %4305 = vmatmul.f32.gmra.mxu0 %v4194
      %v4306 = vpop.f32.mrf.mxu0
      %v4307 = vadd.f32 0.0, %v4306
      %4308 = vmatmul.f32.gmra.mxu0 %v4197
      %v4309 = vpop.f32.mrf.mxu0
      %v4310 = vadd.f32 0.0, %v4309
      %4311 = vmatmul.f32.gmra.mxu0 %v4200
      %v4312 = vpop.f32.mrf.mxu0
      %v4313 = vadd.f32 0.0, %v4312
      %4314 = vmatmul.f32.gmra.mxu0 %v4203
      %v4315 = vpop.f32.mrf.mxu0
      %v4316 = vadd.f32 0.0, %v4315
      %4317 = vdwg.mxu0
      %v4318 = vadd.f32 %v4043, %v4223
      %v4319 = vadd.f32 %v4044, %v4226
      %v4320 = vadd.f32 %v4045, %v4229
      %v4321 = vadd.f32 %v4046, %v4232
      %v4322 = vadd.f32 %v4047, %v4235
      %v4323 = vadd.f32 %v4048, %v4238
      %v4324 = vadd.f32 %v4049, %v4241
      %v4325 = vadd.f32 %v4050, %v4244
      %v4326 = vadd.f32 %v4051, %v4247
      %v4327 = vadd.f32 %v4052, %v4250
      %v4328 = vadd.f32 %v4053, %v4253
      %v4329 = vadd.f32 %v4054, %v4256
      %v4330 = vadd.f32 %v4055, %v4259
      %v4331 = vadd.f32 %v4056, %v4262
      %v4332 = vadd.f32 %v4057, %v4265
      %v4333 = vadd.f32 %v4058, %v4268
      %v4334 = vadd.f32 %v4059, %v4271
      %v4335 = vadd.f32 %v4060, %v4274
      %v4336 = vadd.f32 %v4061, %v4277
      %v4337 = vadd.f32 %v4062, %v4280
      %v4338 = vadd.f32 %v4063, %v4283
      %v4339 = vadd.f32 %v4064, %v4286
      %v4340 = vadd.f32 %v4065, %v4289
      %v4341 = vadd.f32 %v4066, %v4292
      %v4342 = vadd.f32 %v4067, %v4295
      %v4343 = vadd.f32 %v4068, %v4298
      %v4344 = vadd.f32 %v4069, %v4301
      %v4345 = vadd.f32 %v4070, %v4304
      %v4346 = vadd.f32 %v4071, %v4307
      %v4347 = vadd.f32 %v4072, %v4310
      %v4348 = vadd.f32 %v4073, %v4313
      %v4349 = vadd.f32 %v4074, %v4316
      %4350 = vst.msk [vmem:[#allocation4] sm:$0xff] %vm373, %v4318
      %4351 = vst.msk [vmem:[#allocation4 + $0x8] sm:$0xff] %vm373, %v4319
      %4352 = vst.msk [vmem:[#allocation4 + $0x10] sm:$0xff] %vm373, %v4320
      %4353 = vst.msk [vmem:[#allocation4 + $0x18] sm:$0xff] %vm373, %v4321
      %4354 = vst.msk [vmem:[#allocation4 + $0x20] sm:$0xff] %vm373, %v4322
      %4355 = vst.msk [vmem:[#allocation4 + $0x28] sm:$0xff] %vm373, %v4323
      %4356 = vst.msk [vmem:[#allocation4 + $0x30] sm:$0xff] %vm373, %v4324
      %4357 = vst.msk [vmem:[#allocation4 + $0x38] sm:$0xff] %vm373, %v4325
      %4358 = vst.msk [vmem:[#allocation4 + $0x40] sm:$0xff] %vm373, %v4326
      %4359 = vst.msk [vmem:[#allocation4 + $0x48] sm:$0xff] %vm373, %v4327
      %4360 = vst.msk [vmem:[#allocation4 + $0x50] sm:$0xff] %vm373, %v4328
      %4361 = vst.msk [vmem:[#allocation4 + $0x58] sm:$0xff] %vm373, %v4329
      %4362 = vst.msk [vmem:[#allocation4 + $0x60] sm:$0xff] %vm373, %v4330
      %4363 = vst.msk [vmem:[#allocation4 + $0x68] sm:$0xff] %vm373, %v4331
      %4364 = vst.msk [vmem:[#allocation4 + $0x70] sm:$0xff] %vm373, %v4332
      %4365 = vst.msk [vmem:[#allocation4 + $0x78] sm:$0xff] %vm373, %v4333
      %4366 = vst.msk [vmem:[#allocation4 + $0x80] sm:$0xff] %vm373, %v4334
      %4367 = vst.msk [vmem:[#allocation4 + $0x88] sm:$0xff] %vm373, %v4335
      %4368 = vst.msk [vmem:[#allocation4 + $0x90] sm:$0xff] %vm373, %v4336
      %4369 = vst.msk [vmem:[#allocation4 + $0x98] sm:$0xff] %vm373, %v4337
      %4370 = vst.msk [vmem:[#allocation4 + $0xa0] sm:$0xff] %vm373, %v4338
      %4371 = vst.msk [vmem:[#allocation4 + $0xa8] sm:$0xff] %vm373, %v4339
      %4372 = vst.msk [vmem:[#allocation4 + $0xb0] sm:$0xff] %vm373, %v4340
      %4373 = vst.msk [vmem:[#allocation4 + $0xb8] sm:$0xff] %vm373, %v4341
      %4374 = vst.msk [vmem:[#allocation4 + $0xc0] sm:$0xff] %vm373, %v4342
      %4375 = vst.msk [vmem:[#allocation4 + $0xc8] sm:$0xff] %vm373, %v4343
      %4376 = vst.msk [vmem:[#allocation4 + $0xd0] sm:$0xff] %vm373, %v4344
      %4377 = vst.msk [vmem:[#allocation4 + $0xd8] sm:$0xff] %vm373, %v4345
      %4378 = vst.msk [vmem:[#allocation4 + $0xe0] sm:$0xff] %vm373, %v4346
      %4379 = vst.msk [vmem:[#allocation4 + $0xe8] sm:$0xff] %vm373, %v4347
      %4380 = vst.msk [vmem:[#allocation4 + $0xf0] sm:$0xff] %vm373, %v4348
      %4381 = vst.msk [vmem:[#allocation4 + $0xf8] sm:$0xff] %vm373, %v4349
      %v4382 = vld [vmem:[#allocation4] sm:$0xff]
      %v4383 = vld [vmem:[#allocation4 + $0x8] sm:$0xff]
      %v4384 = vld [vmem:[#allocation4 + $0x10] sm:$0xff]
      %v4385 = vld [vmem:[#allocation4 + $0x18] sm:$0xff]
      %v4386 = vld [vmem:[#allocation4 + $0x20] sm:$0xff]
      %v4387 = vld [vmem:[#allocation4 + $0x28] sm:$0xff]
      %v4388 = vld [vmem:[#allocation4 + $0x30] sm:$0xff]
      %v4389 = vld [vmem:[#allocation4 + $0x38] sm:$0xff]
      %v4390 = vld [vmem:[#allocation4 + $0x40] sm:$0xff]
      %v4391 = vld [vmem:[#allocation4 + $0x48] sm:$0xff]
      %v4392 = vld [vmem:[#allocation4 + $0x50] sm:$0xff]
      %v4393 = vld [vmem:[#allocation4 + $0x58] sm:$0xff]
      %v4394 = vld [vmem:[#allocation4 + $0x60] sm:$0xff]
      %v4395 = vld [vmem:[#allocation4 + $0x68] sm:$0xff]
      %v4396 = vld [vmem:[#allocation4 + $0x70] sm:$0xff]
      %v4397 = vld [vmem:[#allocation4 + $0x78] sm:$0xff]
      %v4398 = vld [vmem:[#allocation4 + $0x80] sm:$0xff]
      %v4399 = vld [vmem:[#allocation4 + $0x88] sm:$0xff]
      %v4400 = vld [vmem:[#allocation4 + $0x90] sm:$0xff]
      %v4401 = vld [vmem:[#allocation4 + $0x98] sm:$0xff]
      %v4402 = vld [vmem:[#allocation4 + $0xa0] sm:$0xff]
      %v4403 = vld [vmem:[#allocation4 + $0xa8] sm:$0xff]
      %v4404 = vld [vmem:[#allocation4 + $0xb0] sm:$0xff]
      %v4405 = vld [vmem:[#allocation4 + $0xb8] sm:$0xff]
      %v4406 = vld [vmem:[#allocation4 + $0xc0] sm:$0xff]
      %v4407 = vld [vmem:[#allocation4 + $0xc8] sm:$0xff]
      %v4408 = vld [vmem:[#allocation4 + $0xd0] sm:$0xff]
      %v4409 = vld [vmem:[#allocation4 + $0xd8] sm:$0xff]
      %v4410 = vld [vmem:[#allocation4 + $0xe0] sm:$0xff]
      %v4411 = vld [vmem:[#allocation4 + $0xe8] sm:$0xff]
      %v4412 = vld [vmem:[#allocation4 + $0xf0] sm:$0xff]
      %v4413 = vld [vmem:[#allocation4 + $0xf8] sm:$0xff]
      %v4414 = vld [vmem:[#allocation3 + $0x2] sm:$0xff]
      %v4415 = vld [vmem:[#allocation3 + $0xa] sm:$0xff]
      %v4416 = vld [vmem:[#allocation3 + $0x1a] sm:$0xff]
      %v4417 = vld [vmem:[#allocation3 + $0x22] sm:$0xff]
      %v4418 = vld [vmem:[#allocation3 + $0x32] sm:$0xff]
      %v4419 = vld [vmem:[#allocation3 + $0x3a] sm:$0xff]
      %v4420 = vld [vmem:[#allocation3 + $0x4a] sm:$0xff]
      %v4421 = vld [vmem:[#allocation3 + $0x52] sm:$0xff]
      %v4422 = vld [vmem:[#allocation3 + $0x62] sm:$0xff]
      %v4423 = vld [vmem:[#allocation3 + $0x6a] sm:$0xff]
      %v4424 = vld [vmem:[#allocation3 + $0x7a] sm:$0xff]
      %v4425 = vld [vmem:[#allocation3 + $0x82] sm:$0xff]
      %v4426 = vld [vmem:[#allocation3 + $0x92] sm:$0xff]
      %v4427 = vld [vmem:[#allocation3 + $0x9a] sm:$0xff]
      %v4428 = vld [vmem:[#allocation3 + $0xaa] sm:$0xff]
      %v4429 = vld [vmem:[#allocation3 + $0xb2] sm:$0xff]
      %v4430 = vld [vmem:[#allocation3 + $0xc2] sm:$0xff]
      %v4431 = vld [vmem:[#allocation3 + $0xca] sm:$0xff]
      %v4432 = vld [vmem:[#allocation3 + $0xda] sm:$0xff]
      %v4433 = vld [vmem:[#allocation3 + $0xe2] sm:$0xff]
      %v4434 = vld [vmem:[#allocation3 + $0xf2] sm:$0xff]
      %v4435 = vld [vmem:[#allocation3 + $0xfa] sm:$0xff]
      %v4436 = vld [vmem:[#allocation3 + $0x10a] sm:$0xff]
      %v4437 = vld [vmem:[#allocation3 + $0x112] sm:$0xff]
      %v4438 = vld [vmem:[#allocation3 + $0x122] sm:$0xff]
      %v4439 = vld [vmem:[#allocation3 + $0x12a] sm:$0xff]
      %v4440 = vld [vmem:[#allocation3 + $0x13a] sm:$0xff]
      %v4441 = vld [vmem:[#allocation3 + $0x142] sm:$0xff]
      %v4442 = vld [vmem:[#allocation3 + $0x152] sm:$0xff]
      %v4443 = vld [vmem:[#allocation3 + $0x15a] sm:$0xff]
      %v4444 = vld [vmem:[#allocation3 + $0x16a] sm:$0xff]
      %v4445 = vld [vmem:[#allocation3 + $0x172] sm:$0xff]
      %s4446 = scalar_lea.vmem %s3, 16
      %v4447 = vld [vmem:[%s4446] sm:$0xff]
      %v4449 = vsel %vm373, %v4414, 0
      %v4452 = vsel %vm373, %v4415, 0
      %v4455 = vsel %vm373, %v4416, 0
      %v4458 = vsel %vm373, %v4417, 0
      %v4461 = vsel %vm373, %v4418, 0
      %v4464 = vsel %vm373, %v4419, 0
      %v4467 = vsel %vm373, %v4420, 0
      %v4470 = vsel %vm373, %v4421, 0
      %v4473 = vsel %vm373, %v4422, 0
      %v4476 = vsel %vm373, %v4423, 0
      %v4479 = vsel %vm373, %v4424, 0
      %v4482 = vsel %vm373, %v4425, 0
      %v4485 = vsel %vm373, %v4426, 0
      %v4488 = vsel %vm373, %v4427, 0
      %v4491 = vsel %vm373, %v4428, 0
      %v4494 = vsel %vm373, %v4429, 0
      %v4497 = vsel %vm373, %v4430, 0
      %v4500 = vsel %vm373, %v4431, 0
      %v4503 = vsel %vm373, %v4432, 0
      %v4506 = vsel %vm373, %v4433, 0
      %v4509 = vsel %vm373, %v4434, 0
      %v4512 = vsel %vm373, %v4435, 0
      %v4515 = vsel %vm373, %v4436, 0
      %v4518 = vsel %vm373, %v4437, 0
      %v4521 = vsel %vm373, %v4438, 0
      %v4524 = vsel %vm373, %v4439, 0
      %v4527 = vsel %vm373, %v4440, 0
      %v4530 = vsel %vm373, %v4441, 0
      %v4533 = vsel %vm373, %v4442, 0
      %v4536 = vsel %vm373, %v4443, 0
      %v4539 = vsel %vm373, %v4444, 0
      %v4542 = vsel %vm373, %v4445, 0
      %4544 = vmatpush.msra.mxu0 0.0
      %4545 = vmatpush.msra.mxu0 0.0
      %4546 = vmatpush.msra.mxu0 0.0
      %4547 = vmatpush.msra.mxu0 0.0
      %4548 = vmatpush.msra.mxu0 0.0
      %4549 = vmatpush.msra.mxu0 0.0
      %4550 = vmatpush.msra.mxu0 0.0
      %4551 = vmatpush.msra.mxu0 0.0
      %4552 = vmatpush.msra.mxu0 0.0
      %4553 = vmatpush.msra.mxu0 0.0
      %4554 = vmatpush.msra.mxu0 0.0
      %4555 = vmatpush.msra.mxu0 0.0
      %4556 = vmatpush.msra.mxu0 0.0
      %4557 = vmatpush.msra.mxu0 0.0
      %4558 = vmatpush.msra.mxu0 0.0
      %4559 = vmatpush.msra.mxu0 %v4447
      %4560 = vmatmul.f32.gmra.mxu0 %v4449
      %v4561 = vpop.f32.mrf.mxu0
      %v4562 = vadd.f32 0.0, %v4561
      %4563 = vmatmul.f32.gmra.mxu0 %v4452
      %v4564 = vpop.f32.mrf.mxu0
      %v4565 = vadd.f32 0.0, %v4564
      %4566 = vmatmul.f32.gmra.mxu0 %v4455
      %v4567 = vpop.f32.mrf.mxu0
      %v4568 = vadd.f32 0.0, %v4567
      %4569 = vmatmul.f32.gmra.mxu0 %v4458
      %v4570 = vpop.f32.mrf.mxu0
      %v4571 = vadd.f32 0.0, %v4570
      %4572 = vmatmul.f32.gmra.mxu0 %v4461
      %v4573 = vpop.f32.mrf.mxu0
      %v4574 = vadd.f32 0.0, %v4573
      %4575 = vmatmul.f32.gmra.mxu0 %v4464
      %v4576 = vpop.f32.mrf.mxu0
      %v4577 = vadd.f32 0.0, %v4576
      %4578 = vmatmul.f32.gmra.mxu0 %v4467
      %v4579 = vpop.f32.mrf.mxu0
      %v4580 = vadd.f32 0.0, %v4579
      %4581 = vmatmul.f32.gmra.mxu0 %v4470
      %v4582 = vpop.f32.mrf.mxu0
      %v4583 = vadd.f32 0.0, %v4582
      %4584 = vmatmul.f32.gmra.mxu0 %v4473
      %v4585 = vpop.f32.mrf.mxu0
      %v4586 = vadd.f32 0.0, %v4585
      %4587 = vmatmul.f32.gmra.mxu0 %v4476
      %v4588 = vpop.f32.mrf.mxu0
      %v4589 = vadd.f32 0.0, %v4588
      %4590 = vmatmul.f32.gmra.mxu0 %v4479
      %v4591 = vpop.f32.mrf.mxu0
      %v4592 = vadd.f32 0.0, %v4591
      %4593 = vmatmul.f32.gmra.mxu0 %v4482
      %v4594 = vpop.f32.mrf.mxu0
      %v4595 = vadd.f32 0.0, %v4594
      %4596 = vmatmul.f32.gmra.mxu0 %v4485
      %v4597 = vpop.f32.mrf.mxu0
      %v4598 = vadd.f32 0.0, %v4597
      %4599 = vmatmul.f32.gmra.mxu0 %v4488
      %v4600 = vpop.f32.mrf.mxu0
      %v4601 = vadd.f32 0.0, %v4600
      %4602 = vmatmul.f32.gmra.mxu0 %v4491
      %v4603 = vpop.f32.mrf.mxu0
      %v4604 = vadd.f32 0.0, %v4603
      %4605 = vmatmul.f32.gmra.mxu0 %v4494
      %v4606 = vpop.f32.mrf.mxu0
      %v4607 = vadd.f32 0.0, %v4606
      %4608 = vmatmul.f32.gmra.mxu0 %v4497
      %v4609 = vpop.f32.mrf.mxu0
      %v4610 = vadd.f32 0.0, %v4609
      %4611 = vmatmul.f32.gmra.mxu0 %v4500
      %v4612 = vpop.f32.mrf.mxu0
      %v4613 = vadd.f32 0.0, %v4612
      %4614 = vmatmul.f32.gmra.mxu0 %v4503
      %v4615 = vpop.f32.mrf.mxu0
      %v4616 = vadd.f32 0.0, %v4615
      %4617 = vmatmul.f32.gmra.mxu0 %v4506
      %v4618 = vpop.f32.mrf.mxu0
      %v4619 = vadd.f32 0.0, %v4618
      %4620 = vmatmul.f32.gmra.mxu0 %v4509
      %v4621 = vpop.f32.mrf.mxu0
      %v4622 = vadd.f32 0.0, %v4621
      %4623 = vmatmul.f32.gmra.mxu0 %v4512
      %v4624 = vpop.f32.mrf.mxu0
      %v4625 = vadd.f32 0.0, %v4624
      %4626 = vmatmul.f32.gmra.mxu0 %v4515
      %v4627 = vpop.f32.mrf.mxu0
      %v4628 = vadd.f32 0.0, %v4627
      %4629 = vmatmul.f32.gmra.mxu0 %v4518
      %v4630 = vpop.f32.mrf.mxu0
      %v4631 = vadd.f32 0.0, %v4630
      %4632 = vmatmul.f32.gmra.mxu0 %v4521
      %v4633 = vpop.f32.mrf.mxu0
      %v4634 = vadd.f32 0.0, %v4633
      %4635 = vmatmul.f32.gmra.mxu0 %v4524
      %v4636 = vpop.f32.mrf.mxu0
      %v4637 = vadd.f32 0.0, %v4636
      %4638 = vmatmul.f32.gmra.mxu0 %v4527
      %v4639 = vpop.f32.mrf.mxu0
      %v4640 = vadd.f32 0.0, %v4639
      %4641 = vmatmul.f32.gmra.mxu0 %v4530
      %v4642 = vpop.f32.mrf.mxu0
      %v4643 = vadd.f32 0.0, %v4642
      %4644 = vmatmul.f32.gmra.mxu0 %v4533
      %v4645 = vpop.f32.mrf.mxu0
      %v4646 = vadd.f32 0.0, %v4645
      %4647 = vmatmul.f32.gmra.mxu0 %v4536
      %v4648 = vpop.f32.mrf.mxu0
      %v4649 = vadd.f32 0.0, %v4648
      %4650 = vmatmul.f32.gmra.mxu0 %v4539
      %v4651 = vpop.f32.mrf.mxu0
      %v4652 = vadd.f32 0.0, %v4651
      %4653 = vmatmul.f32.gmra.mxu0 %v4542
      %v4654 = vpop.f32.mrf.mxu0
      %v4655 = vadd.f32 0.0, %v4654
      %4656 = vdwg.mxu0
      %v4657 = vadd.f32 %v4382, %v4562
      %v4658 = vadd.f32 %v4383, %v4565
      %v4659 = vadd.f32 %v4384, %v4568
      %v4660 = vadd.f32 %v4385, %v4571
      %v4661 = vadd.f32 %v4386, %v4574
      %v4662 = vadd.f32 %v4387, %v4577
      %v4663 = vadd.f32 %v4388, %v4580
      %v4664 = vadd.f32 %v4389, %v4583
      %v4665 = vadd.f32 %v4390, %v4586
      %v4666 = vadd.f32 %v4391, %v4589
      %v4667 = vadd.f32 %v4392, %v4592
      %v4668 = vadd.f32 %v4393, %v4595
      %v4669 = vadd.f32 %v4394, %v4598
      %v4670 = vadd.f32 %v4395, %v4601
      %v4671 = vadd.f32 %v4396, %v4604
      %v4672 = vadd.f32 %v4397, %v4607
      %v4673 = vadd.f32 %v4398, %v4610
      %v4674 = vadd.f32 %v4399, %v4613
      %v4675 = vadd.f32 %v4400, %v4616
      %v4676 = vadd.f32 %v4401, %v4619
      %v4677 = vadd.f32 %v4402, %v4622
      %v4678 = vadd.f32 %v4403, %v4625
      %v4679 = vadd.f32 %v4404, %v4628
      %v4680 = vadd.f32 %v4405, %v4631
      %v4681 = vadd.f32 %v4406, %v4634
      %v4682 = vadd.f32 %v4407, %v4637
      %v4683 = vadd.f32 %v4408, %v4640
      %v4684 = vadd.f32 %v4409, %v4643
      %v4685 = vadd.f32 %v4410, %v4646
      %v4686 = vadd.f32 %v4411, %v4649
      %v4687 = vadd.f32 %v4412, %v4652
      %v4688 = vadd.f32 %v4413, %v4655
      %4689 = vst.msk [vmem:[#allocation4] sm:$0xff] %vm373, %v4657
      %4690 = vst.msk [vmem:[#allocation4 + $0x8] sm:$0xff] %vm373, %v4658
      %4691 = vst.msk [vmem:[#allocation4 + $0x10] sm:$0xff] %vm373, %v4659
      %4692 = vst.msk [vmem:[#allocation4 + $0x18] sm:$0xff] %vm373, %v4660
      %4693 = vst.msk [vmem:[#allocation4 + $0x20] sm:$0xff] %vm373, %v4661
      %4694 = vst.msk [vmem:[#allocation4 + $0x28] sm:$0xff] %vm373, %v4662
      %4695 = vst.msk [vmem:[#allocation4 + $0x30] sm:$0xff] %vm373, %v4663
      %4696 = vst.msk [vmem:[#allocation4 + $0x38] sm:$0xff] %vm373, %v4664
      %4697 = vst.msk [vmem:[#allocation4 + $0x40] sm:$0xff] %vm373, %v4665
      %4698 = vst.msk [vmem:[#allocation4 + $0x48] sm:$0xff] %vm373, %v4666
      %4699 = vst.msk [vmem:[#allocation4 + $0x50] sm:$0xff] %vm373, %v4667
      %4700 = vst.msk [vmem:[#allocation4 + $0x58] sm:$0xff] %vm373, %v4668
      %4701 = vst.msk [vmem:[#allocation4 + $0x60] sm:$0xff] %vm373, %v4669
      %4702 = vst.msk [vmem:[#allocation4 + $0x68] sm:$0xff] %vm373, %v4670
      %4703 = vst.msk [vmem:[#allocation4 + $0x70] sm:$0xff] %vm373, %v4671
      %4704 = vst.msk [vmem:[#allocation4 + $0x78] sm:$0xff] %vm373, %v4672
      %4705 = vst.msk [vmem:[#allocation4 + $0x80] sm:$0xff] %vm373, %v4673
      %4706 = vst.msk [vmem:[#allocation4 + $0x88] sm:$0xff] %vm373, %v4674
      %4707 = vst.msk [vmem:[#allocation4 + $0x90] sm:$0xff] %vm373, %v4675
      %4708 = vst.msk [vmem:[#allocation4 + $0x98] sm:$0xff] %vm373, %v4676
      %4709 = vst.msk [vmem:[#allocation4 + $0xa0] sm:$0xff] %vm373, %v4677
      %4710 = vst.msk [vmem:[#allocation4 + $0xa8] sm:$0xff] %vm373, %v4678
      %4711 = vst.msk [vmem:[#allocation4 + $0xb0] sm:$0xff] %vm373, %v4679
      %4712 = vst.msk [vmem:[#allocation4 + $0xb8] sm:$0xff] %vm373, %v4680
      %4713 = vst.msk [vmem:[#allocation4 + $0xc0] sm:$0xff] %vm373, %v4681
      %4714 = vst.msk [vmem:[#allocation4 + $0xc8] sm:$0xff] %vm373, %v4682
      %4715 = vst.msk [vmem:[#allocation4 + $0xd0] sm:$0xff] %vm373, %v4683
      %4716 = vst.msk [vmem:[#allocation4 + $0xd8] sm:$0xff] %vm373, %v4684
      %4717 = vst.msk [vmem:[#allocation4 + $0xe0] sm:$0xff] %vm373, %v4685
      %4718 = vst.msk [vmem:[#allocation4 + $0xe8] sm:$0xff] %vm373, %v4686
      %4719 = vst.msk [vmem:[#allocation4 + $0xf0] sm:$0xff] %vm373, %v4687
      %4720 = vst.msk [vmem:[#allocation4 + $0xf8] sm:$0xff] %vm373, %v4688
      %v4721 = vld [vmem:[#allocation4] sm:$0xff]
      %v4722 = vld [vmem:[#allocation4 + $0x8] sm:$0xff]
      %v4723 = vld [vmem:[#allocation4 + $0x10] sm:$0xff]
      %v4724 = vld [vmem:[#allocation4 + $0x18] sm:$0xff]
      %v4725 = vld [vmem:[#allocation4 + $0x20] sm:$0xff]
      %v4726 = vld [vmem:[#allocation4 + $0x28] sm:$0xff]
      %v4727 = vld [vmem:[#allocation4 + $0x30] sm:$0xff]
      %v4728 = vld [vmem:[#allocation4 + $0x38] sm:$0xff]
      %v4729 = vld [vmem:[#allocation4 + $0x40] sm:$0xff]
      %v4730 = vld [vmem:[#allocation4 + $0x48] sm:$0xff]
      %v4731 = vld [vmem:[#allocation4 + $0x50] sm:$0xff]
      %v4732 = vld [vmem:[#allocation4 + $0x58] sm:$0xff]
      %v4733 = vld [vmem:[#allocation4 + $0x60] sm:$0xff]
      %v4734 = vld [vmem:[#allocation4 + $0x68] sm:$0xff]
      %v4735 = vld [vmem:[#allocation4 + $0x70] sm:$0xff]
      %v4736 = vld [vmem:[#allocation4 + $0x78] sm:$0xff]
      %v4737 = vld [vmem:[#allocation4 + $0x80] sm:$0xff]
      %v4738 = vld [vmem:[#allocation4 + $0x88] sm:$0xff]
      %v4739 = vld [vmem:[#allocation4 + $0x90] sm:$0xff]
      %v4740 = vld [vmem:[#allocation4 + $0x98] sm:$0xff]
      %v4741 = vld [vmem:[#allocation4 + $0xa0] sm:$0xff]
      %v4742 = vld [vmem:[#allocation4 + $0xa8] sm:$0xff]
      %v4743 = vld [vmem:[#allocation4 + $0xb0] sm:$0xff]
      %v4744 = vld [vmem:[#allocation4 + $0xb8] sm:$0xff]
      %v4745 = vld [vmem:[#allocation4 + $0xc0] sm:$0xff]
      %v4746 = vld [vmem:[#allocation4 + $0xc8] sm:$0xff]
      %v4747 = vld [vmem:[#allocation4 + $0xd0] sm:$0xff]
      %v4748 = vld [vmem:[#allocation4 + $0xd8] sm:$0xff]
      %v4749 = vld [vmem:[#allocation4 + $0xe0] sm:$0xff]
      %v4750 = vld [vmem:[#allocation4 + $0xe8] sm:$0xff]
      %v4751 = vld [vmem:[#allocation4 + $0xf0] sm:$0xff]
      %v4752 = vld [vmem:[#allocation4 + $0xf8] sm:$0xff]
      %v4753 = vld [vmem:[%s3640] sm:$0xff]
      %v4754 = vld [vmem:[%s3640 + $0x8] sm:$0xff]
      %v4755 = vld [vmem:[%s3640 + $0x18] sm:$0xff]
      %v4756 = vld [vmem:[%s3640 + $0x20] sm:$0xff]
      %v4757 = vld [vmem:[%s3640 + $0x30] sm:$0xff]
      %v4758 = vld [vmem:[%s3640 + $0x38] sm:$0xff]
      %v4759 = vld [vmem:[%s3640 + $0x48] sm:$0xff]
      %v4760 = vld [vmem:[%s3640 + $0x50] sm:$0xff]
      %v4761 = vld [vmem:[%s3640 + $0x60] sm:$0xff]
      %v4762 = vld [vmem:[%s3640 + $0x68] sm:$0xff]
      %v4763 = vld [vmem:[%s3640 + $0x78] sm:$0xff]
      %v4764 = vld [vmem:[%s3640 + $0x80] sm:$0xff]
      %v4765 = vld [vmem:[%s3640 + $0x90] sm:$0xff]
      %v4766 = vld [vmem:[%s3640 + $0x98] sm:$0xff]
      %v4767 = vld [vmem:[%s3640 + $0xa8] sm:$0xff]
      %v4768 = vld [vmem:[%s3640 + $0xb0] sm:$0xff]
      %v4769 = vld [vmem:[%s3640 + $0xc0] sm:$0xff]
      %v4770 = vld [vmem:[%s3640 + $0xc8] sm:$0xff]
      %v4771 = vld [vmem:[%s3640 + $0xd8] sm:$0xff]
      %v4772 = vld [vmem:[%s3640 + $0xe0] sm:$0xff]
      %v4773 = vld [vmem:[%s3640 + $0xf0] sm:$0xff]
      %v4774 = vld [vmem:[%s3640 + $0xf8] sm:$0xff]
      %v4775 = vld [vmem:[%s3640 + $0x108] sm:$0xff]
      %v4776 = vld [vmem:[%s3640 + $0x110] sm:$0xff]
      %v4777 = vld [vmem:[%s3640 + $0x120] sm:$0xff]
      %v4778 = vld [vmem:[%s3640 + $0x128] sm:$0xff]
      %v4779 = vld [vmem:[%s3640 + $0x138] sm:$0xff]
      %v4780 = vld [vmem:[%s3640 + $0x140] sm:$0xff]
      %v4781 = vld [vmem:[%s3640 + $0x150] sm:$0xff]
      %v4782 = vld [vmem:[%s3640 + $0x158] sm:$0xff]
      %v4783 = vld [vmem:[%s3640 + $0x168] sm:$0xff]
      %v4784 = vld [vmem:[%s3640 + $0x170] sm:$0xff]
      %s4785 = scalar_lea.vmem %s3, 24
      %v4786 = vld [vmem:[%s4785] sm:$0xff]
      %v4788 = vsel %vm373, %v4753, 0
      %v4791 = vsel %vm373, %v4754, 0
      %v4794 = vsel %vm373, %v4755, 0
      %v4797 = vsel %vm373, %v4756, 0
      %v4800 = vsel %vm373, %v4757, 0
      %v4803 = vsel %vm373, %v4758, 0
      %v4806 = vsel %vm373, %v4759, 0
      %v4809 = vsel %vm373, %v4760, 0
      %v4812 = vsel %vm373, %v4761, 0
      %v4815 = vsel %vm373, %v4762, 0
      %v4818 = vsel %vm373, %v4763, 0
      %v4821 = vsel %vm373, %v4764, 0
      %v4824 = vsel %vm373, %v4765, 0
      %v4827 = vsel %vm373, %v4766, 0
      %v4830 = vsel %vm373, %v4767, 0
      %v4833 = vsel %vm373, %v4768, 0
      %v4836 = vsel %vm373, %v4769, 0
      %v4839 = vsel %vm373, %v4770, 0
      %v4842 = vsel %vm373, %v4771, 0
      %v4845 = vsel %vm373, %v4772, 0
      %v4848 = vsel %vm373, %v4773, 0
      %v4851 = vsel %vm373, %v4774, 0
      %v4854 = vsel %vm373, %v4775, 0
      %v4857 = vsel %vm373, %v4776, 0
      %v4860 = vsel %vm373, %v4777, 0
      %v4863 = vsel %vm373, %v4778, 0
      %v4866 = vsel %vm373, %v4779, 0
      %v4869 = vsel %vm373, %v4780, 0
      %v4872 = vsel %vm373, %v4781, 0
      %v4875 = vsel %vm373, %v4782, 0
      %v4878 = vsel %vm373, %v4783, 0
      %v4881 = vsel %vm373, %v4784, 0
      %4883 = vmatpush.msra.mxu0 0.0
      %4884 = vmatpush.msra.mxu0 0.0
      %4885 = vmatpush.msra.mxu0 0.0
      %4886 = vmatpush.msra.mxu0 0.0
      %4887 = vmatpush.msra.mxu0 0.0
      %4888 = vmatpush.msra.mxu0 0.0
      %4889 = vmatpush.msra.mxu0 0.0
      %4890 = vmatpush.msra.mxu0 0.0
      %4891 = vmatpush.msra.mxu0 0.0
      %4892 = vmatpush.msra.mxu0 0.0
      %4893 = vmatpush.msra.mxu0 0.0
      %4894 = vmatpush.msra.mxu0 0.0
      %4895 = vmatpush.msra.mxu0 0.0
      %4896 = vmatpush.msra.mxu0 0.0
      %4897 = vmatpush.msra.mxu0 0.0
      %4898 = vmatpush.msra.mxu0 %v4786
      %4899 = vmatmul.f32.gmra.mxu0 %v4788
      %v4900 = vpop.f32.mrf.mxu0
      %v4901 = vadd.f32 0.0, %v4900
      %4902 = vmatmul.f32.gmra.mxu0 %v4791
      %v4903 = vpop.f32.mrf.mxu0
      %v4904 = vadd.f32 0.0, %v4903
      %4905 = vmatmul.f32.gmra.mxu0 %v4794
      %v4906 = vpop.f32.mrf.mxu0
      %v4907 = vadd.f32 0.0, %v4906
      %4908 = vmatmul.f32.gmra.mxu0 %v4797
      %v4909 = vpop.f32.mrf.mxu0
      %v4910 = vadd.f32 0.0, %v4909
      %4911 = vmatmul.f32.gmra.mxu0 %v4800
      %v4912 = vpop.f32.mrf.mxu0
      %v4913 = vadd.f32 0.0, %v4912
      %4914 = vmatmul.f32.gmra.mxu0 %v4803
      %v4915 = vpop.f32.mrf.mxu0
      %v4916 = vadd.f32 0.0, %v4915
      %4917 = vmatmul.f32.gmra.mxu0 %v4806
      %v4918 = vpop.f32.mrf.mxu0
      %v4919 = vadd.f32 0.0, %v4918
      %4920 = vmatmul.f32.gmra.mxu0 %v4809
      %v4921 = vpop.f32.mrf.mxu0
      %v4922 = vadd.f32 0.0, %v4921
      %4923 = vmatmul.f32.gmra.mxu0 %v4812
      %v4924 = vpop.f32.mrf.mxu0
      %v4925 = vadd.f32 0.0, %v4924
      %4926 = vmatmul.f32.gmra.mxu0 %v4815
      %v4927 = vpop.f32.mrf.mxu0
      %v4928 = vadd.f32 0.0, %v4927
      %4929 = vmatmul.f32.gmra.mxu0 %v4818
      %v4930 = vpop.f32.mrf.mxu0
      %v4931 = vadd.f32 0.0, %v4930
      %4932 = vmatmul.f32.gmra.mxu0 %v4821
      %v4933 = vpop.f32.mrf.mxu0
      %v4934 = vadd.f32 0.0, %v4933
      %4935 = vmatmul.f32.gmra.mxu0 %v4824
      %v4936 = vpop.f32.mrf.mxu0
      %v4937 = vadd.f32 0.0, %v4936
      %4938 = vmatmul.f32.gmra.mxu0 %v4827
      %v4939 = vpop.f32.mrf.mxu0
      %v4940 = vadd.f32 0.0, %v4939
      %4941 = vmatmul.f32.gmra.mxu0 %v4830
      %v4942 = vpop.f32.mrf.mxu0
      %v4943 = vadd.f32 0.0, %v4942
      %4944 = vmatmul.f32.gmra.mxu0 %v4833
      %v4945 = vpop.f32.mrf.mxu0
      %v4946 = vadd.f32 0.0, %v4945
      %4947 = vmatmul.f32.gmra.mxu0 %v4836
      %v4948 = vpop.f32.mrf.mxu0
      %v4949 = vadd.f32 0.0, %v4948
      %4950 = vmatmul.f32.gmra.mxu0 %v4839
      %v4951 = vpop.f32.mrf.mxu0
      %v4952 = vadd.f32 0.0, %v4951
      %4953 = vmatmul.f32.gmra.mxu0 %v4842
      %v4954 = vpop.f32.mrf.mxu0
      %v4955 = vadd.f32 0.0, %v4954
      %4956 = vmatmul.f32.gmra.mxu0 %v4845
      %v4957 = vpop.f32.mrf.mxu0
      %v4958 = vadd.f32 0.0, %v4957
      %4959 = vmatmul.f32.gmra.mxu0 %v4848
      %v4960 = vpop.f32.mrf.mxu0
      %v4961 = vadd.f32 0.0, %v4960
      %4962 = vmatmul.f32.gmra.mxu0 %v4851
      %v4963 = vpop.f32.mrf.mxu0
      %v4964 = vadd.f32 0.0, %v4963
      %4965 = vmatmul.f32.gmra.mxu0 %v4854
      %v4966 = vpop.f32.mrf.mxu0
      %v4967 = vadd.f32 0.0, %v4966
      %4968 = vmatmul.f32.gmra.mxu0 %v4857
      %v4969 = vpop.f32.mrf.mxu0
      %v4970 = vadd.f32 0.0, %v4969
      %4971 = vmatmul.f32.gmra.mxu0 %v4860
      %v4972 = vpop.f32.mrf.mxu0
      %v4973 = vadd.f32 0.0, %v4972
      %4974 = vmatmul.f32.gmra.mxu0 %v4863
      %v4975 = vpop.f32.mrf.mxu0
      %v4976 = vadd.f32 0.0, %v4975
      %4977 = vmatmul.f32.gmra.mxu0 %v4866
      %v4978 = vpop.f32.mrf.mxu0
      %v4979 = vadd.f32 0.0, %v4978
      %4980 = vmatmul.f32.gmra.mxu0 %v4869
      %v4981 = vpop.f32.mrf.mxu0
      %v4982 = vadd.f32 0.0, %v4981
      %4983 = vmatmul.f32.gmra.mxu0 %v4872
      %v4984 = vpop.f32.mrf.mxu0
      %v4985 = vadd.f32 0.0, %v4984
      %4986 = vmatmul.f32.gmra.mxu0 %v4875
      %v4987 = vpop.f32.mrf.mxu0
      %v4988 = vadd.f32 0.0, %v4987
      %4989 = vmatmul.f32.gmra.mxu0 %v4878
      %v4990 = vpop.f32.mrf.mxu0
      %v4991 = vadd.f32 0.0, %v4990
      %4992 = vmatmul.f32.gmra.mxu0 %v4881
      %v4993 = vpop.f32.mrf.mxu0
      %v4994 = vadd.f32 0.0, %v4993
      %4995 = vdwg.mxu0
      %v4996 = vadd.f32 %v4721, %v4901
      %v4997 = vadd.f32 %v4722, %v4904
      %v4998 = vadd.f32 %v4723, %v4907
      %v4999 = vadd.f32 %v4724, %v4910
      %v5000 = vadd.f32 %v4725, %v4913
      %v5001 = vadd.f32 %v4726, %v4916
      %v5002 = vadd.f32 %v4727, %v4919
      %v5003 = vadd.f32 %v4728, %v4922
      %v5004 = vadd.f32 %v4729, %v4925
      %v5005 = vadd.f32 %v4730, %v4928
      %v5006 = vadd.f32 %v4731, %v4931
      %v5007 = vadd.f32 %v4732, %v4934
      %v5008 = vadd.f32 %v4733, %v4937
      %v5009 = vadd.f32 %v4734, %v4940
      %v5010 = vadd.f32 %v4735, %v4943
      %v5011 = vadd.f32 %v4736, %v4946
      %v5012 = vadd.f32 %v4737, %v4949
      %v5013 = vadd.f32 %v4738, %v4952
      %v5014 = vadd.f32 %v4739, %v4955
      %v5015 = vadd.f32 %v4740, %v4958
      %v5016 = vadd.f32 %v4741, %v4961
      %v5017 = vadd.f32 %v4742, %v4964
      %v5018 = vadd.f32 %v4743, %v4967
      %v5019 = vadd.f32 %v4744, %v4970
      %v5020 = vadd.f32 %v4745, %v4973
      %v5021 = vadd.f32 %v4746, %v4976
      %v5022 = vadd.f32 %v4747, %v4979
      %v5023 = vadd.f32 %v4748, %v4982
      %v5024 = vadd.f32 %v4749, %v4985
      %v5025 = vadd.f32 %v4750, %v4988
      %v5026 = vadd.f32 %v4751, %v4991
      %v5027 = vadd.f32 %v4752, %v4994
      %5028 = vst.msk [vmem:[#allocation4] sm:$0xff] %vm373, %v4996
      %5029 = vst.msk [vmem:[#allocation4 + $0x8] sm:$0xff] %vm373, %v4997
      %5030 = vst.msk [vmem:[#allocation4 + $0x10] sm:$0xff] %vm373, %v4998
      %5031 = vst.msk [vmem:[#allocation4 + $0x18] sm:$0xff] %vm373, %v4999
      %5032 = vst.msk [vmem:[#allocation4 + $0x20] sm:$0xff] %vm373, %v5000
      %5033 = vst.msk [vmem:[#allocation4 + $0x28] sm:$0xff] %vm373, %v5001
      %5034 = vst.msk [vmem:[#allocation4 + $0x30] sm:$0xff] %vm373, %v5002
      %5035 = vst.msk [vmem:[#allocation4 + $0x38] sm:$0xff] %vm373, %v5003
      %5036 = vst.msk [vmem:[#allocation4 + $0x40] sm:$0xff] %vm373, %v5004
      %5037 = vst.msk [vmem:[#allocation4 + $0x48] sm:$0xff] %vm373, %v5005
      %5038 = vst.msk [vmem:[#allocation4 + $0x50] sm:$0xff] %vm373, %v5006
      %5039 = vst.msk [vmem:[#allocation4 + $0x58] sm:$0xff] %vm373, %v5007
      %5040 = vst.msk [vmem:[#allocation4 + $0x60] sm:$0xff] %vm373, %v5008
      %5041 = vst.msk [vmem:[#allocation4 + $0x68] sm:$0xff] %vm373, %v5009
      %5042 = vst.msk [vmem:[#allocation4 + $0x70] sm:$0xff] %vm373, %v5010
      %5043 = vst.msk [vmem:[#allocation4 + $0x78] sm:$0xff] %vm373, %v5011
      %5044 = vst.msk [vmem:[#allocation4 + $0x80] sm:$0xff] %vm373, %v5012
      %5045 = vst.msk [vmem:[#allocation4 + $0x88] sm:$0xff] %vm373, %v5013
      %5046 = vst.msk [vmem:[#allocation4 + $0x90] sm:$0xff] %vm373, %v5014
      %5047 = vst.msk [vmem:[#allocation4 + $0x98] sm:$0xff] %vm373, %v5015
      %5048 = vst.msk [vmem:[#allocation4 + $0xa0] sm:$0xff] %vm373, %v5016
      %5049 = vst.msk [vmem:[#allocation4 + $0xa8] sm:$0xff] %vm373, %v5017
      %5050 = vst.msk [vmem:[#allocation4 + $0xb0] sm:$0xff] %vm373, %v5018
      %5051 = vst.msk [vmem:[#allocation4 + $0xb8] sm:$0xff] %vm373, %v5019
      %5052 = vst.msk [vmem:[#allocation4 + $0xc0] sm:$0xff] %vm373, %v5020
      %5053 = vst.msk [vmem:[#allocation4 + $0xc8] sm:$0xff] %vm373, %v5021
      %5054 = vst.msk [vmem:[#allocation4 + $0xd0] sm:$0xff] %vm373, %v5022
      %5055 = vst.msk [vmem:[#allocation4 + $0xd8] sm:$0xff] %vm373, %v5023
      %5056 = vst.msk [vmem:[#allocation4 + $0xe0] sm:$0xff] %vm373, %v5024
      %5057 = vst.msk [vmem:[#allocation4 + $0xe8] sm:$0xff] %vm373, %v5025
      %5058 = vst.msk [vmem:[#allocation4 + $0xf0] sm:$0xff] %vm373, %v5026
      %5059 = vst.msk [vmem:[#allocation4 + $0xf8] sm:$0xff] %vm373, %v5027
      %v5060 = vld [vmem:[#allocation4] sm:$0xff]
      %v5061 = vld [vmem:[#allocation4 + $0x8] sm:$0xff]
      %v5062 = vld [vmem:[#allocation4 + $0x10] sm:$0xff]
      %v5063 = vld [vmem:[#allocation4 + $0x18] sm:$0xff]
      %v5064 = vld [vmem:[#allocation4 + $0x20] sm:$0xff]
      %v5065 = vld [vmem:[#allocation4 + $0x28] sm:$0xff]
      %v5066 = vld [vmem:[#allocation4 + $0x30] sm:$0xff]
      %v5067 = vld [vmem:[#allocation4 + $0x38] sm:$0xff]
      %v5068 = vld [vmem:[#allocation4 + $0x40] sm:$0xff]
      %v5069 = vld [vmem:[#allocation4 + $0x48] sm:$0xff]
      %v5070 = vld [vmem:[#allocation4 + $0x50] sm:$0xff]
      %v5071 = vld [vmem:[#allocation4 + $0x58] sm:$0xff]
      %v5072 = vld [vmem:[#allocation4 + $0x60] sm:$0xff]
      %v5073 = vld [vmem:[#allocation4 + $0x68] sm:$0xff]
      %v5074 = vld [vmem:[#allocation4 + $0x70] sm:$0xff]
      %v5075 = vld [vmem:[#allocation4 + $0x78] sm:$0xff]
      %v5076 = vld [vmem:[#allocation4 + $0x80] sm:$0xff]
      %v5077 = vld [vmem:[#allocation4 + $0x88] sm:$0xff]
      %v5078 = vld [vmem:[#allocation4 + $0x90] sm:$0xff]
      %v5079 = vld [vmem:[#allocation4 + $0x98] sm:$0xff]
      %v5080 = vld [vmem:[#allocation4 + $0xa0] sm:$0xff]
      %v5081 = vld [vmem:[#allocation4 + $0xa8] sm:$0xff]
      %v5082 = vld [vmem:[#allocation4 + $0xb0] sm:$0xff]
      %v5083 = vld [vmem:[#allocation4 + $0xb8] sm:$0xff]
      %v5084 = vld [vmem:[#allocation4 + $0xc0] sm:$0xff]
      %v5085 = vld [vmem:[#allocation4 + $0xc8] sm:$0xff]
      %v5086 = vld [vmem:[#allocation4 + $0xd0] sm:$0xff]
      %v5087 = vld [vmem:[#allocation4 + $0xd8] sm:$0xff]
      %v5088 = vld [vmem:[#allocation4 + $0xe0] sm:$0xff]
      %v5089 = vld [vmem:[#allocation4 + $0xe8] sm:$0xff]
      %v5090 = vld [vmem:[#allocation4 + $0xf0] sm:$0xff]
      %v5091 = vld [vmem:[#allocation4 + $0xf8] sm:$0xff]
      %v5092 = vld [vmem:[%s3640 + $0x1] sm:$0xff]
      %v5093 = vld [vmem:[%s3640 + $0x9] sm:$0xff]
      %v5094 = vld [vmem:[%s3640 + $0x19] sm:$0xff]
      %v5095 = vld [vmem:[%s3640 + $0x21] sm:$0xff]
      %v5096 = vld [vmem:[%s3640 + $0x31] sm:$0xff]
      %v5097 = vld [vmem:[%s3640 + $0x39] sm:$0xff]
      %v5098 = vld [vmem:[%s3640 + $0x49] sm:$0xff]
      %v5099 = vld [vmem:[%s3640 + $0x51] sm:$0xff]
      %v5100 = vld [vmem:[%s3640 + $0x61] sm:$0xff]
      %v5101 = vld [vmem:[%s3640 + $0x69] sm:$0xff]
      %v5102 = vld [vmem:[%s3640 + $0x79] sm:$0xff]
      %v5103 = vld [vmem:[%s3640 + $0x81] sm:$0xff]
      %v5104 = vld [vmem:[%s3640 + $0x91] sm:$0xff]
      %v5105 = vld [vmem:[%s3640 + $0x99] sm:$0xff]
      %v5106 = vld [vmem:[%s3640 + $0xa9] sm:$0xff]
      %v5107 = vld [vmem:[%s3640 + $0xb1] sm:$0xff]
      %v5108 = vld [vmem:[%s3640 + $0xc1] sm:$0xff]
      %v5109 = vld [vmem:[%s3640 + $0xc9] sm:$0xff]
      %v5110 = vld [vmem:[%s3640 + $0xd9] sm:$0xff]
      %v5111 = vld [vmem:[%s3640 + $0xe1] sm:$0xff]
      %v5112 = vld [vmem:[%s3640 + $0xf1] sm:$0xff]
      %v5113 = vld [vmem:[%s3640 + $0xf9] sm:$0xff]
      %v5114 = vld [vmem:[%s3640 + $0x109] sm:$0xff]
      %v5115 = vld [vmem:[%s3640 + $0x111] sm:$0xff]
      %v5116 = vld [vmem:[%s3640 + $0x121] sm:$0xff]
      %v5117 = vld [vmem:[%s3640 + $0x129] sm:$0xff]
      %v5118 = vld [vmem:[%s3640 + $0x139] sm:$0xff]
      %v5119 = vld [vmem:[%s3640 + $0x141] sm:$0xff]
      %v5120 = vld [vmem:[%s3640 + $0x151] sm:$0xff]
      %v5121 = vld [vmem:[%s3640 + $0x159] sm:$0xff]
      %v5122 = vld [vmem:[%s3640 + $0x169] sm:$0xff]
      %v5123 = vld [vmem:[%s3640 + $0x171] sm:$0xff]
      %s5124 = scalar_lea.vmem %s3, 32
      %v5125 = vld [vmem:[%s5124] sm:$0xff]
      %v5127 = vsel %vm373, %v5092, 0
      %v5130 = vsel %vm373, %v5093, 0
      %v5133 = vsel %vm373, %v5094, 0
      %v5136 = vsel %vm373, %v5095, 0
      %v5139 = vsel %vm373, %v5096, 0
      %v5142 = vsel %vm373, %v5097, 0
      %v5145 = vsel %vm373, %v5098, 0
      %v5148 = vsel %vm373, %v5099, 0
      %v5151 = vsel %vm373, %v5100, 0
      %v5154 = vsel %vm373, %v5101, 0
      %v5157 = vsel %vm373, %v5102, 0
      %v5160 = vsel %vm373, %v5103, 0
      %v5163 = vsel %vm373, %v5104, 0
      %v5166 = vsel %vm373, %v5105, 0
      %v5169 = vsel %vm373, %v5106, 0
      %v5172 = vsel %vm373, %v5107, 0
      %v5175 = vsel %vm373, %v5108, 0
      %v5178 = vsel %vm373, %v5109, 0
      %v5181 = vsel %vm373, %v5110, 0
      %v5184 = vsel %vm373, %v5111, 0
      %v5187 = vsel %vm373, %v5112, 0
      %v5190 = vsel %vm373, %v5113, 0
      %v5193 = vsel %vm373, %v5114, 0
      %v5196 = vsel %vm373, %v5115, 0
      %v5199 = vsel %vm373, %v5116, 0
      %v5202 = vsel %vm373, %v5117, 0
      %v5205 = vsel %vm373, %v5118, 0
      %v5208 = vsel %vm373, %v5119, 0
      %v5211 = vsel %vm373, %v5120, 0
      %v5214 = vsel %vm373, %v5121, 0
      %v5217 = vsel %vm373, %v5122, 0
      %v5220 = vsel %vm373, %v5123, 0
      %5222 = vmatpush.msra.mxu0 0.0
      %5223 = vmatpush.msra.mxu0 0.0
      %5224 = vmatpush.msra.mxu0 0.0
      %5225 = vmatpush.msra.mxu0 0.0
      %5226 = vmatpush.msra.mxu0 0.0
      %5227 = vmatpush.msra.mxu0 0.0
      %5228 = vmatpush.msra.mxu0 0.0
      %5229 = vmatpush.msra.mxu0 0.0
      %5230 = vmatpush.msra.mxu0 0.0
      %5231 = vmatpush.msra.mxu0 0.0
      %5232 = vmatpush.msra.mxu0 0.0
      %5233 = vmatpush.msra.mxu0 0.0
      %5234 = vmatpush.msra.mxu0 0.0
      %5235 = vmatpush.msra.mxu0 0.0
      %5236 = vmatpush.msra.mxu0 0.0
      %5237 = vmatpush.msra.mxu0 %v5125
      %5238 = vmatmul.f32.gmra.mxu0 %v5127
      %v5239 = vpop.f32.mrf.mxu0
      %v5240 = vadd.f32 0.0, %v5239
      %5241 = vmatmul.f32.gmra.mxu0 %v5130
      %v5242 = vpop.f32.mrf.mxu0
      %v5243 = vadd.f32 0.0, %v5242
      %5244 = vmatmul.f32.gmra.mxu0 %v5133
      %v5245 = vpop.f32.mrf.mxu0
      %v5246 = vadd.f32 0.0, %v5245
      %5247 = vmatmul.f32.gmra.mxu0 %v5136
      %v5248 = vpop.f32.mrf.mxu0
      %v5249 = vadd.f32 0.0, %v5248
      %5250 = vmatmul.f32.gmra.mxu0 %v5139
      %v5251 = vpop.f32.mrf.mxu0
      %v5252 = vadd.f32 0.0, %v5251
      %5253 = vmatmul.f32.gmra.mxu0 %v5142
      %v5254 = vpop.f32.mrf.mxu0
      %v5255 = vadd.f32 0.0, %v5254
      %5256 = vmatmul.f32.gmra.mxu0 %v5145
      %v5257 = vpop.f32.mrf.mxu0
      %v5258 = vadd.f32 0.0, %v5257
      %5259 = vmatmul.f32.gmra.mxu0 %v5148
      %v5260 = vpop.f32.mrf.mxu0
      %v5261 = vadd.f32 0.0, %v5260
      %5262 = vmatmul.f32.gmra.mxu0 %v5151
      %v5263 = vpop.f32.mrf.mxu0
      %v5264 = vadd.f32 0.0, %v5263
      %5265 = vmatmul.f32.gmra.mxu0 %v5154
      %v5266 = vpop.f32.mrf.mxu0
      %v5267 = vadd.f32 0.0, %v5266
      %5268 = vmatmul.f32.gmra.mxu0 %v5157
      %v5269 = vpop.f32.mrf.mxu0
      %v5270 = vadd.f32 0.0, %v5269
      %5271 = vmatmul.f32.gmra.mxu0 %v5160
      %v5272 = vpop.f32.mrf.mxu0
      %v5273 = vadd.f32 0.0, %v5272
      %5274 = vmatmul.f32.gmra.mxu0 %v5163
      %v5275 = vpop.f32.mrf.mxu0
      %v5276 = vadd.f32 0.0, %v5275
      %5277 = vmatmul.f32.gmra.mxu0 %v5166
      %v5278 = vpop.f32.mrf.mxu0
      %v5279 = vadd.f32 0.0, %v5278
      %5280 = vmatmul.f32.gmra.mxu0 %v5169
      %v5281 = vpop.f32.mrf.mxu0
      %v5282 = vadd.f32 0.0, %v5281
      %5283 = vmatmul.f32.gmra.mxu0 %v5172
      %v5284 = vpop.f32.mrf.mxu0
      %v5285 = vadd.f32 0.0, %v5284
      %5286 = vmatmul.f32.gmra.mxu0 %v5175
      %v5287 = vpop.f32.mrf.mxu0
      %v5288 = vadd.f32 0.0, %v5287
      %5289 = vmatmul.f32.gmra.mxu0 %v5178
      %v5290 = vpop.f32.mrf.mxu0
      %v5291 = vadd.f32 0.0, %v5290
      %5292 = vmatmul.f32.gmra.mxu0 %v5181
      %v5293 = vpop.f32.mrf.mxu0
      %v5294 = vadd.f32 0.0, %v5293
      %5295 = vmatmul.f32.gmra.mxu0 %v5184
      %v5296 = vpop.f32.mrf.mxu0
      %v5297 = vadd.f32 0.0, %v5296
      %5298 = vmatmul.f32.gmra.mxu0 %v5187
      %v5299 = vpop.f32.mrf.mxu0
      %v5300 = vadd.f32 0.0, %v5299
      %5301 = vmatmul.f32.gmra.mxu0 %v5190
      %v5302 = vpop.f32.mrf.mxu0
      %v5303 = vadd.f32 0.0, %v5302
      %5304 = vmatmul.f32.gmra.mxu0 %v5193
      %v5305 = vpop.f32.mrf.mxu0
      %v5306 = vadd.f32 0.0, %v5305
      %5307 = vmatmul.f32.gmra.mxu0 %v5196
      %v5308 = vpop.f32.mrf.mxu0
      %v5309 = vadd.f32 0.0, %v5308
      %5310 = vmatmul.f32.gmra.mxu0 %v5199
      %v5311 = vpop.f32.mrf.mxu0
      %v5312 = vadd.f32 0.0, %v5311
      %5313 = vmatmul.f32.gmra.mxu0 %v5202
      %v5314 = vpop.f32.mrf.mxu0
      %v5315 = vadd.f32 0.0, %v5314
      %5316 = vmatmul.f32.gmra.mxu0 %v5205
      %v5317 = vpop.f32.mrf.mxu0
      %v5318 = vadd.f32 0.0, %v5317
      %5319 = vmatmul.f32.gmra.mxu0 %v5208
      %v5320 = vpop.f32.mrf.mxu0
      %v5321 = vadd.f32 0.0, %v5320
      %5322 = vmatmul.f32.gmra.mxu0 %v5211
      %v5323 = vpop.f32.mrf.mxu0
      %v5324 = vadd.f32 0.0, %v5323
      %5325 = vmatmul.f32.gmra.mxu0 %v5214
      %v5326 = vpop.f32.mrf.mxu0
      %v5327 = vadd.f32 0.0, %v5326
      %5328 = vmatmul.f32.gmra.mxu0 %v5217
      %v5329 = vpop.f32.mrf.mxu0
      %v5330 = vadd.f32 0.0, %v5329
      %5331 = vmatmul.f32.gmra.mxu0 %v5220
      %v5332 = vpop.f32.mrf.mxu0
      %v5333 = vadd.f32 0.0, %v5332
      %5334 = vdwg.mxu0
      %v5335 = vadd.f32 %v5060, %v5240
      %v5336 = vadd.f32 %v5061, %v5243
      %v5337 = vadd.f32 %v5062, %v5246
      %v5338 = vadd.f32 %v5063, %v5249
      %v5339 = vadd.f32 %v5064, %v5252
      %v5340 = vadd.f32 %v5065, %v5255
      %v5341 = vadd.f32 %v5066, %v5258
      %v5342 = vadd.f32 %v5067, %v5261
      %v5343 = vadd.f32 %v5068, %v5264
      %v5344 = vadd.f32 %v5069, %v5267
      %v5345 = vadd.f32 %v5070, %v5270
      %v5346 = vadd.f32 %v5071, %v5273
      %v5347 = vadd.f32 %v5072, %v5276
      %v5348 = vadd.f32 %v5073, %v5279
      %v5349 = vadd.f32 %v5074, %v5282
      %v5350 = vadd.f32 %v5075, %v5285
      %v5351 = vadd.f32 %v5076, %v5288
      %v5352 = vadd.f32 %v5077, %v5291
      %v5353 = vadd.f32 %v5078, %v5294
      %v5354 = vadd.f32 %v5079, %v5297
      %v5355 = vadd.f32 %v5080, %v5300
      %v5356 = vadd.f32 %v5081, %v5303
      %v5357 = vadd.f32 %v5082, %v5306
      %v5358 = vadd.f32 %v5083, %v5309
      %v5359 = vadd.f32 %v5084, %v5312
      %v5360 = vadd.f32 %v5085, %v5315
      %v5361 = vadd.f32 %v5086, %v5318
      %v5362 = vadd.f32 %v5087, %v5321
      %v5363 = vadd.f32 %v5088, %v5324
      %v5364 = vadd.f32 %v5089, %v5327
      %v5365 = vadd.f32 %v5090, %v5330
      %v5366 = vadd.f32 %v5091, %v5333
      %5367 = vst.msk [vmem:[#allocation4] sm:$0xff] %vm373, %v5335
      %5368 = vst.msk [vmem:[#allocation4 + $0x8] sm:$0xff] %vm373, %v5336
      %5369 = vst.msk [vmem:[#allocation4 + $0x10] sm:$0xff] %vm373, %v5337
      %5370 = vst.msk [vmem:[#allocation4 + $0x18] sm:$0xff] %vm373, %v5338
      %5371 = vst.msk [vmem:[#allocation4 + $0x20] sm:$0xff] %vm373, %v5339
      %5372 = vst.msk [vmem:[#allocation4 + $0x28] sm:$0xff] %vm373, %v5340
      %5373 = vst.msk [vmem:[#allocation4 + $0x30] sm:$0xff] %vm373, %v5341
      %5374 = vst.msk [vmem:[#allocation4 + $0x38] sm:$0xff] %vm373, %v5342
      %5375 = vst.msk [vmem:[#allocation4 + $0x40] sm:$0xff] %vm373, %v5343
      %5376 = vst.msk [vmem:[#allocation4 + $0x48] sm:$0xff] %vm373, %v5344
      %5377 = vst.msk [vmem:[#allocation4 + $0x50] sm:$0xff] %vm373, %v5345
      %5378 = vst.msk [vmem:[#allocation4 + $0x58] sm:$0xff] %vm373, %v5346
      %5379 = vst.msk [vmem:[#allocation4 + $0x60] sm:$0xff] %vm373, %v5347
      %5380 = vst.msk [vmem:[#allocation4 + $0x68] sm:$0xff] %vm373, %v5348
      %5381 = vst.msk [vmem:[#allocation4 + $0x70] sm:$0xff] %vm373, %v5349
      %5382 = vst.msk [vmem:[#allocation4 + $0x78] sm:$0xff] %vm373, %v5350
      %5383 = vst.msk [vmem:[#allocation4 + $0x80] sm:$0xff] %vm373, %v5351
      %5384 = vst.msk [vmem:[#allocation4 + $0x88] sm:$0xff] %vm373, %v5352
      %5385 = vst.msk [vmem:[#allocation4 + $0x90] sm:$0xff] %vm373, %v5353
      %5386 = vst.msk [vmem:[#allocation4 + $0x98] sm:$0xff] %vm373, %v5354
      %5387 = vst.msk [vmem:[#allocation4 + $0xa0] sm:$0xff] %vm373, %v5355
      %5388 = vst.msk [vmem:[#allocation4 + $0xa8] sm:$0xff] %vm373, %v5356
      %5389 = vst.msk [vmem:[#allocation4 + $0xb0] sm:$0xff] %vm373, %v5357
      %5390 = vst.msk [vmem:[#allocation4 + $0xb8] sm:$0xff] %vm373, %v5358
      %5391 = vst.msk [vmem:[#allocation4 + $0xc0] sm:$0xff] %vm373, %v5359
      %5392 = vst.msk [vmem:[#allocation4 + $0xc8] sm:$0xff] %vm373, %v5360
      %5393 = vst.msk [vmem:[#allocation4 + $0xd0] sm:$0xff] %vm373, %v5361
      %5394 = vst.msk [vmem:[#allocation4 + $0xd8] sm:$0xff] %vm373, %v5362
      %5395 = vst.msk [vmem:[#allocation4 + $0xe0] sm:$0xff] %vm373, %v5363
      %5396 = vst.msk [vmem:[#allocation4 + $0xe8] sm:$0xff] %vm373, %v5364
      %5397 = vst.msk [vmem:[#allocation4 + $0xf0] sm:$0xff] %vm373, %v5365
      %5398 = vst.msk [vmem:[#allocation4 + $0xf8] sm:$0xff] %vm373, %v5366
      %v5399 = vld [vmem:[#allocation4] sm:$0xff]
      %v5400 = vld [vmem:[#allocation4 + $0x8] sm:$0xff]
      %v5401 = vld [vmem:[#allocation4 + $0x10] sm:$0xff]
      %v5402 = vld [vmem:[#allocation4 + $0x18] sm:$0xff]
      %v5403 = vld [vmem:[#allocation4 + $0x20] sm:$0xff]
      %v5404 = vld [vmem:[#allocation4 + $0x28] sm:$0xff]
      %v5405 = vld [vmem:[#allocation4 + $0x30] sm:$0xff]
      %v5406 = vld [vmem:[#allocation4 + $0x38] sm:$0xff]
      %v5407 = vld [vmem:[#allocation4 + $0x40] sm:$0xff]
      %v5408 = vld [vmem:[#allocation4 + $0x48] sm:$0xff]
      %v5409 = vld [vmem:[#allocation4 + $0x50] sm:$0xff]
      %v5410 = vld [vmem:[#allocation4 + $0x58] sm:$0xff]
      %v5411 = vld [vmem:[#allocation4 + $0x60] sm:$0xff]
      %v5412 = vld [vmem:[#allocation4 + $0x68] sm:$0xff]
      %v5413 = vld [vmem:[#allocation4 + $0x70] sm:$0xff]
      %v5414 = vld [vmem:[#allocation4 + $0x78] sm:$0xff]
      %v5415 = vld [vmem:[#allocation4 + $0x80] sm:$0xff]
      %v5416 = vld [vmem:[#allocation4 + $0x88] sm:$0xff]
      %v5417 = vld [vmem:[#allocation4 + $0x90] sm:$0xff]
      %v5418 = vld [vmem:[#allocation4 + $0x98] sm:$0xff]
      %v5419 = vld [vmem:[#allocation4 + $0xa0] sm:$0xff]
      %v5420 = vld [vmem:[#allocation4 + $0xa8] sm:$0xff]
      %v5421 = vld [vmem:[#allocation4 + $0xb0] sm:$0xff]
      %v5422 = vld [vmem:[#allocation4 + $0xb8] sm:$0xff]
      %v5423 = vld [vmem:[#allocation4 + $0xc0] sm:$0xff]
      %v5424 = vld [vmem:[#allocation4 + $0xc8] sm:$0xff]
      %v5425 = vld [vmem:[#allocation4 + $0xd0] sm:$0xff]
      %v5426 = vld [vmem:[#allocation4 + $0xd8] sm:$0xff]
      %v5427 = vld [vmem:[#allocation4 + $0xe0] sm:$0xff]
      %v5428 = vld [vmem:[#allocation4 + $0xe8] sm:$0xff]
      %v5429 = vld [vmem:[#allocation4 + $0xf0] sm:$0xff]
      %v5430 = vld [vmem:[#allocation4 + $0xf8] sm:$0xff]
      %v5431 = vld [vmem:[%s3640 + $0x2] sm:$0xff]
      %v5432 = vld [vmem:[%s3640 + $0xa] sm:$0xff]
      %v5433 = vld [vmem:[%s3640 + $0x1a] sm:$0xff]
      %v5434 = vld [vmem:[%s3640 + $0x22] sm:$0xff]
      %v5435 = vld [vmem:[%s3640 + $0x32] sm:$0xff]
      %v5436 = vld [vmem:[%s3640 + $0x3a] sm:$0xff]
      %v5437 = vld [vmem:[%s3640 + $0x4a] sm:$0xff]
      %v5438 = vld [vmem:[%s3640 + $0x52] sm:$0xff]
      %v5439 = vld [vmem:[%s3640 + $0x62] sm:$0xff]
      %v5440 = vld [vmem:[%s3640 + $0x6a] sm:$0xff]
      %v5441 = vld [vmem:[%s3640 + $0x7a] sm:$0xff]
      %v5442 = vld [vmem:[%s3640 + $0x82] sm:$0xff]
      %v5443 = vld [vmem:[%s3640 + $0x92] sm:$0xff]
      %v5444 = vld [vmem:[%s3640 + $0x9a] sm:$0xff]
      %v5445 = vld [vmem:[%s3640 + $0xaa] sm:$0xff]
      %v5446 = vld [vmem:[%s3640 + $0xb2] sm:$0xff]
      %v5447 = vld [vmem:[%s3640 + $0xc2] sm:$0xff]
      %v5448 = vld [vmem:[%s3640 + $0xca] sm:$0xff]
      %v5449 = vld [vmem:[%s3640 + $0xda] sm:$0xff]
      %v5450 = vld [vmem:[%s3640 + $0xe2] sm:$0xff]
      %v5451 = vld [vmem:[%s3640 + $0xf2] sm:$0xff]
      %v5452 = vld [vmem:[%s3640 + $0xfa] sm:$0xff]
      %v5453 = vld [vmem:[%s3640 + $0x10a] sm:$0xff]
      %v5454 = vld [vmem:[%s3640 + $0x112] sm:$0xff]
      %v5455 = vld [vmem:[%s3640 + $0x122] sm:$0xff]
      %v5456 = vld [vmem:[%s3640 + $0x12a] sm:$0xff]
      %v5457 = vld [vmem:[%s3640 + $0x13a] sm:$0xff]
      %v5458 = vld [vmem:[%s3640 + $0x142] sm:$0xff]
      %v5459 = vld [vmem:[%s3640 + $0x152] sm:$0xff]
      %v5460 = vld [vmem:[%s3640 + $0x15a] sm:$0xff]
      %v5461 = vld [vmem:[%s3640 + $0x16a] sm:$0xff]
      %v5462 = vld [vmem:[%s3640 + $0x172] sm:$0xff]
      %s5463 = scalar_lea.vmem %s3, 40
      %v5464 = vld [vmem:[%s5463] sm:$0xff]
      %v5466 = vsel %vm373, %v5431, 0
      %v5469 = vsel %vm373, %v5432, 0
      %v5472 = vsel %vm373, %v5433, 0
      %v5475 = vsel %vm373, %v5434, 0
      %v5478 = vsel %vm373, %v5435, 0
      %v5481 = vsel %vm373, %v5436, 0
      %v5484 = vsel %vm373, %v5437, 0
      %v5487 = vsel %vm373, %v5438, 0
      %v5490 = vsel %vm373, %v5439, 0
      %v5493 = vsel %vm373, %v5440, 0
      %v5496 = vsel %vm373, %v5441, 0
      %v5499 = vsel %vm373, %v5442, 0
      %v5502 = vsel %vm373, %v5443, 0
      %v5505 = vsel %vm373, %v5444, 0
      %v5508 = vsel %vm373, %v5445, 0
      %v5511 = vsel %vm373, %v5446, 0
      %v5514 = vsel %vm373, %v5447, 0
      %v5517 = vsel %vm373, %v5448, 0
      %v5520 = vsel %vm373, %v5449, 0
      %v5523 = vsel %vm373, %v5450, 0
      %v5526 = vsel %vm373, %v5451, 0
      %v5529 = vsel %vm373, %v5452, 0
      %v5532 = vsel %vm373, %v5453, 0
      %v5535 = vsel %vm373, %v5454, 0
      %v5538 = vsel %vm373, %v5455, 0
      %v5541 = vsel %vm373, %v5456, 0
      %v5544 = vsel %vm373, %v5457, 0
      %v5547 = vsel %vm373, %v5458, 0
      %v5550 = vsel %vm373, %v5459, 0
      %v5553 = vsel %vm373, %v5460, 0
      %v5556 = vsel %vm373, %v5461, 0
      %v5559 = vsel %vm373, %v5462, 0
      %5561 = vmatpush.msra.mxu0 0.0
      %5562 = vmatpush.msra.mxu0 0.0
      %5563 = vmatpush.msra.mxu0 0.0
      %5564 = vmatpush.msra.mxu0 0.0
      %5565 = vmatpush.msra.mxu0 0.0
      %5566 = vmatpush.msra.mxu0 0.0
      %5567 = vmatpush.msra.mxu0 0.0
      %5568 = vmatpush.msra.mxu0 0.0
      %5569 = vmatpush.msra.mxu0 0.0
      %5570 = vmatpush.msra.mxu0 0.0
      %5571 = vmatpush.msra.mxu0 0.0
      %5572 = vmatpush.msra.mxu0 0.0
      %5573 = vmatpush.msra.mxu0 0.0
      %5574 = vmatpush.msra.mxu0 0.0
      %5575 = vmatpush.msra.mxu0 0.0
      %5576 = vmatpush.msra.mxu0 %v5464
      %5577 = vmatmul.f32.gmra.mxu0 %v5466
      %v5578 = vpop.f32.mrf.mxu0
      %v5579 = vadd.f32 0.0, %v5578
      %5580 = vmatmul.f32.gmra.mxu0 %v5469
      %v5581 = vpop.f32.mrf.mxu0
      %v5582 = vadd.f32 0.0, %v5581
      %5583 = vmatmul.f32.gmra.mxu0 %v5472
      %v5584 = vpop.f32.mrf.mxu0
      %v5585 = vadd.f32 0.0, %v5584
      %5586 = vmatmul.f32.gmra.mxu0 %v5475
      %v5587 = vpop.f32.mrf.mxu0
      %v5588 = vadd.f32 0.0, %v5587
      %5589 = vmatmul.f32.gmra.mxu0 %v5478
      %v5590 = vpop.f32.mrf.mxu0
      %v5591 = vadd.f32 0.0, %v5590
      %5592 = vmatmul.f32.gmra.mxu0 %v5481
      %v5593 = vpop.f32.mrf.mxu0
      %v5594 = vadd.f32 0.0, %v5593
      %5595 = vmatmul.f32.gmra.mxu0 %v5484
      %v5596 = vpop.f32.mrf.mxu0
      %v5597 = vadd.f32 0.0, %v5596
      %5598 = vmatmul.f32.gmra.mxu0 %v5487
      %v5599 = vpop.f32.mrf.mxu0
      %v5600 = vadd.f32 0.0, %v5599
      %5601 = vmatmul.f32.gmra.mxu0 %v5490
      %v5602 = vpop.f32.mrf.mxu0
      %v5603 = vadd.f32 0.0, %v5602
      %5604 = vmatmul.f32.gmra.mxu0 %v5493
      %v5605 = vpop.f32.mrf.mxu0
      %v5606 = vadd.f32 0.0, %v5605
      %5607 = vmatmul.f32.gmra.mxu0 %v5496
      %v5608 = vpop.f32.mrf.mxu0
      %v5609 = vadd.f32 0.0, %v5608
      %5610 = vmatmul.f32.gmra.mxu0 %v5499
      %v5611 = vpop.f32.mrf.mxu0
      %v5612 = vadd.f32 0.0, %v5611
      %5613 = vmatmul.f32.gmra.mxu0 %v5502
      %v5614 = vpop.f32.mrf.mxu0
      %v5615 = vadd.f32 0.0, %v5614
      %5616 = vmatmul.f32.gmra.mxu0 %v5505
      %v5617 = vpop.f32.mrf.mxu0
      %v5618 = vadd.f32 0.0, %v5617
      %5619 = vmatmul.f32.gmra.mxu0 %v5508
      %v5620 = vpop.f32.mrf.mxu0
      %v5621 = vadd.f32 0.0, %v5620
      %5622 = vmatmul.f32.gmra.mxu0 %v5511
      %v5623 = vpop.f32.mrf.mxu0
      %v5624 = vadd.f32 0.0, %v5623
      %5625 = vmatmul.f32.gmra.mxu0 %v5514
      %v5626 = vpop.f32.mrf.mxu0
      %v5627 = vadd.f32 0.0, %v5626
      %5628 = vmatmul.f32.gmra.mxu0 %v5517
      %v5629 = vpop.f32.mrf.mxu0
      %v5630 = vadd.f32 0.0, %v5629
      %5631 = vmatmul.f32.gmra.mxu0 %v5520
      %v5632 = vpop.f32.mrf.mxu0
      %v5633 = vadd.f32 0.0, %v5632
      %5634 = vmatmul.f32.gmra.mxu0 %v5523
      %v5635 = vpop.f32.mrf.mxu0
      %v5636 = vadd.f32 0.0, %v5635
      %5637 = vmatmul.f32.gmra.mxu0 %v5526
      %v5638 = vpop.f32.mrf.mxu0
      %v5639 = vadd.f32 0.0, %v5638
      %5640 = vmatmul.f32.gmra.mxu0 %v5529
      %v5641 = vpop.f32.mrf.mxu0
      %v5642 = vadd.f32 0.0, %v5641
      %5643 = vmatmul.f32.gmra.mxu0 %v5532
      %v5644 = vpop.f32.mrf.mxu0
      %v5645 = vadd.f32 0.0, %v5644
      %5646 = vmatmul.f32.gmra.mxu0 %v5535
      %v5647 = vpop.f32.mrf.mxu0
      %v5648 = vadd.f32 0.0, %v5647
      %5649 = vmatmul.f32.gmra.mxu0 %v5538
      %v5650 = vpop.f32.mrf.mxu0
      %v5651 = vadd.f32 0.0, %v5650
      %5652 = vmatmul.f32.gmra.mxu0 %v5541
      %v5653 = vpop.f32.mrf.mxu0
      %v5654 = vadd.f32 0.0, %v5653
      %5655 = vmatmul.f32.gmra.mxu0 %v5544
      %v5656 = vpop.f32.mrf.mxu0
      %v5657 = vadd.f32 0.0, %v5656
      %5658 = vmatmul.f32.gmra.mxu0 %v5547
      %v5659 = vpop.f32.mrf.mxu0
      %v5660 = vadd.f32 0.0, %v5659
      %5661 = vmatmul.f32.gmra.mxu0 %v5550
      %v5662 = vpop.f32.mrf.mxu0
      %v5663 = vadd.f32 0.0, %v5662
      %5664 = vmatmul.f32.gmra.mxu0 %v5553
      %v5665 = vpop.f32.mrf.mxu0
      %v5666 = vadd.f32 0.0, %v5665
      %5667 = vmatmul.f32.gmra.mxu0 %v5556
      %v5668 = vpop.f32.mrf.mxu0
      %v5669 = vadd.f32 0.0, %v5668
      %5670 = vmatmul.f32.gmra.mxu0 %v5559
      %v5671 = vpop.f32.mrf.mxu0
      %v5672 = vadd.f32 0.0, %v5671
      %5673 = vdwg.mxu0
      %v5674 = vadd.f32 %v5399, %v5579
      %v5675 = vadd.f32 %v5400, %v5582
      %v5676 = vadd.f32 %v5401, %v5585
      %v5677 = vadd.f32 %v5402, %v5588
      %v5678 = vadd.f32 %v5403, %v5591
      %v5679 = vadd.f32 %v5404, %v5594
      %v5680 = vadd.f32 %v5405, %v5597
      %v5681 = vadd.f32 %v5406, %v5600
      %v5682 = vadd.f32 %v5407, %v5603
      %v5683 = vadd.f32 %v5408, %v5606
      %v5684 = vadd.f32 %v5409, %v5609
      %v5685 = vadd.f32 %v5410, %v5612
      %v5686 = vadd.f32 %v5411, %v5615
      %v5687 = vadd.f32 %v5412, %v5618
      %v5688 = vadd.f32 %v5413, %v5621
      %v5689 = vadd.f32 %v5414, %v5624
      %v5690 = vadd.f32 %v5415, %v5627
      %v5691 = vadd.f32 %v5416, %v5630
      %v5692 = vadd.f32 %v5417, %v5633
      %v5693 = vadd.f32 %v5418, %v5636
      %v5694 = vadd.f32 %v5419, %v5639
      %v5695 = vadd.f32 %v5420, %v5642
      %v5696 = vadd.f32 %v5421, %v5645
      %v5697 = vadd.f32 %v5422, %v5648
      %v5698 = vadd.f32 %v5423, %v5651
      %v5699 = vadd.f32 %v5424, %v5654
      %v5700 = vadd.f32 %v5425, %v5657
      %v5701 = vadd.f32 %v5426, %v5660
      %v5702 = vadd.f32 %v5427, %v5663
      %v5703 = vadd.f32 %v5428, %v5666
      %v5704 = vadd.f32 %v5429, %v5669
      %v5705 = vadd.f32 %v5430, %v5672
      %5706 = vst.msk [vmem:[#allocation4] sm:$0xff] %vm373, %v5674
      %5707 = vst.msk [vmem:[#allocation4 + $0x8] sm:$0xff] %vm373, %v5675
      %5708 = vst.msk [vmem:[#allocation4 + $0x10] sm:$0xff] %vm373, %v5676
      %5709 = vst.msk [vmem:[#allocation4 + $0x18] sm:$0xff] %vm373, %v5677
      %5710 = vst.msk [vmem:[#allocation4 + $0x20] sm:$0xff] %vm373, %v5678
      %5711 = vst.msk [vmem:[#allocation4 + $0x28] sm:$0xff] %vm373, %v5679
      %5712 = vst.msk [vmem:[#allocation4 + $0x30] sm:$0xff] %vm373, %v5680
      %5713 = vst.msk [vmem:[#allocation4 + $0x38] sm:$0xff] %vm373, %v5681
      %5714 = vst.msk [vmem:[#allocation4 + $0x40] sm:$0xff] %vm373, %v5682
      %5715 = vst.msk [vmem:[#allocation4 + $0x48] sm:$0xff] %vm373, %v5683
      %5716 = vst.msk [vmem:[#allocation4 + $0x50] sm:$0xff] %vm373, %v5684
      %5717 = vst.msk [vmem:[#allocation4 + $0x58] sm:$0xff] %vm373, %v5685
      %5718 = vst.msk [vmem:[#allocation4 + $0x60] sm:$0xff] %vm373, %v5686
      %5719 = vst.msk [vmem:[#allocation4 + $0x68] sm:$0xff] %vm373, %v5687
      %5720 = vst.msk [vmem:[#allocation4 + $0x70] sm:$0xff] %vm373, %v5688
      %5721 = vst.msk [vmem:[#allocation4 + $0x78] sm:$0xff] %vm373, %v5689
      %5722 = vst.msk [vmem:[#allocation4 + $0x80] sm:$0xff] %vm373, %v5690
      %5723 = vst.msk [vmem:[#allocation4 + $0x88] sm:$0xff] %vm373, %v5691
      %5724 = vst.msk [vmem:[#allocation4 + $0x90] sm:$0xff] %vm373, %v5692
      %5725 = vst.msk [vmem:[#allocation4 + $0x98] sm:$0xff] %vm373, %v5693
      %5726 = vst.msk [vmem:[#allocation4 + $0xa0] sm:$0xff] %vm373, %v5694
      %5727 = vst.msk [vmem:[#allocation4 + $0xa8] sm:$0xff] %vm373, %v5695
      %5728 = vst.msk [vmem:[#allocation4 + $0xb0] sm:$0xff] %vm373, %v5696
      %5729 = vst.msk [vmem:[#allocation4 + $0xb8] sm:$0xff] %vm373, %v5697
      %5730 = vst.msk [vmem:[#allocation4 + $0xc0] sm:$0xff] %vm373, %v5698
      %5731 = vst.msk [vmem:[#allocation4 + $0xc8] sm:$0xff] %vm373, %v5699
      %5732 = vst.msk [vmem:[#allocation4 + $0xd0] sm:$0xff] %vm373, %v5700
      %5733 = vst.msk [vmem:[#allocation4 + $0xd8] sm:$0xff] %vm373, %v5701
      %5734 = vst.msk [vmem:[#allocation4 + $0xe0] sm:$0xff] %vm373, %v5702
      %5735 = vst.msk [vmem:[#allocation4 + $0xe8] sm:$0xff] %vm373, %v5703
      %5736 = vst.msk [vmem:[#allocation4 + $0xf0] sm:$0xff] %vm373, %v5704
      %5737 = vst.msk [vmem:[#allocation4 + $0xf8] sm:$0xff] %vm373, %v5705
      %v5738 = vld [vmem:[#allocation4] sm:$0xff]
      %v5739 = vld [vmem:[#allocation4 + $0x8] sm:$0xff]
      %v5740 = vld [vmem:[#allocation4 + $0x10] sm:$0xff]
      %v5741 = vld [vmem:[#allocation4 + $0x18] sm:$0xff]
      %v5742 = vld [vmem:[#allocation4 + $0x20] sm:$0xff]
      %v5743 = vld [vmem:[#allocation4 + $0x28] sm:$0xff]
      %v5744 = vld [vmem:[#allocation4 + $0x30] sm:$0xff]
      %v5745 = vld [vmem:[#allocation4 + $0x38] sm:$0xff]
      %v5746 = vld [vmem:[#allocation4 + $0x40] sm:$0xff]
      %v5747 = vld [vmem:[#allocation4 + $0x48] sm:$0xff]
      %v5748 = vld [vmem:[#allocation4 + $0x50] sm:$0xff]
      %v5749 = vld [vmem:[#allocation4 + $0x58] sm:$0xff]
      %v5750 = vld [vmem:[#allocation4 + $0x60] sm:$0xff]
      %v5751 = vld [vmem:[#allocation4 + $0x68] sm:$0xff]
      %v5752 = vld [vmem:[#allocation4 + $0x70] sm:$0xff]
      %v5753 = vld [vmem:[#allocation4 + $0x78] sm:$0xff]
      %v5754 = vld [vmem:[#allocation4 + $0x80] sm:$0xff]
      %v5755 = vld [vmem:[#allocation4 + $0x88] sm:$0xff]
      %v5756 = vld [vmem:[#allocation4 + $0x90] sm:$0xff]
      %v5757 = vld [vmem:[#allocation4 + $0x98] sm:$0xff]
      %v5758 = vld [vmem:[#allocation4 + $0xa0] sm:$0xff]
      %v5759 = vld [vmem:[#allocation4 + $0xa8] sm:$0xff]
      %v5760 = vld [vmem:[#allocation4 + $0xb0] sm:$0xff]
      %v5761 = vld [vmem:[#allocation4 + $0xb8] sm:$0xff]
      %v5762 = vld [vmem:[#allocation4 + $0xc0] sm:$0xff]
      %v5763 = vld [vmem:[#allocation4 + $0xc8] sm:$0xff]
      %v5764 = vld [vmem:[#allocation4 + $0xd0] sm:$0xff]
      %v5765 = vld [vmem:[#allocation4 + $0xd8] sm:$0xff]
      %v5766 = vld [vmem:[#allocation4 + $0xe0] sm:$0xff]
      %v5767 = vld [vmem:[#allocation4 + $0xe8] sm:$0xff]
      %v5768 = vld [vmem:[#allocation4 + $0xf0] sm:$0xff]
      %v5769 = vld [vmem:[#allocation4 + $0xf8] sm:$0xff]
      %s5770 = scalar_lea.vmem [#allocation3], 48
      %v5771 = vld [vmem:[%s5770] sm:$0xff]
      %v5772 = vld [vmem:[%s5770 + $0x8] sm:$0xff]
      %v5773 = vld [vmem:[%s5770 + $0x18] sm:$0xff]
      %v5774 = vld [vmem:[%s5770 + $0x20] sm:$0xff]
      %v5775 = vld [vmem:[%s5770 + $0x30] sm:$0xff]
      %v5776 = vld [vmem:[%s5770 + $0x38] sm:$0xff]
      %v5777 = vld [vmem:[%s5770 + $0x48] sm:$0xff]
      %v5778 = vld [vmem:[%s5770 + $0x50] sm:$0xff]
      %v5779 = vld [vmem:[%s5770 + $0x60] sm:$0xff]
      %v5780 = vld [vmem:[%s5770 + $0x68] sm:$0xff]
      %v5781 = vld [vmem:[%s5770 + $0x78] sm:$0xff]
      %v5782 = vld [vmem:[%s5770 + $0x80] sm:$0xff]
      %v5783 = vld [vmem:[%s5770 + $0x90] sm:$0xff]
      %v5784 = vld [vmem:[%s5770 + $0x98] sm:$0xff]
      %v5785 = vld [vmem:[%s5770 + $0xa8] sm:$0xff]
      %v5786 = vld [vmem:[%s5770 + $0xb0] sm:$0xff]
      %v5787 = vld [vmem:[%s5770 + $0xc0] sm:$0xff]
      %v5788 = vld [vmem:[%s5770 + $0xc8] sm:$0xff]
      %v5789 = vld [vmem:[%s5770 + $0xd8] sm:$0xff]
      %v5790 = vld [vmem:[%s5770 + $0xe0] sm:$0xff]
      %v5791 = vld [vmem:[%s5770 + $0xf0] sm:$0xff]
      %v5792 = vld [vmem:[%s5770 + $0xf8] sm:$0xff]
      %v5793 = vld [vmem:[%s5770 + $0x108] sm:$0xff]
      %v5794 = vld [vmem:[%s5770 + $0x110] sm:$0xff]
      %v5795 = vld [vmem:[%s5770 + $0x120] sm:$0xff]
      %v5796 = vld [vmem:[%s5770 + $0x128] sm:$0xff]
      %v5797 = vld [vmem:[%s5770 + $0x138] sm:$0xff]
      %v5798 = vld [vmem:[%s5770 + $0x140] sm:$0xff]
      %v5799 = vld [vmem:[%s5770 + $0x150] sm:$0xff]
      %v5800 = vld [vmem:[%s5770 + $0x158] sm:$0xff]
      %v5801 = vld [vmem:[%s5770 + $0x168] sm:$0xff]
      %v5802 = vld [vmem:[%s5770 + $0x170] sm:$0xff]
      %s5803 = scalar_lea.vmem %s3, 48
      %v5804 = vld [vmem:[%s5803] sm:$0xff]
      %v5806 = vsel %vm373, %v5771, 0
      %v5809 = vsel %vm373, %v5772, 0
      %v5812 = vsel %vm373, %v5773, 0
      %v5815 = vsel %vm373, %v5774, 0
      %v5818 = vsel %vm373, %v5775, 0
      %v5821 = vsel %vm373, %v5776, 0
      %v5824 = vsel %vm373, %v5777, 0
      %v5827 = vsel %vm373, %v5778, 0
      %v5830 = vsel %vm373, %v5779, 0
      %v5833 = vsel %vm373, %v5780, 0
      %v5836 = vsel %vm373, %v5781, 0
      %v5839 = vsel %vm373, %v5782, 0
      %v5842 = vsel %vm373, %v5783, 0
      %v5845 = vsel %vm373, %v5784, 0
      %v5848 = vsel %vm373, %v5785, 0
      %v5851 = vsel %vm373, %v5786, 0
      %v5854 = vsel %vm373, %v5787, 0
      %v5857 = vsel %vm373, %v5788, 0
      %v5860 = vsel %vm373, %v5789, 0
      %v5863 = vsel %vm373, %v5790, 0
      %v5866 = vsel %vm373, %v5791, 0
      %v5869 = vsel %vm373, %v5792, 0
      %v5872 = vsel %vm373, %v5793, 0
      %v5875 = vsel %vm373, %v5794, 0
      %v5878 = vsel %vm373, %v5795, 0
      %v5881 = vsel %vm373, %v5796, 0
      %v5884 = vsel %vm373, %v5797, 0
      %v5887 = vsel %vm373, %v5798, 0
      %v5890 = vsel %vm373, %v5799, 0
      %v5893 = vsel %vm373, %v5800, 0
      %v5896 = vsel %vm373, %v5801, 0
      %v5899 = vsel %vm373, %v5802, 0
      %5901 = vmatpush.msra.mxu0 0.0
      %5902 = vmatpush.msra.mxu0 0.0
      %5903 = vmatpush.msra.mxu0 0.0
      %5904 = vmatpush.msra.mxu0 0.0
      %5905 = vmatpush.msra.mxu0 0.0
      %5906 = vmatpush.msra.mxu0 0.0
      %5907 = vmatpush.msra.mxu0 0.0
      %5908 = vmatpush.msra.mxu0 0.0
      %5909 = vmatpush.msra.mxu0 0.0
      %5910 = vmatpush.msra.mxu0 0.0
      %5911 = vmatpush.msra.mxu0 0.0
      %5912 = vmatpush.msra.mxu0 0.0
      %5913 = vmatpush.msra.mxu0 0.0
      %5914 = vmatpush.msra.mxu0 0.0
      %5915 = vmatpush.msra.mxu0 0.0
      %5916 = vmatpush.msra.mxu0 %v5804
      %5917 = vmatmul.f32.gmra.mxu0 %v5806
      %v5918 = vpop.f32.mrf.mxu0
      %v5919 = vadd.f32 0.0, %v5918
      %5920 = vmatmul.f32.gmra.mxu0 %v5809
      %v5921 = vpop.f32.mrf.mxu0
      %v5922 = vadd.f32 0.0, %v5921
      %5923 = vmatmul.f32.gmra.mxu0 %v5812
      %v5924 = vpop.f32.mrf.mxu0
      %v5925 = vadd.f32 0.0, %v5924
      %5926 = vmatmul.f32.gmra.mxu0 %v5815
      %v5927 = vpop.f32.mrf.mxu0
      %v5928 = vadd.f32 0.0, %v5927
      %5929 = vmatmul.f32.gmra.mxu0 %v5818
      %v5930 = vpop.f32.mrf.mxu0
      %v5931 = vadd.f32 0.0, %v5930
      %5932 = vmatmul.f32.gmra.mxu0 %v5821
      %v5933 = vpop.f32.mrf.mxu0
      %v5934 = vadd.f32 0.0, %v5933
      %5935 = vmatmul.f32.gmra.mxu0 %v5824
      %v5936 = vpop.f32.mrf.mxu0
      %v5937 = vadd.f32 0.0, %v5936
      %5938 = vmatmul.f32.gmra.mxu0 %v5827
      %v5939 = vpop.f32.mrf.mxu0
      %v5940 = vadd.f32 0.0, %v5939
      %5941 = vmatmul.f32.gmra.mxu0 %v5830
      %v5942 = vpop.f32.mrf.mxu0
      %v5943 = vadd.f32 0.0, %v5942
      %5944 = vmatmul.f32.gmra.mxu0 %v5833
      %v5945 = vpop.f32.mrf.mxu0
      %v5946 = vadd.f32 0.0, %v5945
      %5947 = vmatmul.f32.gmra.mxu0 %v5836
      %v5948 = vpop.f32.mrf.mxu0
      %v5949 = vadd.f32 0.0, %v5948
      %5950 = vmatmul.f32.gmra.mxu0 %v5839
      %v5951 = vpop.f32.mrf.mxu0
      %v5952 = vadd.f32 0.0, %v5951
      %5953 = vmatmul.f32.gmra.mxu0 %v5842
      %v5954 = vpop.f32.mrf.mxu0
      %v5955 = vadd.f32 0.0, %v5954
      %5956 = vmatmul.f32.gmra.mxu0 %v5845
      %v5957 = vpop.f32.mrf.mxu0
      %v5958 = vadd.f32 0.0, %v5957
      %5959 = vmatmul.f32.gmra.mxu0 %v5848
      %v5960 = vpop.f32.mrf.mxu0
      %v5961 = vadd.f32 0.0, %v5960
      %5962 = vmatmul.f32.gmra.mxu0 %v5851
      %v5963 = vpop.f32.mrf.mxu0
      %v5964 = vadd.f32 0.0, %v5963
      %5965 = vmatmul.f32.gmra.mxu0 %v5854
      %v5966 = vpop.f32.mrf.mxu0
      %v5967 = vadd.f32 0.0, %v5966
      %5968 = vmatmul.f32.gmra.mxu0 %v5857
      %v5969 = vpop.f32.mrf.mxu0
      %v5970 = vadd.f32 0.0, %v5969
      %5971 = vmatmul.f32.gmra.mxu0 %v5860
      %v5972 = vpop.f32.mrf.mxu0
      %v5973 = vadd.f32 0.0, %v5972
      %5974 = vmatmul.f32.gmra.mxu0 %v5863
      %v5975 = vpop.f32.mrf.mxu0
      %v5976 = vadd.f32 0.0, %v5975
      %5977 = vmatmul.f32.gmra.mxu0 %v5866
      %v5978 = vpop.f32.mrf.mxu0
      %v5979 = vadd.f32 0.0, %v5978
      %5980 = vmatmul.f32.gmra.mxu0 %v5869
      %v5981 = vpop.f32.mrf.mxu0
      %v5982 = vadd.f32 0.0, %v5981
      %5983 = vmatmul.f32.gmra.mxu0 %v5872
      %v5984 = vpop.f32.mrf.mxu0
      %v5985 = vadd.f32 0.0, %v5984
      %5986 = vmatmul.f32.gmra.mxu0 %v5875
      %v5987 = vpop.f32.mrf.mxu0
      %v5988 = vadd.f32 0.0, %v5987
      %5989 = vmatmul.f32.gmra.mxu0 %v5878
      %v5990 = vpop.f32.mrf.mxu0
      %v5991 = vadd.f32 0.0, %v5990
      %5992 = vmatmul.f32.gmra.mxu0 %v5881
      %v5993 = vpop.f32.mrf.mxu0
      %v5994 = vadd.f32 0.0, %v5993
      %5995 = vmatmul.f32.gmra.mxu0 %v5884
      %v5996 = vpop.f32.mrf.mxu0
      %v5997 = vadd.f32 0.0, %v5996
      %5998 = vmatmul.f32.gmra.mxu0 %v5887
      %v5999 = vpop.f32.mrf.mxu0
      %v6000 = vadd.f32 0.0, %v5999
      %6001 = vmatmul.f32.gmra.mxu0 %v5890
      %v6002 = vpop.f32.mrf.mxu0
      %v6003 = vadd.f32 0.0, %v6002
      %6004 = vmatmul.f32.gmra.mxu0 %v5893
      %v6005 = vpop.f32.mrf.mxu0
      %v6006 = vadd.f32 0.0, %v6005
      %6007 = vmatmul.f32.gmra.mxu0 %v5896
      %v6008 = vpop.f32.mrf.mxu0
      %v6009 = vadd.f32 0.0, %v6008
      %6010 = vmatmul.f32.gmra.mxu0 %v5899
      %v6011 = vpop.f32.mrf.mxu0
      %v6012 = vadd.f32 0.0, %v6011
      %6013 = vdwg.mxu0
      %v6014 = vadd.f32 %v5738, %v5919
      %v6015 = vadd.f32 %v5739, %v5922
      %v6016 = vadd.f32 %v5740, %v5925
      %v6017 = vadd.f32 %v5741, %v5928
      %v6018 = vadd.f32 %v5742, %v5931
      %v6019 = vadd.f32 %v5743, %v5934
      %v6020 = vadd.f32 %v5744, %v5937
      %v6021 = vadd.f32 %v5745, %v5940
      %v6022 = vadd.f32 %v5746, %v5943
      %v6023 = vadd.f32 %v5747, %v5946
      %v6024 = vadd.f32 %v5748, %v5949
      %v6025 = vadd.f32 %v5749, %v5952
      %v6026 = vadd.f32 %v5750, %v5955
      %v6027 = vadd.f32 %v5751, %v5958
      %v6028 = vadd.f32 %v5752, %v5961
      %v6029 = vadd.f32 %v5753, %v5964
      %v6030 = vadd.f32 %v5754, %v5967
      %v6031 = vadd.f32 %v5755, %v5970
      %v6032 = vadd.f32 %v5756, %v5973
      %v6033 = vadd.f32 %v5757, %v5976
      %v6034 = vadd.f32 %v5758, %v5979
      %v6035 = vadd.f32 %v5759, %v5982
      %v6036 = vadd.f32 %v5760, %v5985
      %v6037 = vadd.f32 %v5761, %v5988
      %v6038 = vadd.f32 %v5762, %v5991
      %v6039 = vadd.f32 %v5763, %v5994
      %v6040 = vadd.f32 %v5764, %v5997
      %v6041 = vadd.f32 %v5765, %v6000
      %v6042 = vadd.f32 %v5766, %v6003
      %v6043 = vadd.f32 %v5767, %v6006
      %v6044 = vadd.f32 %v5768, %v6009
      %v6045 = vadd.f32 %v5769, %v6012
      %6046 = vst.msk [vmem:[#allocation4] sm:$0xff] %vm373, %v6014
      %6047 = vst.msk [vmem:[#allocation4 + $0x8] sm:$0xff] %vm373, %v6015
      %6048 = vst.msk [vmem:[#allocation4 + $0x10] sm:$0xff] %vm373, %v6016
      %6049 = vst.msk [vmem:[#allocation4 + $0x18] sm:$0xff] %vm373, %v6017
      %6050 = vst.msk [vmem:[#allocation4 + $0x20] sm:$0xff] %vm373, %v6018
      %6051 = vst.msk [vmem:[#allocation4 + $0x28] sm:$0xff] %vm373, %v6019
      %6052 = vst.msk [vmem:[#allocation4 + $0x30] sm:$0xff] %vm373, %v6020
      %6053 = vst.msk [vmem:[#allocation4 + $0x38] sm:$0xff] %vm373, %v6021
      %6054 = vst.msk [vmem:[#allocation4 + $0x40] sm:$0xff] %vm373, %v6022
      %6055 = vst.msk [vmem:[#allocation4 + $0x48] sm:$0xff] %vm373, %v6023
      %6056 = vst.msk [vmem:[#allocation4 + $0x50] sm:$0xff] %vm373, %v6024
      %6057 = vst.msk [vmem:[#allocation4 + $0x58] sm:$0xff] %vm373, %v6025
      %6058 = vst.msk [vmem:[#allocation4 + $0x60] sm:$0xff] %vm373, %v6026
      %6059 = vst.msk [vmem:[#allocation4 + $0x68] sm:$0xff] %vm373, %v6027
      %6060 = vst.msk [vmem:[#allocation4 + $0x70] sm:$0xff] %vm373, %v6028
      %6061 = vst.msk [vmem:[#allocation4 + $0x78] sm:$0xff] %vm373, %v6029
      %6062 = vst.msk [vmem:[#allocation4 + $0x80] sm:$0xff] %vm373, %v6030
      %6063 = vst.msk [vmem:[#allocation4 + $0x88] sm:$0xff] %vm373, %v6031
      %6064 = vst.msk [vmem:[#allocation4 + $0x90] sm:$0xff] %vm373, %v6032
      %6065 = vst.msk [vmem:[#allocation4 + $0x98] sm:$0xff] %vm373, %v6033
      %6066 = vst.msk [vmem:[#allocation4 + $0xa0] sm:$0xff] %vm373, %v6034
      %6067 = vst.msk [vmem:[#allocation4 + $0xa8] sm:$0xff] %vm373, %v6035
      %6068 = vst.msk [vmem:[#allocation4 + $0xb0] sm:$0xff] %vm373, %v6036
      %6069 = vst.msk [vmem:[#allocation4 + $0xb8] sm:$0xff] %vm373, %v6037
      %6070 = vst.msk [vmem:[#allocation4 + $0xc0] sm:$0xff] %vm373, %v6038
      %6071 = vst.msk [vmem:[#allocation4 + $0xc8] sm:$0xff] %vm373, %v6039
      %6072 = vst.msk [vmem:[#allocation4 + $0xd0] sm:$0xff] %vm373, %v6040
      %6073 = vst.msk [vmem:[#allocation4 + $0xd8] sm:$0xff] %vm373, %v6041
      %6074 = vst.msk [vmem:[#allocation4 + $0xe0] sm:$0xff] %vm373, %v6042
      %6075 = vst.msk [vmem:[#allocation4 + $0xe8] sm:$0xff] %vm373, %v6043
      %6076 = vst.msk [vmem:[#allocation4 + $0xf0] sm:$0xff] %vm373, %v6044
      %6077 = vst.msk [vmem:[#allocation4 + $0xf8] sm:$0xff] %vm373, %v6045
      %v6078 = vld [vmem:[#allocation4] sm:$0xff]
      %v6079 = vld [vmem:[#allocation4 + $0x8] sm:$0xff]
      %v6080 = vld [vmem:[#allocation4 + $0x10] sm:$0xff]
      %v6081 = vld [vmem:[#allocation4 + $0x18] sm:$0xff]
      %v6082 = vld [vmem:[#allocation4 + $0x20] sm:$0xff]
      %v6083 = vld [vmem:[#allocation4 + $0x28] sm:$0xff]
      %v6084 = vld [vmem:[#allocation4 + $0x30] sm:$0xff]
      %v6085 = vld [vmem:[#allocation4 + $0x38] sm:$0xff]
      %v6086 = vld [vmem:[#allocation4 + $0x40] sm:$0xff]
      %v6087 = vld [vmem:[#allocation4 + $0x48] sm:$0xff]
      %v6088 = vld [vmem:[#allocation4 + $0x50] sm:$0xff]
      %v6089 = vld [vmem:[#allocation4 + $0x58] sm:$0xff]
      %v6090 = vld [vmem:[#allocation4 + $0x60] sm:$0xff]
      %v6091 = vld [vmem:[#allocation4 + $0x68] sm:$0xff]
      %v6092 = vld [vmem:[#allocation4 + $0x70] sm:$0xff]
      %v6093 = vld [vmem:[#allocation4 + $0x78] sm:$0xff]
      %v6094 = vld [vmem:[#allocation4 + $0x80] sm:$0xff]
      %v6095 = vld [vmem:[#allocation4 + $0x88] sm:$0xff]
      %v6096 = vld [vmem:[#allocation4 + $0x90] sm:$0xff]
      %v6097 = vld [vmem:[#allocation4 + $0x98] sm:$0xff]
      %v6098 = vld [vmem:[#allocation4 + $0xa0] sm:$0xff]
      %v6099 = vld [vmem:[#allocation4 + $0xa8] sm:$0xff]
      %v6100 = vld [vmem:[#allocation4 + $0xb0] sm:$0xff]
      %v6101 = vld [vmem:[#allocation4 + $0xb8] sm:$0xff]
      %v6102 = vld [vmem:[#allocation4 + $0xc0] sm:$0xff]
      %v6103 = vld [vmem:[#allocation4 + $0xc8] sm:$0xff]
      %v6104 = vld [vmem:[#allocation4 + $0xd0] sm:$0xff]
      %v6105 = vld [vmem:[#allocation4 + $0xd8] sm:$0xff]
      %v6106 = vld [vmem:[#allocation4 + $0xe0] sm:$0xff]
      %v6107 = vld [vmem:[#allocation4 + $0xe8] sm:$0xff]
      %v6108 = vld [vmem:[#allocation4 + $0xf0] sm:$0xff]
      %v6109 = vld [vmem:[#allocation4 + $0xf8] sm:$0xff]
      %v6110 = vld [vmem:[%s5770 + $0x1] sm:$0xff]
      %v6111 = vld [vmem:[%s5770 + $0x9] sm:$0xff]
      %v6112 = vld [vmem:[%s5770 + $0x19] sm:$0xff]
      %v6113 = vld [vmem:[%s5770 + $0x21] sm:$0xff]
      %v6114 = vld [vmem:[%s5770 + $0x31] sm:$0xff]
      %v6115 = vld [vmem:[%s5770 + $0x39] sm:$0xff]
      %v6116 = vld [vmem:[%s5770 + $0x49] sm:$0xff]
      %v6117 = vld [vmem:[%s5770 + $0x51] sm:$0xff]
      %v6118 = vld [vmem:[%s5770 + $0x61] sm:$0xff]
      %v6119 = vld [vmem:[%s5770 + $0x69] sm:$0xff]
      %v6120 = vld [vmem:[%s5770 + $0x79] sm:$0xff]
      %v6121 = vld [vmem:[%s5770 + $0x81] sm:$0xff]
      %v6122 = vld [vmem:[%s5770 + $0x91] sm:$0xff]
      %v6123 = vld [vmem:[%s5770 + $0x99] sm:$0xff]
      %v6124 = vld [vmem:[%s5770 + $0xa9] sm:$0xff]
      %v6125 = vld [vmem:[%s5770 + $0xb1] sm:$0xff]
      %v6126 = vld [vmem:[%s5770 + $0xc1] sm:$0xff]
      %v6127 = vld [vmem:[%s5770 + $0xc9] sm:$0xff]
      %v6128 = vld [vmem:[%s5770 + $0xd9] sm:$0xff]
      %v6129 = vld [vmem:[%s5770 + $0xe1] sm:$0xff]
      %v6130 = vld [vmem:[%s5770 + $0xf1] sm:$0xff]
      %v6131 = vld [vmem:[%s5770 + $0xf9] sm:$0xff]
      %v6132 = vld [vmem:[%s5770 + $0x109] sm:$0xff]
      %v6133 = vld [vmem:[%s5770 + $0x111] sm:$0xff]
      %v6134 = vld [vmem:[%s5770 + $0x121] sm:$0xff]
      %v6135 = vld [vmem:[%s5770 + $0x129] sm:$0xff]
      %v6136 = vld [vmem:[%s5770 + $0x139] sm:$0xff]
      %v6137 = vld [vmem:[%s5770 + $0x141] sm:$0xff]
      %v6138 = vld [vmem:[%s5770 + $0x151] sm:$0xff]
      %v6139 = vld [vmem:[%s5770 + $0x159] sm:$0xff]
      %v6140 = vld [vmem:[%s5770 + $0x169] sm:$0xff]
      %v6141 = vld [vmem:[%s5770 + $0x171] sm:$0xff]
      %s6142 = scalar_lea.vmem %s3, 56
      %v6143 = vld [vmem:[%s6142] sm:$0xff]
      %v6145 = vsel %vm373, %v6110, 0
      %v6148 = vsel %vm373, %v6111, 0
      %v6151 = vsel %vm373, %v6112, 0
      %v6154 = vsel %vm373, %v6113, 0
      %v6157 = vsel %vm373, %v6114, 0
      %v6160 = vsel %vm373, %v6115, 0
      %v6163 = vsel %vm373, %v6116, 0
      %v6166 = vsel %vm373, %v6117, 0
      %v6169 = vsel %vm373, %v6118, 0
      %v6172 = vsel %vm373, %v6119, 0
      %v6175 = vsel %vm373, %v6120, 0
      %v6178 = vsel %vm373, %v6121, 0
      %v6181 = vsel %vm373, %v6122, 0
      %v6184 = vsel %vm373, %v6123, 0
      %v6187 = vsel %vm373, %v6124, 0
      %v6190 = vsel %vm373, %v6125, 0
      %v6193 = vsel %vm373, %v6126, 0
      %v6196 = vsel %vm373, %v6127, 0
      %v6199 = vsel %vm373, %v6128, 0
      %v6202 = vsel %vm373, %v6129, 0
      %v6205 = vsel %vm373, %v6130, 0
      %v6208 = vsel %vm373, %v6131, 0
      %v6211 = vsel %vm373, %v6132, 0
      %v6214 = vsel %vm373, %v6133, 0
      %v6217 = vsel %vm373, %v6134, 0
      %v6220 = vsel %vm373, %v6135, 0
      %v6223 = vsel %vm373, %v6136, 0
      %v6226 = vsel %vm373, %v6137, 0
      %v6229 = vsel %vm373, %v6138, 0
      %v6232 = vsel %vm373, %v6139, 0
      %v6235 = vsel %vm373, %v6140, 0
      %v6238 = vsel %vm373, %v6141, 0
      %6240 = vmatpush.msra.mxu0 0.0
      %6241 = vmatpush.msra.mxu0 0.0
      %6242 = vmatpush.msra.mxu0 0.0
      %6243 = vmatpush.msra.mxu0 0.0
      %6244 = vmatpush.msra.mxu0 0.0
      %6245 = vmatpush.msra.mxu0 0.0
      %6246 = vmatpush.msra.mxu0 0.0
      %6247 = vmatpush.msra.mxu0 0.0
      %6248 = vmatpush.msra.mxu0 0.0
      %6249 = vmatpush.msra.mxu0 0.0
      %6250 = vmatpush.msra.mxu0 0.0
      %6251 = vmatpush.msra.mxu0 0.0
      %6252 = vmatpush.msra.mxu0 0.0
      %6253 = vmatpush.msra.mxu0 0.0
      %6254 = vmatpush.msra.mxu0 0.0
      %6255 = vmatpush.msra.mxu0 %v6143
      %6256 = vmatmul.f32.gmra.mxu0 %v6145
      %v6257 = vpop.f32.mrf.mxu0
      %v6258 = vadd.f32 0.0, %v6257
      %6259 = vmatmul.f32.gmra.mxu0 %v6148
      %v6260 = vpop.f32.mrf.mxu0
      %v6261 = vadd.f32 0.0, %v6260
      %6262 = vmatmul.f32.gmra.mxu0 %v6151
      %v6263 = vpop.f32.mrf.mxu0
      %v6264 = vadd.f32 0.0, %v6263
      %6265 = vmatmul.f32.gmra.mxu0 %v6154
      %v6266 = vpop.f32.mrf.mxu0
      %v6267 = vadd.f32 0.0, %v6266
      %6268 = vmatmul.f32.gmra.mxu0 %v6157
      %v6269 = vpop.f32.mrf.mxu0
      %v6270 = vadd.f32 0.0, %v6269
      %6271 = vmatmul.f32.gmra.mxu0 %v6160
      %v6272 = vpop.f32.mrf.mxu0
      %v6273 = vadd.f32 0.0, %v6272
      %6274 = vmatmul.f32.gmra.mxu0 %v6163
      %v6275 = vpop.f32.mrf.mxu0
      %v6276 = vadd.f32 0.0, %v6275
      %6277 = vmatmul.f32.gmra.mxu0 %v6166
      %v6278 = vpop.f32.mrf.mxu0
      %v6279 = vadd.f32 0.0, %v6278
      %6280 = vmatmul.f32.gmra.mxu0 %v6169
      %v6281 = vpop.f32.mrf.mxu0
      %v6282 = vadd.f32 0.0, %v6281
      %6283 = vmatmul.f32.gmra.mxu0 %v6172
      %v6284 = vpop.f32.mrf.mxu0
      %v6285 = vadd.f32 0.0, %v6284
      %6286 = vmatmul.f32.gmra.mxu0 %v6175
      %v6287 = vpop.f32.mrf.mxu0
      %v6288 = vadd.f32 0.0, %v6287
      %6289 = vmatmul.f32.gmra.mxu0 %v6178
      %v6290 = vpop.f32.mrf.mxu0
      %v6291 = vadd.f32 0.0, %v6290
      %6292 = vmatmul.f32.gmra.mxu0 %v6181
      %v6293 = vpop.f32.mrf.mxu0
      %v6294 = vadd.f32 0.0, %v6293
      %6295 = vmatmul.f32.gmra.mxu0 %v6184
      %v6296 = vpop.f32.mrf.mxu0
      %v6297 = vadd.f32 0.0, %v6296
      %6298 = vmatmul.f32.gmra.mxu0 %v6187
      %v6299 = vpop.f32.mrf.mxu0
      %v6300 = vadd.f32 0.0, %v6299
      %6301 = vmatmul.f32.gmra.mxu0 %v6190
      %v6302 = vpop.f32.mrf.mxu0
      %v6303 = vadd.f32 0.0, %v6302
      %6304 = vmatmul.f32.gmra.mxu0 %v6193
      %v6305 = vpop.f32.mrf.mxu0
      %v6306 = vadd.f32 0.0, %v6305
      %6307 = vmatmul.f32.gmra.mxu0 %v6196
      %v6308 = vpop.f32.mrf.mxu0
      %v6309 = vadd.f32 0.0, %v6308
      %6310 = vmatmul.f32.gmra.mxu0 %v6199
      %v6311 = vpop.f32.mrf.mxu0
      %v6312 = vadd.f32 0.0, %v6311
      %6313 = vmatmul.f32.gmra.mxu0 %v6202
      %v6314 = vpop.f32.mrf.mxu0
      %v6315 = vadd.f32 0.0, %v6314
      %6316 = vmatmul.f32.gmra.mxu0 %v6205
      %v6317 = vpop.f32.mrf.mxu0
      %v6318 = vadd.f32 0.0, %v6317
      %6319 = vmatmul.f32.gmra.mxu0 %v6208
      %v6320 = vpop.f32.mrf.mxu0
      %v6321 = vadd.f32 0.0, %v6320
      %6322 = vmatmul.f32.gmra.mxu0 %v6211
      %v6323 = vpop.f32.mrf.mxu0
      %v6324 = vadd.f32 0.0, %v6323
      %6325 = vmatmul.f32.gmra.mxu0 %v6214
      %v6326 = vpop.f32.mrf.mxu0
      %v6327 = vadd.f32 0.0, %v6326
      %6328 = vmatmul.f32.gmra.mxu0 %v6217
      %v6329 = vpop.f32.mrf.mxu0
      %v6330 = vadd.f32 0.0, %v6329
      %6331 = vmatmul.f32.gmra.mxu0 %v6220
      %v6332 = vpop.f32.mrf.mxu0
      %v6333 = vadd.f32 0.0, %v6332
      %6334 = vmatmul.f32.gmra.mxu0 %v6223
      %v6335 = vpop.f32.mrf.mxu0
      %v6336 = vadd.f32 0.0, %v6335
      %6337 = vmatmul.f32.gmra.mxu0 %v6226
      %v6338 = vpop.f32.mrf.mxu0
      %v6339 = vadd.f32 0.0, %v6338
      %6340 = vmatmul.f32.gmra.mxu0 %v6229
      %v6341 = vpop.f32.mrf.mxu0
      %v6342 = vadd.f32 0.0, %v6341
      %6343 = vmatmul.f32.gmra.mxu0 %v6232
      %v6344 = vpop.f32.mrf.mxu0
      %v6345 = vadd.f32 0.0, %v6344
      %6346 = vmatmul.f32.gmra.mxu0 %v6235
      %v6347 = vpop.f32.mrf.mxu0
      %v6348 = vadd.f32 0.0, %v6347
      %6349 = vmatmul.f32.gmra.mxu0 %v6238
      %v6350 = vpop.f32.mrf.mxu0
      %v6351 = vadd.f32 0.0, %v6350
      %6352 = vdwg.mxu0
      %v6353 = vadd.f32 %v6078, %v6258
      %v6354 = vadd.f32 %v6079, %v6261
      %v6355 = vadd.f32 %v6080, %v6264
      %v6356 = vadd.f32 %v6081, %v6267
      %v6357 = vadd.f32 %v6082, %v6270
      %v6358 = vadd.f32 %v6083, %v6273
      %v6359 = vadd.f32 %v6084, %v6276
      %v6360 = vadd.f32 %v6085, %v6279
      %v6361 = vadd.f32 %v6086, %v6282
      %v6362 = vadd.f32 %v6087, %v6285
      %v6363 = vadd.f32 %v6088, %v6288
      %v6364 = vadd.f32 %v6089, %v6291
      %v6365 = vadd.f32 %v6090, %v6294
      %v6366 = vadd.f32 %v6091, %v6297
      %v6367 = vadd.f32 %v6092, %v6300
      %v6368 = vadd.f32 %v6093, %v6303
      %v6369 = vadd.f32 %v6094, %v6306
      %v6370 = vadd.f32 %v6095, %v6309
      %v6371 = vadd.f32 %v6096, %v6312
      %v6372 = vadd.f32 %v6097, %v6315
      %v6373 = vadd.f32 %v6098, %v6318
      %v6374 = vadd.f32 %v6099, %v6321
      %v6375 = vadd.f32 %v6100, %v6324
      %v6376 = vadd.f32 %v6101, %v6327
      %v6377 = vadd.f32 %v6102, %v6330
      %v6378 = vadd.f32 %v6103, %v6333
      %v6379 = vadd.f32 %v6104, %v6336
      %v6380 = vadd.f32 %v6105, %v6339
      %v6381 = vadd.f32 %v6106, %v6342
      %v6382 = vadd.f32 %v6107, %v6345
      %v6383 = vadd.f32 %v6108, %v6348
      %v6384 = vadd.f32 %v6109, %v6351
      %6385 = vst.msk [vmem:[#allocation4] sm:$0xff] %vm373, %v6353
      %6386 = vst.msk [vmem:[#allocation4 + $0x8] sm:$0xff] %vm373, %v6354
      %6387 = vst.msk [vmem:[#allocation4 + $0x10] sm:$0xff] %vm373, %v6355
      %6388 = vst.msk [vmem:[#allocation4 + $0x18] sm:$0xff] %vm373, %v6356
      %6389 = vst.msk [vmem:[#allocation4 + $0x20] sm:$0xff] %vm373, %v6357
      %6390 = vst.msk [vmem:[#allocation4 + $0x28] sm:$0xff] %vm373, %v6358
      %6391 = vst.msk [vmem:[#allocation4 + $0x30] sm:$0xff] %vm373, %v6359
      %6392 = vst.msk [vmem:[#allocation4 + $0x38] sm:$0xff] %vm373, %v6360
      %6393 = vst.msk [vmem:[#allocation4 + $0x40] sm:$0xff] %vm373, %v6361
      %6394 = vst.msk [vmem:[#allocation4 + $0x48] sm:$0xff] %vm373, %v6362
      %6395 = vst.msk [vmem:[#allocation4 + $0x50] sm:$0xff] %vm373, %v6363
      %6396 = vst.msk [vmem:[#allocation4 + $0x58] sm:$0xff] %vm373, %v6364
      %6397 = vst.msk [vmem:[#allocation4 + $0x60] sm:$0xff] %vm373, %v6365
      %6398 = vst.msk [vmem:[#allocation4 + $0x68] sm:$0xff] %vm373, %v6366
      %6399 = vst.msk [vmem:[#allocation4 + $0x70] sm:$0xff] %vm373, %v6367
      %6400 = vst.msk [vmem:[#allocation4 + $0x78] sm:$0xff] %vm373, %v6368
      %6401 = vst.msk [vmem:[#allocation4 + $0x80] sm:$0xff] %vm373, %v6369
      %6402 = vst.msk [vmem:[#allocation4 + $0x88] sm:$0xff] %vm373, %v6370
      %6403 = vst.msk [vmem:[#allocation4 + $0x90] sm:$0xff] %vm373, %v6371
      %6404 = vst.msk [vmem:[#allocation4 + $0x98] sm:$0xff] %vm373, %v6372
      %6405 = vst.msk [vmem:[#allocation4 + $0xa0] sm:$0xff] %vm373, %v6373
      %6406 = vst.msk [vmem:[#allocation4 + $0xa8] sm:$0xff] %vm373, %v6374
      %6407 = vst.msk [vmem:[#allocation4 + $0xb0] sm:$0xff] %vm373, %v6375
      %6408 = vst.msk [vmem:[#allocation4 + $0xb8] sm:$0xff] %vm373, %v6376
      %6409 = vst.msk [vmem:[#allocation4 + $0xc0] sm:$0xff] %vm373, %v6377
      %6410 = vst.msk [vmem:[#allocation4 + $0xc8] sm:$0xff] %vm373, %v6378
      %6411 = vst.msk [vmem:[#allocation4 + $0xd0] sm:$0xff] %vm373, %v6379
      %6412 = vst.msk [vmem:[#allocation4 + $0xd8] sm:$0xff] %vm373, %v6380
      %6413 = vst.msk [vmem:[#allocation4 + $0xe0] sm:$0xff] %vm373, %v6381
      %6414 = vst.msk [vmem:[#allocation4 + $0xe8] sm:$0xff] %vm373, %v6382
      %6415 = vst.msk [vmem:[#allocation4 + $0xf0] sm:$0xff] %vm373, %v6383
      %6416 = vst.msk [vmem:[#allocation4 + $0xf8] sm:$0xff] %vm373, %v6384
      %v6417 = vld [vmem:[#allocation4] sm:$0xff]
      %v6418 = vld [vmem:[#allocation4 + $0x8] sm:$0xff]
      %v6419 = vld [vmem:[#allocation4 + $0x10] sm:$0xff]
      %v6420 = vld [vmem:[#allocation4 + $0x18] sm:$0xff]
      %v6421 = vld [vmem:[#allocation4 + $0x20] sm:$0xff]
      %v6422 = vld [vmem:[#allocation4 + $0x28] sm:$0xff]
      %v6423 = vld [vmem:[#allocation4 + $0x30] sm:$0xff]
      %v6424 = vld [vmem:[#allocation4 + $0x38] sm:$0xff]
      %v6425 = vld [vmem:[#allocation4 + $0x40] sm:$0xff]
      %v6426 = vld [vmem:[#allocation4 + $0x48] sm:$0xff]
      %v6427 = vld [vmem:[#allocation4 + $0x50] sm:$0xff]
      %v6428 = vld [vmem:[#allocation4 + $0x58] sm:$0xff]
      %v6429 = vld [vmem:[#allocation4 + $0x60] sm:$0xff]
      %v6430 = vld [vmem:[#allocation4 + $0x68] sm:$0xff]
      %v6431 = vld [vmem:[#allocation4 + $0x70] sm:$0xff]
      %v6432 = vld [vmem:[#allocation4 + $0x78] sm:$0xff]
      %v6433 = vld [vmem:[#allocation4 + $0x80] sm:$0xff]
      %v6434 = vld [vmem:[#allocation4 + $0x88] sm:$0xff]
      %v6435 = vld [vmem:[#allocation4 + $0x90] sm:$0xff]
      %v6436 = vld [vmem:[#allocation4 + $0x98] sm:$0xff]
      %v6437 = vld [vmem:[#allocation4 + $0xa0] sm:$0xff]
      %v6438 = vld [vmem:[#allocation4 + $0xa8] sm:$0xff]
      %v6439 = vld [vmem:[#allocation4 + $0xb0] sm:$0xff]
      %v6440 = vld [vmem:[#allocation4 + $0xb8] sm:$0xff]
      %v6441 = vld [vmem:[#allocation4 + $0xc0] sm:$0xff]
      %v6442 = vld [vmem:[#allocation4 + $0xc8] sm:$0xff]
      %v6443 = vld [vmem:[#allocation4 + $0xd0] sm:$0xff]
      %v6444 = vld [vmem:[#allocation4 + $0xd8] sm:$0xff]
      %v6445 = vld [vmem:[#allocation4 + $0xe0] sm:$0xff]
      %v6446 = vld [vmem:[#allocation4 + $0xe8] sm:$0xff]
      %v6447 = vld [vmem:[#allocation4 + $0xf0] sm:$0xff]
      %v6448 = vld [vmem:[#allocation4 + $0xf8] sm:$0xff]
      %v6449 = vld [vmem:[%s5770 + $0x2] sm:$0xff]
      %v6450 = vld [vmem:[%s5770 + $0xa] sm:$0xff]
      %v6451 = vld [vmem:[%s5770 + $0x1a] sm:$0xff]
      %v6452 = vld [vmem:[%s5770 + $0x22] sm:$0xff]
      %v6453 = vld [vmem:[%s5770 + $0x32] sm:$0xff]
      %v6454 = vld [vmem:[%s5770 + $0x3a] sm:$0xff]
      %v6455 = vld [vmem:[%s5770 + $0x4a] sm:$0xff]
      %v6456 = vld [vmem:[%s5770 + $0x52] sm:$0xff]
      %v6457 = vld [vmem:[%s5770 + $0x62] sm:$0xff]
      %v6458 = vld [vmem:[%s5770 + $0x6a] sm:$0xff]
      %v6459 = vld [vmem:[%s5770 + $0x7a] sm:$0xff]
      %v6460 = vld [vmem:[%s5770 + $0x82] sm:$0xff]
      %v6461 = vld [vmem:[%s5770 + $0x92] sm:$0xff]
      %v6462 = vld [vmem:[%s5770 + $0x9a] sm:$0xff]
      %v6463 = vld [vmem:[%s5770 + $0xaa] sm:$0xff]
      %v6464 = vld [vmem:[%s5770 + $0xb2] sm:$0xff]
      %v6465 = vld [vmem:[%s5770 + $0xc2] sm:$0xff]
      %v6466 = vld [vmem:[%s5770 + $0xca] sm:$0xff]
      %v6467 = vld [vmem:[%s5770 + $0xda] sm:$0xff]
      %v6468 = vld [vmem:[%s5770 + $0xe2] sm:$0xff]
      %v6469 = vld [vmem:[%s5770 + $0xf2] sm:$0xff]
      %v6470 = vld [vmem:[%s5770 + $0xfa] sm:$0xff]
      %v6471 = vld [vmem:[%s5770 + $0x10a] sm:$0xff]
      %v6472 = vld [vmem:[%s5770 + $0x112] sm:$0xff]
      %v6473 = vld [vmem:[%s5770 + $0x122] sm:$0xff]
      %v6474 = vld [vmem:[%s5770 + $0x12a] sm:$0xff]
      %v6475 = vld [vmem:[%s5770 + $0x13a] sm:$0xff]
      %v6476 = vld [vmem:[%s5770 + $0x142] sm:$0xff]
      %v6477 = vld [vmem:[%s5770 + $0x152] sm:$0xff]
      %v6478 = vld [vmem:[%s5770 + $0x15a] sm:$0xff]
      %v6479 = vld [vmem:[%s5770 + $0x16a] sm:$0xff]
      %v6480 = vld [vmem:[%s5770 + $0x172] sm:$0xff]
      %s6481 = scalar_lea.vmem %s3, 64
      %v6482 = vld [vmem:[%s6481] sm:$0xff]
      %v6484 = vsel %vm373, %v6449, 0
      %v6487 = vsel %vm373, %v6450, 0
      %v6490 = vsel %vm373, %v6451, 0
      %v6493 = vsel %vm373, %v6452, 0
      %v6496 = vsel %vm373, %v6453, 0
      %v6499 = vsel %vm373, %v6454, 0
      %v6502 = vsel %vm373, %v6455, 0
      %v6505 = vsel %vm373, %v6456, 0
      %v6508 = vsel %vm373, %v6457, 0
      %v6511 = vsel %vm373, %v6458, 0
      %v6514 = vsel %vm373, %v6459, 0
      %v6517 = vsel %vm373, %v6460, 0
      %v6520 = vsel %vm373, %v6461, 0
      %v6523 = vsel %vm373, %v6462, 0
      %v6526 = vsel %vm373, %v6463, 0
      %v6529 = vsel %vm373, %v6464, 0
      %v6532 = vsel %vm373, %v6465, 0
      %v6535 = vsel %vm373, %v6466, 0
      %v6538 = vsel %vm373, %v6467, 0
      %v6541 = vsel %vm373, %v6468, 0
      %v6544 = vsel %vm373, %v6469, 0
      %v6547 = vsel %vm373, %v6470, 0
      %v6550 = vsel %vm373, %v6471, 0
      %v6553 = vsel %vm373, %v6472, 0
      %v6556 = vsel %vm373, %v6473, 0
      %v6559 = vsel %vm373, %v6474, 0
      %v6562 = vsel %vm373, %v6475, 0
      %v6565 = vsel %vm373, %v6476, 0
      %v6568 = vsel %vm373, %v6477, 0
      %v6571 = vsel %vm373, %v6478, 0
      %v6574 = vsel %vm373, %v6479, 0
      %v6577 = vsel %vm373, %v6480, 0
      %6579 = vmatpush.msra.mxu0 0.0
      %6580 = vmatpush.msra.mxu0 0.0
      %6581 = vmatpush.msra.mxu0 0.0
      %6582 = vmatpush.msra.mxu0 0.0
      %6583 = vmatpush.msra.mxu0 0.0
      %6584 = vmatpush.msra.mxu0 0.0
      %6585 = vmatpush.msra.mxu0 0.0
      %6586 = vmatpush.msra.mxu0 0.0
      %6587 = vmatpush.msra.mxu0 0.0
      %6588 = vmatpush.msra.mxu0 0.0
      %6589 = vmatpush.msra.mxu0 0.0
      %6590 = vmatpush.msra.mxu0 0.0
      %6591 = vmatpush.msra.mxu0 0.0
      %6592 = vmatpush.msra.mxu0 0.0
      %6593 = vmatpush.msra.mxu0 0.0
      %6594 = vmatpush.msra.mxu0 %v6482
      %6595 = vmatmul.f32.gmra.mxu0 %v6484
      %v6596 = vpop.f32.mrf.mxu0
      %v6597 = vadd.f32 0.0, %v6596
      %6598 = vmatmul.f32.gmra.mxu0 %v6487
      %v6599 = vpop.f32.mrf.mxu0
      %v6600 = vadd.f32 0.0, %v6599
      %6601 = vmatmul.f32.gmra.mxu0 %v6490
      %v6602 = vpop.f32.mrf.mxu0
      %v6603 = vadd.f32 0.0, %v6602
      %6604 = vmatmul.f32.gmra.mxu0 %v6493
      %v6605 = vpop.f32.mrf.mxu0
      %v6606 = vadd.f32 0.0, %v6605
      %6607 = vmatmul.f32.gmra.mxu0 %v6496
      %v6608 = vpop.f32.mrf.mxu0
      %v6609 = vadd.f32 0.0, %v6608
      %6610 = vmatmul.f32.gmra.mxu0 %v6499
      %v6611 = vpop.f32.mrf.mxu0
      %v6612 = vadd.f32 0.0, %v6611
      %6613 = vmatmul.f32.gmra.mxu0 %v6502
      %v6614 = vpop.f32.mrf.mxu0
      %v6615 = vadd.f32 0.0, %v6614
      %6616 = vmatmul.f32.gmra.mxu0 %v6505
      %v6617 = vpop.f32.mrf.mxu0
      %v6618 = vadd.f32 0.0, %v6617
      %6619 = vmatmul.f32.gmra.mxu0 %v6508
      %v6620 = vpop.f32.mrf.mxu0
      %v6621 = vadd.f32 0.0, %v6620
      %6622 = vmatmul.f32.gmra.mxu0 %v6511
      %v6623 = vpop.f32.mrf.mxu0
      %v6624 = vadd.f32 0.0, %v6623
      %6625 = vmatmul.f32.gmra.mxu0 %v6514
      %v6626 = vpop.f32.mrf.mxu0
      %v6627 = vadd.f32 0.0, %v6626
      %6628 = vmatmul.f32.gmra.mxu0 %v6517
      %v6629 = vpop.f32.mrf.mxu0
      %v6630 = vadd.f32 0.0, %v6629
      %6631 = vmatmul.f32.gmra.mxu0 %v6520
      %v6632 = vpop.f32.mrf.mxu0
      %v6633 = vadd.f32 0.0, %v6632
      %6634 = vmatmul.f32.gmra.mxu0 %v6523
      %v6635 = vpop.f32.mrf.mxu0
      %v6636 = vadd.f32 0.0, %v6635
      %6637 = vmatmul.f32.gmra.mxu0 %v6526
      %v6638 = vpop.f32.mrf.mxu0
      %v6639 = vadd.f32 0.0, %v6638
      %6640 = vmatmul.f32.gmra.mxu0 %v6529
      %v6641 = vpop.f32.mrf.mxu0
      %v6642 = vadd.f32 0.0, %v6641
      %6643 = vmatmul.f32.gmra.mxu0 %v6532
      %v6644 = vpop.f32.mrf.mxu0
      %v6645 = vadd.f32 0.0, %v6644
      %6646 = vmatmul.f32.gmra.mxu0 %v6535
      %v6647 = vpop.f32.mrf.mxu0
      %v6648 = vadd.f32 0.0, %v6647
      %6649 = vmatmul.f32.gmra.mxu0 %v6538
      %v6650 = vpop.f32.mrf.mxu0
      %v6651 = vadd.f32 0.0, %v6650
      %6652 = vmatmul.f32.gmra.mxu0 %v6541
      %v6653 = vpop.f32.mrf.mxu0
      %v6654 = vadd.f32 0.0, %v6653
      %6655 = vmatmul.f32.gmra.mxu0 %v6544
      %v6656 = vpop.f32.mrf.mxu0
      %v6657 = vadd.f32 0.0, %v6656
      %6658 = vmatmul.f32.gmra.mxu0 %v6547
      %v6659 = vpop.f32.mrf.mxu0
      %v6660 = vadd.f32 0.0, %v6659
      %6661 = vmatmul.f32.gmra.mxu0 %v6550
      %v6662 = vpop.f32.mrf.mxu0
      %v6663 = vadd.f32 0.0, %v6662
      %6664 = vmatmul.f32.gmra.mxu0 %v6553
      %v6665 = vpop.f32.mrf.mxu0
      %v6666 = vadd.f32 0.0, %v6665
      %6667 = vmatmul.f32.gmra.mxu0 %v6556
      %v6668 = vpop.f32.mrf.mxu0
      %v6669 = vadd.f32 0.0, %v6668
      %6670 = vmatmul.f32.gmra.mxu0 %v6559
      %v6671 = vpop.f32.mrf.mxu0
      %v6672 = vadd.f32 0.0, %v6671
      %6673 = vmatmul.f32.gmra.mxu0 %v6562
      %v6674 = vpop.f32.mrf.mxu0
      %v6675 = vadd.f32 0.0, %v6674
      %6676 = vmatmul.f32.gmra.mxu0 %v6565
      %v6677 = vpop.f32.mrf.mxu0
      %v6678 = vadd.f32 0.0, %v6677
      %6679 = vmatmul.f32.gmra.mxu0 %v6568
      %v6680 = vpop.f32.mrf.mxu0
      %v6681 = vadd.f32 0.0, %v6680
      %6682 = vmatmul.f32.gmra.mxu0 %v6571
      %v6683 = vpop.f32.mrf.mxu0
      %v6684 = vadd.f32 0.0, %v6683
      %6685 = vmatmul.f32.gmra.mxu0 %v6574
      %v6686 = vpop.f32.mrf.mxu0
      %v6687 = vadd.f32 0.0, %v6686
      %6688 = vmatmul.f32.gmra.mxu0 %v6577
      %v6689 = vpop.f32.mrf.mxu0
      %v6690 = vadd.f32 0.0, %v6689
      %6691 = vdwg.mxu0
      %v6692 = vadd.f32 %v6417, %v6597
      %v6693 = vadd.f32 %v6418, %v6600
      %v6694 = vadd.f32 %v6419, %v6603
      %v6695 = vadd.f32 %v6420, %v6606
      %v6696 = vadd.f32 %v6421, %v6609
      %v6697 = vadd.f32 %v6422, %v6612
      %v6698 = vadd.f32 %v6423, %v6615
      %v6699 = vadd.f32 %v6424, %v6618
      %v6700 = vadd.f32 %v6425, %v6621
      %v6701 = vadd.f32 %v6426, %v6624
      %v6702 = vadd.f32 %v6427, %v6627
      %v6703 = vadd.f32 %v6428, %v6630
      %v6704 = vadd.f32 %v6429, %v6633
      %v6705 = vadd.f32 %v6430, %v6636
      %v6706 = vadd.f32 %v6431, %v6639
      %v6707 = vadd.f32 %v6432, %v6642
      %v6708 = vadd.f32 %v6433, %v6645
      %v6709 = vadd.f32 %v6434, %v6648
      %v6710 = vadd.f32 %v6435, %v6651
      %v6711 = vadd.f32 %v6436, %v6654
      %v6712 = vadd.f32 %v6437, %v6657
      %v6713 = vadd.f32 %v6438, %v6660
      %v6714 = vadd.f32 %v6439, %v6663
      %v6715 = vadd.f32 %v6440, %v6666
      %v6716 = vadd.f32 %v6441, %v6669
      %v6717 = vadd.f32 %v6442, %v6672
      %v6718 = vadd.f32 %v6443, %v6675
      %v6719 = vadd.f32 %v6444, %v6678
      %v6720 = vadd.f32 %v6445, %v6681
      %v6721 = vadd.f32 %v6446, %v6684
      %v6722 = vadd.f32 %v6447, %v6687
      %v6723 = vadd.f32 %v6448, %v6690
      %6724 = vst.msk [vmem:[#allocation4] sm:$0xff] %vm373, %v6692
      %6725 = vst.msk [vmem:[#allocation4 + $0x8] sm:$0xff] %vm373, %v6693
      %6726 = vst.msk [vmem:[#allocation4 + $0x10] sm:$0xff] %vm373, %v6694
      %6727 = vst.msk [vmem:[#allocation4 + $0x18] sm:$0xff] %vm373, %v6695
      %6728 = vst.msk [vmem:[#allocation4 + $0x20] sm:$0xff] %vm373, %v6696
      %6729 = vst.msk [vmem:[#allocation4 + $0x28] sm:$0xff] %vm373, %v6697
      %6730 = vst.msk [vmem:[#allocation4 + $0x30] sm:$0xff] %vm373, %v6698
      %6731 = vst.msk [vmem:[#allocation4 + $0x38] sm:$0xff] %vm373, %v6699
      %6732 = vst.msk [vmem:[#allocation4 + $0x40] sm:$0xff] %vm373, %v6700
      %6733 = vst.msk [vmem:[#allocation4 + $0x48] sm:$0xff] %vm373, %v6701
      %6734 = vst.msk [vmem:[#allocation4 + $0x50] sm:$0xff] %vm373, %v6702
      %6735 = vst.msk [vmem:[#allocation4 + $0x58] sm:$0xff] %vm373, %v6703
      %6736 = vst.msk [vmem:[#allocation4 + $0x60] sm:$0xff] %vm373, %v6704
      %6737 = vst.msk [vmem:[#allocation4 + $0x68] sm:$0xff] %vm373, %v6705
      %6738 = vst.msk [vmem:[#allocation4 + $0x70] sm:$0xff] %vm373, %v6706
      %6739 = vst.msk [vmem:[#allocation4 + $0x78] sm:$0xff] %vm373, %v6707
      %6740 = vst.msk [vmem:[#allocation4 + $0x80] sm:$0xff] %vm373, %v6708
      %6741 = vst.msk [vmem:[#allocation4 + $0x88] sm:$0xff] %vm373, %v6709
      %6742 = vst.msk [vmem:[#allocation4 + $0x90] sm:$0xff] %vm373, %v6710
      %6743 = vst.msk [vmem:[#allocation4 + $0x98] sm:$0xff] %vm373, %v6711
      %6744 = vst.msk [vmem:[#allocation4 + $0xa0] sm:$0xff] %vm373, %v6712
      %6745 = vst.msk [vmem:[#allocation4 + $0xa8] sm:$0xff] %vm373, %v6713
      %6746 = vst.msk [vmem:[#allocation4 + $0xb0] sm:$0xff] %vm373, %v6714
      %6747 = vst.msk [vmem:[#allocation4 + $0xb8] sm:$0xff] %vm373, %v6715
      %6748 = vst.msk [vmem:[#allocation4 + $0xc0] sm:$0xff] %vm373, %v6716
      %6749 = vst.msk [vmem:[#allocation4 + $0xc8] sm:$0xff] %vm373, %v6717
      %6750 = vst.msk [vmem:[#allocation4 + $0xd0] sm:$0xff] %vm373, %v6718
      %6751 = vst.msk [vmem:[#allocation4 + $0xd8] sm:$0xff] %vm373, %v6719
      %6752 = vst.msk [vmem:[#allocation4 + $0xe0] sm:$0xff] %vm373, %v6720
      %6753 = vst.msk [vmem:[#allocation4 + $0xe8] sm:$0xff] %vm373, %v6721
      %6754 = vst.msk [vmem:[#allocation4 + $0xf0] sm:$0xff] %vm373, %v6722
      %6755 = vst.msk [vmem:[#allocation4 + $0xf8] sm:$0xff] %vm373, %v6723
      %v6756 = vld [vmem:[#allocation4] sm:$0xff]
      %v6757 = vld [vmem:[#allocation4 + $0x8] sm:$0xff]
      %v6758 = vld [vmem:[#allocation4 + $0x10] sm:$0xff]
      %v6759 = vld [vmem:[#allocation4 + $0x18] sm:$0xff]
      %v6760 = vld [vmem:[#allocation4 + $0x20] sm:$0xff]
      %v6761 = vld [vmem:[#allocation4 + $0x28] sm:$0xff]
      %v6762 = vld [vmem:[#allocation4 + $0x30] sm:$0xff]
      %v6763 = vld [vmem:[#allocation4 + $0x38] sm:$0xff]
      %v6764 = vld [vmem:[#allocation4 + $0x40] sm:$0xff]
      %v6765 = vld [vmem:[#allocation4 + $0x48] sm:$0xff]
      %v6766 = vld [vmem:[#allocation4 + $0x50] sm:$0xff]
      %v6767 = vld [vmem:[#allocation4 + $0x58] sm:$0xff]
      %v6768 = vld [vmem:[#allocation4 + $0x60] sm:$0xff]
      %v6769 = vld [vmem:[#allocation4 + $0x68] sm:$0xff]
      %v6770 = vld [vmem:[#allocation4 + $0x70] sm:$0xff]
      %v6771 = vld [vmem:[#allocation4 + $0x78] sm:$0xff]
      %v6772 = vld [vmem:[#allocation4 + $0x80] sm:$0xff]
      %v6773 = vld [vmem:[#allocation4 + $0x88] sm:$0xff]
      %v6774 = vld [vmem:[#allocation4 + $0x90] sm:$0xff]
      %v6775 = vld [vmem:[#allocation4 + $0x98] sm:$0xff]
      %v6776 = vld [vmem:[#allocation4 + $0xa0] sm:$0xff]
      %v6777 = vld [vmem:[#allocation4 + $0xa8] sm:$0xff]
      %v6778 = vld [vmem:[#allocation4 + $0xb0] sm:$0xff]
      %v6779 = vld [vmem:[#allocation4 + $0xb8] sm:$0xff]
      %v6780 = vld [vmem:[#allocation4 + $0xc0] sm:$0xff]
      %v6781 = vld [vmem:[#allocation4 + $0xc8] sm:$0xff]
      %v6782 = vld [vmem:[#allocation4 + $0xd0] sm:$0xff]
      %v6783 = vld [vmem:[#allocation4 + $0xd8] sm:$0xff]
      %v6784 = vld [vmem:[#allocation4 + $0xe0] sm:$0xff]
      %v6785 = vld [vmem:[#allocation4 + $0xe8] sm:$0xff]
      %v6786 = vld [vmem:[#allocation4 + $0xf0] sm:$0xff]
      %v6787 = vld [vmem:[#allocation4 + $0xf8] sm:$0xff]
      %v6788 = vld [vmem:[%s4] sm:$0x1]
      %v6790 = vperm.slane %v6788, 0
      %v6792 = vadd.f32 %v6756, %v6790
      %v6793 = vadd.f32 %v6757, %v6790
      %v6794 = vadd.f32 %v6758, %v6790
      %v6795 = vadd.f32 %v6759, %v6790
      %v6796 = vadd.f32 %v6760, %v6790
      %v6797 = vadd.f32 %v6761, %v6790
      %v6798 = vadd.f32 %v6762, %v6790
      %v6799 = vadd.f32 %v6763, %v6790
      %v6800 = vadd.f32 %v6764, %v6790
      %v6801 = vadd.f32 %v6765, %v6790
      %v6802 = vadd.f32 %v6766, %v6790
      %v6803 = vadd.f32 %v6767, %v6790
      %v6804 = vadd.f32 %v6768, %v6790
      %v6805 = vadd.f32 %v6769, %v6790
      %v6806 = vadd.f32 %v6770, %v6790
      %v6807 = vadd.f32 %v6771, %v6790
      %v6808 = vadd.f32 %v6772, %v6790
      %v6809 = vadd.f32 %v6773, %v6790
      %v6810 = vadd.f32 %v6774, %v6790
      %v6811 = vadd.f32 %v6775, %v6790
      %v6812 = vadd.f32 %v6776, %v6790
      %v6813 = vadd.f32 %v6777, %v6790
      %v6814 = vadd.f32 %v6778, %v6790
      %v6815 = vadd.f32 %v6779, %v6790
      %v6816 = vadd.f32 %v6780, %v6790
      %v6817 = vadd.f32 %v6781, %v6790
      %v6818 = vadd.f32 %v6782, %v6790
      %v6819 = vadd.f32 %v6783, %v6790
      %v6820 = vadd.f32 %v6784, %v6790
      %v6821 = vadd.f32 %v6785, %v6790
      %v6822 = vadd.f32 %v6786, %v6790
      %v6823 = vadd.f32 %v6787, %v6790
      %v6824 = vld [vmem:[%s340 + $0x1] sm:$0xff]
      %v6825 = vld [vmem:[%s340 + $0x9] sm:$0xff]
      %v6826 = vld [vmem:[%s340 + $0x19] sm:$0xff]
      %v6827 = vld [vmem:[%s340 + $0x21] sm:$0xff]
      %v6828 = vld [vmem:[%s340 + $0x31] sm:$0xff]
      %v6829 = vld [vmem:[%s340 + $0x39] sm:$0xff]
      %v6830 = vld [vmem:[%s340 + $0x49] sm:$0xff]
      %v6831 = vld [vmem:[%s340 + $0x51] sm:$0xff]
      %v6832 = vld [vmem:[%s340 + $0x61] sm:$0xff]
      %v6833 = vld [vmem:[%s340 + $0x69] sm:$0xff]
      %v6834 = vld [vmem:[%s340 + $0x79] sm:$0xff]
      %v6835 = vld [vmem:[%s340 + $0x81] sm:$0xff]
      %v6836 = vld [vmem:[%s340 + $0x91] sm:$0xff]
      %v6837 = vld [vmem:[%s340 + $0x99] sm:$0xff]
      %v6838 = vld [vmem:[%s340 + $0xa9] sm:$0xff]
      %v6839 = vld [vmem:[%s340 + $0xb1] sm:$0xff]
      %v6840 = vld [vmem:[%s340 + $0xc1] sm:$0xff]
      %v6841 = vld [vmem:[%s340 + $0xc9] sm:$0xff]
      %v6842 = vld [vmem:[%s340 + $0xd9] sm:$0xff]
      %v6843 = vld [vmem:[%s340 + $0xe1] sm:$0xff]
      %v6844 = vld [vmem:[%s340 + $0xf1] sm:$0xff]
      %v6845 = vld [vmem:[%s340 + $0xf9] sm:$0xff]
      %v6846 = vld [vmem:[%s340 + $0x109] sm:$0xff]
      %v6847 = vld [vmem:[%s340 + $0x111] sm:$0xff]
      %v6848 = vld [vmem:[%s340 + $0x121] sm:$0xff]
      %v6849 = vld [vmem:[%s340 + $0x129] sm:$0xff]
      %v6850 = vld [vmem:[%s340 + $0x139] sm:$0xff]
      %v6851 = vld [vmem:[%s340 + $0x141] sm:$0xff]
      %v6852 = vld [vmem:[%s340 + $0x151] sm:$0xff]
      %v6853 = vld [vmem:[%s340 + $0x159] sm:$0xff]
      %v6854 = vld [vmem:[%s340 + $0x169] sm:$0xff]
      %v6855 = vld [vmem:[%s340 + $0x171] sm:$0xff]
      %v6856 = vld [vmem:[%s5] sm:$0xf]
      %v6858 = vsel %vm252, %v6824, 0
      %v6861 = vsel %vm252, %v6825, 0
      %v6864 = vsel %vm252, %v6826, 0
      %v6867 = vsel %vm252, %v6827, 0
      %v6870 = vsel %vm252, %v6828, 0
      %v6873 = vsel %vm252, %v6829, 0
      %v6876 = vsel %vm252, %v6830, 0
      %v6879 = vsel %vm252, %v6831, 0
      %v6882 = vsel %vm252, %v6832, 0
      %v6885 = vsel %vm252, %v6833, 0
      %v6888 = vsel %vm252, %v6834, 0
      %v6891 = vsel %vm252, %v6835, 0
      %v6894 = vsel %vm252, %v6836, 0
      %v6897 = vsel %vm252, %v6837, 0
      %v6900 = vsel %vm252, %v6838, 0
      %v6903 = vsel %vm252, %v6839, 0
      %v6906 = vsel %vm252, %v6840, 0
      %v6909 = vsel %vm252, %v6841, 0
      %v6912 = vsel %vm252, %v6842, 0
      %v6915 = vsel %vm252, %v6843, 0
      %v6918 = vsel %vm252, %v6844, 0
      %v6921 = vsel %vm252, %v6845, 0
      %v6924 = vsel %vm252, %v6846, 0
      %v6927 = vsel %vm252, %v6847, 0
      %v6930 = vsel %vm252, %v6848, 0
      %v6933 = vsel %vm252, %v6849, 0
      %v6936 = vsel %vm252, %v6850, 0
      %v6939 = vsel %vm252, %v6851, 0
      %v6942 = vsel %vm252, %v6852, 0
      %v6945 = vsel %vm252, %v6853, 0
      %v6948 = vsel %vm252, %v6854, 0
      %v6951 = vsel %vm252, %v6855, 0
      %v6954 = vsel %vm567, %v6856, 0
      %6956 = vmatpush.msra.mxu0 0.0
      %6957 = vmatpush.msra.mxu0 0.0
      %6958 = vmatpush.msra.mxu0 0.0
      %6959 = vmatpush.msra.mxu0 0.0
      %6960 = vmatpush.msra.mxu0 0.0
      %6961 = vmatpush.msra.mxu0 0.0
      %6962 = vmatpush.msra.mxu0 0.0
      %6963 = vmatpush.msra.mxu0 0.0
      %6964 = vmatpush.msra.mxu0 0.0
      %6965 = vmatpush.msra.mxu0 0.0
      %6966 = vmatpush.msra.mxu0 0.0
      %6967 = vmatpush.msra.mxu0 0.0
      %6968 = vmatpush.msra.mxu0 0.0
      %6969 = vmatpush.msra.mxu0 0.0
      %6970 = vmatpush.msra.mxu0 0.0
      %6971 = vmatpush.msra.mxu0 %v6954
      %6972 = vmatmul.f32.gmra.mxu0 %v6858
      %v6973 = vpop.f32.mrf.mxu0
      %v6974 = vadd.f32 0.0, %v6973
      %6975 = vmatmul.f32.gmra.mxu0 %v6861
      %v6976 = vpop.f32.mrf.mxu0
      %v6977 = vadd.f32 0.0, %v6976
      %6978 = vmatmul.f32.gmra.mxu0 %v6864
      %v6979 = vpop.f32.mrf.mxu0
      %v6980 = vadd.f32 0.0, %v6979
      %6981 = vmatmul.f32.gmra.mxu0 %v6867
      %v6982 = vpop.f32.mrf.mxu0
      %v6983 = vadd.f32 0.0, %v6982
      %6984 = vmatmul.f32.gmra.mxu0 %v6870
      %v6985 = vpop.f32.mrf.mxu0
      %v6986 = vadd.f32 0.0, %v6985
      %6987 = vmatmul.f32.gmra.mxu0 %v6873
      %v6988 = vpop.f32.mrf.mxu0
      %v6989 = vadd.f32 0.0, %v6988
      %6990 = vmatmul.f32.gmra.mxu0 %v6876
      %v6991 = vpop.f32.mrf.mxu0
      %v6992 = vadd.f32 0.0, %v6991
      %6993 = vmatmul.f32.gmra.mxu0 %v6879
      %v6994 = vpop.f32.mrf.mxu0
      %v6995 = vadd.f32 0.0, %v6994
      %6996 = vmatmul.f32.gmra.mxu0 %v6882
      %v6997 = vpop.f32.mrf.mxu0
      %v6998 = vadd.f32 0.0, %v6997
      %6999 = vmatmul.f32.gmra.mxu0 %v6885
      %v7000 = vpop.f32.mrf.mxu0
      %v7001 = vadd.f32 0.0, %v7000
      %7002 = vmatmul.f32.gmra.mxu0 %v6888
      %v7003 = vpop.f32.mrf.mxu0
      %v7004 = vadd.f32 0.0, %v7003
      %7005 = vmatmul.f32.gmra.mxu0 %v6891
      %v7006 = vpop.f32.mrf.mxu0
      %v7007 = vadd.f32 0.0, %v7006
      %7008 = vmatmul.f32.gmra.mxu0 %v6894
      %v7009 = vpop.f32.mrf.mxu0
      %v7010 = vadd.f32 0.0, %v7009
      %7011 = vmatmul.f32.gmra.mxu0 %v6897
      %v7012 = vpop.f32.mrf.mxu0
      %v7013 = vadd.f32 0.0, %v7012
      %7014 = vmatmul.f32.gmra.mxu0 %v6900
      %v7015 = vpop.f32.mrf.mxu0
      %v7016 = vadd.f32 0.0, %v7015
      %7017 = vmatmul.f32.gmra.mxu0 %v6903
      %v7018 = vpop.f32.mrf.mxu0
      %v7019 = vadd.f32 0.0, %v7018
      %7020 = vmatmul.f32.gmra.mxu0 %v6906
      %v7021 = vpop.f32.mrf.mxu0
      %v7022 = vadd.f32 0.0, %v7021
      %7023 = vmatmul.f32.gmra.mxu0 %v6909
      %v7024 = vpop.f32.mrf.mxu0
      %v7025 = vadd.f32 0.0, %v7024
      %7026 = vmatmul.f32.gmra.mxu0 %v6912
      %v7027 = vpop.f32.mrf.mxu0
      %v7028 = vadd.f32 0.0, %v7027
      %7029 = vmatmul.f32.gmra.mxu0 %v6915
      %v7030 = vpop.f32.mrf.mxu0
      %v7031 = vadd.f32 0.0, %v7030
      %7032 = vmatmul.f32.gmra.mxu0 %v6918
      %v7033 = vpop.f32.mrf.mxu0
      %v7034 = vadd.f32 0.0, %v7033
      %7035 = vmatmul.f32.gmra.mxu0 %v6921
      %v7036 = vpop.f32.mrf.mxu0
      %v7037 = vadd.f32 0.0, %v7036
      %7038 = vmatmul.f32.gmra.mxu0 %v6924
      %v7039 = vpop.f32.mrf.mxu0
      %v7040 = vadd.f32 0.0, %v7039
      %7041 = vmatmul.f32.gmra.mxu0 %v6927
      %v7042 = vpop.f32.mrf.mxu0
      %v7043 = vadd.f32 0.0, %v7042
      %7044 = vmatmul.f32.gmra.mxu0 %v6930
      %v7045 = vpop.f32.mrf.mxu0
      %v7046 = vadd.f32 0.0, %v7045
      %7047 = vmatmul.f32.gmra.mxu0 %v6933
      %v7048 = vpop.f32.mrf.mxu0
      %v7049 = vadd.f32 0.0, %v7048
      %7050 = vmatmul.f32.gmra.mxu0 %v6936
      %v7051 = vpop.f32.mrf.mxu0
      %v7052 = vadd.f32 0.0, %v7051
      %7053 = vmatmul.f32.gmra.mxu0 %v6939
      %v7054 = vpop.f32.mrf.mxu0
      %v7055 = vadd.f32 0.0, %v7054
      %7056 = vmatmul.f32.gmra.mxu0 %v6942
      %v7057 = vpop.f32.mrf.mxu0
      %v7058 = vadd.f32 0.0, %v7057
      %7059 = vmatmul.f32.gmra.mxu0 %v6945
      %v7060 = vpop.f32.mrf.mxu0
      %v7061 = vadd.f32 0.0, %v7060
      %7062 = vmatmul.f32.gmra.mxu0 %v6948
      %v7063 = vpop.f32.mrf.mxu0
      %v7064 = vadd.f32 0.0, %v7063
      %7065 = vmatmul.f32.gmra.mxu0 %v6951
      %v7066 = vpop.f32.mrf.mxu0
      %v7067 = vadd.f32 0.0, %v7066
      %7068 = vdwg.mxu0
      %v7069 = vadd.f32 %v6792, %v6974
      %v7070 = vadd.f32 %v6793, %v6977
      %v7071 = vadd.f32 %v6794, %v6980
      %v7072 = vadd.f32 %v6795, %v6983
      %v7073 = vadd.f32 %v6796, %v6986
      %v7074 = vadd.f32 %v6797, %v6989
      %v7075 = vadd.f32 %v6798, %v6992
      %v7076 = vadd.f32 %v6799, %v6995
      %v7077 = vadd.f32 %v6800, %v6998
      %v7078 = vadd.f32 %v6801, %v7001
      %v7079 = vadd.f32 %v6802, %v7004
      %v7080 = vadd.f32 %v6803, %v7007
      %v7081 = vadd.f32 %v6804, %v7010
      %v7082 = vadd.f32 %v6805, %v7013
      %v7083 = vadd.f32 %v6806, %v7016
      %v7084 = vadd.f32 %v6807, %v7019
      %v7085 = vadd.f32 %v6808, %v7022
      %v7086 = vadd.f32 %v6809, %v7025
      %v7087 = vadd.f32 %v6810, %v7028
      %v7088 = vadd.f32 %v6811, %v7031
      %v7089 = vadd.f32 %v6812, %v7034
      %v7090 = vadd.f32 %v6813, %v7037
      %v7091 = vadd.f32 %v6814, %v7040
      %v7092 = vadd.f32 %v6815, %v7043
      %v7093 = vadd.f32 %v6816, %v7046
      %v7094 = vadd.f32 %v6817, %v7049
      %v7095 = vadd.f32 %v6818, %v7052
      %v7096 = vadd.f32 %v6819, %v7055
      %v7097 = vadd.f32 %v6820, %v7058
      %v7098 = vadd.f32 %v6821, %v7061
      %v7099 = vadd.f32 %v6822, %v7064
      %v7100 = vadd.f32 %v6823, %v7067
      %v7101 = vmax.f32 %v7069, 0.0
      %v7102 = vmax.f32 %v7070, 0.0
      %v7103 = vmax.f32 %v7071, 0.0
      %v7104 = vmax.f32 %v7072, 0.0
      %v7105 = vmax.f32 %v7073, 0.0
      %v7106 = vmax.f32 %v7074, 0.0
      %v7107 = vmax.f32 %v7075, 0.0
      %v7108 = vmax.f32 %v7076, 0.0
      %v7109 = vmax.f32 %v7077, 0.0
      %v7110 = vmax.f32 %v7078, 0.0
      %v7111 = vmax.f32 %v7079, 0.0
      %v7112 = vmax.f32 %v7080, 0.0
      %v7113 = vmax.f32 %v7081, 0.0
      %v7114 = vmax.f32 %v7082, 0.0
      %v7115 = vmax.f32 %v7083, 0.0
      %v7116 = vmax.f32 %v7084, 0.0
      %v7117 = vmax.f32 %v7085, 0.0
      %v7118 = vmax.f32 %v7086, 0.0
      %v7119 = vmax.f32 %v7087, 0.0
      %v7120 = vmax.f32 %v7088, 0.0
      %v7121 = vmax.f32 %v7089, 0.0
      %v7122 = vmax.f32 %v7090, 0.0
      %v7123 = vmax.f32 %v7091, 0.0
      %v7124 = vmax.f32 %v7092, 0.0
      %v7125 = vmax.f32 %v7093, 0.0
      %v7126 = vmax.f32 %v7094, 0.0
      %v7127 = vmax.f32 %v7095, 0.0
      %v7128 = vmax.f32 %v7096, 0.0
      %v7129 = vmax.f32 %v7097, 0.0
      %v7130 = vmax.f32 %v7098, 0.0
      %v7131 = vmax.f32 %v7099, 0.0
      %v7132 = vmax.f32 %v7100, 0.0
      %7133 = vst.msk [vmem:[%s251] sm:$0xff] %vm373, %v7101
      %7134 = vst.msk [vmem:[%s251 + $0x8] sm:$0xff] %vm373, %v7102
      %7135 = vst.msk [vmem:[%s251 + $0x10] sm:$0xff] %vm373, %v7103
      %7136 = vst.msk [vmem:[%s251 + $0x18] sm:$0xff] %vm373, %v7104
      %7137 = vst.msk [vmem:[%s251 + $0x20] sm:$0xff] %vm373, %v7105
      %7138 = vst.msk [vmem:[%s251 + $0x28] sm:$0xff] %vm373, %v7106
      %7139 = vst.msk [vmem:[%s251 + $0x30] sm:$0xff] %vm373, %v7107
      %7140 = vst.msk [vmem:[%s251 + $0x38] sm:$0xff] %vm373, %v7108
      %7141 = vst.msk [vmem:[%s251 + $0x40] sm:$0xff] %vm373, %v7109
      %7142 = vst.msk [vmem:[%s251 + $0x48] sm:$0xff] %vm373, %v7110
      %7143 = vst.msk [vmem:[%s251 + $0x50] sm:$0xff] %vm373, %v7111
      %7144 = vst.msk [vmem:[%s251 + $0x58] sm:$0xff] %vm373, %v7112
      %7145 = vst.msk [vmem:[%s251 + $0x60] sm:$0xff] %vm373, %v7113
      %7146 = vst.msk [vmem:[%s251 + $0x68] sm:$0xff] %vm373, %v7114
      %7147 = vst.msk [vmem:[%s251 + $0x70] sm:$0xff] %vm373, %v7115
      %7148 = vst.msk [vmem:[%s251 + $0x78] sm:$0xff] %vm373, %v7116
      %7149 = vst.msk [vmem:[%s251 + $0x80] sm:$0xff] %vm373, %v7117
      %7150 = vst.msk [vmem:[%s251 + $0x88] sm:$0xff] %vm373, %v7118
      %7151 = vst.msk [vmem:[%s251 + $0x90] sm:$0xff] %vm373, %v7119
      %7152 = vst.msk [vmem:[%s251 + $0x98] sm:$0xff] %vm373, %v7120
      %7153 = vst.msk [vmem:[%s251 + $0xa0] sm:$0xff] %vm373, %v7121
      %7154 = vst.msk [vmem:[%s251 + $0xa8] sm:$0xff] %vm373, %v7122
      %7155 = vst.msk [vmem:[%s251 + $0xb0] sm:$0xff] %vm373, %v7123
      %7156 = vst.msk [vmem:[%s251 + $0xb8] sm:$0xff] %vm373, %v7124
      %7157 = vst.msk [vmem:[%s251 + $0xc0] sm:$0xff] %vm373, %v7125
      %7158 = vst.msk [vmem:[%s251 + $0xc8] sm:$0xff] %vm373, %v7126
      %7159 = vst.msk [vmem:[%s251 + $0xd0] sm:$0xff] %vm373, %v7127
      %7160 = vst.msk [vmem:[%s251 + $0xd8] sm:$0xff] %vm373, %v7128
      %7161 = vst.msk [vmem:[%s251 + $0xe0] sm:$0xff] %vm373, %v7129
      %7162 = vst.msk [vmem:[%s251 + $0xe8] sm:$0xff] %vm373, %v7130
      %7163 = vst.msk [vmem:[%s251 + $0xf0] sm:$0xff] %vm373, %v7131
      %7164 = vst.msk [vmem:[%s251 + $0xf8] sm:$0xff] %vm373, %v7132
      %p7165 = scmp.lt.s32.totalorder %s17, 1
      %s7166 = scalar_select %p7165, %s17, 1
      %s7167 = smul.addr %s7166, 32
      %s7168 = smul.addr %s7167, 8
      %s7169 = scalar_lea.vmem %s6, %s7168
      // Predicated region
      $region45: #{tpu_custom_call.1} parent=43 // pred_check
        %p7170 = pneg %p166
      $region46: #{tpu_custom_call.1} parent=43 // pred_check_branch
        %7172 = sbr.rel (%p7170) target = $region48
      $region47: #{tpu_custom_call.1} parent=43 // pred_region
        _
      $region48: #{tpu_custom_call.1} parent=43 // pred_fallthru
        _
    $region44: #{tpu_custom_call.1} parent=5 // pred_fallthru
      _
    %p7173 = scmp.le.s32.totalorder 2, %s12
    // Predicated region
    $region49: #{tpu_custom_call.1} parent=5 // pred_check
      %p7174 = pneg %p7173
    $region50: #{tpu_custom_call.1} parent=5 // pred_check_branch
      %7176 = sbr.rel (%p7174) target = $region52
    $region51: #{tpu_custom_call.1} parent=5 // pred_region
      %s7177 = ssub.s32 %s12, 2
      // Predicated region
      $region53: #{tpu_custom_call.1} parent=51 // pred_check
        %p7178 = pneg %p172
      $region54: #{tpu_custom_call.1} parent=51 // pred_check_branch
        %7180 = sbr.rel (%p7178) target = $region56
      $region55: #{tpu_custom_call.1} parent=51 // pred_region
        %p7181 = scmp.lt.s32.totalorder %s18, 1
        %s7182 = scalar_select %p7181, %s18, 1
        %s7183 = smul.addr %s7182, 32
        %s7184 = smul.addr %s7183, 8
        %s7185 = scalar_lea.vmem %s6, %s7184
      $region56: #{tpu_custom_call.1} parent=51 // pred_fallthru
        _
    $region52: #{tpu_custom_call.1} parent=5 // pred_fallthru
      _
  $region6: #{tpu_custom_call.1} parent=0 // loop_footer
    %s16 = sadd.s32 1, %s12
  $region7: #{tpu_custom_call.1} parent=0 // loop_footer_branch
    %11 = sbr.rel target = $region3
  $region8: #{tpu_custom_call.1} parent=0 // loop_exit
    _

</llo_original>
